<compile_context>
chip_gen: v7x
topology: tpu7x:2x2x1
jax: 0.10.0
libtpu: 0.0.40
codegen_flags: <defaults>
</compile_context>

<pallas_src>
import numpy as np
import jax
import jax.numpy as jnp
from jax.experimental import pallas as pl
from jax.experimental.pallas import tpu as pltpu

ENCODED_SPACE_DIM = 64
OUT_CHANNELS = 4
_IMG = 39
_FC_HID = 128
_BT = 16      # images per grid step; multiple of 16 keeps bf16 sublane tiles aligned

_CONV_CHANNELS = [(1, OUT_CHANNELS), (OUT_CHANNELS, OUT_CHANNELS),
                  (OUT_CHANNELS, 2 * OUT_CHANNELS),
                  (2 * OUT_CHANNELS, 4 * OUT_CHANNELS),
                  (4 * OUT_CHANNELS, 8 * OUT_CHANNELS),
                  (8 * OUT_CHANNELS, 16 * OUT_CHANNELS)]
_CONV_STRIDES = [1, 1, 2, 2, 2, 2]


def _layer_cfgs():
    cfgs, H = [], _IMG
    for (cin, cout), s in zip(_CONV_CHANNELS, _CONV_STRIDES):
        Ho = (H + 2 - 3) // s + 1
        # Row groups: group 0 = top zero pad, groups 1..H = data rows,
        # group H+1 = bottom zero pad; stride-2 layers get one extra
        # (never-used) group so the contiguous 2*Ho-group tap read fits.
        G = (H + 2) if s == 1 else (2 * Ho + 2)
        cfgs.append(dict(cin=cin, cout=cout, s=s, H=H, Ho=Ho, G=G,
                         wc=H * cin,      # input row length  (w*Cin + ci)
                         woc=Ho * cout))  # output row length (ow*Cout + co)
        H = Ho
    return cfgs


_LAYERS = _layer_cfgs()
_N_CONV = len(_LAYERS)
_FC_H = _LAYERS[-1]["Ho"]        # 3
_FC_WC = _LAYERS[-1]["woc"]      # 192 = 3 * 64


# ----------------------------------------------------------------------------
# Parameters: torch-like layouts, deterministic synthetic init.
# ----------------------------------------------------------------------------
def init_params(key):
    params = {}
    keys = jax.random.split(key, _N_CONV + 2)
    for i, (cin, cout) in enumerate(_CONV_CHANNELS):
        fan_in = 9 * cin
        params[f"conv{i}_w"] = (
            jax.random.normal(keys[i], (3, 3, cin, cout), jnp.float32)
            / jnp.sqrt(jnp.float32(fan_in)))
        params[f"conv{i}_b"] = jnp.full((cout,), 0.01, jnp.float32)
    params["fc1_w"] = (jax.random.normal(keys[-2], (64 * 3 * 3, _FC_HID),
                                         jnp.float32)
                       / jnp.sqrt(jnp.float32(64 * 3 * 3)))
    params["fc1_b"] = jnp.full((_FC_HID,), 0.01, jnp.float32)
    params["fc2_w"] = (jax.random.normal(keys[-1], (_FC_HID, ENCODED_SPACE_DIM),
                                         jnp.float32)
                       / jnp.sqrt(jnp.float32(_FC_HID)))
    params["fc2_b"] = jnp.full((ENCODED_SPACE_DIM,), 0.01, jnp.float32)
    return params


# ----------------------------------------------------------------------------
# One-time host-side weight packing:
#   * banded ("Toeplitz") matrix per vertical tap kh:
#       T[kh][w_in*Cin + ci, ow*Cout + co] = w[kh, kw, ci, co]
#       with w_in = s*ow + kw - 1, edge-clipped -> horizontal zero-padding is
#       baked in, so activation rows have no width padding at all.
#   * bias tiled across the flattened output row
#   * fc1 rows permuted so the kernel's (oh, ow*64 + c) layout matches
#     torch's NCHW Flatten order (c, oh, ow).
# ----------------------------------------------------------------------------
def prepare_params(params):
    prep = []
    for i, cfg in enumerate(_LAYERS):
        w = np.asarray(params[f"conv{i}_w"], np.float32)      # (3,3,Cin,Cout)
        b = np.asarray(params[f"conv{i}_b"], np.float32)
        cin, cout, s = cfg["cin"], cfg["cout"], cfg["s"]
        H, Ho = cfg["H"], cfg["Ho"]                            # W == H (square)

        T = np.zeros((3, H * cin, Ho * cout), np.float32)
        for kh in range(3):
            for ow in range(Ho):
                for kw in range(3):
                    w_in = s * ow + kw - 1
                    if 0 <= w_in < H:
                        T[kh, w_in * cin:(w_in + 1) * cin,
                          ow * cout:(ow + 1) * cout] = w[kh, kw]

        brow = np.tile(b, Ho).reshape(1, Ho * cout)
        prep += [jnp.asarray(T, jnp.bfloat16),
                 jnp.asarray(brow, jnp.float32)]

    # fc1: torch row index = c*9 + oh*3 + ow ; kernel layout = (oh, ow*64 + c)
    fw1 = np.asarray(params["fc1_w"], np.float32).reshape(64, 3, 3, _FC_HID)
    fw1 = np.transpose(fw1, (1, 2, 0, 3)).reshape(_FC_H, _FC_WC, _FC_HID)
    prep += [jnp.asarray(fw1, jnp.bfloat16),
             jnp.asarray(params["fc1_b"], jnp.float32).reshape(1, _FC_HID),
             jnp.asarray(params["fc2_w"], jnp.bfloat16),
             jnp.asarray(params["fc2_b"], jnp.float32).reshape(
                 1, ENCODED_SPACE_DIM)]
    return prep


# ----------------------------------------------------------------------------
# The fused kernel: one grid step = _BT images, everything resident in VMEM.
# Activation buffers: (G, Bt, W*Cin) bf16, row-group major / batch minor, so
# every slice, store and reshape is tile aligned (Bt = 16 = one bf16 tile).
# ----------------------------------------------------------------------------
def _fused_encoder_kernel(*args):
    x_ref = args[0]
    conv_w = args[1:1 + 2 * _N_CONV]
    fw1_ref, fb1_ref, fw2_ref, fb2_ref = args[1 + 2 * _N_CONV:5 + 2 * _N_CONV]
    o_ref = args[5 + 2 * _N_CONV]
    bufs = args[6 + 2 * _N_CONV:]

    # Zero only the two pad row-groups of each buffer; the data groups are
    # fully overwritten every grid step (megacore-safe, a few KB per step).
    for i, cfg in enumerate(_LAYERS):
        z = jnp.zeros((1, _BT, cfg["wc"]), jnp.bfloat16)
        bufs[i][0:1, :, :] = z
        bufs[i][cfg["H"] + 1:cfg["H"] + 2, :, :] = z

    # Input tile (H, Bt, W) -> data row-groups 1..H of the layer-0 buffer.
    bufs[0][1:1 + _IMG, :, :] = x_ref[...].astype(jnp.bfloat16)

    c_last = None
    for i, cfg in enumerate(_LAYERS):
        t_ref, b_ref = conv_w[2 * i], conv_w[2 * i + 1]
        s, Ho, wc, woc = cfg["s"], cfg["Ho"], cfg["wc"], cfg["woc"]

        acc = None
        for kh in range(3):
            if s == 1:
                a2 = bufs[i][kh:kh + Ho, :, :].reshape(Ho * _BT, wc)
            else:
                # stride-2: read 2*Ho consecutive row groups and keep the even
                # ones (relabel reshapes + an aligned 16-sublane slice).
                a4 = bufs[i][kh:kh + 2 * Ho, :, :]
                a2 = (a4.reshape(Ho, 2 * _BT, wc)[:, :_BT, :]
                      .reshape(Ho * _BT, wc))
            d = jnp.dot(a2, t_ref[kh], preferred_element_type=jnp.float32)
            acc = d if acc is None else acc + d

        out = jnp.maximum(acc + b_ref[...], 0.0)               # f32 epilogue
        out3 = out.astype(jnp.bfloat16).reshape(Ho, _BT, woc)
        if i + 1 < _N_CONV:
            bufs[i + 1][1:1 + Ho, :, :] = out3                 # aligned store
        else:
            c_last = out3                                      # (3, Bt, 192)

    # FC head: (Bt,192)@(192,128) per spatial row, then (Bt,128)@(128,64).
    acc1 = None
    for h in range(_FC_H):
        d = jnp.dot(c_last[h], fw1_ref[h], preferred_element_type=jnp.float32)
        acc1 = d if acc1 is None else acc1 + d
    y1 = jnp.maximum(acc1 + fb1_ref[...], 0.0).astype(jnp.bfloat16)
    y2 = jnp.dot(y1, fw2_ref[...], preferred_element_type=jnp.float32)
    o_ref[...] = jnp.maximum(y2 + fb2_ref[...], 0.0)


def encoder_forward(x, prep):
    # torch: x.view(-1, 1, 39, 39); channel dim is 1 so fold it away.
    x = x.reshape(-1, _IMG, _IMG).astype(jnp.float32)
    B = x.shape[0]
    n_steps = max(1, (B + _BT - 1) // _BT)
    Bp = n_steps * _BT
    if Bp != B:
        x = jnp.concatenate(
            [x, jnp.zeros((Bp - B, _IMG, _IMG), jnp.float32)], axis=0)
    # (n, Bt, H, W) -> (n, H, Bt, W): row-major, batch-minor per grid step.
    x_t = x.reshape(n_steps, _BT, _IMG, _IMG).transpose(0, 2, 1, 3)

    in_specs = [pl.BlockSpec((None, _IMG, _BT, _IMG), lambda n: (n, 0, 0, 0))]
    for a in prep:  # weights: one full block, constant index map (fetched once)
        in_specs.append(pl.BlockSpec(a.shape, lambda n, _nd=a.ndim: (0,) * _nd))

    scratch_shapes = [pltpu.VMEM((cfg["G"], _BT, cfg["wc"]), jnp.bfloat16)
                      for cfg in _LAYERS]

    out = pl.pallas_call(
        _fused_encoder_kernel,
        out_shape=jax.ShapeDtypeStruct((Bp, ENCODED_SPACE_DIM), jnp.float32),
        grid=(n_steps,),
        in_specs=in_specs,
        out_specs=pl.BlockSpec((_BT, ENCODED_SPACE_DIM), lambda n: (n, 0)),
        scratch_shapes=scratch_shapes,
        compiler_params=pltpu.CompilerParams(
            dimension_semantics=("parallel",)),
    )(x_t, *prep)
    return out[:B]


# ----------------------------------------------------------------------------
# Plain-JAX reference (exact torch semantics) for a sanity check.
# ----------------------------------------------------------------------------
def encoder_reference(x, params):
    x = x.reshape(-1, 1, _IMG, _IMG).astype(jnp.float32)
    for i, s in enumerate(_CONV_STRIDES):
        w = params[f"conv{i}_w"]                        # (3,3,Cin,Cout) HWIO
        x = jax.lax.conv_general_dilated(
            x, w, window_strides=(s, s), padding=((1, 1), (1, 1)),
            dimension_numbers=("NCHW", "HWIO", "NCHW"))
        x = jax.nn.relu(x + params[f"conv{i}_b"][None, :, None, None])
    x = x.reshape(x.shape[0], -1)                       # NCHW flatten (c,h,w)
    x = jax.nn.relu(x @ params["fc1_w"] + params["fc1_b"])
    x = jax.nn.relu(x @ params["fc2_w"] + params["fc2_b"])
    return x


if __name__ == "__main__":
    root = jax.random.PRNGKey(0)
    pkey, xkey = jax.random.split(root)
    params = init_params(pkey)
    prep = prepare_params(params)                       # one-time host packing

    # batch=2, single-channel 39x39 grids (shape forced by the module's .view)
    x = jax.random.normal(xkey, (2, 1, _IMG, _IMG), jnp.float32)

    fwd = jax.jit(encoder_forward)
    out = jax.block_until_ready(fwd(x, prep))

    ref = jax.block_until_ready(jax.jit(encoder_reference)(x, params))

    assert out.shape == (2, ENCODED_SPACE_DIM), out.shape
    assert out.dtype == jnp.float32
    assert bool(jnp.all(jnp.isfinite(out)))
    # bf16 matmul operands / bf16 activations (f32 accumulation) vs f32 ref.
    assert bool(jnp.allclose(out, ref, rtol=0.15, atol=0.15)), (
        float(jnp.max(jnp.abs(out - ref))))
    print("KERNEL_OK")
</pallas_src>

<mosaic_0001>
module attributes {stable_mosaic.version = 11 : i64} {
  func.func @_fused_encoder_kernel(%arg0: i32, %arg1: memref<1x39x16x39xf32, #tpu.memory_space<vmem>>, %arg2: memref<3x39x156xbf16, #tpu.memory_space<vmem>>, %arg3: memref<1x156xf32, #tpu.memory_space<vmem>>, %arg4: memref<3x156x156xbf16, #tpu.memory_space<vmem>>, %arg5: memref<1x156xf32, #tpu.memory_space<vmem>>, %arg6: memref<3x156x160xbf16, #tpu.memory_space<vmem>>, %arg7: memref<1x160xf32, #tpu.memory_space<vmem>>, %arg8: memref<3x160x160xbf16, #tpu.memory_space<vmem>>, %arg9: memref<1x160xf32, #tpu.memory_space<vmem>>, %arg10: memref<3x160x160xbf16, #tpu.memory_space<vmem>>, %arg11: memref<1x160xf32, #tpu.memory_space<vmem>>, %arg12: memref<3x160x192xbf16, #tpu.memory_space<vmem>>, %arg13: memref<1x192xf32, #tpu.memory_space<vmem>>, %arg14: memref<3x192x128xbf16, #tpu.memory_space<vmem>>, %arg15: memref<1x128xf32, #tpu.memory_space<vmem>>, %arg16: memref<128x64xbf16, #tpu.memory_space<vmem>>, %arg17: memref<1x64xf32, #tpu.memory_space<vmem>>, %arg18: memref<16x64xf32, #tpu.memory_space<vmem>>, %arg19: memref<41x16x39xbf16, #tpu.memory_space<vmem>>, %arg20: memref<41x16x156xbf16, #tpu.memory_space<vmem>>, %arg21: memref<42x16x156xbf16, #tpu.memory_space<vmem>>, %arg22: memref<22x16x160xbf16, #tpu.memory_space<vmem>>, %arg23: memref<12x16x160xbf16, #tpu.memory_space<vmem>>, %arg24: memref<8x16x160xbf16, #tpu.memory_space<vmem>>) attributes {dimension_semantics = [#tpu.dimension_semantics<parallel>], iteration_bounds = array<i64: 1>, scalar_prefetch = 0 : i64, scratch_operands = 6 : i64, tpu.core_type = #tpu.core_type<tc>, window_params = [{transform_indices = @transform_0, window_bounds = array<i64: 1, 39, 16, 39>}, {pipeline_mode = #tpu.pipeline_mode<synchronous>, transform_indices = @transform_1, window_bounds = array<i64: 3, 39, 156>}, {pipeline_mode = #tpu.pipeline_mode<synchronous>, transform_indices = @transform_2, window_bounds = array<i64: 1, 156>}, {pipeline_mode = #tpu.pipeline_mode<synchronous>, transform_indices = @transform_3, window_bounds = array<i64: 3, 156, 156>}, {pipeline_mode = #tpu.pipeline_mode<synchronous>, transform_indices = @transform_4, window_bounds = array<i64: 1, 156>}, {pipeline_mode = #tpu.pipeline_mode<synchronous>, transform_indices = @transform_5, window_bounds = array<i64: 3, 156, 160>}, {pipeline_mode = #tpu.pipeline_mode<synchronous>, transform_indices = @transform_6, window_bounds = array<i64: 1, 160>}, {pipeline_mode = #tpu.pipeline_mode<synchronous>, transform_indices = @transform_7, window_bounds = array<i64: 3, 160, 160>}, {pipeline_mode = #tpu.pipeline_mode<synchronous>, transform_indices = @transform_8, window_bounds = array<i64: 1, 160>}, {pipeline_mode = #tpu.pipeline_mode<synchronous>, transform_indices = @transform_9, window_bounds = array<i64: 3, 160, 160>}, {pipeline_mode = #tpu.pipeline_mode<synchronous>, transform_indices = @transform_10, window_bounds = array<i64: 1, 160>}, {pipeline_mode = #tpu.pipeline_mode<synchronous>, transform_indices = @transform_11, window_bounds = array<i64: 3, 160, 192>}, {pipeline_mode = #tpu.pipeline_mode<synchronous>, transform_indices = @transform_12, window_bounds = array<i64: 1, 192>}, {pipeline_mode = #tpu.pipeline_mode<synchronous>, transform_indices = @transform_13, window_bounds = array<i64: 3, 192, 128>}, {pipeline_mode = #tpu.pipeline_mode<synchronous>, transform_indices = @transform_14, window_bounds = array<i64: 1, 128>}, {pipeline_mode = #tpu.pipeline_mode<synchronous>, transform_indices = @transform_15, window_bounds = array<i64: 128, 64>}, {pipeline_mode = #tpu.pipeline_mode<synchronous>, transform_indices = @transform_16, window_bounds = array<i64: 1, 64>}, {transform_indices = @transform_17, window_bounds = array<i64: 16, 64>}]} {
    %cst = arith.constant 0.000000e+00 : bf16
    %0 = vector.broadcast %cst : bf16 to vector<1x16x39xbf16>
    %c0 = arith.constant 0 : index
    %c0_0 = arith.constant 0 : index
    %c0_1 = arith.constant 0 : index
    %1 = vector.load %arg19[%c0, %c0_0, %c0_1] : memref<41x16x39xbf16, #tpu.memory_space<vmem>>, vector<1x16x39xbf16>
    tpu.vector_store %arg19[%c0, %c0_0, %c0_1], %0 {strides = array<i32>} : memref<41x16x39xbf16, #tpu.memory_space<vmem>>, vector<1x16x39xbf16>,
    %c40 = arith.constant 40 : index
    %c0_2 = arith.constant 0 : index
    %c0_3 = arith.constant 0 : index
    %2 = vector.load %arg19[%c40, %c0_2, %c0_3] : memref<41x16x39xbf16, #tpu.memory_space<vmem>>, vector<1x16x39xbf16>
    tpu.vector_store %arg19[%c40, %c0_2, %c0_3], %0 {strides = array<i32>} : memref<41x16x39xbf16, #tpu.memory_space<vmem>>, vector<1x16x39xbf16>,
    %cst_4 = arith.constant 0.000000e+00 : bf16
    %3 = vector.broadcast %cst_4 : bf16 to vector<1x16x156xbf16>
    %c0_5 = arith.constant 0 : index
    %c0_6 = arith.constant 0 : index
    %c0_7 = arith.constant 0 : index
    %4 = vector.load %arg20[%c0_5, %c0_6, %c0_7] : memref<41x16x156xbf16, #tpu.memory_space<vmem>>, vector<1x16x156xbf16>
    tpu.vector_store %arg20[%c0_5, %c0_6, %c0_7], %3 {strides = array<i32>} : memref<41x16x156xbf16, #tpu.memory_space<vmem>>, vector<1x16x156xbf16>,
    %c40_8 = arith.constant 40 : index
    %c0_9 = arith.constant 0 : index
    %c0_10 = arith.constant 0 : index
    %5 = vector.load %arg20[%c40_8, %c0_9, %c0_10] : memref<41x16x156xbf16, #tpu.memory_space<vmem>>, vector<1x16x156xbf16>
    tpu.vector_store %arg20[%c40_8, %c0_9, %c0_10], %3 {strides = array<i32>} : memref<41x16x156xbf16, #tpu.memory_space<vmem>>, vector<1x16x156xbf16>,
    %cst_11 = arith.constant 0.000000e+00 : bf16
    %6 = vector.broadcast %cst_11 : bf16 to vector<1x16x156xbf16>
    %c0_12 = arith.constant 0 : index
    %c0_13 = arith.constant 0 : index
    %c0_14 = arith.constant 0 : index
    %7 = vector.load %arg21[%c0_12, %c0_13, %c0_14] : memref<42x16x156xbf16, #tpu.memory_space<vmem>>, vector<1x16x156xbf16>
    tpu.vector_store %arg21[%c0_12, %c0_13, %c0_14], %6 {strides = array<i32>} : memref<42x16x156xbf16, #tpu.memory_space<vmem>>, vector<1x16x156xbf16>,
    %c40_15 = arith.constant 40 : index
    %c0_16 = arith.constant 0 : index
    %c0_17 = arith.constant 0 : index
    %8 = vector.load %arg21[%c40_15, %c0_16, %c0_17] : memref<42x16x156xbf16, #tpu.memory_space<vmem>>, vector<1x16x156xbf16>
    tpu.vector_store %arg21[%c40_15, %c0_16, %c0_17], %6 {strides = array<i32>} : memref<42x16x156xbf16, #tpu.memory_space<vmem>>, vector<1x16x156xbf16>,
    %cst_18 = arith.constant 0.000000e+00 : bf16
    %9 = vector.broadcast %cst_18 : bf16 to vector<1x16x160xbf16>
    %c0_19 = arith.constant 0 : index
    %c0_20 = arith.constant 0 : index
    %c0_21 = arith.constant 0 : index
    %10 = vector.load %arg22[%c0_19, %c0_20, %c0_21] : memref<22x16x160xbf16, #tpu.memory_space<vmem>>, vector<1x16x160xbf16>
    tpu.vector_store %arg22[%c0_19, %c0_20, %c0_21], %9 {strides = array<i32>} : memref<22x16x160xbf16, #tpu.memory_space<vmem>>, vector<1x16x160xbf16>,
    %c21 = arith.constant 21 : index
    %c0_22 = arith.constant 0 : index
    %c0_23 = arith.constant 0 : index
    %11 = vector.load %arg22[%c21, %c0_22, %c0_23] : memref<22x16x160xbf16, #tpu.memory_space<vmem>>, vector<1x16x160xbf16>
    tpu.vector_store %arg22[%c21, %c0_22, %c0_23], %9 {strides = array<i32>} : memref<22x16x160xbf16, #tpu.memory_space<vmem>>, vector<1x16x160xbf16>,
    %cst_24 = arith.constant 0.000000e+00 : bf16
    %12 = vector.broadcast %cst_24 : bf16 to vector<1x16x160xbf16>
    %c0_25 = arith.constant 0 : index
    %c0_26 = arith.constant 0 : index
    %c0_27 = arith.constant 0 : index
    %13 = vector.load %arg23[%c0_25, %c0_26, %c0_27] : memref<12x16x160xbf16, #tpu.memory_space<vmem>>, vector<1x16x160xbf16>
    tpu.vector_store %arg23[%c0_25, %c0_26, %c0_27], %12 {strides = array<i32>} : memref<12x16x160xbf16, #tpu.memory_space<vmem>>, vector<1x16x160xbf16>,
    %c11 = arith.constant 11 : index
    %c0_28 = arith.constant 0 : index
    %c0_29 = arith.constant 0 : index
    %14 = vector.load %arg23[%c11, %c0_28, %c0_29] : memref<12x16x160xbf16, #tpu.memory_space<vmem>>, vector<1x16x160xbf16>
    tpu.vector_store %arg23[%c11, %c0_28, %c0_29], %12 {strides = array<i32>} : memref<12x16x160xbf16, #tpu.memory_space<vmem>>, vector<1x16x160xbf16>,
    %cst_30 = arith.constant 0.000000e+00 : bf16
    %15 = vector.broadcast %cst_30 : bf16 to vector<1x16x160xbf16>
    %c0_31 = arith.constant 0 : index
    %c0_32 = arith.constant 0 : index
    %c0_33 = arith.constant 0 : index
    %16 = vector.load %arg24[%c0_31, %c0_32, %c0_33] : memref<8x16x160xbf16, #tpu.memory_space<vmem>>, vector<1x16x160xbf16>
    tpu.vector_store %arg24[%c0_31, %c0_32, %c0_33], %15 {strides = array<i32>} : memref<8x16x160xbf16, #tpu.memory_space<vmem>>, vector<1x16x160xbf16>,
    %c6 = arith.constant 6 : index
    %c0_34 = arith.constant 0 : index
    %c0_35 = arith.constant 0 : index
    %17 = vector.load %arg24[%c6, %c0_34, %c0_35] : memref<8x16x160xbf16, #tpu.memory_space<vmem>>, vector<1x16x160xbf16>
    tpu.vector_store %arg24[%c6, %c0_34, %c0_35], %15 {strides = array<i32>} : memref<8x16x160xbf16, #tpu.memory_space<vmem>>, vector<1x16x160xbf16>,
    %c0_36 = arith.constant 0 : index
    %c0_37 = arith.constant 0 : index
    %c0_38 = arith.constant 0 : index
    %c0_39 = arith.constant 0 : index
    %18 = vector.load %arg1[%c0_36, %c0_37, %c0_38, %c0_39] : memref<1x39x16x39xf32, #tpu.memory_space<vmem>>, vector<1x39x16x39xf32>
    %19 = vector.shape_cast %18 : vector<1x39x16x39xf32> to vector<39x16x39xf32>
    %20 = arith.truncf %19 : vector<39x16x39xf32> to vector<39x16x39xbf16>
    %c1 = arith.constant 1 : index
    %c0_40 = arith.constant 0 : index
    %c0_41 = arith.constant 0 : index
    %21 = vector.load %arg19[%c1, %c0_40, %c0_41] : memref<41x16x39xbf16, #tpu.memory_space<vmem>>, vector<39x16x39xbf16>
    tpu.vector_store %arg19[%c1, %c0_40, %c0_41], %20 {strides = array<i32>} : memref<41x16x39xbf16, #tpu.memory_space<vmem>>, vector<39x16x39xbf16>,
    %c0_42 = arith.constant 0 : index
    %c0_43 = arith.constant 0 : index
    %c0_44 = arith.constant 0 : index
    %22 = vector.load %arg19[%c0_42, %c0_43, %c0_44] : memref<41x16x39xbf16, #tpu.memory_space<vmem>>, vector<39x16x39xbf16>
    %23 = vector.shape_cast %22 : vector<39x16x39xbf16> to vector<624x39xbf16>
    %c0_45 = arith.constant 0 : index
    %c0_46 = arith.constant 0 : index
    %c0_47 = arith.constant 0 : index
    %24 = vector.load %arg2[%c0_45, %c0_46, %c0_47] : memref<3x39x156xbf16, #tpu.memory_space<vmem>>, vector<1x39x156xbf16>
    %25 = vector.shape_cast %24 : vector<1x39x156xbf16> to vector<39x156xbf16>
    %cst_48 = arith.constant dense<0.000000e+00> : vector<624x156xf32>
    %26 = tpu.matmul %23, %25, %cst_48 {dimension_numbers = #tpu.dot_dimension_numbers<[1], [0], [0], [1], [0, 0, 1, 1], [], []>} : vector<624x39xbf16>, vector<39x156xbf16>, vector<624x156xf32> -> vector<624x156xf32>
    %c1_49 = arith.constant 1 : index
    %c0_50 = arith.constant 0 : index
    %c0_51 = arith.constant 0 : index
    %27 = vector.load %arg19[%c1_49, %c0_50, %c0_51] : memref<41x16x39xbf16, #tpu.memory_space<vmem>>, vector<39x16x39xbf16>
    %28 = vector.shape_cast %27 : vector<39x16x39xbf16> to vector<624x39xbf16>
    %c1_52 = arith.constant 1 : index
    %c0_53 = arith.constant 0 : index
    %c0_54 = arith.constant 0 : index
    %29 = vector.load %arg2[%c1_52, %c0_53, %c0_54] : memref<3x39x156xbf16, #tpu.memory_space<vmem>>, vector<1x39x156xbf16>
    %30 = vector.shape_cast %29 : vector<1x39x156xbf16> to vector<39x156xbf16>
    %cst_55 = arith.constant dense<0.000000e+00> : vector<624x156xf32>
    %31 = tpu.matmul %28, %30, %cst_55 {dimension_numbers = #tpu.dot_dimension_numbers<[1], [0], [0], [1], [0, 0, 1, 1], [], []>} : vector<624x39xbf16>, vector<39x156xbf16>, vector<624x156xf32> -> vector<624x156xf32>
    %32 = arith.addf %26, %31 : vector<624x156xf32>
    %c2 = arith.constant 2 : index
    %c0_56 = arith.constant 0 : index
    %c0_57 = arith.constant 0 : index
    %33 = vector.load %arg19[%c2, %c0_56, %c0_57] : memref<41x16x39xbf16, #tpu.memory_space<vmem>>, vector<39x16x39xbf16>
    %34 = vector.shape_cast %33 : vector<39x16x39xbf16> to vector<624x39xbf16>
    %c2_58 = arith.constant 2 : index
    %c0_59 = arith.constant 0 : index
    %c0_60 = arith.constant 0 : index
    %35 = vector.load %arg2[%c2_58, %c0_59, %c0_60] : memref<3x39x156xbf16, #tpu.memory_space<vmem>>, vector<1x39x156xbf16>
    %36 = vector.shape_cast %35 : vector<1x39x156xbf16> to vector<39x156xbf16>
    %cst_61 = arith.constant dense<0.000000e+00> : vector<624x156xf32>
    %37 = tpu.matmul %34, %36, %cst_61 {dimension_numbers = #tpu.dot_dimension_numbers<[1], [0], [0], [1], [0, 0, 1, 1], [], []>} : vector<624x39xbf16>, vector<39x156xbf16>, vector<624x156xf32> -> vector<624x156xf32>
    %38 = arith.addf %32, %37 : vector<624x156xf32>
    %c0_62 = arith.constant 0 : index
    %c0_63 = arith.constant 0 : index
    %39 = vector.load %arg3[%c0_62, %c0_63] : memref<1x156xf32, #tpu.memory_space<vmem>>, vector<1x156xf32>
    %40 = vector.broadcast %39 : vector<1x156xf32> to vector<624x156xf32>
    %41 = arith.addf %38, %40 : vector<624x156xf32>
    %cst_64 = arith.constant 0.000000e+00 : f32
    %42 = vector.broadcast %cst_64 : f32 to vector<624x156xf32>
    %43 = arith.maximumf %41, %42 : vector<624x156xf32>
    %44 = arith.truncf %43 : vector<624x156xf32> to vector<624x156xbf16>
    %45 = vector.shape_cast %44 : vector<624x156xbf16> to vector<39x16x156xbf16>
    %c1_65 = arith.constant 1 : index
    %c0_66 = arith.constant 0 : index
    %c0_67 = arith.constant 0 : index
    %46 = vector.load %arg20[%c1_65, %c0_66, %c0_67] : memref<41x16x156xbf16, #tpu.memory_space<vmem>>, vector<39x16x156xbf16>
    tpu.vector_store %arg20[%c1_65, %c0_66, %c0_67], %45 {strides = array<i32>} : memref<41x16x156xbf16, #tpu.memory_space<vmem>>, vector<39x16x156xbf16>,
    %c0_68 = arith.constant 0 : index
    %c0_69 = arith.constant 0 : index
    %c0_70 = arith.constant 0 : index
    %47 = vector.load %arg20[%c0_68, %c0_69, %c0_70] : memref<41x16x156xbf16, #tpu.memory_space<vmem>>, vector<39x16x156xbf16>
    %48 = vector.shape_cast %47 : vector<39x16x156xbf16> to vector<624x156xbf16>
    %c0_71 = arith.constant 0 : index
    %c0_72 = arith.constant 0 : index
    %c0_73 = arith.constant 0 : index
    %49 = vector.load %arg4[%c0_71, %c0_72, %c0_73] : memref<3x156x156xbf16, #tpu.memory_space<vmem>>, vector<1x156x156xbf16>
    %50 = vector.shape_cast %49 : vector<1x156x156xbf16> to vector<156x156xbf16>
    %cst_74 = arith.constant dense<0.000000e+00> : vector<624x156xf32>
    %51 = tpu.matmul %48, %50, %cst_74 {dimension_numbers = #tpu.dot_dimension_numbers<[1], [0], [0], [1], [0, 0, 1, 1], [], []>} : vector<624x156xbf16>, vector<156x156xbf16>, vector<624x156xf32> -> vector<624x156xf32>
    %c1_75 = arith.constant 1 : index
    %c0_76 = arith.constant 0 : index
    %c0_77 = arith.constant 0 : index
    %52 = vector.load %arg20[%c1_75, %c0_76, %c0_77] : memref<41x16x156xbf16, #tpu.memory_space<vmem>>, vector<39x16x156xbf16>
    %53 = vector.shape_cast %52 : vector<39x16x156xbf16> to vector<624x156xbf16>
    %c1_78 = arith.constant 1 : index
    %c0_79 = arith.constant 0 : index
    %c0_80 = arith.constant 0 : index
    %54 = vector.load %arg4[%c1_78, %c0_79, %c0_80] : memref<3x156x156xbf16, #tpu.memory_space<vmem>>, vector<1x156x156xbf16>
    %55 = vector.shape_cast %54 : vector<1x156x156xbf16> to vector<156x156xbf16>
    %cst_81 = arith.constant dense<0.000000e+00> : vector<624x156xf32>
    %56 = tpu.matmul %53, %55, %cst_81 {dimension_numbers = #tpu.dot_dimension_numbers<[1], [0], [0], [1], [0, 0, 1, 1], [], []>} : vector<624x156xbf16>, vector<156x156xbf16>, vector<624x156xf32> -> vector<624x156xf32>
    %57 = arith.addf %51, %56 : vector<624x156xf32>
    %c2_82 = arith.constant 2 : index
    %c0_83 = arith.constant 0 : index
    %c0_84 = arith.constant 0 : index
    %58 = vector.load %arg20[%c2_82, %c0_83, %c0_84] : memref<41x16x156xbf16, #tpu.memory_space<vmem>>, vector<39x16x156xbf16>
    %59 = vector.shape_cast %58 : vector<39x16x156xbf16> to vector<624x156xbf16>
    %c2_85 = arith.constant 2 : index
    %c0_86 = arith.constant 0 : index
    %c0_87 = arith.constant 0 : index
    %60 = vector.load %arg4[%c2_85, %c0_86, %c0_87] : memref<3x156x156xbf16, #tpu.memory_space<vmem>>, vector<1x156x156xbf16>
    %61 = vector.shape_cast %60 : vector<1x156x156xbf16> to vector<156x156xbf16>
    %cst_88 = arith.constant dense<0.000000e+00> : vector<624x156xf32>
    %62 = tpu.matmul %59, %61, %cst_88 {dimension_numbers = #tpu.dot_dimension_numbers<[1], [0], [0], [1], [0, 0, 1, 1], [], []>} : vector<624x156xbf16>, vector<156x156xbf16>, vector<624x156xf32> -> vector<624x156xf32>
    %63 = arith.addf %57, %62 : vector<624x156xf32>
    %c0_89 = arith.constant 0 : index
    %c0_90 = arith.constant 0 : index
    %64 = vector.load %arg5[%c0_89, %c0_90] : memref<1x156xf32, #tpu.memory_space<vmem>>, vector<1x156xf32>
    %65 = vector.broadcast %64 : vector<1x156xf32> to vector<624x156xf32>
    %66 = arith.addf %63, %65 : vector<624x156xf32>
    %cst_91 = arith.constant 0.000000e+00 : f32
    %67 = vector.broadcast %cst_91 : f32 to vector<624x156xf32>
    %68 = arith.maximumf %66, %67 : vector<624x156xf32>
    %69 = arith.truncf %68 : vector<624x156xf32> to vector<624x156xbf16>
    %70 = vector.shape_cast %69 : vector<624x156xbf16> to vector<39x16x156xbf16>
    %c1_92 = arith.constant 1 : index
    %c0_93 = arith.constant 0 : index
    %c0_94 = arith.constant 0 : index
    %71 = vector.load %arg21[%c1_92, %c0_93, %c0_94] : memref<42x16x156xbf16, #tpu.memory_space<vmem>>, vector<39x16x156xbf16>
    tpu.vector_store %arg21[%c1_92, %c0_93, %c0_94], %70 {strides = array<i32>} : memref<42x16x156xbf16, #tpu.memory_space<vmem>>, vector<39x16x156xbf16>,
    %c0_95 = arith.constant 0 : index
    %c0_96 = arith.constant 0 : index
    %c0_97 = arith.constant 0 : index
    %72 = vector.load %arg21[%c0_95, %c0_96, %c0_97] : memref<42x16x156xbf16, #tpu.memory_space<vmem>>, vector<40x16x156xbf16>
    %73 = vector.shape_cast %72 : vector<40x16x156xbf16> to vector<20x32x156xbf16>
    %74 = vector.extract_strided_slice %73 {offsets = [0, 0, 0], sizes = [20, 16, 156], strides = [1, 1, 1]} : vector<20x32x156xbf16> to vector<20x16x156xbf16>
    %75 = vector.shape_cast %74 : vector<20x16x156xbf16> to vector<320x156xbf16>
    %c0_98 = arith.constant 0 : index
    %c0_99 = arith.constant 0 : index
    %c0_100 = arith.constant 0 : index
    %76 = vector.load %arg6[%c0_98, %c0_99, %c0_100] : memref<3x156x160xbf16, #tpu.memory_space<vmem>>, vector<1x156x160xbf16>
    %77 = vector.shape_cast %76 : vector<1x156x160xbf16> to vector<156x160xbf16>
    %cst_101 = arith.constant dense<0.000000e+00> : vector<320x160xf32>
    %78 = tpu.matmul %75, %77, %cst_101 {dimension_numbers = #tpu.dot_dimension_numbers<[1], [0], [0], [1], [0, 0, 1, 1], [], []>} : vector<320x156xbf16>, vector<156x160xbf16>, vector<320x160xf32> -> vector<320x160xf32>
    %c1_102 = arith.constant 1 : index
    %c0_103 = arith.constant 0 : index
    %c0_104 = arith.constant 0 : index
    %79 = vector.load %arg21[%c1_102, %c0_103, %c0_104] : memref<42x16x156xbf16, #tpu.memory_space<vmem>>, vector<40x16x156xbf16>
    %80 = vector.shape_cast %79 : vector<40x16x156xbf16> to vector<20x32x156xbf16>
    %81 = vector.extract_strided_slice %80 {offsets = [0, 0, 0], sizes = [20, 16, 156], strides = [1, 1, 1]} : vector<20x32x156xbf16> to vector<20x16x156xbf16>
    %82 = vector.shape_cast %81 : vector<20x16x156xbf16> to vector<320x156xbf16>
    %c1_105 = arith.constant 1 : index
    %c0_106 = arith.constant 0 : index
    %c0_107 = arith.constant 0 : index
    %83 = vector.load %arg6[%c1_105, %c0_106, %c0_107] : memref<3x156x160xbf16, #tpu.memory_space<vmem>>, vector<1x156x160xbf16>
    %84 = vector.shape_cast %83 : vector<1x156x160xbf16> to vector<156x160xbf16>
    %cst_108 = arith.constant dense<0.000000e+00> : vector<320x160xf32>
    %85 = tpu.matmul %82, %84, %cst_108 {dimension_numbers = #tpu.dot_dimension_numbers<[1], [0], [0], [1], [0, 0, 1, 1], [], []>} : vector<320x156xbf16>, vector<156x160xbf16>, vector<320x160xf32> -> vector<320x160xf32>
    %86 = arith.addf %78, %85 : vector<320x160xf32>
    %c2_109 = arith.constant 2 : index
    %c0_110 = arith.constant 0 : index
    %c0_111 = arith.constant 0 : index
    %87 = vector.load %arg21[%c2_109, %c0_110, %c0_111] : memref<42x16x156xbf16, #tpu.memory_space<vmem>>, vector<40x16x156xbf16>
    %88 = vector.shape_cast %87 : vector<40x16x156xbf16> to vector<20x32x156xbf16>
    %89 = vector.extract_strided_slice %88 {offsets = [0, 0, 0], sizes = [20, 16, 156], strides = [1, 1, 1]} : vector<20x32x156xbf16> to vector<20x16x156xbf16>
    %90 = vector.shape_cast %89 : vector<20x16x156xbf16> to vector<320x156xbf16>
    %c2_112 = arith.constant 2 : index
    %c0_113 = arith.constant 0 : index
    %c0_114 = arith.constant 0 : index
    %91 = vector.load %arg6[%c2_112, %c0_113, %c0_114] : memref<3x156x160xbf16, #tpu.memory_space<vmem>>, vector<1x156x160xbf16>
    %92 = vector.shape_cast %91 : vector<1x156x160xbf16> to vector<156x160xbf16>
    %cst_115 = arith.constant dense<0.000000e+00> : vector<320x160xf32>
    %93 = tpu.matmul %90, %92, %cst_115 {dimension_numbers = #tpu.dot_dimension_numbers<[1], [0], [0], [1], [0, 0, 1, 1], [], []>} : vector<320x156xbf16>, vector<156x160xbf16>, vector<320x160xf32> -> vector<320x160xf32>
    %94 = arith.addf %86, %93 : vector<320x160xf32>
    %c0_116 = arith.constant 0 : index
    %c0_117 = arith.constant 0 : index
    %95 = vector.load %arg7[%c0_116, %c0_117] : memref<1x160xf32, #tpu.memory_space<vmem>>, vector<1x160xf32>
    %96 = vector.broadcast %95 : vector<1x160xf32> to vector<320x160xf32>
    %97 = arith.addf %94, %96 : vector<320x160xf32>
    %cst_118 = arith.constant 0.000000e+00 : f32
    %98 = vector.broadcast %cst_118 : f32 to vector<320x160xf32>
    %99 = arith.maximumf %97, %98 : vector<320x160xf32>
    %100 = arith.truncf %99 : vector<320x160xf32> to vector<320x160xbf16>
    %101 = vector.shape_cast %100 : vector<320x160xbf16> to vector<20x16x160xbf16>
    %c1_119 = arith.constant 1 : index
    %c0_120 = arith.constant 0 : index
    %c0_121 = arith.constant 0 : index
    %102 = vector.load %arg22[%c1_119, %c0_120, %c0_121] : memref<22x16x160xbf16, #tpu.memory_space<vmem>>, vector<20x16x160xbf16>
    tpu.vector_store %arg22[%c1_119, %c0_120, %c0_121], %101 {strides = array<i32>} : memref<22x16x160xbf16, #tpu.memory_space<vmem>>, vector<20x16x160xbf16>,
    %c0_122 = arith.constant 0 : index
    %c0_123 = arith.constant 0 : index
    %c0_124 = arith.constant 0 : index
    %103 = vector.load %arg22[%c0_122, %c0_123, %c0_124] : memref<22x16x160xbf16, #tpu.memory_space<vmem>>, vector<20x16x160xbf16>
    %104 = vector.shape_cast %103 : vector<20x16x160xbf16> to vector<10x32x160xbf16>
    %105 = vector.extract_strided_slice %104 {offsets = [0, 0, 0], sizes = [10, 16, 160], strides = [1, 1, 1]} : vector<10x32x160xbf16> to vector<10x16x160xbf16>
    %106 = vector.shape_cast %105 : vector<10x16x160xbf16> to vector<160x160xbf16>
    %c0_125 = arith.constant 0 : index
    %c0_126 = arith.constant 0 : index
    %c0_127 = arith.constant 0 : index
    %107 = vector.load %arg8[%c0_125, %c0_126, %c0_127] : memref<3x160x160xbf16, #tpu.memory_space<vmem>>, vector<1x160x160xbf16>
    %108 = vector.shape_cast %107 : vector<1x160x160xbf16> to vector<160x160xbf16>
    %cst_128 = arith.constant dense<0.000000e+00> : vector<160x160xf32>
    %109 = tpu.matmul %106, %108, %cst_128 {dimension_numbers = #tpu.dot_dimension_numbers<[1], [0], [0], [1], [0, 0, 1, 1], [], []>} : vector<160x160xbf16>, vector<160x160xbf16>, vector<160x160xf32> -> vector<160x160xf32>
    %c1_129 = arith.constant 1 : index
    %c0_130 = arith.constant 0 : index
    %c0_131 = arith.constant 0 : index
    %110 = vector.load %arg22[%c1_129, %c0_130, %c0_131] : memref<22x16x160xbf16, #tpu.memory_space<vmem>>, vector<20x16x160xbf16>
    %111 = vector.shape_cast %110 : vector<20x16x160xbf16> to vector<10x32x160xbf16>
    %112 = vector.extract_strided_slice %111 {offsets = [0, 0, 0], sizes = [10, 16, 160], strides = [1, 1, 1]} : vector<10x32x160xbf16> to vector<10x16x160xbf16>
    %113 = vector.shape_cast %112 : vector<10x16x160xbf16> to vector<160x160xbf16>
    %c1_132 = arith.constant 1 : index
    %c0_133 = arith.constant 0 : index
    %c0_134 = arith.constant 0 : index
    %114 = vector.load %arg8[%c1_132, %c0_133, %c0_134] : memref<3x160x160xbf16, #tpu.memory_space<vmem>>, vector<1x160x160xbf16>
    %115 = vector.shape_cast %114 : vector<1x160x160xbf16> to vector<160x160xbf16>
    %cst_135 = arith.constant dense<0.000000e+00> : vector<160x160xf32>
    %116 = tpu.matmul %113, %115, %cst_135 {dimension_numbers = #tpu.dot_dimension_numbers<[1], [0], [0], [1], [0, 0, 1, 1], [], []>} : vector<160x160xbf16>, vector<160x160xbf16>, vector<160x160xf32> -> vector<160x160xf32>
    %117 = arith.addf %109, %116 : vector<160x160xf32>
    %c2_136 = arith.constant 2 : index
    %c0_137 = arith.constant 0 : index
    %c0_138 = arith.constant 0 : index
    %118 = vector.load %arg22[%c2_136, %c0_137, %c0_138] : memref<22x16x160xbf16, #tpu.memory_space<vmem>>, vector<20x16x160xbf16>
    %119 = vector.shape_cast %118 : vector<20x16x160xbf16> to vector<10x32x160xbf16>
    %120 = vector.extract_strided_slice %119 {offsets = [0, 0, 0], sizes = [10, 16, 160], strides = [1, 1, 1]} : vector<10x32x160xbf16> to vector<10x16x160xbf16>
    %121 = vector.shape_cast %120 : vector<10x16x160xbf16> to vector<160x160xbf16>
    %c2_139 = arith.constant 2 : index
    %c0_140 = arith.constant 0 : index
    %c0_141 = arith.constant 0 : index
    %122 = vector.load %arg8[%c2_139, %c0_140, %c0_141] : memref<3x160x160xbf16, #tpu.memory_space<vmem>>, vector<1x160x160xbf16>
    %123 = vector.shape_cast %122 : vector<1x160x160xbf16> to vector<160x160xbf16>
    %cst_142 = arith.constant dense<0.000000e+00> : vector<160x160xf32>
    %124 = tpu.matmul %121, %123, %cst_142 {dimension_numbers = #tpu.dot_dimension_numbers<[1], [0], [0], [1], [0, 0, 1, 1], [], []>} : vector<160x160xbf16>, vector<160x160xbf16>, vector<160x160xf32> -> vector<160x160xf32>
    %125 = arith.addf %117, %124 : vector<160x160xf32>
    %c0_143 = arith.constant 0 : index
    %c0_144 = arith.constant 0 : index
    %126 = vector.load %arg9[%c0_143, %c0_144] : memref<1x160xf32, #tpu.memory_space<vmem>>, vector<1x160xf32>
    %127 = vector.broadcast %126 : vector<1x160xf32> to vector<160x160xf32>
    %128 = arith.addf %125, %127 : vector<160x160xf32>
    %cst_145 = arith.constant 0.000000e+00 : f32
    %129 = vector.broadcast %cst_145 : f32 to vector<160x160xf32>
    %130 = arith.maximumf %128, %129 : vector<160x160xf32>
    %131 = arith.truncf %130 : vector<160x160xf32> to vector<160x160xbf16>
    %132 = vector.shape_cast %131 : vector<160x160xbf16> to vector<10x16x160xbf16>
    %c1_146 = arith.constant 1 : index
    %c0_147 = arith.constant 0 : index
    %c0_148 = arith.constant 0 : index
    %133 = vector.load %arg23[%c1_146, %c0_147, %c0_148] : memref<12x16x160xbf16, #tpu.memory_space<vmem>>, vector<10x16x160xbf16>
    tpu.vector_store %arg23[%c1_146, %c0_147, %c0_148], %132 {strides = array<i32>} : memref<12x16x160xbf16, #tpu.memory_space<vmem>>, vector<10x16x160xbf16>,
    %c0_149 = arith.constant 0 : index
    %c0_150 = arith.constant 0 : index
    %c0_151 = arith.constant 0 : index
    %134 = vector.load %arg23[%c0_149, %c0_150, %c0_151] : memref<12x16x160xbf16, #tpu.memory_space<vmem>>, vector<10x16x160xbf16>
    %135 = vector.shape_cast %134 : vector<10x16x160xbf16> to vector<5x32x160xbf16>
    %136 = vector.extract_strided_slice %135 {offsets = [0, 0, 0], sizes = [5, 16, 160], strides = [1, 1, 1]} : vector<5x32x160xbf16> to vector<5x16x160xbf16>
    %137 = vector.shape_cast %136 : vector<5x16x160xbf16> to vector<80x160xbf16>
    %c0_152 = arith.constant 0 : index
    %c0_153 = arith.constant 0 : index
    %c0_154 = arith.constant 0 : index
    %138 = vector.load %arg10[%c0_152, %c0_153, %c0_154] : memref<3x160x160xbf16, #tpu.memory_space<vmem>>, vector<1x160x160xbf16>
    %139 = vector.shape_cast %138 : vector<1x160x160xbf16> to vector<160x160xbf16>
    %cst_155 = arith.constant dense<0.000000e+00> : vector<80x160xf32>
    %140 = tpu.matmul %137, %139, %cst_155 {dimension_numbers = #tpu.dot_dimension_numbers<[1], [0], [0], [1], [0, 0, 1, 1], [], []>} : vector<80x160xbf16>, vector<160x160xbf16>, vector<80x160xf32> -> vector<80x160xf32>
    %c1_156 = arith.constant 1 : index
    %c0_157 = arith.constant 0 : index
    %c0_158 = arith.constant 0 : index
    %141 = vector.load %arg23[%c1_156, %c0_157, %c0_158] : memref<12x16x160xbf16, #tpu.memory_space<vmem>>, vector<10x16x160xbf16>
    %142 = vector.shape_cast %141 : vector<10x16x160xbf16> to vector<5x32x160xbf16>
    %143 = vector.extract_strided_slice %142 {offsets = [0, 0, 0], sizes = [5, 16, 160], strides = [1, 1, 1]} : vector<5x32x160xbf16> to vector<5x16x160xbf16>
    %144 = vector.shape_cast %143 : vector<5x16x160xbf16> to vector<80x160xbf16>
    %c1_159 = arith.constant 1 : index
    %c0_160 = arith.constant 0 : index
    %c0_161 = arith.constant 0 : index
    %145 = vector.load %arg10[%c1_159, %c0_160, %c0_161] : memref<3x160x160xbf16, #tpu.memory_space<vmem>>, vector<1x160x160xbf16>
    %146 = vector.shape_cast %145 : vector<1x160x160xbf16> to vector<160x160xbf16>
    %cst_162 = arith.constant dense<0.000000e+00> : vector<80x160xf32>
    %147 = tpu.matmul %144, %146, %cst_162 {dimension_numbers = #tpu.dot_dimension_numbers<[1], [0], [0], [1], [0, 0, 1, 1], [], []>} : vector<80x160xbf16>, vector<160x160xbf16>, vector<80x160xf32> -> vector<80x160xf32>
    %148 = arith.addf %140, %147 : vector<80x160xf32>
    %c2_163 = arith.constant 2 : index
    %c0_164 = arith.constant 0 : index
    %c0_165 = arith.constant 0 : index
    %149 = vector.load %arg23[%c2_163, %c0_164, %c0_165] : memref<12x16x160xbf16, #tpu.memory_space<vmem>>, vector<10x16x160xbf16>
    %150 = vector.shape_cast %149 : vector<10x16x160xbf16> to vector<5x32x160xbf16>
    %151 = vector.extract_strided_slice %150 {offsets = [0, 0, 0], sizes = [5, 16, 160], strides = [1, 1, 1]} : vector<5x32x160xbf16> to vector<5x16x160xbf16>
    %152 = vector.shape_cast %151 : vector<5x16x160xbf16> to vector<80x160xbf16>
    %c2_166 = arith.constant 2 : index
    %c0_167 = arith.constant 0 : index
    %c0_168 = arith.constant 0 : index
    %153 = vector.load %arg10[%c2_166, %c0_167, %c0_168] : memref<3x160x160xbf16, #tpu.memory_space<vmem>>, vector<1x160x160xbf16>
    %154 = vector.shape_cast %153 : vector<1x160x160xbf16> to vector<160x160xbf16>
    %cst_169 = arith.constant dense<0.000000e+00> : vector<80x160xf32>
    %155 = tpu.matmul %152, %154, %cst_169 {dimension_numbers = #tpu.dot_dimension_numbers<[1], [0], [0], [1], [0, 0, 1, 1], [], []>} : vector<80x160xbf16>, vector<160x160xbf16>, vector<80x160xf32> -> vector<80x160xf32>
    %156 = arith.addf %148, %155 : vector<80x160xf32>
    %c0_170 = arith.constant 0 : index
    %c0_171 = arith.constant 0 : index
    %157 = vector.load %arg11[%c0_170, %c0_171] : memref<1x160xf32, #tpu.memory_space<vmem>>, vector<1x160xf32>
    %158 = vector.broadcast %157 : vector<1x160xf32> to vector<80x160xf32>
    %159 = arith.addf %156, %158 : vector<80x160xf32>
    %cst_172 = arith.constant 0.000000e+00 : f32
    %160 = vector.broadcast %cst_172 : f32 to vector<80x160xf32>
    %161 = arith.maximumf %159, %160 : vector<80x160xf32>
    %162 = arith.truncf %161 : vector<80x160xf32> to vector<80x160xbf16>
    %163 = vector.shape_cast %162 : vector<80x160xbf16> to vector<5x16x160xbf16>
    %c1_173 = arith.constant 1 : index
    %c0_174 = arith.constant 0 : index
    %c0_175 = arith.constant 0 : index
    %164 = vector.load %arg24[%c1_173, %c0_174, %c0_175] : memref<8x16x160xbf16, #tpu.memory_space<vmem>>, vector<5x16x160xbf16>
    tpu.vector_store %arg24[%c1_173, %c0_174, %c0_175], %163 {strides = array<i32>} : memref<8x16x160xbf16, #tpu.memory_space<vmem>>, vector<5x16x160xbf16>,
    %c0_176 = arith.constant 0 : index
    %c0_177 = arith.constant 0 : index
    %c0_178 = arith.constant 0 : index
    %165 = vector.load %arg24[%c0_176, %c0_177, %c0_178] : memref<8x16x160xbf16, #tpu.memory_space<vmem>>, vector<6x16x160xbf16>
    %166 = vector.shape_cast %165 : vector<6x16x160xbf16> to vector<3x32x160xbf16>
    %167 = vector.extract_strided_slice %166 {offsets = [0, 0, 0], sizes = [3, 16, 160], strides = [1, 1, 1]} : vector<3x32x160xbf16> to vector<3x16x160xbf16>
    %168 = vector.shape_cast %167 : vector<3x16x160xbf16> to vector<48x160xbf16>
    %c0_179 = arith.constant 0 : index
    %c0_180 = arith.constant 0 : index
    %c0_181 = arith.constant 0 : index
    %169 = vector.load %arg12[%c0_179, %c0_180, %c0_181] : memref<3x160x192xbf16, #tpu.memory_space<vmem>>, vector<1x160x192xbf16>
    %170 = vector.shape_cast %169 : vector<1x160x192xbf16> to vector<160x192xbf16>
    %cst_182 = arith.constant dense<0.000000e+00> : vector<48x192xf32>
    %171 = tpu.matmul %168, %170, %cst_182 {dimension_numbers = #tpu.dot_dimension_numbers<[1], [0], [0], [1], [0, 0, 1, 1], [], []>} : vector<48x160xbf16>, vector<160x192xbf16>, vector<48x192xf32> -> vector<48x192xf32>
    %c1_183 = arith.constant 1 : index
    %c0_184 = arith.constant 0 : index
    %c0_185 = arith.constant 0 : index
    %172 = vector.load %arg24[%c1_183, %c0_184, %c0_185] : memref<8x16x160xbf16, #tpu.memory_space<vmem>>, vector<6x16x160xbf16>
    %173 = vector.shape_cast %172 : vector<6x16x160xbf16> to vector<3x32x160xbf16>
    %174 = vector.extract_strided_slice %173 {offsets = [0, 0, 0], sizes = [3, 16, 160], strides = [1, 1, 1]} : vector<3x32x160xbf16> to vector<3x16x160xbf16>
    %175 = vector.shape_cast %174 : vector<3x16x160xbf16> to vector<48x160xbf16>
    %c1_186 = arith.constant 1 : index
    %c0_187 = arith.constant 0 : index
    %c0_188 = arith.constant 0 : index
    %176 = vector.load %arg12[%c1_186, %c0_187, %c0_188] : memref<3x160x192xbf16, #tpu.memory_space<vmem>>, vector<1x160x192xbf16>
    %177 = vector.shape_cast %176 : vector<1x160x192xbf16> to vector<160x192xbf16>
    %cst_189 = arith.constant dense<0.000000e+00> : vector<48x192xf32>
    %178 = tpu.matmul %175, %177, %cst_189 {dimension_numbers = #tpu.dot_dimension_numbers<[1], [0], [0], [1], [0, 0, 1, 1], [], []>} : vector<48x160xbf16>, vector<160x192xbf16>, vector<48x192xf32> -> vector<48x192xf32>
    %179 = arith.addf %171, %178 : vector<48x192xf32>
    %c2_190 = arith.constant 2 : index
    %c0_191 = arith.constant 0 : index
    %c0_192 = arith.constant 0 : index
    %180 = vector.load %arg24[%c2_190, %c0_191, %c0_192] : memref<8x16x160xbf16, #tpu.memory_space<vmem>>, vector<6x16x160xbf16>
    %181 = vector.shape_cast %180 : vector<6x16x160xbf16> to vector<3x32x160xbf16>
    %182 = vector.extract_strided_slice %181 {offsets = [0, 0, 0], sizes = [3, 16, 160], strides = [1, 1, 1]} : vector<3x32x160xbf16> to vector<3x16x160xbf16>
    %183 = vector.shape_cast %182 : vector<3x16x160xbf16> to vector<48x160xbf16>
    %c2_193 = arith.constant 2 : index
    %c0_194 = arith.constant 0 : index
    %c0_195 = arith.constant 0 : index
    %184 = vector.load %arg12[%c2_193, %c0_194, %c0_195] : memref<3x160x192xbf16, #tpu.memory_space<vmem>>, vector<1x160x192xbf16>
    %185 = vector.shape_cast %184 : vector<1x160x192xbf16> to vector<160x192xbf16>
    %cst_196 = arith.constant dense<0.000000e+00> : vector<48x192xf32>
    %186 = tpu.matmul %183, %185, %cst_196 {dimension_numbers = #tpu.dot_dimension_numbers<[1], [0], [0], [1], [0, 0, 1, 1], [], []>} : vector<48x160xbf16>, vector<160x192xbf16>, vector<48x192xf32> -> vector<48x192xf32>
    %187 = arith.addf %179, %186 : vector<48x192xf32>
    %c0_197 = arith.constant 0 : index
    %c0_198 = arith.constant 0 : index
    %188 = vector.load %arg13[%c0_197, %c0_198] : memref<1x192xf32, #tpu.memory_space<vmem>>, vector<1x192xf32>
    %189 = vector.broadcast %188 : vector<1x192xf32> to vector<48x192xf32>
    %190 = arith.addf %187, %189 : vector<48x192xf32>
    %cst_199 = arith.constant 0.000000e+00 : f32
    %191 = vector.broadcast %cst_199 : f32 to vector<48x192xf32>
    %192 = arith.maximumf %190, %191 : vector<48x192xf32>
    %193 = arith.truncf %192 : vector<48x192xf32> to vector<48x192xbf16>
    %194 = vector.shape_cast %193 : vector<48x192xbf16> to vector<3x16x192xbf16>
    %195 = vector.extract_strided_slice %194 {offsets = [0, 0, 0], sizes = [1, 16, 192], strides = [1, 1, 1]} : vector<3x16x192xbf16> to vector<1x16x192xbf16>
    %196 = vector.shape_cast %195 : vector<1x16x192xbf16> to vector<16x192xbf16>
    %c0_200 = arith.constant 0 : index
    %c0_201 = arith.constant 0 : index
    %c0_202 = arith.constant 0 : index
    %197 = vector.load %arg14[%c0_200, %c0_201, %c0_202] : memref<3x192x128xbf16, #tpu.memory_space<vmem>>, vector<1x192x128xbf16>
    %198 = vector.shape_cast %197 : vector<1x192x128xbf16> to vector<192x128xbf16>
    %cst_203 = arith.constant dense<0.000000e+00> : vector<16x128xf32>
    %199 = tpu.matmul %196, %198, %cst_203 {dimension_numbers = #tpu.dot_dimension_numbers<[1], [0], [0], [1], [0, 0, 1, 1], [], []>} : vector<16x192xbf16>, vector<192x128xbf16>, vector<16x128xf32> -> vector<16x128xf32>
    %200 = vector.extract_strided_slice %194 {offsets = [1, 0, 0], sizes = [1, 16, 192], strides = [1, 1, 1]} : vector<3x16x192xbf16> to vector<1x16x192xbf16>
    %201 = vector.shape_cast %200 : vector<1x16x192xbf16> to vector<16x192xbf16>
    %c1_204 = arith.constant 1 : index
    %c0_205 = arith.constant 0 : index
    %c0_206 = arith.constant 0 : index
    %202 = vector.load %arg14[%c1_204, %c0_205, %c0_206] : memref<3x192x128xbf16, #tpu.memory_space<vmem>>, vector<1x192x128xbf16>
    %203 = vector.shape_cast %202 : vector<1x192x128xbf16> to vector<192x128xbf16>
    %cst_207 = arith.constant dense<0.000000e+00> : vector<16x128xf32>
    %204 = tpu.matmul %201, %203, %cst_207 {dimension_numbers = #tpu.dot_dimension_numbers<[1], [0], [0], [1], [0, 0, 1, 1], [], []>} : vector<16x192xbf16>, vector<192x128xbf16>, vector<16x128xf32> -> vector<16x128xf32>
    %205 = arith.addf %199, %204 : vector<16x128xf32>
    %206 = vector.extract_strided_slice %194 {offsets = [2, 0, 0], sizes = [1, 16, 192], strides = [1, 1, 1]} : vector<3x16x192xbf16> to vector<1x16x192xbf16>
    %207 = vector.shape_cast %206 : vector<1x16x192xbf16> to vector<16x192xbf16>
    %c2_208 = arith.constant 2 : index
    %c0_209 = arith.constant 0 : index
    %c0_210 = arith.constant 0 : index
    %208 = vector.load %arg14[%c2_208, %c0_209, %c0_210] : memref<3x192x128xbf16, #tpu.memory_space<vmem>>, vector<1x192x128xbf16>
    %209 = vector.shape_cast %208 : vector<1x192x128xbf16> to vector<192x128xbf16>
    %cst_211 = arith.constant dense<0.000000e+00> : vector<16x128xf32>
    %210 = tpu.matmul %207, %209, %cst_211 {dimension_numbers = #tpu.dot_dimension_numbers<[1], [0], [0], [1], [0, 0, 1, 1], [], []>} : vector<16x192xbf16>, vector<192x128xbf16>, vector<16x128xf32> -> vector<16x128xf32>
    %211 = arith.addf %205, %210 : vector<16x128xf32>
    %c0_212 = arith.constant 0 : index
    %c0_213 = arith.constant 0 : index
    %212 = vector.load %arg15[%c0_212, %c0_213] : memref<1x128xf32, #tpu.memory_space<vmem>>, vector<1x128xf32>
    %213 = vector.broadcast %212 : vector<1x128xf32> to vector<16x128xf32>
    %214 = arith.addf %211, %213 : vector<16x128xf32>
    %cst_214 = arith.constant 0.000000e+00 : f32
    %215 = vector.broadcast %cst_214 : f32 to vector<16x128xf32>
    %216 = arith.maximumf %214, %215 : vector<16x128xf32>
    %217 = arith.truncf %216 : vector<16x128xf32> to vector<16x128xbf16>
    %c0_215 = arith.constant 0 : index
    %c0_216 = arith.constant 0 : index
    %218 = vector.load %arg16[%c0_215, %c0_216] : memref<128x64xbf16, #tpu.memory_space<vmem>>, vector<128x64xbf16>
    %cst_217 = arith.constant dense<0.000000e+00> : vector<16x64xf32>
    %219 = tpu.matmul %217, %218, %cst_217 {dimension_numbers = #tpu.dot_dimension_numbers<[1], [0], [0], [1], [0, 0, 1, 1], [], []>} : vector<16x128xbf16>, vector<128x64xbf16>, vector<16x64xf32> -> vector<16x64xf32>
    %c0_218 = arith.constant 0 : index
    %c0_219 = arith.constant 0 : index
    %220 = vector.load %arg17[%c0_218, %c0_219] : memref<1x64xf32, #tpu.memory_space<vmem>>, vector<1x64xf32>
    %221 = vector.broadcast %220 : vector<1x64xf32> to vector<16x64xf32>
    %222 = arith.addf %219, %221 : vector<16x64xf32>
    %cst_220 = arith.constant 0.000000e+00 : f32
    %223 = vector.broadcast %cst_220 : f32 to vector<16x64xf32>
    %224 = arith.maximumf %222, %223 : vector<16x64xf32>
    %c0_221 = arith.constant 0 : index
    %c0_222 = arith.constant 0 : index
    %225 = vector.load %arg18[%c0_221, %c0_222] : memref<16x64xf32, #tpu.memory_space<vmem>>, vector<16x64xf32>
    tpu.vector_store %arg18[%c0_221, %c0_222], %224 {strides = array<i32>} : memref<16x64xf32, #tpu.memory_space<vmem>>, vector<16x64xf32>,
    return
  }
  func.func @transform_0(%arg0: i32) -> (i32, i32, i32, i32) {
    %c0_i32 = arith.constant 0 : i32
    %c0_i32_0 = arith.constant 0 : i32
    %c0_i32_1 = arith.constant 0 : i32
    %c0_i32_2 = arith.constant 0 : i32
    return %arg0, %c0_i32, %c0_i32_0, %c0_i32_1 : i32, i32, i32, i32
  }
  func.func @transform_1(%arg0: i32) -> (i32, i32, i32) {
    %c0_i32 = arith.constant 0 : i32
    %c0_i32_0 = arith.constant 0 : i32
    %c0_i32_1 = arith.constant 0 : i32
    %c0_i32_2 = arith.constant 0 : i32
    return %c0_i32, %c0_i32_0, %c0_i32_1 : i32, i32, i32
  }
  func.func @transform_2(%arg0: i32) -> (i32, i32) {
    %c0_i32 = arith.constant 0 : i32
    %c0_i32_0 = arith.constant 0 : i32
    %c0_i32_1 = arith.constant 0 : i32
    return %c0_i32, %c0_i32_0 : i32, i32
  }
  func.func @transform_3(%arg0: i32) -> (i32, i32, i32) {
    %c0_i32 = arith.constant 0 : i32
    %c0_i32_0 = arith.constant 0 : i32
    %c0_i32_1 = arith.constant 0 : i32
    %c0_i32_2 = arith.constant 0 : i32
    return %c0_i32, %c0_i32_0, %c0_i32_1 : i32, i32, i32
  }
  func.func @transform_4(%arg0: i32) -> (i32, i32) {
    %c0_i32 = arith.constant 0 : i32
    %c0_i32_0 = arith.constant 0 : i32
    %c0_i32_1 = arith.constant 0 : i32
    return %c0_i32, %c0_i32_0 : i32, i32
  }
  func.func @transform_5(%arg0: i32) -> (i32, i32, i32) {
    %c0_i32 = arith.constant 0 : i32
    %c0_i32_0 = arith.constant 0 : i32
    %c0_i32_1 = arith.constant 0 : i32
    %c0_i32_2 = arith.constant 0 : i32
    return %c0_i32, %c0_i32_0, %c0_i32_1 : i32, i32, i32
  }
  func.func @transform_6(%arg0: i32) -> (i32, i32) {
    %c0_i32 = arith.constant 0 : i32
    %c0_i32_0 = arith.constant 0 : i32
    %c0_i32_1 = arith.constant 0 : i32
    return %c0_i32, %c0_i32_0 : i32, i32
  }
  func.func @transform_7(%arg0: i32) -> (i32, i32, i32) {
    %c0_i32 = arith.constant 0 : i32
    %c0_i32_0 = arith.constant 0 : i32
    %c0_i32_1 = arith.constant 0 : i32
    %c0_i32_2 = arith.constant 0 : i32
    return %c0_i32, %c0_i32_0, %c0_i32_1 : i32, i32, i32
  }
  func.func @transform_8(%arg0: i32) -> (i32, i32) {
    %c0_i32 = arith.constant 0 : i32
    %c0_i32_0 = arith.constant 0 : i32
    %c0_i32_1 = arith.constant 0 : i32
    return %c0_i32, %c0_i32_0 : i32, i32
  }
  func.func @transform_9(%arg0: i32) -> (i32, i32, i32) {
    %c0_i32 = arith.constant 0 : i32
    %c0_i32_0 = arith.constant 0 : i32
    %c0_i32_1 = arith.constant 0 : i32
    %c0_i32_2 = arith.constant 0 : i32
    return %c0_i32, %c0_i32_0, %c0_i32_1 : i32, i32, i32
  }
  func.func @transform_10(%arg0: i32) -> (i32, i32) {
    %c0_i32 = arith.constant 0 : i32
    %c0_i32_0 = arith.constant 0 : i32
    %c0_i32_1 = arith.constant 0 : i32
    return %c0_i32, %c0_i32_0 : i32, i32
  }
  func.func @transform_11(%arg0: i32) -> (i32, i32, i32) {
    %c0_i32 = arith.constant 0 : i32
    %c0_i32_0 = arith.constant 0 : i32
    %c0_i32_1 = arith.constant 0 : i32
    %c0_i32_2 = arith.constant 0 : i32
    return %c0_i32, %c0_i32_0, %c0_i32_1 : i32, i32, i32
  }
  func.func @transform_12(%arg0: i32) -> (i32, i32) {
    %c0_i32 = arith.constant 0 : i32
    %c0_i32_0 = arith.constant 0 : i32
    %c0_i32_1 = arith.constant 0 : i32
    return %c0_i32, %c0_i32_0 : i32, i32
  }
  func.func @transform_13(%arg0: i32) -> (i32, i32, i32) {
    %c0_i32 = arith.constant 0 : i32
    %c0_i32_0 = arith.constant 0 : i32
    %c0_i32_1 = arith.constant 0 : i32
    %c0_i32_2 = arith.constant 0 : i32
    return %c0_i32, %c0_i32_0, %c0_i32_1 : i32, i32, i32
  }
  func.func @transform_14(%arg0: i32) -> (i32, i32) {
    %c0_i32 = arith.constant 0 : i32
    %c0_i32_0 = arith.constant 0 : i32
    %c0_i32_1 = arith.constant 0 : i32
    return %c0_i32, %c0_i32_0 : i32, i32
  }
  func.func @transform_15(%arg0: i32) -> (i32, i32) {
    %c0_i32 = arith.constant 0 : i32
    %c0_i32_0 = arith.constant 0 : i32
    %c0_i32_1 = arith.constant 0 : i32
    return %c0_i32, %c0_i32_0 : i32, i32
  }
  func.func @transform_16(%arg0: i32) -> (i32, i32) {
    %c0_i32 = arith.constant 0 : i32
    %c0_i32_0 = arith.constant 0 : i32
    %c0_i32_1 = arith.constant 0 : i32
    return %c0_i32, %c0_i32_0 : i32, i32
  }
  func.func @transform_17(%arg0: i32) -> (i32, i32) {
    %c0_i32 = arith.constant 0 : i32
    %c0_i32_0 = arith.constant 0 : i32
    return %arg0, %c0_i32 : i32, i32
  }
}

</mosaic_0001>

<llo_original>
// kernel: encoder_forward.1
$region0: #{encoder_forward.1}
  #allocation0 [shape = 'u32[]', space=smem, size = 0x4, offset = 0x4, fixed_abs, tag = 'smem constant byte address 0x4 - core index']
  #allocation1 [shape = 'u32[144,128]{1,0:T(1,128)}', space=vmem, size = 0x12000, scoped, tag = 'internal scratch']
  #allocation2 [shape = 'bf16[41,16,39]{2,1,0:T(16,128)(2,1)}', space=vmem, size = 0x29000, scoped, tag = 'scratch operand']
  #allocation3 [shape = 'bf16[41,16,156]{2,1,0:T(16,128)(2,1)}', space=vmem, size = 0x52000, scoped, tag = 'scratch operand']
  #allocation4 [shape = 'bf16[42,16,156]{2,1,0:T(16,128)(2,1)}', space=vmem, size = 0x54000, scoped, tag = 'scratch operand']
  #allocation5 [shape = 'bf16[22,16,160]{2,1,0:T(16,128)(2,1)}', space=vmem, size = 0x2c000, scoped, tag = 'scratch operand']
  #allocation6 [shape = 'bf16[12,16,160]{2,1,0:T(16,128)(2,1)}', space=vmem, size = 0x18000, scoped, tag = 'scratch operand']
  #allocation7 [shape = 'bf16[8,16,160]{2,1,0:T(16,128)(2,1)}', space=vmem, size = 0x10000, scoped, tag = 'scratch operand']
  %s0 = inlined_call_operand.vmem [shape: f32[1,39,16,39], index: 0, kind: input, shape index: {}]
  %s1 = inlined_call_operand.hbm [shape: bf16[3,39,156], index: 1, kind: input, shape index: {}]
  %s2 = inlined_call_operand.vmem [shape: f32[1,156], index: 2, kind: input, shape index: {}]
  %s3 = inlined_call_operand.vmem [shape: bf16[3,156,156], index: 3, kind: input, shape index: {}]
  %s4 = inlined_call_operand.vmem [shape: f32[1,156], index: 4, kind: input, shape index: {}]
  %s5 = inlined_call_operand.vmem [shape: bf16[3,156,160], index: 5, kind: input, shape index: {}]
  %s6 = inlined_call_operand.hbm [shape: f32[1,160], index: 6, kind: input, shape index: {}]
  %s7 = inlined_call_operand.hbm [shape: bf16[3,160,160], index: 7, kind: input, shape index: {}]
  %s8 = inlined_call_operand.hbm [shape: f32[1,160], index: 8, kind: input, shape index: {}]
  %s9 = inlined_call_operand.hbm [shape: bf16[3,160,160], index: 9, kind: input, shape index: {}]
  %s10 = inlined_call_operand.hbm [shape: f32[1,160], index: 10, kind: input, shape index: {}]
  %s11 = inlined_call_operand.hbm [shape: bf16[3,160,192], index: 11, kind: input, shape index: {}]
  %s12 = inlined_call_operand.vmem [shape: f32[1,192], index: 12, kind: input, shape index: {}]
  %s13 = inlined_call_operand.hbm [shape: bf16[3,192,128], index: 13, kind: input, shape index: {}]
  %s14 = inlined_call_operand.vmem [shape: f32[1,128], index: 14, kind: input, shape index: {}]
  %s15 = inlined_call_operand.vmem [shape: bf16[128,64], index: 15, kind: input, shape index: {}]
  %s16 = inlined_call_operand.hbm [shape: f32[1,64], index: 16, kind: input, shape index: {}]
  %s17 = inlined_call_operand.vmem [shape: f32[16,64], index: 17, kind: output, shape index: {}]
  %s18 = sld [smem:[#allocation0]]
  $region114: #{encoder_forward.1} parent=0
    _
  %s20 = ssub.s32 1, %s18
  %s21 = scalar_select 0, %s20, %s18
  $region1: #{encoder_forward.1} parent=0
    #allocation8 [shape = 'u8[61440]{0}', space=vmem, size = 0xf000, scoped, tag = 'input window, operand 1, single buffered']
    #allocation9 [shape = 's32[1]{0}', space=sflag, size = 0x4, scoped, tag = 'scoped memory for encoder_forward.1']
    #allocation10 [shape = 'u8[1024]{0}', space=vmem, size = 0x400, scoped, tag = 'input window, operand 6, single buffered']
    #allocation11 [shape = 's32[1]{0}', space=sflag, size = 0x4, scoped, tag = 'scoped memory for encoder_forward.1']
    #allocation12 [shape = 'u8[245760]{0}', space=vmem, size = 0x3c000, scoped, tag = 'input window, operand 7, single buffered']
    #allocation13 [shape = 'u8[1024]{0}', space=vmem, size = 0x400, scoped, tag = 'input window, operand 8, single buffered']
    #allocation14 [shape = 's32[1]{0}', space=sflag, size = 0x4, scoped, tag = 'scoped memory for encoder_forward.1']
    #allocation15 [shape = 'u8[245760]{0}', space=vmem, size = 0x3c000, scoped, tag = 'input window, operand 9, single buffered']
    #allocation16 [shape = 'u8[1024]{0}', space=vmem, size = 0x400, scoped, tag = 'input window, operand 10, single buffered']
    #allocation17 [shape = 's32[1]{0}', space=sflag, size = 0x4, scoped, tag = 'scoped memory for encoder_forward.1']
    #allocation18 [shape = 'u8[245760]{0}', space=vmem, size = 0x3c000, scoped, tag = 'input window, operand 11, single buffered']
    #allocation19 [shape = 'u8[147456]{0}', space=vmem, size = 0x24000, scoped, tag = 'input window, operand 13, single buffered']
    #allocation20 [shape = 's32[1]{0}', space=sflag, size = 0x4, scoped, tag = 'scoped memory for encoder_forward.1']
    #allocation21 [shape = 'u8[512]{0}', space=vmem, size = 0x400, scoped, tag = 'input window, operand 16, single buffered']
    %22 = vsyncpa [#allocation9], 0
    %23 = vsyncpa [#allocation11], 0
    %24 = vsyncpa [#allocation14], 0
    %25 = vsyncpa [#allocation17], 0
    %26 = vsyncpa [#allocation20], 0
    // Predicated region
    $region2: #{encoder_forward.1} parent=1 // pred_check
      _
    $region3: #{encoder_forward.1} parent=1 // pred_check_branch
      %28 = sbr.rel (0) target = $region5
    $region4: #{encoder_forward.1} parent=1 // pred_region
      _
    $region5: #{encoder_forward.1} parent=1 // pred_fallthru
      _
    // Predicated region
    $region6: #{encoder_forward.1} parent=1 // pred_check
      _
    $region7: #{encoder_forward.1} parent=1 // pred_check_branch
      %30 = sbr.rel (0) target = $region9
    $region8: #{encoder_forward.1} parent=1 // pred_region
      %s32 = ssub.s32 1920, 1920
      %33 = vsyncadd [#allocation9], %s32
      %s34 = sshll.u32 [#allocation8], 4
      %s35 = int_to_ptr.vmem [resolvable:$true] %s34
      %40 = dma.hbm_to_vmem [thread:$0]  %s1, 1920, %s35, [#allocation9], 128, 128, 8
    $region9: #{encoder_forward.1} parent=1 // pred_fallthru
      _
    // Predicated region
    $region10: #{encoder_forward.1} parent=1 // pred_check
      _
    $region11: #{encoder_forward.1} parent=1 // pred_check_branch
      %42 = sbr.rel (0) target = $region13
    $region12: #{encoder_forward.1} parent=1 // pred_region
      _
    $region13: #{encoder_forward.1} parent=1 // pred_fallthru
      _
    // Predicated region
    $region14: #{encoder_forward.1} parent=1 // pred_check
      _
    $region15: #{encoder_forward.1} parent=1 // pred_check_branch
      %44 = sbr.rel (0) target = $region17
    $region16: #{encoder_forward.1} parent=1 // pred_region
      _
    $region17: #{encoder_forward.1} parent=1 // pred_fallthru
      _
    // Predicated region
    $region18: #{encoder_forward.1} parent=1 // pred_check
      _
    $region19: #{encoder_forward.1} parent=1 // pred_check_branch
      %46 = sbr.rel (0) target = $region21
    $region20: #{encoder_forward.1} parent=1 // pred_region
      _
    $region21: #{encoder_forward.1} parent=1 // pred_fallthru
      _
    // Predicated region
    $region22: #{encoder_forward.1} parent=1 // pred_check
      _
    $region23: #{encoder_forward.1} parent=1 // pred_check_branch
      %48 = sbr.rel (0) target = $region25
    $region24: #{encoder_forward.1} parent=1 // pred_region
      _
    $region25: #{encoder_forward.1} parent=1 // pred_fallthru
      _
    // Predicated region
    $region26: #{encoder_forward.1} parent=1 // pred_check
      _
    $region27: #{encoder_forward.1} parent=1 // pred_check_branch
      %50 = sbr.rel (0) target = $region29
    $region28: #{encoder_forward.1} parent=1 // pred_region
      %s52 = ssub.s32 32, 32
      %53 = vsyncadd [#allocation11], %s52
      %s55 = sshll.u32 [#allocation10], 4
      %s56 = int_to_ptr.vmem [resolvable:$true] %s55
      %58 = dma.hbm_to_vmem [thread:$0]  %s6, 32, %s56, [#allocation11]
    $region29: #{encoder_forward.1} parent=1 // pred_fallthru
      _
    // Predicated region
    $region30: #{encoder_forward.1} parent=1 // pred_check
      _
    $region31: #{encoder_forward.1} parent=1 // pred_check_branch
      %60 = sbr.rel (0) target = $region33
    $region32: #{encoder_forward.1} parent=1 // pred_region
      %s62 = ssub.s32 7680, 7680
      %63 = vsyncadd [#allocation11], %s62
      %s64 = sshll.u32 [#allocation12], 4
      %s65 = int_to_ptr.vmem [resolvable:$true] %s64
      %70 = dma.hbm_to_vmem [thread:$0]  %s7, 7680, %s65, [#allocation11], 128, 128, 8
    $region33: #{encoder_forward.1} parent=1 // pred_fallthru
      _
    // Predicated region
    $region34: #{encoder_forward.1} parent=1 // pred_check
      _
    $region35: #{encoder_forward.1} parent=1 // pred_check_branch
      %72 = sbr.rel (0) target = $region37
    $region36: #{encoder_forward.1} parent=1 // pred_region
      %s74 = ssub.s32 32, 32
      %75 = vsyncadd [#allocation14], %s74
      %s77 = sshll.u32 [#allocation13], 4
      %s78 = int_to_ptr.vmem [resolvable:$true] %s77
      %80 = dma.hbm_to_vmem [thread:$0]  %s8, 32, %s78, [#allocation14]
    $region37: #{encoder_forward.1} parent=1 // pred_fallthru
      _
    // Predicated region
    $region38: #{encoder_forward.1} parent=1 // pred_check
      _
    $region39: #{encoder_forward.1} parent=1 // pred_check_branch
      %82 = sbr.rel (0) target = $region41
    $region40: #{encoder_forward.1} parent=1 // pred_region
      %s84 = ssub.s32 7680, 7680
      %85 = vsyncadd [#allocation14], %s84
      %s86 = sshll.u32 [#allocation15], 4
      %s87 = int_to_ptr.vmem [resolvable:$true] %s86
      %92 = dma.hbm_to_vmem [thread:$0]  %s9, 7680, %s87, [#allocation14], 128, 128, 8
    $region41: #{encoder_forward.1} parent=1 // pred_fallthru
      _
    // Predicated region
    $region42: #{encoder_forward.1} parent=1 // pred_check
      _
    $region43: #{encoder_forward.1} parent=1 // pred_check_branch
      %94 = sbr.rel (0) target = $region45
    $region44: #{encoder_forward.1} parent=1 // pred_region
      %s96 = ssub.s32 32, 32
      %97 = vsyncadd [#allocation17], %s96
      %s99 = sshll.u32 [#allocation16], 4
      %s100 = int_to_ptr.vmem [resolvable:$true] %s99
      %102 = dma.hbm_to_vmem [thread:$0]  %s10, 32, %s100, [#allocation17]
    $region45: #{encoder_forward.1} parent=1 // pred_fallthru
      _
    // Predicated region
    $region46: #{encoder_forward.1} parent=1 // pred_check
      _
    $region47: #{encoder_forward.1} parent=1 // pred_check_branch
      %104 = sbr.rel (0) target = $region49
    $region48: #{encoder_forward.1} parent=1 // pred_region
      %s106 = ssub.s32 7680, 7680
      %107 = vsyncadd [#allocation17], %s106
      %s108 = sshll.u32 [#allocation18], 4
      %s109 = int_to_ptr.vmem [resolvable:$true] %s108
      %114 = dma.hbm_to_vmem [thread:$0]  %s11, 7680, %s109, [#allocation17], 128, 128, 8
    $region49: #{encoder_forward.1} parent=1 // pred_fallthru
      _
    // Predicated region
    $region50: #{encoder_forward.1} parent=1 // pred_check
      _
    $region51: #{encoder_forward.1} parent=1 // pred_check_branch
      %116 = sbr.rel (0) target = $region53
    $region52: #{encoder_forward.1} parent=1 // pred_region
      _
    $region53: #{encoder_forward.1} parent=1 // pred_fallthru
      _
    // Predicated region
    $region54: #{encoder_forward.1} parent=1 // pred_check
      _
    $region55: #{encoder_forward.1} parent=1 // pred_check_branch
      %118 = sbr.rel (0) target = $region57
    $region56: #{encoder_forward.1} parent=1 // pred_region
      %s120 = ssub.s32 4608, 4608
      %121 = vsyncadd [#allocation20], %s120
      %s122 = sshll.u32 [#allocation19], 4
      %s123 = int_to_ptr.vmem [resolvable:$true] %s122
      %128 = dma.hbm_to_vmem [thread:$0]  %s13, 4608, %s123, [#allocation20], 64, 64, 4
    $region57: #{encoder_forward.1} parent=1 // pred_fallthru
      _
    // Predicated region
    $region58: #{encoder_forward.1} parent=1 // pred_check
      _
    $region59: #{encoder_forward.1} parent=1 // pred_check_branch
      %130 = sbr.rel (0) target = $region61
    $region60: #{encoder_forward.1} parent=1 // pred_region
      _
    $region61: #{encoder_forward.1} parent=1 // pred_fallthru
      _
    // Predicated region
    $region62: #{encoder_forward.1} parent=1 // pred_check
      _
    $region63: #{encoder_forward.1} parent=1 // pred_check_branch
      %132 = sbr.rel (0) target = $region65
    $region64: #{encoder_forward.1} parent=1 // pred_region
      _
    $region65: #{encoder_forward.1} parent=1 // pred_fallthru
      _
    // Predicated region
    $region66: #{encoder_forward.1} parent=1 // pred_check
      _
    $region67: #{encoder_forward.1} parent=1 // pred_check_branch
      %134 = sbr.rel (0) target = $region69
    $region68: #{encoder_forward.1} parent=1 // pred_region
      %s136 = ssub.s32 16, 16
      %137 = vsyncadd [#allocation20], %s136
      %s139 = sshll.u32 [#allocation21], 4
      %s140 = int_to_ptr.vmem [resolvable:$true] %s139
      %142 = dma.hbm_to_vmem [thread:$0]  %s16, 16, %s140, [#allocation20]
    $region69: #{encoder_forward.1} parent=1 // pred_fallthru
      _
    // Predicated region
    $region70: #{encoder_forward.1} parent=1 // pred_check
      _
    $region71: #{encoder_forward.1} parent=1 // pred_check_branch
      %144 = sbr.rel (0) target = $region73
    $region72: #{encoder_forward.1} parent=1 // pred_region
      %145 = dma.done [#allocation9], 1920
    $region73: #{encoder_forward.1} parent=1 // pred_fallthru
      _
    // Predicated region
    $region74: #{encoder_forward.1} parent=1 // pred_check
      _
    $region75: #{encoder_forward.1} parent=1 // pred_check_branch
      %147 = sbr.rel (0) target = $region77
    $region76: #{encoder_forward.1} parent=1 // pred_region
      %148 = dma.done [#allocation11], 32
    $region77: #{encoder_forward.1} parent=1 // pred_fallthru
      _
    // Predicated region
    $region78: #{encoder_forward.1} parent=1 // pred_check
      _
    $region79: #{encoder_forward.1} parent=1 // pred_check_branch
      %150 = sbr.rel (0) target = $region81
    $region80: #{encoder_forward.1} parent=1 // pred_region
      %151 = dma.done [#allocation11], 7680
    $region81: #{encoder_forward.1} parent=1 // pred_fallthru
      _
    // Predicated region
    $region82: #{encoder_forward.1} parent=1 // pred_check
      _
    $region83: #{encoder_forward.1} parent=1 // pred_check_branch
      %153 = sbr.rel (0) target = $region85
    $region84: #{encoder_forward.1} parent=1 // pred_region
      %154 = dma.done [#allocation14], 32
    $region85: #{encoder_forward.1} parent=1 // pred_fallthru
      _
    // Predicated region
    $region86: #{encoder_forward.1} parent=1 // pred_check
      _
    $region87: #{encoder_forward.1} parent=1 // pred_check_branch
      %156 = sbr.rel (0) target = $region89
    $region88: #{encoder_forward.1} parent=1 // pred_region
      %157 = dma.done [#allocation14], 7680
    $region89: #{encoder_forward.1} parent=1 // pred_fallthru
      _
    // Predicated region
    $region90: #{encoder_forward.1} parent=1 // pred_check
      _
    $region91: #{encoder_forward.1} parent=1 // pred_check_branch
      %159 = sbr.rel (0) target = $region93
    $region92: #{encoder_forward.1} parent=1 // pred_region
      %160 = dma.done [#allocation17], 32
    $region93: #{encoder_forward.1} parent=1 // pred_fallthru
      _
    // Predicated region
    $region94: #{encoder_forward.1} parent=1 // pred_check
      _
    $region95: #{encoder_forward.1} parent=1 // pred_check_branch
      %162 = sbr.rel (0) target = $region97
    $region96: #{encoder_forward.1} parent=1 // pred_region
      %163 = dma.done [#allocation17], 7680
    $region97: #{encoder_forward.1} parent=1 // pred_fallthru
      _
    // Predicated region
    $region98: #{encoder_forward.1} parent=1 // pred_check
      _
    $region99: #{encoder_forward.1} parent=1 // pred_check_branch
      %165 = sbr.rel (0) target = $region101
    $region100: #{encoder_forward.1} parent=1 // pred_region
      %166 = dma.done [#allocation20], 4608
    $region101: #{encoder_forward.1} parent=1 // pred_fallthru
      _
    // Predicated region
    $region102: #{encoder_forward.1} parent=1 // pred_check
      _
    $region103: #{encoder_forward.1} parent=1 // pred_check_branch
      %168 = sbr.rel (0) target = $region105
    $region104: #{encoder_forward.1} parent=1 // pred_region
      %169 = dma.done [#allocation20], 16
    $region105: #{encoder_forward.1} parent=1 // pred_fallthru
      _
    %vm171 = vcmask 318464
    %172 = vst.msk [vmem:[#allocation2] sm:$0xff] %vm171, 0
    %s173 = scalar_lea.vmem [#allocation2], 320
    %174 = vst.msk [vmem:[%s173] sm:$0xff] %vm171, 0
    %175 = vst [vmem:[#allocation3] sm:$0xff] 0
    %vm176 = vcmask 228352
    %177 = vst.msk [vmem:[#allocation3 + $0x8] sm:$0xff] %vm176, 0
    %s178 = scalar_lea.vmem [#allocation3], 640
    %179 = vst [vmem:[%s178] sm:$0xff] 0
    %180 = vst.msk [vmem:[%s178 + $0x8] sm:$0xff] %vm176, 0
    %181 = vst [vmem:[#allocation4] sm:$0xff] 0
    %182 = vst.msk [vmem:[#allocation4 + $0x8] sm:$0xff] %vm176, 0
    %s183 = scalar_lea.vmem [#allocation4], 640
    %184 = vst [vmem:[%s183] sm:$0xff] 0
    %185 = vst.msk [vmem:[%s183 + $0x8] sm:$0xff] %vm176, 0
    %186 = vst [vmem:[#allocation5] sm:$0xff] 0
    %vm187 = vcmask 261120
    %188 = vst.msk [vmem:[#allocation5 + $0x8] sm:$0xff] %vm187, 0
    %s189 = scalar_lea.vmem [#allocation5], 336
    %190 = vst [vmem:[%s189] sm:$0xff] 0
    %191 = vst.msk [vmem:[%s189 + $0x8] sm:$0xff] %vm187, 0
    %192 = vst [vmem:[#allocation6] sm:$0xff] 0
    %193 = vst.msk [vmem:[#allocation6 + $0x8] sm:$0xff] %vm187, 0
    %s194 = scalar_lea.vmem [#allocation6], 176
    %195 = vst [vmem:[%s194] sm:$0xff] 0
    %196 = vst.msk [vmem:[%s194 + $0x8] sm:$0xff] %vm187, 0
    %197 = vst [vmem:[#allocation7] sm:$0xff] 0
    %198 = vst.msk [vmem:[#allocation7 + $0x8] sm:$0xff] %vm187, 0
    %s199 = scalar_lea.vmem [#allocation7], 96
    %200 = vst [vmem:[%s199] sm:$0xff] 0
    %201 = vst.msk [vmem:[%s199 + $0x8] sm:$0xff] %vm187, 0
    %v202 = vld [vmem:[%s0] sm:$0xff]
    %v203 = vld [vmem:[%s0 + $0x8] sm:$0xff]
    %v204 = vld [vmem:[%s0 + $0x10] sm:$0xff]
    %v205 = vld [vmem:[%s0 + $0x18] sm:$0xff]
    %v206 = vld [vmem:[%s0 + $0x20] sm:$0xff]
    %v207 = vld [vmem:[%s0 + $0x28] sm:$0xff]
    %v208 = vld [vmem:[%s0 + $0x30] sm:$0xff]
    %v209 = vld [vmem:[%s0 + $0x38] sm:$0xff]
    %v210 = vld [vmem:[%s0 + $0x40] sm:$0xff]
    %v211 = vld [vmem:[%s0 + $0x48] sm:$0xff]
    %v212 = vld [vmem:[%s0 + $0x50] sm:$0xff]
    %v213 = vld [vmem:[%s0 + $0x58] sm:$0xff]
    %v214 = vld [vmem:[%s0 + $0x60] sm:$0xff]
    %v215 = vld [vmem:[%s0 + $0x68] sm:$0xff]
    %v216 = vld [vmem:[%s0 + $0x70] sm:$0xff]
    %v217 = vld [vmem:[%s0 + $0x78] sm:$0xff]
    %v218 = vld [vmem:[%s0 + $0x80] sm:$0xff]
    %v219 = vld [vmem:[%s0 + $0x88] sm:$0xff]
    %v220 = vld [vmem:[%s0 + $0x90] sm:$0xff]
    %v221 = vld [vmem:[%s0 + $0x98] sm:$0xff]
    %v222 = vld [vmem:[%s0 + $0xa0] sm:$0xff]
    %v223 = vld [vmem:[%s0 + $0xa8] sm:$0xff]
    %v224 = vld [vmem:[%s0 + $0xb0] sm:$0xff]
    %v225 = vld [vmem:[%s0 + $0xb8] sm:$0xff]
    %v226 = vld [vmem:[%s0 + $0xc0] sm:$0xff]
    %v227 = vld [vmem:[%s0 + $0xc8] sm:$0xff]
    %v228 = vld [vmem:[%s0 + $0xd0] sm:$0xff]
    %v229 = vld [vmem:[%s0 + $0xd8] sm:$0xff]
    %v230 = vld [vmem:[%s0 + $0xe0] sm:$0xff]
    %v231 = vld [vmem:[%s0 + $0xe8] sm:$0xff]
    %v232 = vld [vmem:[%s0 + $0xf0] sm:$0xff]
    %v233 = vld [vmem:[%s0 + $0xf8] sm:$0xff]
    %v234 = vld [vmem:[%s0 + $0x100] sm:$0xff]
    %v235 = vld [vmem:[%s0 + $0x108] sm:$0xff]
    %v236 = vld [vmem:[%s0 + $0x110] sm:$0xff]
    %v237 = vld [vmem:[%s0 + $0x118] sm:$0xff]
    %v238 = vld [vmem:[%s0 + $0x120] sm:$0xff]
    %v239 = vld [vmem:[%s0 + $0x128] sm:$0xff]
    %v240 = vld [vmem:[%s0 + $0x130] sm:$0xff]
    %v241 = vld [vmem:[%s0 + $0x138] sm:$0xff]
    %v242 = vld [vmem:[%s0 + $0x140] sm:$0xff]
    %v243 = vld [vmem:[%s0 + $0x148] sm:$0xff]
    %v244 = vld [vmem:[%s0 + $0x150] sm:$0xff]
    %v245 = vld [vmem:[%s0 + $0x158] sm:$0xff]
    %v246 = vld [vmem:[%s0 + $0x160] sm:$0xff]
    %v247 = vld [vmem:[%s0 + $0x168] sm:$0xff]
    %v248 = vld [vmem:[%s0 + $0x170] sm:$0xff]
    %v249 = vld [vmem:[%s0 + $0x178] sm:$0xff]
    %v250 = vld [vmem:[%s0 + $0x180] sm:$0xff]
    %v251 = vld [vmem:[%s0 + $0x188] sm:$0xff]
    %v252 = vld [vmem:[%s0 + $0x190] sm:$0xff]
    %v253 = vld [vmem:[%s0 + $0x198] sm:$0xff]
    %v254 = vld [vmem:[%s0 + $0x1a0] sm:$0xff]
    %v255 = vld [vmem:[%s0 + $0x1a8] sm:$0xff]
    %v256 = vld [vmem:[%s0 + $0x1b0] sm:$0xff]
    %v257 = vld [vmem:[%s0 + $0x1b8] sm:$0xff]
    %v258 = vld [vmem:[%s0 + $0x1c0] sm:$0xff]
    %v259 = vld [vmem:[%s0 + $0x1c8] sm:$0xff]
    %v260 = vld [vmem:[%s0 + $0x1d0] sm:$0xff]
    %v261 = vld [vmem:[%s0 + $0x1d8] sm:$0xff]
    %v262 = vld [vmem:[%s0 + $0x1e0] sm:$0xff]
    %v263 = vld [vmem:[%s0 + $0x1e8] sm:$0xff]
    %v264 = vld [vmem:[%s0 + $0x1f0] sm:$0xff]
    %v265 = vld [vmem:[%s0 + $0x1f8] sm:$0xff]
    %v266 = vld [vmem:[%s0 + $0x200] sm:$0xff]
    %v267 = vld [vmem:[%s0 + $0x208] sm:$0xff]
    %v268 = vld [vmem:[%s0 + $0x210] sm:$0xff]
    %v269 = vld [vmem:[%s0 + $0x218] sm:$0xff]
    %v270 = vld [vmem:[%s0 + $0x220] sm:$0xff]
    %v271 = vld [vmem:[%s0 + $0x228] sm:$0xff]
    %v272 = vld [vmem:[%s0 + $0x230] sm:$0xff]
    %v273 = vld [vmem:[%s0 + $0x238] sm:$0xff]
    %v274 = vld [vmem:[%s0 + $0x240] sm:$0xff]
    %v275 = vld [vmem:[%s0 + $0x248] sm:$0xff]
    %v276 = vld [vmem:[%s0 + $0x250] sm:$0xff]
    %v277 = vld [vmem:[%s0 + $0x258] sm:$0xff]
    %v278 = vld [vmem:[%s0 + $0x260] sm:$0xff]
    %v279 = vld [vmem:[%s0 + $0x268] sm:$0xff]
    %v280 = vpack.c.bf16 %v203, %v202
    %v281 = vpack.c.bf16 %v205, %v204
    %v282 = vpack.c.bf16 %v207, %v206
    %v283 = vpack.c.bf16 %v209, %v208
    %v284 = vpack.c.bf16 %v211, %v210
    %v285 = vpack.c.bf16 %v213, %v212
    %v286 = vpack.c.bf16 %v215, %v214
    %v287 = vpack.c.bf16 %v217, %v216
    %v288 = vpack.c.bf16 %v219, %v218
    %v289 = vpack.c.bf16 %v221, %v220
    %v290 = vpack.c.bf16 %v223, %v222
    %v291 = vpack.c.bf16 %v225, %v224
    %v292 = vpack.c.bf16 %v227, %v226
    %v293 = vpack.c.bf16 %v229, %v228
    %v294 = vpack.c.bf16 %v231, %v230
    %v295 = vpack.c.bf16 %v233, %v232
    %v296 = vpack.c.bf16 %v235, %v234
    %v297 = vpack.c.bf16 %v237, %v236
    %v298 = vpack.c.bf16 %v239, %v238
    %v299 = vpack.c.bf16 %v241, %v240
    %v300 = vpack.c.bf16 %v243, %v242
    %v301 = vpack.c.bf16 %v245, %v244
    %v302 = vpack.c.bf16 %v247, %v246
    %v303 = vpack.c.bf16 %v249, %v248
    %v304 = vpack.c.bf16 %v251, %v250
    %v305 = vpack.c.bf16 %v253, %v252
    %v306 = vpack.c.bf16 %v255, %v254
    %v307 = vpack.c.bf16 %v257, %v256
    %v308 = vpack.c.bf16 %v259, %v258
    %v309 = vpack.c.bf16 %v261, %v260
    %v310 = vpack.c.bf16 %v263, %v262
    %v311 = vpack.c.bf16 %v265, %v264
    %v312 = vpack.c.bf16 %v267, %v266
    %v313 = vpack.c.bf16 %v269, %v268
    %v314 = vpack.c.bf16 %v271, %v270
    %v315 = vpack.c.bf16 %v273, %v272
    %v316 = vpack.c.bf16 %v275, %v274
    %v317 = vpack.c.bf16 %v277, %v276
    %v318 = vpack.c.bf16 %v279, %v278
    %s319 = scalar_lea.vmem [#allocation2], 8
    %320 = vst.msk [vmem:[%s319] sm:$0xff] %vm171, %v280
    %321 = vst.msk [vmem:[%s319 + $0x8] sm:$0xff] %vm171, %v281
    %322 = vst.msk [vmem:[%s319 + $0x10] sm:$0xff] %vm171, %v282
    %323 = vst.msk [vmem:[%s319 + $0x18] sm:$0xff] %vm171, %v283
    %324 = vst.msk [vmem:[%s319 + $0x20] sm:$0xff] %vm171, %v284
    %325 = vst.msk [vmem:[%s319 + $0x28] sm:$0xff] %vm171, %v285
    %326 = vst.msk [vmem:[%s319 + $0x30] sm:$0xff] %vm171, %v286
    %327 = vst.msk [vmem:[%s319 + $0x38] sm:$0xff] %vm171, %v287
    %328 = vst.msk [vmem:[%s319 + $0x40] sm:$0xff] %vm171, %v288
    %329 = vst.msk [vmem:[%s319 + $0x48] sm:$0xff] %vm171, %v289
    %330 = vst.msk [vmem:[%s319 + $0x50] sm:$0xff] %vm171, %v290
    %331 = vst.msk [vmem:[%s319 + $0x58] sm:$0xff] %vm171, %v291
    %332 = vst.msk [vmem:[%s319 + $0x60] sm:$0xff] %vm171, %v292
    %333 = vst.msk [vmem:[%s319 + $0x68] sm:$0xff] %vm171, %v293
    %334 = vst.msk [vmem:[%s319 + $0x70] sm:$0xff] %vm171, %v294
    %335 = vst.msk [vmem:[%s319 + $0x78] sm:$0xff] %vm171, %v295
    %336 = vst.msk [vmem:[%s319 + $0x80] sm:$0xff] %vm171, %v296
    %337 = vst.msk [vmem:[%s319 + $0x88] sm:$0xff] %vm171, %v297
    %338 = vst.msk [vmem:[%s319 + $0x90] sm:$0xff] %vm171, %v298
    %339 = vst.msk [vmem:[%s319 + $0x98] sm:$0xff] %vm171, %v299
    %340 = vst.msk [vmem:[%s319 + $0xa0] sm:$0xff] %vm171, %v300
    %341 = vst.msk [vmem:[%s319 + $0xa8] sm:$0xff] %vm171, %v301
    %342 = vst.msk [vmem:[%s319 + $0xb0] sm:$0xff] %vm171, %v302
    %343 = vst.msk [vmem:[%s319 + $0xb8] sm:$0xff] %vm171, %v303
    %344 = vst.msk [vmem:[%s319 + $0xc0] sm:$0xff] %vm171, %v304
    %345 = vst.msk [vmem:[%s319 + $0xc8] sm:$0xff] %vm171, %v305
    %346 = vst.msk [vmem:[%s319 + $0xd0] sm:$0xff] %vm171, %v306
    %347 = vst.msk [vmem:[%s319 + $0xd8] sm:$0xff] %vm171, %v307
    %348 = vst.msk [vmem:[%s319 + $0xe0] sm:$0xff] %vm171, %v308
    %349 = vst.msk [vmem:[%s319 + $0xe8] sm:$0xff] %vm171, %v309
    %350 = vst.msk [vmem:[%s319 + $0xf0] sm:$0xff] %vm171, %v310
    %351 = vst.msk [vmem:[%s319 + $0xf8] sm:$0xff] %vm171, %v311
    %352 = vst.msk [vmem:[%s319 + $0x100] sm:$0xff] %vm171, %v312
    %353 = vst.msk [vmem:[%s319 + $0x108] sm:$0xff] %vm171, %v313
    %354 = vst.msk [vmem:[%s319 + $0x110] sm:$0xff] %vm171, %v314
    %355 = vst.msk [vmem:[%s319 + $0x118] sm:$0xff] %vm171, %v315
    %356 = vst.msk [vmem:[%s319 + $0x120] sm:$0xff] %vm171, %v316
    %357 = vst.msk [vmem:[%s319 + $0x128] sm:$0xff] %vm171, %v317
    %358 = vst.msk [vmem:[%s319 + $0x130] sm:$0xff] %vm171, %v318
    %v359 = vld [vmem:[#allocation2] sm:$0xff]
    %v360 = vld [vmem:[#allocation2 + $0x8] sm:$0xff]
    %v361 = vld [vmem:[#allocation2 + $0x10] sm:$0xff]
    %v362 = vld [vmem:[#allocation2 + $0x18] sm:$0xff]
    %v363 = vld [vmem:[#allocation2 + $0x20] sm:$0xff]
    %v364 = vld [vmem:[#allocation2 + $0x28] sm:$0xff]
    %v365 = vld [vmem:[#allocation2 + $0x30] sm:$0xff]
    %v366 = vld [vmem:[#allocation2 + $0x38] sm:$0xff]
    %v367 = vld [vmem:[#allocation2 + $0x40] sm:$0xff]
    %v368 = vld [vmem:[#allocation2 + $0x48] sm:$0xff]
    %v369 = vld [vmem:[#allocation2 + $0x50] sm:$0xff]
    %v370 = vld [vmem:[#allocation2 + $0x58] sm:$0xff]
    %v371 = vld [vmem:[#allocation2 + $0x60] sm:$0xff]
    %v372 = vld [vmem:[#allocation2 + $0x68] sm:$0xff]
    %v373 = vld [vmem:[#allocation2 + $0x70] sm:$0xff]
    %v374 = vld [vmem:[#allocation2 + $0x78] sm:$0xff]
    %v375 = vld [vmem:[#allocation2 + $0x80] sm:$0xff]
    %v376 = vld [vmem:[#allocation2 + $0x88] sm:$0xff]
    %v377 = vld [vmem:[#allocation2 + $0x90] sm:$0xff]
    %v378 = vld [vmem:[#allocation2 + $0x98] sm:$0xff]
    %v379 = vld [vmem:[#allocation2 + $0xa0] sm:$0xff]
    %v380 = vld [vmem:[#allocation2 + $0xa8] sm:$0xff]
    %v381 = vld [vmem:[#allocation2 + $0xb0] sm:$0xff]
    %v382 = vld [vmem:[#allocation2 + $0xb8] sm:$0xff]
    %v383 = vld [vmem:[#allocation2 + $0xc0] sm:$0xff]
    %v384 = vld [vmem:[#allocation2 + $0xc8] sm:$0xff]
    %v385 = vld [vmem:[#allocation2 + $0xd0] sm:$0xff]
    %v386 = vld [vmem:[#allocation2 + $0xd8] sm:$0xff]
    %v387 = vld [vmem:[#allocation2 + $0xe0] sm:$0xff]
    %v388 = vld [vmem:[#allocation2 + $0xe8] sm:$0xff]
    %v389 = vld [vmem:[#allocation2 + $0xf0] sm:$0xff]
    %v390 = vld [vmem:[#allocation2 + $0xf8] sm:$0xff]
    %v391 = vld [vmem:[#allocation2 + $0x100] sm:$0xff]
    %v392 = vld [vmem:[#allocation2 + $0x108] sm:$0xff]
    %v393 = vld [vmem:[#allocation2 + $0x110] sm:$0xff]
    %v394 = vld [vmem:[#allocation2 + $0x118] sm:$0xff]
    %v395 = vld [vmem:[#allocation2 + $0x120] sm:$0xff]
    %v396 = vld [vmem:[#allocation2 + $0x128] sm:$0xff]
    %v397 = vld [vmem:[#allocation2 + $0x130] sm:$0xff]
    %v398 = vld [vmem:[#allocation8] sm:$0xff]
    %v399 = vld [vmem:[#allocation8 + $0x8] sm:$0xff]
    %v400 = vld [vmem:[#allocation8 + $0x10] sm:$0xff]
    %v401 = vld [vmem:[#allocation8 + $0x18] sm:$0xff]
    %v402 = vld [vmem:[#allocation8 + $0x20] sm:$0xff]
    %v403 = vld [vmem:[%s319] sm:$0xff]
    %v404 = vld [vmem:[%s319 + $0x8] sm:$0xff]
    %v405 = vld [vmem:[%s319 + $0x10] sm:$0xff]
    %v406 = vld [vmem:[%s319 + $0x18] sm:$0xff]
    %v407 = vld [vmem:[%s319 + $0x20] sm:$0xff]
    %v408 = vld [vmem:[%s319 + $0x28] sm:$0xff]
    %v409 = vld [vmem:[%s319 + $0x30] sm:$0xff]
    %v410 = vld [vmem:[%s319 + $0x38] sm:$0xff]
    %v411 = vld [vmem:[%s319 + $0x40] sm:$0xff]
    %v412 = vld [vmem:[%s319 + $0x48] sm:$0xff]
    %v413 = vld [vmem:[%s319 + $0x50] sm:$0xff]
    %v414 = vld [vmem:[%s319 + $0x58] sm:$0xff]
    %v415 = vld [vmem:[%s319 + $0x60] sm:$0xff]
    %v416 = vld [vmem:[%s319 + $0x68] sm:$0xff]
    %v417 = vld [vmem:[%s319 + $0x70] sm:$0xff]
    %v418 = vld [vmem:[%s319 + $0x78] sm:$0xff]
    %v419 = vld [vmem:[%s319 + $0x80] sm:$0xff]
    %v420 = vld [vmem:[%s319 + $0x88] sm:$0xff]
    %v421 = vld [vmem:[%s319 + $0x90] sm:$0xff]
    %v422 = vld [vmem:[%s319 + $0x98] sm:$0xff]
    %v423 = vld [vmem:[%s319 + $0xa0] sm:$0xff]
    %v424 = vld [vmem:[%s319 + $0xa8] sm:$0xff]
    %v425 = vld [vmem:[%s319 + $0xb0] sm:$0xff]
    %v426 = vld [vmem:[%s319 + $0xb8] sm:$0xff]
    %v427 = vld [vmem:[%s319 + $0xc0] sm:$0xff]
    %v428 = vld [vmem:[%s319 + $0xc8] sm:$0xff]
    %v429 = vld [vmem:[%s319 + $0xd0] sm:$0xff]
    %v430 = vld [vmem:[%s319 + $0xd8] sm:$0xff]
    %v431 = vld [vmem:[%s319 + $0xe0] sm:$0xff]
    %v432 = vld [vmem:[%s319 + $0xe8] sm:$0xff]
    %v433 = vld [vmem:[%s319 + $0xf0] sm:$0xff]
    %v434 = vld [vmem:[%s319 + $0xf8] sm:$0xff]
    %v435 = vld [vmem:[%s319 + $0x100] sm:$0xff]
    %v436 = vld [vmem:[%s319 + $0x108] sm:$0xff]
    %v437 = vld [vmem:[%s319 + $0x110] sm:$0xff]
    %v438 = vld [vmem:[%s319 + $0x118] sm:$0xff]
    %v439 = vld [vmem:[%s319 + $0x120] sm:$0xff]
    %v440 = vld [vmem:[%s319 + $0x128] sm:$0xff]
    %v441 = vld [vmem:[%s319 + $0x130] sm:$0xff]
    %s442 = scalar_lea.vmem [#allocation8], 40
    %v443 = vld [vmem:[%s442] sm:$0xff]
    %v444 = vld [vmem:[%s442 + $0x8] sm:$0xff]
    %v445 = vld [vmem:[%s442 + $0x10] sm:$0xff]
    %v446 = vld [vmem:[%s442 + $0x18] sm:$0xff]
    %v447 = vld [vmem:[%s442 + $0x20] sm:$0xff]
    %v453 = vunpack.c.l.b16 %v443
    %v454 = vunpack.c.h.b16 %v443
    %v455 = vunpack.c.l.b16 %v444
    %v456 = vunpack.c.h.b16 %v444
    %v457 = vunpack.c.l.b16 %v445
    %v458 = vunpack.c.h.b16 %v445
    %v459 = vunpack.c.l.b16 %v446
    %v460 = vunpack.c.h.b16 %v446
    %v461 = vunpack.c.l.b16 %v447
    %v462 = vunpack.c.h.b16 %v447
    %v463 = vpack.c.b16 %v455, %v453
    %v464 = vpack.c.b16 %v456, %v454
    %v465 = vpack.c.b16 %v459, %v457
    %v466 = vpack.c.b16 %v460, %v458
    %v467 = vpack.c.b16 %v461, %v461
    %v468 = vpack.c.b16 %v462, %v462
    %v474 = vsel %vm171, %v403, 0
    %v477 = vsel %vm171, %v404, 0
    %v480 = vsel %vm171, %v405, 0
    %v483 = vsel %vm171, %v406, 0
    %v486 = vsel %vm171, %v407, 0
    %v489 = vsel %vm171, %v408, 0
    %v492 = vsel %vm171, %v409, 0
    %v495 = vsel %vm171, %v410, 0
    %v498 = vsel %vm171, %v411, 0
    %v501 = vsel %vm171, %v412, 0
    %v504 = vsel %vm171, %v413, 0
    %v507 = vsel %vm171, %v414, 0
    %v510 = vsel %vm171, %v415, 0
    %v513 = vsel %vm171, %v416, 0
    %v516 = vsel %vm171, %v417, 0
    %v519 = vsel %vm171, %v418, 0
    %v522 = vsel %vm171, %v419, 0
    %v525 = vsel %vm171, %v420, 0
    %v528 = vsel %vm171, %v421, 0
    %v531 = vsel %vm171, %v422, 0
    %v534 = vsel %vm171, %v423, 0
    %v537 = vsel %vm171, %v424, 0
    %v540 = vsel %vm171, %v425, 0
    %v543 = vsel %vm171, %v426, 0
    %v546 = vsel %vm171, %v427, 0
    %v549 = vsel %vm171, %v428, 0
    %v552 = vsel %vm171, %v429, 0
    %v555 = vsel %vm171, %v430, 0
    %v558 = vsel %vm171, %v431, 0
    %v561 = vsel %vm171, %v432, 0
    %v564 = vsel %vm171, %v433, 0
    %v567 = vsel %vm171, %v434, 0
    %v570 = vsel %vm171, %v435, 0
    %v573 = vsel %vm171, %v436, 0
    %v576 = vsel %vm171, %v437, 0
    %v579 = vsel %vm171, %v438, 0
    %v582 = vsel %vm171, %v439, 0
    %v585 = vsel %vm171, %v440, 0
    %v588 = vsel %vm171, %v441, 0
    %vm590 = vcmask 1042432
    %vm591 = vcmask 1043456
    %v592 = vsel %vm590, 4294967295, 65535
    %v593 = vsel %vm591, %v592, 0
    %v595 = vand.u32 %v467, %v593
    %v598 = vand.u32 %v468, %v593
    %600 = vmatprep.subr.bf16.mxu0 %v464
    %601 = vmatpush1.bf16.msra.mxu0 %v463
    %602 = vmatprep.subr.bf16.mxu0 %v466
    %603 = vmatpush1.bf16.msra.mxu0 %v465
    %604 = vmatprep.subr.bf16.mxu0 %v598
    %605 = vmatpush1.bf16.msra.mxu0 %v595
    %606 = vmatprep.subr.bf16.mxu0 0
    %607 = vmatpush1.bf16.msra.mxu0 0
    %608 = vmatprep.subr.bf16.mxu0 0
    %609 = vmatpush1.bf16.msra.mxu0 0
    %610 = vmatprep.subr.bf16.mxu0 0
    %611 = vmatpush1.bf16.msra.mxu0 0
    %612 = vmatprep.subr.bf16.mxu0 0
    %613 = vmatpush1.bf16.msra.mxu0 0
    %614 = vmatprep.subr.bf16.mxu0 0
    %615 = vmatpush1.bf16.msra.mxu0 0
    %616 = vmatprep.subr.bf16.mxu0 0
    %617 = vmatpush1.bf16.msra.mxu0 0
    %618 = vmatprep.subr.bf16.mxu0 0
    %619 = vmatpush1.bf16.msra.mxu0 0
    %620 = vmatprep.subr.bf16.mxu0 0
    %621 = vmatpush1.bf16.msra.mxu0 0
    %622 = vmatprep.subr.bf16.mxu0 0
    %623 = vmatpush1.bf16.msra.mxu0 0
    %624 = vmatprep.subr.bf16.mxu0 0
    %625 = vmatpush1.bf16.msra.mxu0 0
    %626 = vmatprep.subr.bf16.mxu0 0
    %627 = vmatpush1.bf16.msra.mxu0 0
    %628 = vmatprep.subr.bf16.mxu0 0
    %629 = vmatpush1.bf16.msra.mxu0 0
    %630 = vmatprep.subr.bf16.mxu0 0
    %631 = vmatpush1.bf16.msra.mxu0 0
    %632 = vmatprep.mubr.bf16.mxu0 0
    %633 = vmatmul.mubr.bf16.gmra.mrb[0].mxu0 %v474
    %v634 = vpop.f32.mrb[0].mxu0
    %v635 = vadd.f32 0.0, %v634
    %v636 = vpop.f32.mrb[0].mxu0
    %v637 = vadd.f32 0.0, %v636
    %v638 = vpop.f32.mrb[0].mxu0
    %v639 = vadd.f32 0.0, %v638
    %v640 = vpop.f32.mrb[0].mxu0
    %v641 = vadd.f32 0.0, %v640
    %642 = vmatprep.mubr.bf16.mxu0 0
    %643 = vmatmul.mubr.bf16.gmra.mrb[0].mxu0 %v477
    %v644 = vpop.f32.mrb[0].mxu0
    %v645 = vadd.f32 0.0, %v644
    %v646 = vpop.f32.mrb[0].mxu0
    %v647 = vadd.f32 0.0, %v646
    %v648 = vpop.f32.mrb[0].mxu0
    %v649 = vadd.f32 0.0, %v648
    %v650 = vpop.f32.mrb[0].mxu0
    %v651 = vadd.f32 0.0, %v650
    %652 = vmatprep.mubr.bf16.mxu0 0
    %653 = vmatmul.mubr.bf16.gmra.mrb[0].mxu0 %v480
    %v654 = vpop.f32.mrb[0].mxu0
    %v655 = vadd.f32 0.0, %v654
    %v656 = vpop.f32.mrb[0].mxu0
    %v657 = vadd.f32 0.0, %v656
    %v658 = vpop.f32.mrb[0].mxu0
    %v659 = vadd.f32 0.0, %v658
    %v660 = vpop.f32.mrb[0].mxu0
    %v661 = vadd.f32 0.0, %v660
    %662 = vmatprep.mubr.bf16.mxu0 0
    %663 = vmatmul.mubr.bf16.gmra.mrb[0].mxu0 %v483
    %v664 = vpop.f32.mrb[0].mxu0
    %v665 = vadd.f32 0.0, %v664
    %v666 = vpop.f32.mrb[0].mxu0
    %v667 = vadd.f32 0.0, %v666
    %v668 = vpop.f32.mrb[0].mxu0
    %v669 = vadd.f32 0.0, %v668
    %v670 = vpop.f32.mrb[0].mxu0
    %v671 = vadd.f32 0.0, %v670
    %672 = vmatprep.mubr.bf16.mxu0 0
    %673 = vmatmul.mubr.bf16.gmra.mrb[0].mxu0 %v486
    %v674 = vpop.f32.mrb[0].mxu0
    %v675 = vadd.f32 0.0, %v674
    %v676 = vpop.f32.mrb[0].mxu0
    %v677 = vadd.f32 0.0, %v676
    %v678 = vpop.f32.mrb[0].mxu0
    %v679 = vadd.f32 0.0, %v678
    %v680 = vpop.f32.mrb[0].mxu0
    %v681 = vadd.f32 0.0, %v680
    %682 = vmatprep.mubr.bf16.mxu0 0
    %683 = vmatmul.mubr.bf16.gmra.mrb[0].mxu0 %v489
    %v684 = vpop.f32.mrb[0].mxu0
    %v685 = vadd.f32 0.0, %v684
    %v686 = vpop.f32.mrb[0].mxu0
    %v687 = vadd.f32 0.0, %v686
    %v688 = vpop.f32.mrb[0].mxu0
    %v689 = vadd.f32 0.0, %v688
    %v690 = vpop.f32.mrb[0].mxu0
    %v691 = vadd.f32 0.0, %v690
    %692 = vmatprep.mubr.bf16.mxu0 0
    %693 = vmatmul.mubr.bf16.gmra.mrb[0].mxu0 %v492
    %v694 = vpop.f32.mrb[0].mxu0
    %v695 = vadd.f32 0.0, %v694
    %v696 = vpop.f32.mrb[0].mxu0
    %v697 = vadd.f32 0.0, %v696
    %v698 = vpop.f32.mrb[0].mxu0
    %v699 = vadd.f32 0.0, %v698
    %v700 = vpop.f32.mrb[0].mxu0
    %v701 = vadd.f32 0.0, %v700
    %702 = vmatprep.mubr.bf16.mxu0 0
    %703 = vmatmul.mubr.bf16.gmra.mrb[0].mxu0 %v495
    %v704 = vpop.f32.mrb[0].mxu0
    %v705 = vadd.f32 0.0, %v704
    %v706 = vpop.f32.mrb[0].mxu0
    %v707 = vadd.f32 0.0, %v706
    %v708 = vpop.f32.mrb[0].mxu0
    %v709 = vadd.f32 0.0, %v708
    %v710 = vpop.f32.mrb[0].mxu0
    %v711 = vadd.f32 0.0, %v710
    %712 = vmatprep.mubr.bf16.mxu0 0
    %713 = vmatmul.mubr.bf16.gmra.mrb[0].mxu0 %v498
    %v714 = vpop.f32.mrb[0].mxu0
    %v715 = vadd.f32 0.0, %v714
    %v716 = vpop.f32.mrb[0].mxu0
    %v717 = vadd.f32 0.0, %v716
    %v718 = vpop.f32.mrb[0].mxu0
    %v719 = vadd.f32 0.0, %v718
    %v720 = vpop.f32.mrb[0].mxu0
    %v721 = vadd.f32 0.0, %v720
    %722 = vmatprep.mubr.bf16.mxu0 0
    %723 = vmatmul.mubr.bf16.gmra.mrb[0].mxu0 %v501
    %v724 = vpop.f32.mrb[0].mxu0
    %v725 = vadd.f32 0.0, %v724
    %v726 = vpop.f32.mrb[0].mxu0
    %v727 = vadd.f32 0.0, %v726
    %v728 = vpop.f32.mrb[0].mxu0
    %v729 = vadd.f32 0.0, %v728
    %v730 = vpop.f32.mrb[0].mxu0
    %v731 = vadd.f32 0.0, %v730
    %732 = vmatprep.mubr.bf16.mxu0 0
    %733 = vmatmul.mubr.bf16.gmra.mrb[0].mxu0 %v504
    %v734 = vpop.f32.mrb[0].mxu0
    %v735 = vadd.f32 0.0, %v734
    %v736 = vpop.f32.mrb[0].mxu0
    %v737 = vadd.f32 0.0, %v736
    %v738 = vpop.f32.mrb[0].mxu0
    %v739 = vadd.f32 0.0, %v738
    %v740 = vpop.f32.mrb[0].mxu0
    %v741 = vadd.f32 0.0, %v740
    %742 = vmatprep.mubr.bf16.mxu0 0
    %743 = vmatmul.mubr.bf16.gmra.mrb[0].mxu0 %v507
    %v744 = vpop.f32.mrb[0].mxu0
    %v745 = vadd.f32 0.0, %v744
    %v746 = vpop.f32.mrb[0].mxu0
    %v747 = vadd.f32 0.0, %v746
    %v748 = vpop.f32.mrb[0].mxu0
    %v749 = vadd.f32 0.0, %v748
    %v750 = vpop.f32.mrb[0].mxu0
    %v751 = vadd.f32 0.0, %v750
    %752 = vmatprep.mubr.bf16.mxu0 0
    %753 = vmatmul.mubr.bf16.gmra.mrb[0].mxu0 %v510
    %v754 = vpop.f32.mrb[0].mxu0
    %v755 = vadd.f32 0.0, %v754
    %v756 = vpop.f32.mrb[0].mxu0
    %v757 = vadd.f32 0.0, %v756
    %v758 = vpop.f32.mrb[0].mxu0
    %v759 = vadd.f32 0.0, %v758
    %v760 = vpop.f32.mrb[0].mxu0
    %v761 = vadd.f32 0.0, %v760
    %762 = vmatprep.mubr.bf16.mxu0 0
    %763 = vmatmul.mubr.bf16.gmra.mrb[0].mxu0 %v513
    %v764 = vpop.f32.mrb[0].mxu0
    %v765 = vadd.f32 0.0, %v764
    %v766 = vpop.f32.mrb[0].mxu0
    %v767 = vadd.f32 0.0, %v766
    %v768 = vpop.f32.mrb[0].mxu0
    %v769 = vadd.f32 0.0, %v768
    %v770 = vpop.f32.mrb[0].mxu0
    %v771 = vadd.f32 0.0, %v770
    %772 = vmatprep.mubr.bf16.mxu0 0
    %773 = vmatmul.mubr.bf16.gmra.mrb[0].mxu0 %v516
    %v774 = vpop.f32.mrb[0].mxu0
    %v775 = vadd.f32 0.0, %v774
    %v776 = vpop.f32.mrb[0].mxu0
    %v777 = vadd.f32 0.0, %v776
    %v778 = vpop.f32.mrb[0].mxu0
    %v779 = vadd.f32 0.0, %v778
    %v780 = vpop.f32.mrb[0].mxu0
    %v781 = vadd.f32 0.0, %v780
    %782 = vmatprep.mubr.bf16.mxu0 0
    %783 = vmatmul.mubr.bf16.gmra.mrb[0].mxu0 %v519
    %v784 = vpop.f32.mrb[0].mxu0
    %v785 = vadd.f32 0.0, %v784
    %v786 = vpop.f32.mrb[0].mxu0
    %v787 = vadd.f32 0.0, %v786
    %v788 = vpop.f32.mrb[0].mxu0
    %v789 = vadd.f32 0.0, %v788
    %v790 = vpop.f32.mrb[0].mxu0
    %v791 = vadd.f32 0.0, %v790
    %792 = vmatprep.mubr.bf16.mxu0 0
    %793 = vmatmul.mubr.bf16.gmra.mrb[0].mxu0 %v522
    %v794 = vpop.f32.mrb[0].mxu0
    %v795 = vadd.f32 0.0, %v794
    %v796 = vpop.f32.mrb[0].mxu0
    %v797 = vadd.f32 0.0, %v796
    %v798 = vpop.f32.mrb[0].mxu0
    %v799 = vadd.f32 0.0, %v798
    %v800 = vpop.f32.mrb[0].mxu0
    %v801 = vadd.f32 0.0, %v800
    %802 = vmatprep.mubr.bf16.mxu0 0
    %803 = vmatmul.mubr.bf16.gmra.mrb[0].mxu0 %v525
    %v804 = vpop.f32.mrb[0].mxu0
    %v805 = vadd.f32 0.0, %v804
    %v806 = vpop.f32.mrb[0].mxu0
    %v807 = vadd.f32 0.0, %v806
    %v808 = vpop.f32.mrb[0].mxu0
    %v809 = vadd.f32 0.0, %v808
    %v810 = vpop.f32.mrb[0].mxu0
    %v811 = vadd.f32 0.0, %v810
    %812 = vmatprep.mubr.bf16.mxu0 0
    %813 = vmatmul.mubr.bf16.gmra.mrb[0].mxu0 %v528
    %v814 = vpop.f32.mrb[0].mxu0
    %v815 = vadd.f32 0.0, %v814
    %v816 = vpop.f32.mrb[0].mxu0
    %v817 = vadd.f32 0.0, %v816
    %v818 = vpop.f32.mrb[0].mxu0
    %v819 = vadd.f32 0.0, %v818
    %v820 = vpop.f32.mrb[0].mxu0
    %v821 = vadd.f32 0.0, %v820
    %822 = vmatprep.mubr.bf16.mxu0 0
    %823 = vmatmul.mubr.bf16.gmra.mrb[0].mxu0 %v531
    %v824 = vpop.f32.mrb[0].mxu0
    %v825 = vadd.f32 0.0, %v824
    %v826 = vpop.f32.mrb[0].mxu0
    %v827 = vadd.f32 0.0, %v826
    %v828 = vpop.f32.mrb[0].mxu0
    %v829 = vadd.f32 0.0, %v828
    %v830 = vpop.f32.mrb[0].mxu0
    %v831 = vadd.f32 0.0, %v830
    %832 = vmatprep.mubr.bf16.mxu0 0
    %833 = vmatmul.mubr.bf16.gmra.mrb[0].mxu0 %v534
    %v834 = vpop.f32.mrb[0].mxu0
    %v835 = vadd.f32 0.0, %v834
    %v836 = vpop.f32.mrb[0].mxu0
    %v837 = vadd.f32 0.0, %v836
    %v838 = vpop.f32.mrb[0].mxu0
    %v839 = vadd.f32 0.0, %v838
    %v840 = vpop.f32.mrb[0].mxu0
    %v841 = vadd.f32 0.0, %v840
    %842 = vmatprep.mubr.bf16.mxu0 0
    %843 = vmatmul.mubr.bf16.gmra.mrb[0].mxu0 %v537
    %v844 = vpop.f32.mrb[0].mxu0
    %v845 = vadd.f32 0.0, %v844
    %v846 = vpop.f32.mrb[0].mxu0
    %v847 = vadd.f32 0.0, %v846
    %v848 = vpop.f32.mrb[0].mxu0
    %v849 = vadd.f32 0.0, %v848
    %v850 = vpop.f32.mrb[0].mxu0
    %v851 = vadd.f32 0.0, %v850
    %852 = vmatprep.mubr.bf16.mxu0 0
    %853 = vmatmul.mubr.bf16.gmra.mrb[0].mxu0 %v540
    %v854 = vpop.f32.mrb[0].mxu0
    %v855 = vadd.f32 0.0, %v854
    %v856 = vpop.f32.mrb[0].mxu0
    %v857 = vadd.f32 0.0, %v856
    %v858 = vpop.f32.mrb[0].mxu0
    %v859 = vadd.f32 0.0, %v858
    %v860 = vpop.f32.mrb[0].mxu0
    %v861 = vadd.f32 0.0, %v860
    %862 = vmatprep.mubr.bf16.mxu0 0
    %863 = vmatmul.mubr.bf16.gmra.mrb[0].mxu0 %v543
    %v864 = vpop.f32.mrb[0].mxu0
    %v865 = vadd.f32 0.0, %v864
    %v866 = vpop.f32.mrb[0].mxu0
    %v867 = vadd.f32 0.0, %v866
    %v868 = vpop.f32.mrb[0].mxu0
    %v869 = vadd.f32 0.0, %v868
    %v870 = vpop.f32.mrb[0].mxu0
    %v871 = vadd.f32 0.0, %v870
    %872 = vmatprep.mubr.bf16.mxu0 0
    %873 = vmatmul.mubr.bf16.gmra.mrb[0].mxu0 %v546
    %v874 = vpop.f32.mrb[0].mxu0
    %v875 = vadd.f32 0.0, %v874
    %v876 = vpop.f32.mrb[0].mxu0
    %v877 = vadd.f32 0.0, %v876
    %v878 = vpop.f32.mrb[0].mxu0
    %v879 = vadd.f32 0.0, %v878
    %v880 = vpop.f32.mrb[0].mxu0
    %v881 = vadd.f32 0.0, %v880
    %882 = vmatprep.mubr.bf16.mxu0 0
    %883 = vmatmul.mubr.bf16.gmra.mrb[0].mxu0 %v549
    %v884 = vpop.f32.mrb[0].mxu0
    %v885 = vadd.f32 0.0, %v884
    %v886 = vpop.f32.mrb[0].mxu0
    %v887 = vadd.f32 0.0, %v886
    %v888 = vpop.f32.mrb[0].mxu0
    %v889 = vadd.f32 0.0, %v888
    %v890 = vpop.f32.mrb[0].mxu0
    %v891 = vadd.f32 0.0, %v890
    %892 = vmatprep.mubr.bf16.mxu0 0
    %893 = vmatmul.mubr.bf16.gmra.mrb[0].mxu0 %v552
    %v894 = vpop.f32.mrb[0].mxu0
    %v895 = vadd.f32 0.0, %v894
    %v896 = vpop.f32.mrb[0].mxu0
    %v897 = vadd.f32 0.0, %v896
    %v898 = vpop.f32.mrb[0].mxu0
    %v899 = vadd.f32 0.0, %v898
    %v900 = vpop.f32.mrb[0].mxu0
    %v901 = vadd.f32 0.0, %v900
    %902 = vmatprep.mubr.bf16.mxu0 0
    %903 = vmatmul.mubr.bf16.gmra.mrb[0].mxu0 %v555
    %v904 = vpop.f32.mrb[0].mxu0
    %v905 = vadd.f32 0.0, %v904
    %v906 = vpop.f32.mrb[0].mxu0
    %v907 = vadd.f32 0.0, %v906
    %v908 = vpop.f32.mrb[0].mxu0
    %v909 = vadd.f32 0.0, %v908
    %v910 = vpop.f32.mrb[0].mxu0
    %v911 = vadd.f32 0.0, %v910
    %912 = vmatprep.mubr.bf16.mxu0 0
    %913 = vmatmul.mubr.bf16.gmra.mrb[0].mxu0 %v558
    %v914 = vpop.f32.mrb[0].mxu0
    %v915 = vadd.f32 0.0, %v914
    %v916 = vpop.f32.mrb[0].mxu0
    %v917 = vadd.f32 0.0, %v916
    %v918 = vpop.f32.mrb[0].mxu0
    %v919 = vadd.f32 0.0, %v918
    %v920 = vpop.f32.mrb[0].mxu0
    %v921 = vadd.f32 0.0, %v920
    %922 = vmatprep.mubr.bf16.mxu0 0
    %923 = vmatmul.mubr.bf16.gmra.mrb[0].mxu0 %v561
    %v924 = vpop.f32.mrb[0].mxu0
    %v925 = vadd.f32 0.0, %v924
    %v926 = vpop.f32.mrb[0].mxu0
    %v927 = vadd.f32 0.0, %v926
    %v928 = vpop.f32.mrb[0].mxu0
    %v929 = vadd.f32 0.0, %v928
    %v930 = vpop.f32.mrb[0].mxu0
    %v931 = vadd.f32 0.0, %v930
    %932 = vmatprep.mubr.bf16.mxu0 0
    %933 = vmatmul.mubr.bf16.gmra.mrb[0].mxu0 %v564
    %v934 = vpop.f32.mrb[0].mxu0
    %v935 = vadd.f32 0.0, %v934
    %v936 = vpop.f32.mrb[0].mxu0
    %v937 = vadd.f32 0.0, %v936
    %v938 = vpop.f32.mrb[0].mxu0
    %v939 = vadd.f32 0.0, %v938
    %v940 = vpop.f32.mrb[0].mxu0
    %v941 = vadd.f32 0.0, %v940
    %942 = vmatprep.mubr.bf16.mxu0 0
    %943 = vmatmul.mubr.bf16.gmra.mrb[0].mxu0 %v567
    %v944 = vpop.f32.mrb[0].mxu0
    %v945 = vadd.f32 0.0, %v944
    %v946 = vpop.f32.mrb[0].mxu0
    %v947 = vadd.f32 0.0, %v946
    %v948 = vpop.f32.mrb[0].mxu0
    %v949 = vadd.f32 0.0, %v948
    %v950 = vpop.f32.mrb[0].mxu0
    %v951 = vadd.f32 0.0, %v950
    %952 = vmatprep.mubr.bf16.mxu0 0
    %953 = vmatmul.mubr.bf16.gmra.mrb[0].mxu0 %v570
    %v954 = vpop.f32.mrb[0].mxu0
    %v955 = vadd.f32 0.0, %v954
    %v956 = vpop.f32.mrb[0].mxu0
    %v957 = vadd.f32 0.0, %v956
    %v958 = vpop.f32.mrb[0].mxu0
    %v959 = vadd.f32 0.0, %v958
    %v960 = vpop.f32.mrb[0].mxu0
    %v961 = vadd.f32 0.0, %v960
    %962 = vmatprep.mubr.bf16.mxu0 0
    %963 = vmatmul.mubr.bf16.gmra.mrb[0].mxu0 %v573
    %v964 = vpop.f32.mrb[0].mxu0
    %v965 = vadd.f32 0.0, %v964
    %v966 = vpop.f32.mrb[0].mxu0
    %v967 = vadd.f32 0.0, %v966
    %v968 = vpop.f32.mrb[0].mxu0
    %v969 = vadd.f32 0.0, %v968
    %v970 = vpop.f32.mrb[0].mxu0
    %v971 = vadd.f32 0.0, %v970
    %972 = vmatprep.mubr.bf16.mxu0 0
    %973 = vmatmul.mubr.bf16.gmra.mrb[0].mxu0 %v576
    %v974 = vpop.f32.mrb[0].mxu0
    %v975 = vadd.f32 0.0, %v974
    %v976 = vpop.f32.mrb[0].mxu0
    %v977 = vadd.f32 0.0, %v976
    %v978 = vpop.f32.mrb[0].mxu0
    %v979 = vadd.f32 0.0, %v978
    %v980 = vpop.f32.mrb[0].mxu0
    %v981 = vadd.f32 0.0, %v980
    %982 = vmatprep.mubr.bf16.mxu0 0
    %983 = vmatmul.mubr.bf16.gmra.mrb[0].mxu0 %v579
    %v984 = vpop.f32.mrb[0].mxu0
    %v985 = vadd.f32 0.0, %v984
    %v986 = vpop.f32.mrb[0].mxu0
    %v987 = vadd.f32 0.0, %v986
    %v988 = vpop.f32.mrb[0].mxu0
    %v989 = vadd.f32 0.0, %v988
    %v990 = vpop.f32.mrb[0].mxu0
    %v991 = vadd.f32 0.0, %v990
    %992 = vmatprep.mubr.bf16.mxu0 0
    %993 = vmatmul.mubr.bf16.gmra.mrb[0].mxu0 %v582
    %v994 = vpop.f32.mrb[0].mxu0
    %v995 = vadd.f32 0.0, %v994
    %v996 = vpop.f32.mrb[0].mxu0
    %v997 = vadd.f32 0.0, %v996
    %v998 = vpop.f32.mrb[0].mxu0
    %v999 = vadd.f32 0.0, %v998
    %v1000 = vpop.f32.mrb[0].mxu0
    %v1001 = vadd.f32 0.0, %v1000
    %1002 = vmatprep.mubr.bf16.mxu0 0
    %1003 = vmatmul.mubr.bf16.gmra.mrb[0].mxu0 %v585
    %v1004 = vpop.f32.mrb[0].mxu0
    %v1005 = vadd.f32 0.0, %v1004
    %v1006 = vpop.f32.mrb[0].mxu0
    %v1007 = vadd.f32 0.0, %v1006
    %v1008 = vpop.f32.mrb[0].mxu0
    %v1009 = vadd.f32 0.0, %v1008
    %v1010 = vpop.f32.mrb[0].mxu0
    %v1011 = vadd.f32 0.0, %v1010
    %1012 = vmatprep.mubr.bf16.mxu0 0
    %1013 = vmatmul.mubr.bf16.gmra.mrb[0].mxu0 %v588
    %v1014 = vpop.f32.mrb[0].mxu0
    %v1015 = vadd.f32 0.0, %v1014
    %v1016 = vpop.f32.mrb[0].mxu0
    %v1017 = vadd.f32 0.0, %v1016
    %v1018 = vpop.f32.mrb[0].mxu0
    %v1019 = vadd.f32 0.0, %v1018
    %v1020 = vpop.f32.mrb[0].mxu0
    %v1021 = vadd.f32 0.0, %v1020
    %1022 = vdwg.mxu0
    %v1028 = vunpack.c.l.b16 %v398
    %v1029 = vunpack.c.h.b16 %v398
    %v1030 = vunpack.c.l.b16 %v399
    %v1031 = vunpack.c.h.b16 %v399
    %v1032 = vunpack.c.l.b16 %v400
    %v1033 = vunpack.c.h.b16 %v400
    %v1034 = vunpack.c.l.b16 %v401
    %v1035 = vunpack.c.h.b16 %v401
    %v1036 = vunpack.c.l.b16 %v402
    %v1037 = vunpack.c.h.b16 %v402
    %v1038 = vpack.c.b16 %v1030, %v1028
    %v1039 = vpack.c.b16 %v1031, %v1029
    %v1040 = vpack.c.b16 %v1034, %v1032
    %v1041 = vpack.c.b16 %v1035, %v1033
    %v1042 = vpack.c.b16 %v1036, %v1036
    %v1043 = vpack.c.b16 %v1037, %v1037
    %v1049 = vsel %vm171, %v359, 0
    %v1052 = vsel %vm171, %v360, 0
    %v1055 = vsel %vm171, %v361, 0
    %v1058 = vsel %vm171, %v362, 0
    %v1061 = vsel %vm171, %v363, 0
    %v1064 = vsel %vm171, %v364, 0
    %v1067 = vsel %vm171, %v365, 0
    %v1070 = vsel %vm171, %v366, 0
    %v1073 = vsel %vm171, %v367, 0
    %v1076 = vsel %vm171, %v368, 0
    %v1079 = vsel %vm171, %v369, 0
    %v1082 = vsel %vm171, %v370, 0
    %v1085 = vsel %vm171, %v371, 0
    %v1088 = vsel %vm171, %v372, 0
    %v1091 = vsel %vm171, %v373, 0
    %v1094 = vsel %vm171, %v374, 0
    %v1097 = vsel %vm171, %v375, 0
    %v1100 = vsel %vm171, %v376, 0
    %v1103 = vsel %vm171, %v377, 0
    %v1106 = vsel %vm171, %v378, 0
    %v1109 = vsel %vm171, %v379, 0
    %v1112 = vsel %vm171, %v380, 0
    %v1115 = vsel %vm171, %v381, 0
    %v1118 = vsel %vm171, %v382, 0
    %v1121 = vsel %vm171, %v383, 0
    %v1124 = vsel %vm171, %v384, 0
    %v1127 = vsel %vm171, %v385, 0
    %v1130 = vsel %vm171, %v386, 0
    %v1133 = vsel %vm171, %v387, 0
    %v1136 = vsel %vm171, %v388, 0
    %v1139 = vsel %vm171, %v389, 0
    %v1142 = vsel %vm171, %v390, 0
    %v1145 = vsel %vm171, %v391, 0
    %v1148 = vsel %vm171, %v392, 0
    %v1151 = vsel %vm171, %v393, 0
    %v1154 = vsel %vm171, %v394, 0
    %v1157 = vsel %vm171, %v395, 0
    %v1160 = vsel %vm171, %v396, 0
    %v1163 = vsel %vm171, %v397, 0
    %v1166 = vand.u32 %v1042, %v593
    %v1169 = vand.u32 %v1043, %v593
    %1171 = vmatprep.subr.bf16.mxu0 %v1039
    %1172 = vmatpush1.bf16.msra.mxu0 %v1038
    %1173 = vmatprep.subr.bf16.mxu0 %v1041
    %1174 = vmatpush1.bf16.msra.mxu0 %v1040
    %1175 = vmatprep.subr.bf16.mxu0 %v1169
    %1176 = vmatpush1.bf16.msra.mxu0 %v1166
    %1177 = vmatprep.subr.bf16.mxu0 0
    %1178 = vmatpush1.bf16.msra.mxu0 0
    %1179 = vmatprep.subr.bf16.mxu0 0
    %1180 = vmatpush1.bf16.msra.mxu0 0
    %1181 = vmatprep.subr.bf16.mxu0 0
    %1182 = vmatpush1.bf16.msra.mxu0 0
    %1183 = vmatprep.subr.bf16.mxu0 0
    %1184 = vmatpush1.bf16.msra.mxu0 0
    %1185 = vmatprep.subr.bf16.mxu0 0
    %1186 = vmatpush1.bf16.msra.mxu0 0
    %1187 = vmatprep.subr.bf16.mxu0 0
    %1188 = vmatpush1.bf16.msra.mxu0 0
    %1189 = vmatprep.subr.bf16.mxu0 0
    %1190 = vmatpush1.bf16.msra.mxu0 0
    %1191 = vmatprep.subr.bf16.mxu0 0
    %1192 = vmatpush1.bf16.msra.mxu0 0
    %1193 = vmatprep.subr.bf16.mxu0 0
    %1194 = vmatpush1.bf16.msra.mxu0 0
    %1195 = vmatprep.subr.bf16.mxu0 0
    %1196 = vmatpush1.bf16.msra.mxu0 0
    %1197 = vmatprep.subr.bf16.mxu0 0
    %1198 = vmatpush1.bf16.msra.mxu0 0
    %1199 = vmatprep.subr.bf16.mxu0 0
    %1200 = vmatpush1.bf16.msra.mxu0 0
    %1201 = vmatprep.subr.bf16.mxu0 0
    %1202 = vmatpush1.bf16.msra.mxu0 0
    %1203 = vmatprep.mubr.bf16.mxu0 0
    %1204 = vmatmul.mubr.bf16.gmra.mrb[0].mxu0 %v1049
    %v1205 = vpop.f32.mrb[0].mxu0
    %v1206 = vadd.f32 %v635, %v1205
    %v1207 = vpop.f32.mrb[0].mxu0
    %v1208 = vadd.f32 %v637, %v1207
    %v1209 = vpop.f32.mrb[0].mxu0
    %v1210 = vadd.f32 %v639, %v1209
    %v1211 = vpop.f32.mrb[0].mxu0
    %v1212 = vadd.f32 %v641, %v1211
    %1213 = vmatprep.mubr.bf16.mxu0 0
    %1214 = vmatmul.mubr.bf16.gmra.mrb[0].mxu0 %v1052
    %v1215 = vpop.f32.mrb[0].mxu0
    %v1216 = vadd.f32 %v645, %v1215
    %v1217 = vpop.f32.mrb[0].mxu0
    %v1218 = vadd.f32 %v647, %v1217
    %v1219 = vpop.f32.mrb[0].mxu0
    %v1220 = vadd.f32 %v649, %v1219
    %v1221 = vpop.f32.mrb[0].mxu0
    %v1222 = vadd.f32 %v651, %v1221
    %1223 = vmatprep.mubr.bf16.mxu0 0
    %1224 = vmatmul.mubr.bf16.gmra.mrb[0].mxu0 %v1055
    %v1225 = vpop.f32.mrb[0].mxu0
    %v1226 = vadd.f32 %v655, %v1225
    %v1227 = vpop.f32.mrb[0].mxu0
    %v1228 = vadd.f32 %v657, %v1227
    %v1229 = vpop.f32.mrb[0].mxu0
    %v1230 = vadd.f32 %v659, %v1229
    %v1231 = vpop.f32.mrb[0].mxu0
    %v1232 = vadd.f32 %v661, %v1231
    %1233 = vmatprep.mubr.bf16.mxu0 0
    %1234 = vmatmul.mubr.bf16.gmra.mrb[0].mxu0 %v1058
    %v1235 = vpop.f32.mrb[0].mxu0
    %v1236 = vadd.f32 %v665, %v1235
    %v1237 = vpop.f32.mrb[0].mxu0
    %v1238 = vadd.f32 %v667, %v1237
    %v1239 = vpop.f32.mrb[0].mxu0
    %v1240 = vadd.f32 %v669, %v1239
    %v1241 = vpop.f32.mrb[0].mxu0
    %v1242 = vadd.f32 %v671, %v1241
    %1243 = vmatprep.mubr.bf16.mxu0 0
    %1244 = vmatmul.mubr.bf16.gmra.mrb[0].mxu0 %v1061
    %v1245 = vpop.f32.mrb[0].mxu0
    %v1246 = vadd.f32 %v675, %v1245
    %v1247 = vpop.f32.mrb[0].mxu0
    %v1248 = vadd.f32 %v677, %v1247
    %v1249 = vpop.f32.mrb[0].mxu0
    %v1250 = vadd.f32 %v679, %v1249
    %v1251 = vpop.f32.mrb[0].mxu0
    %v1252 = vadd.f32 %v681, %v1251
    %1253 = vmatprep.mubr.bf16.mxu0 0
    %1254 = vmatmul.mubr.bf16.gmra.mrb[0].mxu0 %v1064
    %v1255 = vpop.f32.mrb[0].mxu0
    %v1256 = vadd.f32 %v685, %v1255
    %v1257 = vpop.f32.mrb[0].mxu0
    %v1258 = vadd.f32 %v687, %v1257
    %v1259 = vpop.f32.mrb[0].mxu0
    %v1260 = vadd.f32 %v689, %v1259
    %v1261 = vpop.f32.mrb[0].mxu0
    %v1262 = vadd.f32 %v691, %v1261
    %1263 = vmatprep.mubr.bf16.mxu0 0
    %1264 = vmatmul.mubr.bf16.gmra.mrb[0].mxu0 %v1067
    %v1265 = vpop.f32.mrb[0].mxu0
    %v1266 = vadd.f32 %v695, %v1265
    %v1267 = vpop.f32.mrb[0].mxu0
    %v1268 = vadd.f32 %v697, %v1267
    %v1269 = vpop.f32.mrb[0].mxu0
    %v1270 = vadd.f32 %v699, %v1269
    %v1271 = vpop.f32.mrb[0].mxu0
    %v1272 = vadd.f32 %v701, %v1271
    %1273 = vmatprep.mubr.bf16.mxu0 0
    %1274 = vmatmul.mubr.bf16.gmra.mrb[0].mxu0 %v1070
    %v1275 = vpop.f32.mrb[0].mxu0
    %v1276 = vadd.f32 %v705, %v1275
    %v1277 = vpop.f32.mrb[0].mxu0
    %v1278 = vadd.f32 %v707, %v1277
    %v1279 = vpop.f32.mrb[0].mxu0
    %v1280 = vadd.f32 %v709, %v1279
    %v1281 = vpop.f32.mrb[0].mxu0
    %v1282 = vadd.f32 %v711, %v1281
    %1283 = vmatprep.mubr.bf16.mxu0 0
    %1284 = vmatmul.mubr.bf16.gmra.mrb[0].mxu0 %v1073
    %v1285 = vpop.f32.mrb[0].mxu0
    %v1286 = vadd.f32 %v715, %v1285
    %v1287 = vpop.f32.mrb[0].mxu0
    %v1288 = vadd.f32 %v717, %v1287
    %v1289 = vpop.f32.mrb[0].mxu0
    %v1290 = vadd.f32 %v719, %v1289
    %v1291 = vpop.f32.mrb[0].mxu0
    %v1292 = vadd.f32 %v721, %v1291
    %1293 = vmatprep.mubr.bf16.mxu0 0
    %1294 = vmatmul.mubr.bf16.gmra.mrb[0].mxu0 %v1076
    %v1295 = vpop.f32.mrb[0].mxu0
    %v1296 = vadd.f32 %v725, %v1295
    %v1297 = vpop.f32.mrb[0].mxu0
    %v1298 = vadd.f32 %v727, %v1297
    %v1299 = vpop.f32.mrb[0].mxu0
    %v1300 = vadd.f32 %v729, %v1299
    %v1301 = vpop.f32.mrb[0].mxu0
    %v1302 = vadd.f32 %v731, %v1301
    %1303 = vmatprep.mubr.bf16.mxu0 0
    %1304 = vmatmul.mubr.bf16.gmra.mrb[0].mxu0 %v1079
    %v1305 = vpop.f32.mrb[0].mxu0
    %v1306 = vadd.f32 %v735, %v1305
    %v1307 = vpop.f32.mrb[0].mxu0
    %v1308 = vadd.f32 %v737, %v1307
    %v1309 = vpop.f32.mrb[0].mxu0
    %v1310 = vadd.f32 %v739, %v1309
    %v1311 = vpop.f32.mrb[0].mxu0
    %v1312 = vadd.f32 %v741, %v1311
    %1313 = vmatprep.mubr.bf16.mxu0 0
    %1314 = vmatmul.mubr.bf16.gmra.mrb[0].mxu0 %v1082
    %v1315 = vpop.f32.mrb[0].mxu0
    %v1316 = vadd.f32 %v745, %v1315
    %v1317 = vpop.f32.mrb[0].mxu0
    %v1318 = vadd.f32 %v747, %v1317
    %v1319 = vpop.f32.mrb[0].mxu0
    %v1320 = vadd.f32 %v749, %v1319
    %v1321 = vpop.f32.mrb[0].mxu0
    %v1322 = vadd.f32 %v751, %v1321
    %1323 = vmatprep.mubr.bf16.mxu0 0
    %1324 = vmatmul.mubr.bf16.gmra.mrb[0].mxu0 %v1085
    %v1325 = vpop.f32.mrb[0].mxu0
    %v1326 = vadd.f32 %v755, %v1325
    %v1327 = vpop.f32.mrb[0].mxu0
    %v1328 = vadd.f32 %v757, %v1327
    %v1329 = vpop.f32.mrb[0].mxu0
    %v1330 = vadd.f32 %v759, %v1329
    %v1331 = vpop.f32.mrb[0].mxu0
    %v1332 = vadd.f32 %v761, %v1331
    %1333 = vmatprep.mubr.bf16.mxu0 0
    %1334 = vmatmul.mubr.bf16.gmra.mrb[0].mxu0 %v1088
    %v1335 = vpop.f32.mrb[0].mxu0
    %v1336 = vadd.f32 %v765, %v1335
    %v1337 = vpop.f32.mrb[0].mxu0
    %v1338 = vadd.f32 %v767, %v1337
    %v1339 = vpop.f32.mrb[0].mxu0
    %v1340 = vadd.f32 %v769, %v1339
    %v1341 = vpop.f32.mrb[0].mxu0
    %v1342 = vadd.f32 %v771, %v1341
    %1343 = vmatprep.mubr.bf16.mxu0 0
    %1344 = vmatmul.mubr.bf16.gmra.mrb[0].mxu0 %v1091
    %v1345 = vpop.f32.mrb[0].mxu0
    %v1346 = vadd.f32 %v775, %v1345
    %v1347 = vpop.f32.mrb[0].mxu0
    %v1348 = vadd.f32 %v777, %v1347
    %v1349 = vpop.f32.mrb[0].mxu0
    %v1350 = vadd.f32 %v779, %v1349
    %v1351 = vpop.f32.mrb[0].mxu0
    %v1352 = vadd.f32 %v781, %v1351
    %1353 = vmatprep.mubr.bf16.mxu0 0
    %1354 = vmatmul.mubr.bf16.gmra.mrb[0].mxu0 %v1094
    %v1355 = vpop.f32.mrb[0].mxu0
    %v1356 = vadd.f32 %v785, %v1355
    %v1357 = vpop.f32.mrb[0].mxu0
    %v1358 = vadd.f32 %v787, %v1357
    %v1359 = vpop.f32.mrb[0].mxu0
    %v1360 = vadd.f32 %v789, %v1359
    %v1361 = vpop.f32.mrb[0].mxu0
    %v1362 = vadd.f32 %v791, %v1361
    %1363 = vmatprep.mubr.bf16.mxu0 0
    %1364 = vmatmul.mubr.bf16.gmra.mrb[0].mxu0 %v1097
    %v1365 = vpop.f32.mrb[0].mxu0
    %v1366 = vadd.f32 %v795, %v1365
    %v1367 = vpop.f32.mrb[0].mxu0
    %v1368 = vadd.f32 %v797, %v1367
    %v1369 = vpop.f32.mrb[0].mxu0
    %v1370 = vadd.f32 %v799, %v1369
    %v1371 = vpop.f32.mrb[0].mxu0
    %v1372 = vadd.f32 %v801, %v1371
    %1373 = vmatprep.mubr.bf16.mxu0 0
    %1374 = vmatmul.mubr.bf16.gmra.mrb[0].mxu0 %v1100
    %v1375 = vpop.f32.mrb[0].mxu0
    %v1376 = vadd.f32 %v805, %v1375
    %v1377 = vpop.f32.mrb[0].mxu0
    %v1378 = vadd.f32 %v807, %v1377
    %v1379 = vpop.f32.mrb[0].mxu0
    %v1380 = vadd.f32 %v809, %v1379
    %v1381 = vpop.f32.mrb[0].mxu0
    %v1382 = vadd.f32 %v811, %v1381
    %1383 = vmatprep.mubr.bf16.mxu0 0
    %1384 = vmatmul.mubr.bf16.gmra.mrb[0].mxu0 %v1103
    %v1385 = vpop.f32.mrb[0].mxu0
    %v1386 = vadd.f32 %v815, %v1385
    %v1387 = vpop.f32.mrb[0].mxu0
    %v1388 = vadd.f32 %v817, %v1387
    %v1389 = vpop.f32.mrb[0].mxu0
    %v1390 = vadd.f32 %v819, %v1389
    %v1391 = vpop.f32.mrb[0].mxu0
    %v1392 = vadd.f32 %v821, %v1391
    %1393 = vmatprep.mubr.bf16.mxu0 0
    %1394 = vmatmul.mubr.bf16.gmra.mrb[0].mxu0 %v1106
    %v1395 = vpop.f32.mrb[0].mxu0
    %v1396 = vadd.f32 %v825, %v1395
    %v1397 = vpop.f32.mrb[0].mxu0
    %v1398 = vadd.f32 %v827, %v1397
    %v1399 = vpop.f32.mrb[0].mxu0
    %v1400 = vadd.f32 %v829, %v1399
    %v1401 = vpop.f32.mrb[0].mxu0
    %v1402 = vadd.f32 %v831, %v1401
    %1403 = vmatprep.mubr.bf16.mxu0 0
    %1404 = vmatmul.mubr.bf16.gmra.mrb[0].mxu0 %v1109
    %v1405 = vpop.f32.mrb[0].mxu0
    %v1406 = vadd.f32 %v835, %v1405
    %v1407 = vpop.f32.mrb[0].mxu0
    %v1408 = vadd.f32 %v837, %v1407
    %v1409 = vpop.f32.mrb[0].mxu0
    %v1410 = vadd.f32 %v839, %v1409
    %v1411 = vpop.f32.mrb[0].mxu0
    %v1412 = vadd.f32 %v841, %v1411
    %1413 = vmatprep.mubr.bf16.mxu0 0
    %1414 = vmatmul.mubr.bf16.gmra.mrb[0].mxu0 %v1112
    %v1415 = vpop.f32.mrb[0].mxu0
    %v1416 = vadd.f32 %v845, %v1415
    %v1417 = vpop.f32.mrb[0].mxu0
    %v1418 = vadd.f32 %v847, %v1417
    %v1419 = vpop.f32.mrb[0].mxu0
    %v1420 = vadd.f32 %v849, %v1419
    %v1421 = vpop.f32.mrb[0].mxu0
    %v1422 = vadd.f32 %v851, %v1421
    %1423 = vmatprep.mubr.bf16.mxu0 0
    %1424 = vmatmul.mubr.bf16.gmra.mrb[0].mxu0 %v1115
    %v1425 = vpop.f32.mrb[0].mxu0
    %v1426 = vadd.f32 %v855, %v1425
    %v1427 = vpop.f32.mrb[0].mxu0
    %v1428 = vadd.f32 %v857, %v1427
    %v1429 = vpop.f32.mrb[0].mxu0
    %v1430 = vadd.f32 %v859, %v1429
    %v1431 = vpop.f32.mrb[0].mxu0
    %v1432 = vadd.f32 %v861, %v1431
    %1433 = vmatprep.mubr.bf16.mxu0 0
    %1434 = vmatmul.mubr.bf16.gmra.mrb[0].mxu0 %v1118
    %v1435 = vpop.f32.mrb[0].mxu0
    %v1436 = vadd.f32 %v865, %v1435
    %v1437 = vpop.f32.mrb[0].mxu0
    %v1438 = vadd.f32 %v867, %v1437
    %v1439 = vpop.f32.mrb[0].mxu0
    %v1440 = vadd.f32 %v869, %v1439
    %v1441 = vpop.f32.mrb[0].mxu0
    %v1442 = vadd.f32 %v871, %v1441
    %1443 = vmatprep.mubr.bf16.mxu0 0
    %1444 = vmatmul.mubr.bf16.gmra.mrb[0].mxu0 %v1121
    %v1445 = vpop.f32.mrb[0].mxu0
    %v1446 = vadd.f32 %v875, %v1445
    %v1447 = vpop.f32.mrb[0].mxu0
    %v1448 = vadd.f32 %v877, %v1447
    %v1449 = vpop.f32.mrb[0].mxu0
    %v1450 = vadd.f32 %v879, %v1449
    %v1451 = vpop.f32.mrb[0].mxu0
    %v1452 = vadd.f32 %v881, %v1451
    %1453 = vmatprep.mubr.bf16.mxu0 0
    %1454 = vmatmul.mubr.bf16.gmra.mrb[0].mxu0 %v1124
    %v1455 = vpop.f32.mrb[0].mxu0
    %v1456 = vadd.f32 %v885, %v1455
    %v1457 = vpop.f32.mrb[0].mxu0
    %v1458 = vadd.f32 %v887, %v1457
    %v1459 = vpop.f32.mrb[0].mxu0
    %v1460 = vadd.f32 %v889, %v1459
    %v1461 = vpop.f32.mrb[0].mxu0
    %v1462 = vadd.f32 %v891, %v1461
    %1463 = vmatprep.mubr.bf16.mxu0 0
    %1464 = vmatmul.mubr.bf16.gmra.mrb[0].mxu0 %v1127
    %v1465 = vpop.f32.mrb[0].mxu0
    %v1466 = vadd.f32 %v895, %v1465
    %v1467 = vpop.f32.mrb[0].mxu0
    %v1468 = vadd.f32 %v897, %v1467
    %v1469 = vpop.f32.mrb[0].mxu0
    %v1470 = vadd.f32 %v899, %v1469
    %v1471 = vpop.f32.mrb[0].mxu0
    %v1472 = vadd.f32 %v901, %v1471
    %1473 = vmatprep.mubr.bf16.mxu0 0
    %1474 = vmatmul.mubr.bf16.gmra.mrb[0].mxu0 %v1130
    %v1475 = vpop.f32.mrb[0].mxu0
    %v1476 = vadd.f32 %v905, %v1475
    %v1477 = vpop.f32.mrb[0].mxu0
    %v1478 = vadd.f32 %v907, %v1477
    %v1479 = vpop.f32.mrb[0].mxu0
    %v1480 = vadd.f32 %v909, %v1479
    %v1481 = vpop.f32.mrb[0].mxu0
    %v1482 = vadd.f32 %v911, %v1481
    %1483 = vmatprep.mubr.bf16.mxu0 0
    %1484 = vmatmul.mubr.bf16.gmra.mrb[0].mxu0 %v1133
    %v1485 = vpop.f32.mrb[0].mxu0
    %v1486 = vadd.f32 %v915, %v1485
    %v1487 = vpop.f32.mrb[0].mxu0
    %v1488 = vadd.f32 %v917, %v1487
    %v1489 = vpop.f32.mrb[0].mxu0
    %v1490 = vadd.f32 %v919, %v1489
    %v1491 = vpop.f32.mrb[0].mxu0
    %v1492 = vadd.f32 %v921, %v1491
    %1493 = vmatprep.mubr.bf16.mxu0 0
    %1494 = vmatmul.mubr.bf16.gmra.mrb[0].mxu0 %v1136
    %v1495 = vpop.f32.mrb[0].mxu0
    %v1496 = vadd.f32 %v925, %v1495
    %v1497 = vpop.f32.mrb[0].mxu0
    %v1498 = vadd.f32 %v927, %v1497
    %v1499 = vpop.f32.mrb[0].mxu0
    %v1500 = vadd.f32 %v929, %v1499
    %v1501 = vpop.f32.mrb[0].mxu0
    %v1502 = vadd.f32 %v931, %v1501
    %1503 = vmatprep.mubr.bf16.mxu0 0
    %1504 = vmatmul.mubr.bf16.gmra.mrb[0].mxu0 %v1139
    %v1505 = vpop.f32.mrb[0].mxu0
    %v1506 = vadd.f32 %v935, %v1505
    %v1507 = vpop.f32.mrb[0].mxu0
    %v1508 = vadd.f32 %v937, %v1507
    %v1509 = vpop.f32.mrb[0].mxu0
    %v1510 = vadd.f32 %v939, %v1509
    %v1511 = vpop.f32.mrb[0].mxu0
    %v1512 = vadd.f32 %v941, %v1511
    %1513 = vmatprep.mubr.bf16.mxu0 0
    %1514 = vmatmul.mubr.bf16.gmra.mrb[0].mxu0 %v1142
    %v1515 = vpop.f32.mrb[0].mxu0
    %v1516 = vadd.f32 %v945, %v1515
    %v1517 = vpop.f32.mrb[0].mxu0
    %v1518 = vadd.f32 %v947, %v1517
    %v1519 = vpop.f32.mrb[0].mxu0
    %v1520 = vadd.f32 %v949, %v1519
    %v1521 = vpop.f32.mrb[0].mxu0
    %v1522 = vadd.f32 %v951, %v1521
    %1523 = vmatprep.mubr.bf16.mxu0 0
    %1524 = vmatmul.mubr.bf16.gmra.mrb[0].mxu0 %v1145
    %v1525 = vpop.f32.mrb[0].mxu0
    %v1526 = vadd.f32 %v955, %v1525
    %v1527 = vpop.f32.mrb[0].mxu0
    %v1528 = vadd.f32 %v957, %v1527
    %v1529 = vpop.f32.mrb[0].mxu0
    %v1530 = vadd.f32 %v959, %v1529
    %v1531 = vpop.f32.mrb[0].mxu0
    %v1532 = vadd.f32 %v961, %v1531
    %1533 = vmatprep.mubr.bf16.mxu0 0
    %1534 = vmatmul.mubr.bf16.gmra.mrb[0].mxu0 %v1148
    %v1535 = vpop.f32.mrb[0].mxu0
    %v1536 = vadd.f32 %v965, %v1535
    %v1537 = vpop.f32.mrb[0].mxu0
    %v1538 = vadd.f32 %v967, %v1537
    %v1539 = vpop.f32.mrb[0].mxu0
    %v1540 = vadd.f32 %v969, %v1539
    %v1541 = vpop.f32.mrb[0].mxu0
    %v1542 = vadd.f32 %v971, %v1541
    %1543 = vmatprep.mubr.bf16.mxu0 0
    %1544 = vmatmul.mubr.bf16.gmra.mrb[0].mxu0 %v1151
    %v1545 = vpop.f32.mrb[0].mxu0
    %v1546 = vadd.f32 %v975, %v1545
    %v1547 = vpop.f32.mrb[0].mxu0
    %v1548 = vadd.f32 %v977, %v1547
    %v1549 = vpop.f32.mrb[0].mxu0
    %v1550 = vadd.f32 %v979, %v1549
    %v1551 = vpop.f32.mrb[0].mxu0
    %v1552 = vadd.f32 %v981, %v1551
    %1553 = vmatprep.mubr.bf16.mxu0 0
    %1554 = vmatmul.mubr.bf16.gmra.mrb[0].mxu0 %v1154
    %v1555 = vpop.f32.mrb[0].mxu0
    %v1556 = vadd.f32 %v985, %v1555
    %v1557 = vpop.f32.mrb[0].mxu0
    %v1558 = vadd.f32 %v987, %v1557
    %v1559 = vpop.f32.mrb[0].mxu0
    %v1560 = vadd.f32 %v989, %v1559
    %v1561 = vpop.f32.mrb[0].mxu0
    %v1562 = vadd.f32 %v991, %v1561
    %1563 = vmatprep.mubr.bf16.mxu0 0
    %1564 = vmatmul.mubr.bf16.gmra.mrb[0].mxu0 %v1157
    %v1565 = vpop.f32.mrb[0].mxu0
    %v1566 = vadd.f32 %v995, %v1565
    %v1567 = vpop.f32.mrb[0].mxu0
    %v1568 = vadd.f32 %v997, %v1567
    %v1569 = vpop.f32.mrb[0].mxu0
    %v1570 = vadd.f32 %v999, %v1569
    %v1571 = vpop.f32.mrb[0].mxu0
    %v1572 = vadd.f32 %v1001, %v1571
    %1573 = vmatprep.mubr.bf16.mxu0 0
    %1574 = vmatmul.mubr.bf16.gmra.mrb[0].mxu0 %v1160
    %v1575 = vpop.f32.mrb[0].mxu0
    %v1576 = vadd.f32 %v1005, %v1575
    %v1577 = vpop.f32.mrb[0].mxu0
    %v1578 = vadd.f32 %v1007, %v1577
    %v1579 = vpop.f32.mrb[0].mxu0
    %v1580 = vadd.f32 %v1009, %v1579
    %v1581 = vpop.f32.mrb[0].mxu0
    %v1582 = vadd.f32 %v1011, %v1581
    %1583 = vmatprep.mubr.bf16.mxu0 0
    %1584 = vmatmul.mubr.bf16.gmra.mrb[0].mxu0 %v1163
    %v1585 = vpop.f32.mrb[0].mxu0
    %v1586 = vadd.f32 %v1015, %v1585
    %v1587 = vpop.f32.mrb[0].mxu0
    %v1588 = vadd.f32 %v1017, %v1587
    %v1589 = vpop.f32.mrb[0].mxu0
    %v1590 = vadd.f32 %v1019, %v1589
    %v1591 = vpop.f32.mrb[0].mxu0
    %v1592 = vadd.f32 %v1021, %v1591
    %1593 = vdwg.mxu0
    %s1594 = scalar_lea.vmem [#allocation2], 16
    %v1595 = vld [vmem:[%s1594] sm:$0xff]
    %v1596 = vld [vmem:[%s1594 + $0x8] sm:$0xff]
    %v1597 = vld [vmem:[%s1594 + $0x10] sm:$0xff]
    %v1598 = vld [vmem:[%s1594 + $0x18] sm:$0xff]
    %v1599 = vld [vmem:[%s1594 + $0x20] sm:$0xff]
    %v1600 = vld [vmem:[%s1594 + $0x28] sm:$0xff]
    %v1601 = vld [vmem:[%s1594 + $0x30] sm:$0xff]
    %v1602 = vld [vmem:[%s1594 + $0x38] sm:$0xff]
    %v1603 = vld [vmem:[%s1594 + $0x40] sm:$0xff]
    %v1604 = vld [vmem:[%s1594 + $0x48] sm:$0xff]
    %v1605 = vld [vmem:[%s1594 + $0x50] sm:$0xff]
    %v1606 = vld [vmem:[%s1594 + $0x58] sm:$0xff]
    %v1607 = vld [vmem:[%s1594 + $0x60] sm:$0xff]
    %v1608 = vld [vmem:[%s1594 + $0x68] sm:$0xff]
    %v1609 = vld [vmem:[%s1594 + $0x70] sm:$0xff]
    %v1610 = vld [vmem:[%s1594 + $0x78] sm:$0xff]
    %v1611 = vld [vmem:[%s1594 + $0x80] sm:$0xff]
    %v1612 = vld [vmem:[%s1594 + $0x88] sm:$0xff]
    %v1613 = vld [vmem:[%s1594 + $0x90] sm:$0xff]
    %v1614 = vld [vmem:[%s1594 + $0x98] sm:$0xff]
    %v1615 = vld [vmem:[%s1594 + $0xa0] sm:$0xff]
    %v1616 = vld [vmem:[%s1594 + $0xa8] sm:$0xff]
    %v1617 = vld [vmem:[%s1594 + $0xb0] sm:$0xff]
    %v1618 = vld [vmem:[%s1594 + $0xb8] sm:$0xff]
    %v1619 = vld [vmem:[%s1594 + $0xc0] sm:$0xff]
    %v1620 = vld [vmem:[%s1594 + $0xc8] sm:$0xff]
    %v1621 = vld [vmem:[%s1594 + $0xd0] sm:$0xff]
    %v1622 = vld [vmem:[%s1594 + $0xd8] sm:$0xff]
    %v1623 = vld [vmem:[%s1594 + $0xe0] sm:$0xff]
    %v1624 = vld [vmem:[%s1594 + $0xe8] sm:$0xff]
    %v1625 = vld [vmem:[%s1594 + $0xf0] sm:$0xff]
    %v1626 = vld [vmem:[%s1594 + $0xf8] sm:$0xff]
    %v1627 = vld [vmem:[%s1594 + $0x100] sm:$0xff]
    %v1628 = vld [vmem:[%s1594 + $0x108] sm:$0xff]
    %v1629 = vld [vmem:[%s1594 + $0x110] sm:$0xff]
    %v1630 = vld [vmem:[%s1594 + $0x118] sm:$0xff]
    %v1631 = vld [vmem:[%s1594 + $0x120] sm:$0xff]
    %v1632 = vld [vmem:[%s1594 + $0x128] sm:$0xff]
    %v1633 = vld [vmem:[%s1594 + $0x130] sm:$0xff]
    %s1634 = scalar_lea.vmem [#allocation8], 80
    %v1635 = vld [vmem:[%s1634] sm:$0xff]
    %v1636 = vld [vmem:[%s1634 + $0x8] sm:$0xff]
    %v1637 = vld [vmem:[%s1634 + $0x10] sm:$0xff]
    %v1638 = vld [vmem:[%s1634 + $0x18] sm:$0xff]
    %v1639 = vld [vmem:[%s1634 + $0x20] sm:$0xff]
    %v1645 = vunpack.c.l.b16 %v1635
    %v1646 = vunpack.c.h.b16 %v1635
    %v1647 = vunpack.c.l.b16 %v1636
    %v1648 = vunpack.c.h.b16 %v1636
    %v1649 = vunpack.c.l.b16 %v1637
    %v1650 = vunpack.c.h.b16 %v1637
    %v1651 = vunpack.c.l.b16 %v1638
    %v1652 = vunpack.c.h.b16 %v1638
    %v1653 = vunpack.c.l.b16 %v1639
    %v1654 = vunpack.c.h.b16 %v1639
    %v1655 = vpack.c.b16 %v1647, %v1645
    %v1656 = vpack.c.b16 %v1648, %v1646
    %v1657 = vpack.c.b16 %v1651, %v1649
    %v1658 = vpack.c.b16 %v1652, %v1650
    %v1659 = vpack.c.b16 %v1653, %v1653
    %v1660 = vpack.c.b16 %v1654, %v1654
    %v1666 = vsel %vm171, %v1595, 0
    %v1669 = vsel %vm171, %v1596, 0
    %v1672 = vsel %vm171, %v1597, 0
    %v1675 = vsel %vm171, %v1598, 0
    %v1678 = vsel %vm171, %v1599, 0
    %v1681 = vsel %vm171, %v1600, 0
    %v1684 = vsel %vm171, %v1601, 0
    %v1687 = vsel %vm171, %v1602, 0
    %v1690 = vsel %vm171, %v1603, 0
    %v1693 = vsel %vm171, %v1604, 0
    %v1696 = vsel %vm171, %v1605, 0
    %v1699 = vsel %vm171, %v1606, 0
    %v1702 = vsel %vm171, %v1607, 0
    %v1705 = vsel %vm171, %v1608, 0
    %v1708 = vsel %vm171, %v1609, 0
    %v1711 = vsel %vm171, %v1610, 0
    %v1714 = vsel %vm171, %v1611, 0
    %v1717 = vsel %vm171, %v1612, 0
    %v1720 = vsel %vm171, %v1613, 0
    %v1723 = vsel %vm171, %v1614, 0
    %v1726 = vsel %vm171, %v1615, 0
    %v1729 = vsel %vm171, %v1616, 0
    %v1732 = vsel %vm171, %v1617, 0
    %v1735 = vsel %vm171, %v1618, 0
    %v1738 = vsel %vm171, %v1619, 0
    %v1741 = vsel %vm171, %v1620, 0
    %v1744 = vsel %vm171, %v1621, 0
    %v1747 = vsel %vm171, %v1622, 0
    %v1750 = vsel %vm171, %v1623, 0
    %v1753 = vsel %vm171, %v1624, 0
    %v1756 = vsel %vm171, %v1625, 0
    %v1759 = vsel %vm171, %v1626, 0
    %v1762 = vsel %vm171, %v1627, 0
    %v1765 = vsel %vm171, %v1628, 0
    %v1768 = vsel %vm171, %v1629, 0
    %v1771 = vsel %vm171, %v1630, 0
    %v1774 = vsel %vm171, %v1631, 0
    %v1777 = vsel %vm171, %v1632, 0
    %v1780 = vsel %vm171, %v1633, 0
    %v1783 = vand.u32 %v1659, %v593
    %v1786 = vand.u32 %v1660, %v593
    %1788 = vmatprep.subr.bf16.mxu0 %v1656
    %1789 = vmatpush1.bf16.msra.mxu0 %v1655
    %1790 = vmatprep.subr.bf16.mxu0 %v1658
    %1791 = vmatpush1.bf16.msra.mxu0 %v1657
    %1792 = vmatprep.subr.bf16.mxu0 %v1786
    %1793 = vmatpush1.bf16.msra.mxu0 %v1783
    %1794 = vmatprep.subr.bf16.mxu0 0
    %1795 = vmatpush1.bf16.msra.mxu0 0
    %1796 = vmatprep.subr.bf16.mxu0 0
    %1797 = vmatpush1.bf16.msra.mxu0 0
    %1798 = vmatprep.subr.bf16.mxu0 0
    %1799 = vmatpush1.bf16.msra.mxu0 0
    %1800 = vmatprep.subr.bf16.mxu0 0
    %1801 = vmatpush1.bf16.msra.mxu0 0
    %1802 = vmatprep.subr.bf16.mxu0 0
    %1803 = vmatpush1.bf16.msra.mxu0 0
    %1804 = vmatprep.subr.bf16.mxu0 0
    %1805 = vmatpush1.bf16.msra.mxu0 0
    %1806 = vmatprep.subr.bf16.mxu0 0
    %1807 = vmatpush1.bf16.msra.mxu0 0
    %1808 = vmatprep.subr.bf16.mxu0 0
    %1809 = vmatpush1.bf16.msra.mxu0 0
    %1810 = vmatprep.subr.bf16.mxu0 0
    %1811 = vmatpush1.bf16.msra.mxu0 0
    %1812 = vmatprep.subr.bf16.mxu0 0
    %1813 = vmatpush1.bf16.msra.mxu0 0
    %1814 = vmatprep.subr.bf16.mxu0 0
    %1815 = vmatpush1.bf16.msra.mxu0 0
    %1816 = vmatprep.subr.bf16.mxu0 0
    %1817 = vmatpush1.bf16.msra.mxu0 0
    %1818 = vmatprep.subr.bf16.mxu0 0
    %1819 = vmatpush1.bf16.msra.mxu0 0
    %1820 = vmatprep.mubr.bf16.mxu0 0
    %1821 = vmatmul.mubr.bf16.gmra.mrb[0].mxu0 %v1666
    %v1822 = vpop.f32.mrb[0].mxu0
    %v1823 = vadd.f32 0.0, %v1822
    %v1824 = vpop.f32.mrb[0].mxu0
    %v1825 = vadd.f32 0.0, %v1824
    %v1826 = vpop.f32.mrb[0].mxu0
    %v1827 = vadd.f32 0.0, %v1826
    %v1828 = vpop.f32.mrb[0].mxu0
    %v1829 = vadd.f32 0.0, %v1828
    %1830 = vmatprep.mubr.bf16.mxu0 0
    %1831 = vmatmul.mubr.bf16.gmra.mrb[0].mxu0 %v1669
    %v1832 = vpop.f32.mrb[0].mxu0
    %v1833 = vadd.f32 0.0, %v1832
    %v1834 = vpop.f32.mrb[0].mxu0
    %v1835 = vadd.f32 0.0, %v1834
    %v1836 = vpop.f32.mrb[0].mxu0
    %v1837 = vadd.f32 0.0, %v1836
    %v1838 = vpop.f32.mrb[0].mxu0
    %v1839 = vadd.f32 0.0, %v1838
    %1840 = vmatprep.mubr.bf16.mxu0 0
    %1841 = vmatmul.mubr.bf16.gmra.mrb[0].mxu0 %v1672
    %v1842 = vpop.f32.mrb[0].mxu0
    %v1843 = vadd.f32 0.0, %v1842
    %v1844 = vpop.f32.mrb[0].mxu0
    %v1845 = vadd.f32 0.0, %v1844
    %v1846 = vpop.f32.mrb[0].mxu0
    %v1847 = vadd.f32 0.0, %v1846
    %v1848 = vpop.f32.mrb[0].mxu0
    %v1849 = vadd.f32 0.0, %v1848
    %1850 = vmatprep.mubr.bf16.mxu0 0
    %1851 = vmatmul.mubr.bf16.gmra.mrb[0].mxu0 %v1675
    %v1852 = vpop.f32.mrb[0].mxu0
    %v1853 = vadd.f32 0.0, %v1852
    %v1854 = vpop.f32.mrb[0].mxu0
    %v1855 = vadd.f32 0.0, %v1854
    %v1856 = vpop.f32.mrb[0].mxu0
    %v1857 = vadd.f32 0.0, %v1856
    %v1858 = vpop.f32.mrb[0].mxu0
    %v1859 = vadd.f32 0.0, %v1858
    %1860 = vmatprep.mubr.bf16.mxu0 0
    %1861 = vmatmul.mubr.bf16.gmra.mrb[0].mxu0 %v1678
    %v1862 = vpop.f32.mrb[0].mxu0
    %v1863 = vadd.f32 0.0, %v1862
    %v1864 = vpop.f32.mrb[0].mxu0
    %v1865 = vadd.f32 0.0, %v1864
    %v1866 = vpop.f32.mrb[0].mxu0
    %v1867 = vadd.f32 0.0, %v1866
    %v1868 = vpop.f32.mrb[0].mxu0
    %v1869 = vadd.f32 0.0, %v1868
    %1870 = vmatprep.mubr.bf16.mxu0 0
    %1871 = vmatmul.mubr.bf16.gmra.mrb[0].mxu0 %v1681
    %v1872 = vpop.f32.mrb[0].mxu0
    %v1873 = vadd.f32 0.0, %v1872
    %v1874 = vpop.f32.mrb[0].mxu0
    %v1875 = vadd.f32 0.0, %v1874
    %v1876 = vpop.f32.mrb[0].mxu0
    %v1877 = vadd.f32 0.0, %v1876
    %v1878 = vpop.f32.mrb[0].mxu0
    %v1879 = vadd.f32 0.0, %v1878
    %1880 = vmatprep.mubr.bf16.mxu0 0
    %1881 = vmatmul.mubr.bf16.gmra.mrb[0].mxu0 %v1684
    %v1882 = vpop.f32.mrb[0].mxu0
    %v1883 = vadd.f32 0.0, %v1882
    %v1884 = vpop.f32.mrb[0].mxu0
    %v1885 = vadd.f32 0.0, %v1884
    %v1886 = vpop.f32.mrb[0].mxu0
    %v1887 = vadd.f32 0.0, %v1886
    %v1888 = vpop.f32.mrb[0].mxu0
    %v1889 = vadd.f32 0.0, %v1888
    %1890 = vmatprep.mubr.bf16.mxu0 0
    %1891 = vmatmul.mubr.bf16.gmra.mrb[0].mxu0 %v1687
    %v1892 = vpop.f32.mrb[0].mxu0
    %v1893 = vadd.f32 0.0, %v1892
    %v1894 = vpop.f32.mrb[0].mxu0
    %v1895 = vadd.f32 0.0, %v1894
    %v1896 = vpop.f32.mrb[0].mxu0
    %v1897 = vadd.f32 0.0, %v1896
    %v1898 = vpop.f32.mrb[0].mxu0
    %v1899 = vadd.f32 0.0, %v1898
    %1900 = vmatprep.mubr.bf16.mxu0 0
    %1901 = vmatmul.mubr.bf16.gmra.mrb[0].mxu0 %v1690
    %v1902 = vpop.f32.mrb[0].mxu0
    %v1903 = vadd.f32 0.0, %v1902
    %v1904 = vpop.f32.mrb[0].mxu0
    %v1905 = vadd.f32 0.0, %v1904
    %v1906 = vpop.f32.mrb[0].mxu0
    %v1907 = vadd.f32 0.0, %v1906
    %v1908 = vpop.f32.mrb[0].mxu0
    %v1909 = vadd.f32 0.0, %v1908
    %1910 = vmatprep.mubr.bf16.mxu0 0
    %1911 = vmatmul.mubr.bf16.gmra.mrb[0].mxu0 %v1693
    %v1912 = vpop.f32.mrb[0].mxu0
    %v1913 = vadd.f32 0.0, %v1912
    %v1914 = vpop.f32.mrb[0].mxu0
    %v1915 = vadd.f32 0.0, %v1914
    %v1916 = vpop.f32.mrb[0].mxu0
    %v1917 = vadd.f32 0.0, %v1916
    %v1918 = vpop.f32.mrb[0].mxu0
    %v1919 = vadd.f32 0.0, %v1918
    %1920 = vmatprep.mubr.bf16.mxu0 0
    %1921 = vmatmul.mubr.bf16.gmra.mrb[0].mxu0 %v1696
    %v1922 = vpop.f32.mrb[0].mxu0
    %v1923 = vadd.f32 0.0, %v1922
    %v1924 = vpop.f32.mrb[0].mxu0
    %v1925 = vadd.f32 0.0, %v1924
    %v1926 = vpop.f32.mrb[0].mxu0
    %v1927 = vadd.f32 0.0, %v1926
    %v1928 = vpop.f32.mrb[0].mxu0
    %v1929 = vadd.f32 0.0, %v1928
    %1930 = vmatprep.mubr.bf16.mxu0 0
    %1931 = vmatmul.mubr.bf16.gmra.mrb[0].mxu0 %v1699
    %v1932 = vpop.f32.mrb[0].mxu0
    %v1933 = vadd.f32 0.0, %v1932
    %v1934 = vpop.f32.mrb[0].mxu0
    %v1935 = vadd.f32 0.0, %v1934
    %v1936 = vpop.f32.mrb[0].mxu0
    %v1937 = vadd.f32 0.0, %v1936
    %v1938 = vpop.f32.mrb[0].mxu0
    %v1939 = vadd.f32 0.0, %v1938
    %1940 = vmatprep.mubr.bf16.mxu0 0
    %1941 = vmatmul.mubr.bf16.gmra.mrb[0].mxu0 %v1702
    %v1942 = vpop.f32.mrb[0].mxu0
    %v1943 = vadd.f32 0.0, %v1942
    %v1944 = vpop.f32.mrb[0].mxu0
    %v1945 = vadd.f32 0.0, %v1944
    %v1946 = vpop.f32.mrb[0].mxu0
    %v1947 = vadd.f32 0.0, %v1946
    %v1948 = vpop.f32.mrb[0].mxu0
    %v1949 = vadd.f32 0.0, %v1948
    %1950 = vmatprep.mubr.bf16.mxu0 0
    %1951 = vmatmul.mubr.bf16.gmra.mrb[0].mxu0 %v1705
    %v1952 = vpop.f32.mrb[0].mxu0
    %v1953 = vadd.f32 0.0, %v1952
    %v1954 = vpop.f32.mrb[0].mxu0
    %v1955 = vadd.f32 0.0, %v1954
    %v1956 = vpop.f32.mrb[0].mxu0
    %v1957 = vadd.f32 0.0, %v1956
    %v1958 = vpop.f32.mrb[0].mxu0
    %v1959 = vadd.f32 0.0, %v1958
    %1960 = vmatprep.mubr.bf16.mxu0 0
    %1961 = vmatmul.mubr.bf16.gmra.mrb[0].mxu0 %v1708
    %v1962 = vpop.f32.mrb[0].mxu0
    %v1963 = vadd.f32 0.0, %v1962
    %v1964 = vpop.f32.mrb[0].mxu0
    %v1965 = vadd.f32 0.0, %v1964
    %v1966 = vpop.f32.mrb[0].mxu0
    %v1967 = vadd.f32 0.0, %v1966
    %v1968 = vpop.f32.mrb[0].mxu0
    %v1969 = vadd.f32 0.0, %v1968
    %1970 = vmatprep.mubr.bf16.mxu0 0
    %1971 = vmatmul.mubr.bf16.gmra.mrb[0].mxu0 %v1711
    %v1972 = vpop.f32.mrb[0].mxu0
    %v1973 = vadd.f32 0.0, %v1972
    %v1974 = vpop.f32.mrb[0].mxu0
    %v1975 = vadd.f32 0.0, %v1974
    %v1976 = vpop.f32.mrb[0].mxu0
    %v1977 = vadd.f32 0.0, %v1976
    %v1978 = vpop.f32.mrb[0].mxu0
    %v1979 = vadd.f32 0.0, %v1978
    %1980 = vmatprep.mubr.bf16.mxu0 0
    %1981 = vmatmul.mubr.bf16.gmra.mrb[0].mxu0 %v1714
    %v1982 = vpop.f32.mrb[0].mxu0
    %v1983 = vadd.f32 0.0, %v1982
    %v1984 = vpop.f32.mrb[0].mxu0
    %v1985 = vadd.f32 0.0, %v1984
    %v1986 = vpop.f32.mrb[0].mxu0
    %v1987 = vadd.f32 0.0, %v1986
    %v1988 = vpop.f32.mrb[0].mxu0
    %v1989 = vadd.f32 0.0, %v1988
    %1990 = vmatprep.mubr.bf16.mxu0 0
    %1991 = vmatmul.mubr.bf16.gmra.mrb[0].mxu0 %v1717
    %v1992 = vpop.f32.mrb[0].mxu0
    %v1993 = vadd.f32 0.0, %v1992
    %v1994 = vpop.f32.mrb[0].mxu0
    %v1995 = vadd.f32 0.0, %v1994
    %v1996 = vpop.f32.mrb[0].mxu0
    %v1997 = vadd.f32 0.0, %v1996
    %v1998 = vpop.f32.mrb[0].mxu0
    %v1999 = vadd.f32 0.0, %v1998
    %2000 = vmatprep.mubr.bf16.mxu0 0
    %2001 = vmatmul.mubr.bf16.gmra.mrb[0].mxu0 %v1720
    %v2002 = vpop.f32.mrb[0].mxu0
    %v2003 = vadd.f32 0.0, %v2002
    %v2004 = vpop.f32.mrb[0].mxu0
    %v2005 = vadd.f32 0.0, %v2004
    %v2006 = vpop.f32.mrb[0].mxu0
    %v2007 = vadd.f32 0.0, %v2006
    %v2008 = vpop.f32.mrb[0].mxu0
    %v2009 = vadd.f32 0.0, %v2008
    %2010 = vmatprep.mubr.bf16.mxu0 0
    %2011 = vmatmul.mubr.bf16.gmra.mrb[0].mxu0 %v1723
    %v2012 = vpop.f32.mrb[0].mxu0
    %v2013 = vadd.f32 0.0, %v2012
    %v2014 = vpop.f32.mrb[0].mxu0
    %v2015 = vadd.f32 0.0, %v2014
    %v2016 = vpop.f32.mrb[0].mxu0
    %v2017 = vadd.f32 0.0, %v2016
    %v2018 = vpop.f32.mrb[0].mxu0
    %v2019 = vadd.f32 0.0, %v2018
    %2020 = vmatprep.mubr.bf16.mxu0 0
    %2021 = vmatmul.mubr.bf16.gmra.mrb[0].mxu0 %v1726
    %v2022 = vpop.f32.mrb[0].mxu0
    %v2023 = vadd.f32 0.0, %v2022
    %v2024 = vpop.f32.mrb[0].mxu0
    %v2025 = vadd.f32 0.0, %v2024
    %v2026 = vpop.f32.mrb[0].mxu0
    %v2027 = vadd.f32 0.0, %v2026
    %v2028 = vpop.f32.mrb[0].mxu0
    %v2029 = vadd.f32 0.0, %v2028
    %2030 = vmatprep.mubr.bf16.mxu0 0
    %2031 = vmatmul.mubr.bf16.gmra.mrb[0].mxu0 %v1729
    %v2032 = vpop.f32.mrb[0].mxu0
    %v2033 = vadd.f32 0.0, %v2032
    %v2034 = vpop.f32.mrb[0].mxu0
    %v2035 = vadd.f32 0.0, %v2034
    %v2036 = vpop.f32.mrb[0].mxu0
    %v2037 = vadd.f32 0.0, %v2036
    %v2038 = vpop.f32.mrb[0].mxu0
    %v2039 = vadd.f32 0.0, %v2038
    %2040 = vmatprep.mubr.bf16.mxu0 0
    %2041 = vmatmul.mubr.bf16.gmra.mrb[0].mxu0 %v1732
    %v2042 = vpop.f32.mrb[0].mxu0
    %v2043 = vadd.f32 0.0, %v2042
    %v2044 = vpop.f32.mrb[0].mxu0
    %v2045 = vadd.f32 0.0, %v2044
    %v2046 = vpop.f32.mrb[0].mxu0
    %v2047 = vadd.f32 0.0, %v2046
    %v2048 = vpop.f32.mrb[0].mxu0
    %v2049 = vadd.f32 0.0, %v2048
    %2050 = vmatprep.mubr.bf16.mxu0 0
    %2051 = vmatmul.mubr.bf16.gmra.mrb[0].mxu0 %v1735
    %v2052 = vpop.f32.mrb[0].mxu0
    %v2053 = vadd.f32 0.0, %v2052
    %v2054 = vpop.f32.mrb[0].mxu0
    %v2055 = vadd.f32 0.0, %v2054
    %v2056 = vpop.f32.mrb[0].mxu0
    %v2057 = vadd.f32 0.0, %v2056
    %v2058 = vpop.f32.mrb[0].mxu0
    %v2059 = vadd.f32 0.0, %v2058
    %2060 = vmatprep.mubr.bf16.mxu0 0
    %2061 = vmatmul.mubr.bf16.gmra.mrb[0].mxu0 %v1738
    %v2062 = vpop.f32.mrb[0].mxu0
    %v2063 = vadd.f32 0.0, %v2062
    %v2064 = vpop.f32.mrb[0].mxu0
    %v2065 = vadd.f32 0.0, %v2064
    %v2066 = vpop.f32.mrb[0].mxu0
    %v2067 = vadd.f32 0.0, %v2066
    %v2068 = vpop.f32.mrb[0].mxu0
    %v2069 = vadd.f32 0.0, %v2068
    %2070 = vmatprep.mubr.bf16.mxu0 0
    %2071 = vmatmul.mubr.bf16.gmra.mrb[0].mxu0 %v1741
    %v2072 = vpop.f32.mrb[0].mxu0
    %v2073 = vadd.f32 0.0, %v2072
    %v2074 = vpop.f32.mrb[0].mxu0
    %v2075 = vadd.f32 0.0, %v2074
    %v2076 = vpop.f32.mrb[0].mxu0
    %v2077 = vadd.f32 0.0, %v2076
    %v2078 = vpop.f32.mrb[0].mxu0
    %v2079 = vadd.f32 0.0, %v2078
    %2080 = vmatprep.mubr.bf16.mxu0 0
    %2081 = vmatmul.mubr.bf16.gmra.mrb[0].mxu0 %v1744
    %v2082 = vpop.f32.mrb[0].mxu0
    %v2083 = vadd.f32 0.0, %v2082
    %v2084 = vpop.f32.mrb[0].mxu0
    %v2085 = vadd.f32 0.0, %v2084
    %v2086 = vpop.f32.mrb[0].mxu0
    %v2087 = vadd.f32 0.0, %v2086
    %v2088 = vpop.f32.mrb[0].mxu0
    %v2089 = vadd.f32 0.0, %v2088
    %2090 = vmatprep.mubr.bf16.mxu0 0
    %2091 = vmatmul.mubr.bf16.gmra.mrb[0].mxu0 %v1747
    %v2092 = vpop.f32.mrb[0].mxu0
    %v2093 = vadd.f32 0.0, %v2092
    %v2094 = vpop.f32.mrb[0].mxu0
    %v2095 = vadd.f32 0.0, %v2094
    %v2096 = vpop.f32.mrb[0].mxu0
    %v2097 = vadd.f32 0.0, %v2096
    %v2098 = vpop.f32.mrb[0].mxu0
    %v2099 = vadd.f32 0.0, %v2098
    %2100 = vmatprep.mubr.bf16.mxu0 0
    %2101 = vmatmul.mubr.bf16.gmra.mrb[0].mxu0 %v1750
    %v2102 = vpop.f32.mrb[0].mxu0
    %v2103 = vadd.f32 0.0, %v2102
    %v2104 = vpop.f32.mrb[0].mxu0
    %v2105 = vadd.f32 0.0, %v2104
    %v2106 = vpop.f32.mrb[0].mxu0
    %v2107 = vadd.f32 0.0, %v2106
    %v2108 = vpop.f32.mrb[0].mxu0
    %v2109 = vadd.f32 0.0, %v2108
    %2110 = vmatprep.mubr.bf16.mxu0 0
    %2111 = vmatmul.mubr.bf16.gmra.mrb[0].mxu0 %v1753
    %v2112 = vpop.f32.mrb[0].mxu0
    %v2113 = vadd.f32 0.0, %v2112
    %v2114 = vpop.f32.mrb[0].mxu0
    %v2115 = vadd.f32 0.0, %v2114
    %v2116 = vpop.f32.mrb[0].mxu0
    %v2117 = vadd.f32 0.0, %v2116
    %v2118 = vpop.f32.mrb[0].mxu0
    %v2119 = vadd.f32 0.0, %v2118
    %2120 = vmatprep.mubr.bf16.mxu0 0
    %2121 = vmatmul.mubr.bf16.gmra.mrb[0].mxu0 %v1756
    %v2122 = vpop.f32.mrb[0].mxu0
    %v2123 = vadd.f32 0.0, %v2122
    %v2124 = vpop.f32.mrb[0].mxu0
    %v2125 = vadd.f32 0.0, %v2124
    %v2126 = vpop.f32.mrb[0].mxu0
    %v2127 = vadd.f32 0.0, %v2126
    %v2128 = vpop.f32.mrb[0].mxu0
    %v2129 = vadd.f32 0.0, %v2128
    %2130 = vmatprep.mubr.bf16.mxu0 0
    %2131 = vmatmul.mubr.bf16.gmra.mrb[0].mxu0 %v1759
    %v2132 = vpop.f32.mrb[0].mxu0
    %v2133 = vadd.f32 0.0, %v2132
    %v2134 = vpop.f32.mrb[0].mxu0
    %v2135 = vadd.f32 0.0, %v2134
    %v2136 = vpop.f32.mrb[0].mxu0
    %v2137 = vadd.f32 0.0, %v2136
    %v2138 = vpop.f32.mrb[0].mxu0
    %v2139 = vadd.f32 0.0, %v2138
    %2140 = vmatprep.mubr.bf16.mxu0 0
    %2141 = vmatmul.mubr.bf16.gmra.mrb[0].mxu0 %v1762
    %v2142 = vpop.f32.mrb[0].mxu0
    %v2143 = vadd.f32 0.0, %v2142
    %v2144 = vpop.f32.mrb[0].mxu0
    %v2145 = vadd.f32 0.0, %v2144
    %v2146 = vpop.f32.mrb[0].mxu0
    %v2147 = vadd.f32 0.0, %v2146
    %v2148 = vpop.f32.mrb[0].mxu0
    %v2149 = vadd.f32 0.0, %v2148
    %2150 = vmatprep.mubr.bf16.mxu0 0
    %2151 = vmatmul.mubr.bf16.gmra.mrb[0].mxu0 %v1765
    %v2152 = vpop.f32.mrb[0].mxu0
    %v2153 = vadd.f32 0.0, %v2152
    %v2154 = vpop.f32.mrb[0].mxu0
    %v2155 = vadd.f32 0.0, %v2154
    %v2156 = vpop.f32.mrb[0].mxu0
    %v2157 = vadd.f32 0.0, %v2156
    %v2158 = vpop.f32.mrb[0].mxu0
    %v2159 = vadd.f32 0.0, %v2158
    %2160 = vmatprep.mubr.bf16.mxu0 0
    %2161 = vmatmul.mubr.bf16.gmra.mrb[0].mxu0 %v1768
    %v2162 = vpop.f32.mrb[0].mxu0
    %v2163 = vadd.f32 0.0, %v2162
    %v2164 = vpop.f32.mrb[0].mxu0
    %v2165 = vadd.f32 0.0, %v2164
    %v2166 = vpop.f32.mrb[0].mxu0
    %v2167 = vadd.f32 0.0, %v2166
    %v2168 = vpop.f32.mrb[0].mxu0
    %v2169 = vadd.f32 0.0, %v2168
    %2170 = vmatprep.mubr.bf16.mxu0 0
    %2171 = vmatmul.mubr.bf16.gmra.mrb[0].mxu0 %v1771
    %v2172 = vpop.f32.mrb[0].mxu0
    %v2173 = vadd.f32 0.0, %v2172
    %v2174 = vpop.f32.mrb[0].mxu0
    %v2175 = vadd.f32 0.0, %v2174
    %v2176 = vpop.f32.mrb[0].mxu0
    %v2177 = vadd.f32 0.0, %v2176
    %v2178 = vpop.f32.mrb[0].mxu0
    %v2179 = vadd.f32 0.0, %v2178
    %2180 = vmatprep.mubr.bf16.mxu0 0
    %2181 = vmatmul.mubr.bf16.gmra.mrb[0].mxu0 %v1774
    %v2182 = vpop.f32.mrb[0].mxu0
    %v2183 = vadd.f32 0.0, %v2182
    %v2184 = vpop.f32.mrb[0].mxu0
    %v2185 = vadd.f32 0.0, %v2184
    %v2186 = vpop.f32.mrb[0].mxu0
    %v2187 = vadd.f32 0.0, %v2186
    %v2188 = vpop.f32.mrb[0].mxu0
    %v2189 = vadd.f32 0.0, %v2188
    %2190 = vmatprep.mubr.bf16.mxu0 0
    %2191 = vmatmul.mubr.bf16.gmra.mrb[0].mxu0 %v1777
    %v2192 = vpop.f32.mrb[0].mxu0
    %v2193 = vadd.f32 0.0, %v2192
    %v2194 = vpop.f32.mrb[0].mxu0
    %v2195 = vadd.f32 0.0, %v2194
    %v2196 = vpop.f32.mrb[0].mxu0
    %v2197 = vadd.f32 0.0, %v2196
    %v2198 = vpop.f32.mrb[0].mxu0
    %v2199 = vadd.f32 0.0, %v2198
    %2200 = vmatprep.mubr.bf16.mxu0 0
    %2201 = vmatmul.mubr.bf16.gmra.mrb[0].mxu0 %v1780
    %v2202 = vpop.f32.mrb[0].mxu0
    %v2203 = vadd.f32 0.0, %v2202
    %v2204 = vpop.f32.mrb[0].mxu0
    %v2205 = vadd.f32 0.0, %v2204
    %v2206 = vpop.f32.mrb[0].mxu0
    %v2207 = vadd.f32 0.0, %v2206
    %v2208 = vpop.f32.mrb[0].mxu0
    %v2209 = vadd.f32 0.0, %v2208
    %2210 = vdwg.mxu0
    %v2211 = vadd.f32 %v1206, %v1823
    %v2212 = vadd.f32 %v1208, %v1825
    %v2213 = vadd.f32 %v1210, %v1827
    %v2214 = vadd.f32 %v1212, %v1829
    %v2215 = vadd.f32 %v1216, %v1833
    %v2216 = vadd.f32 %v1218, %v1835
    %v2217 = vadd.f32 %v1220, %v1837
    %v2218 = vadd.f32 %v1222, %v1839
    %v2219 = vadd.f32 %v1226, %v1843
    %v2220 = vadd.f32 %v1228, %v1845
    %v2221 = vadd.f32 %v1230, %v1847
    %v2222 = vadd.f32 %v1232, %v1849
    %v2223 = vadd.f32 %v1236, %v1853
    %v2224 = vadd.f32 %v1238, %v1855
    %v2225 = vadd.f32 %v1240, %v1857
    %v2226 = vadd.f32 %v1242, %v1859
    %v2227 = vadd.f32 %v1246, %v1863
    %v2228 = vadd.f32 %v1248, %v1865
    %v2229 = vadd.f32 %v1250, %v1867
    %v2230 = vadd.f32 %v1252, %v1869
    %v2231 = vadd.f32 %v1256, %v1873
    %v2232 = vadd.f32 %v1258, %v1875
    %v2233 = vadd.f32 %v1260, %v1877
    %v2234 = vadd.f32 %v1262, %v1879
    %v2235 = vadd.f32 %v1266, %v1883
    %v2236 = vadd.f32 %v1268, %v1885
    %v2237 = vadd.f32 %v1270, %v1887
    %v2238 = vadd.f32 %v1272, %v1889
    %v2239 = vadd.f32 %v1276, %v1893
    %v2240 = vadd.f32 %v1278, %v1895
    %v2241 = vadd.f32 %v1280, %v1897
    %v2242 = vadd.f32 %v1282, %v1899
    %v2243 = vadd.f32 %v1286, %v1903
    %v2244 = vadd.f32 %v1288, %v1905
    %v2245 = vadd.f32 %v1290, %v1907
    %v2246 = vadd.f32 %v1292, %v1909
    %v2247 = vadd.f32 %v1296, %v1913
    %v2248 = vadd.f32 %v1298, %v1915
    %v2249 = vadd.f32 %v1300, %v1917
    %v2250 = vadd.f32 %v1302, %v1919
    %v2251 = vadd.f32 %v1306, %v1923
    %v2252 = vadd.f32 %v1308, %v1925
    %v2253 = vadd.f32 %v1310, %v1927
    %v2254 = vadd.f32 %v1312, %v1929
    %v2255 = vadd.f32 %v1316, %v1933
    %v2256 = vadd.f32 %v1318, %v1935
    %v2257 = vadd.f32 %v1320, %v1937
    %v2258 = vadd.f32 %v1322, %v1939
    %v2259 = vadd.f32 %v1326, %v1943
    %v2260 = vadd.f32 %v1328, %v1945
    %v2261 = vadd.f32 %v1330, %v1947
    %v2262 = vadd.f32 %v1332, %v1949
    %v2263 = vadd.f32 %v1336, %v1953
    %v2264 = vadd.f32 %v1338, %v1955
    %v2265 = vadd.f32 %v1340, %v1957
    %v2266 = vadd.f32 %v1342, %v1959
    %v2267 = vadd.f32 %v1346, %v1963
    %v2268 = vadd.f32 %v1348, %v1965
    %v2269 = vadd.f32 %v1350, %v1967
    %v2270 = vadd.f32 %v1352, %v1969
    %v2271 = vadd.f32 %v1356, %v1973
    %v2272 = vadd.f32 %v1358, %v1975
    %v2273 = vadd.f32 %v1360, %v1977
    %v2274 = vadd.f32 %v1362, %v1979
    %v2275 = vadd.f32 %v1366, %v1983
    %v2276 = vadd.f32 %v1368, %v1985
    %v2277 = vadd.f32 %v1370, %v1987
    %v2278 = vadd.f32 %v1372, %v1989
    %v2279 = vadd.f32 %v1376, %v1993
    %v2280 = vadd.f32 %v1378, %v1995
    %v2281 = vadd.f32 %v1380, %v1997
    %v2282 = vadd.f32 %v1382, %v1999
    %v2283 = vadd.f32 %v1386, %v2003
    %v2284 = vadd.f32 %v1388, %v2005
    %v2285 = vadd.f32 %v1390, %v2007
    %v2286 = vadd.f32 %v1392, %v2009
    %v2287 = vadd.f32 %v1396, %v2013
    %v2288 = vadd.f32 %v1398, %v2015
    %v2289 = vadd.f32 %v1400, %v2017
    %v2290 = vadd.f32 %v1402, %v2019
    %v2291 = vadd.f32 %v1406, %v2023
    %v2292 = vadd.f32 %v1408, %v2025
    %v2293 = vadd.f32 %v1410, %v2027
    %v2294 = vadd.f32 %v1412, %v2029
    %v2295 = vadd.f32 %v1416, %v2033
    %v2296 = vadd.f32 %v1418, %v2035
    %v2297 = vadd.f32 %v1420, %v2037
    %v2298 = vadd.f32 %v1422, %v2039
    %v2299 = vadd.f32 %v1426, %v2043
    %v2300 = vadd.f32 %v1428, %v2045
    %v2301 = vadd.f32 %v1430, %v2047
    %v2302 = vadd.f32 %v1432, %v2049
    %v2303 = vadd.f32 %v1436, %v2053
    %v2304 = vadd.f32 %v1438, %v2055
    %v2305 = vadd.f32 %v1440, %v2057
    %v2306 = vadd.f32 %v1442, %v2059
    %v2307 = vadd.f32 %v1446, %v2063
    %v2308 = vadd.f32 %v1448, %v2065
    %v2309 = vadd.f32 %v1450, %v2067
    %v2310 = vadd.f32 %v1452, %v2069
    %v2311 = vadd.f32 %v1456, %v2073
    %v2312 = vadd.f32 %v1458, %v2075
    %v2313 = vadd.f32 %v1460, %v2077
    %v2314 = vadd.f32 %v1462, %v2079
    %v2315 = vadd.f32 %v1466, %v2083
    %v2316 = vadd.f32 %v1468, %v2085
    %v2317 = vadd.f32 %v1470, %v2087
    %v2318 = vadd.f32 %v1472, %v2089
    %v2319 = vadd.f32 %v1476, %v2093
    %v2320 = vadd.f32 %v1478, %v2095
    %v2321 = vadd.f32 %v1480, %v2097
    %v2322 = vadd.f32 %v1482, %v2099
    %v2323 = vadd.f32 %v1486, %v2103
    %v2324 = vadd.f32 %v1488, %v2105
    %v2325 = vadd.f32 %v1490, %v2107
    %v2326 = vadd.f32 %v1492, %v2109
    %v2327 = vadd.f32 %v1496, %v2113
    %v2328 = vadd.f32 %v1498, %v2115
    %v2329 = vadd.f32 %v1500, %v2117
    %v2330 = vadd.f32 %v1502, %v2119
    %v2331 = vadd.f32 %v1506, %v2123
    %v2332 = vadd.f32 %v1508, %v2125
    %v2333 = vadd.f32 %v1510, %v2127
    %v2334 = vadd.f32 %v1512, %v2129
    %v2335 = vadd.f32 %v1516, %v2133
    %v2336 = vadd.f32 %v1518, %v2135
    %v2337 = vadd.f32 %v1520, %v2137
    %v2338 = vadd.f32 %v1522, %v2139
    %v2339 = vadd.f32 %v1526, %v2143
    %v2340 = vadd.f32 %v1528, %v2145
    %v2341 = vadd.f32 %v1530, %v2147
    %v2342 = vadd.f32 %v1532, %v2149
    %v2343 = vadd.f32 %v1536, %v2153
    %v2344 = vadd.f32 %v1538, %v2155
    %v2345 = vadd.f32 %v1540, %v2157
    %v2346 = vadd.f32 %v1542, %v2159
    %v2347 = vadd.f32 %v1546, %v2163
    %v2348 = vadd.f32 %v1548, %v2165
    %v2349 = vadd.f32 %v1550, %v2167
    %v2350 = vadd.f32 %v1552, %v2169
    %v2351 = vadd.f32 %v1556, %v2173
    %v2352 = vadd.f32 %v1558, %v2175
    %v2353 = vadd.f32 %v1560, %v2177
    %v2354 = vadd.f32 %v1562, %v2179
    %v2355 = vadd.f32 %v1566, %v2183
    %v2356 = vadd.f32 %v1568, %v2185
    %v2357 = vadd.f32 %v1570, %v2187
    %v2358 = vadd.f32 %v1572, %v2189
    %v2359 = vadd.f32 %v1576, %v2193
    %v2360 = vadd.f32 %v1578, %v2195
    %v2361 = vadd.f32 %v1580, %v2197
    %v2362 = vadd.f32 %v1582, %v2199
    %v2363 = vadd.f32 %v1586, %v2203
    %v2364 = vadd.f32 %v1588, %v2205
    %v2365 = vadd.f32 %v1590, %v2207
    %v2366 = vadd.f32 %v1592, %v2209
    %v2367 = vld [vmem:[%s2] sm:$0x3]
    %v2369 = vlaneseq
    %v2370 = vshrl.u32 %v2369, 7
    %v2371 = vsub.s32 0, %v2370
    %v2372 = vrot.slane %v2367, %v2371
    %v2373 = vlaneseq
    %v2374 = vshrl.u32 %v2373, 7
    %v2375 = vsub.s32 1, %v2374
    %v2376 = vrot.slane %v2367, %v2375
    %v2379 = vadd.f32 %v2211, %v2372
    %v2380 = vadd.f32 %v2212, %v2376
    %v2381 = vadd.f32 %v2213, %v2372
    %v2382 = vadd.f32 %v2214, %v2376
    %v2383 = vadd.f32 %v2215, %v2372
    %v2384 = vadd.f32 %v2216, %v2376
    %v2385 = vadd.f32 %v2217, %v2372
    %v2386 = vadd.f32 %v2218, %v2376
    %v2387 = vadd.f32 %v2219, %v2372
    %v2388 = vadd.f32 %v2220, %v2376
    %v2389 = vadd.f32 %v2221, %v2372
    %v2390 = vadd.f32 %v2222, %v2376
    %v2391 = vadd.f32 %v2223, %v2372
    %v2392 = vadd.f32 %v2224, %v2376
    %v2393 = vadd.f32 %v2225, %v2372
    %v2394 = vadd.f32 %v2226, %v2376
    %v2395 = vadd.f32 %v2227, %v2372
    %v2396 = vadd.f32 %v2228, %v2376
    %v2397 = vadd.f32 %v2229, %v2372
    %v2398 = vadd.f32 %v2230, %v2376
    %v2399 = vadd.f32 %v2231, %v2372
    %v2400 = vadd.f32 %v2232, %v2376
    %v2401 = vadd.f32 %v2233, %v2372
    %v2402 = vadd.f32 %v2234, %v2376
    %v2403 = vadd.f32 %v2235, %v2372
    %v2404 = vadd.f32 %v2236, %v2376
    %v2405 = vadd.f32 %v2237, %v2372
    %v2406 = vadd.f32 %v2238, %v2376
    %v2407 = vadd.f32 %v2239, %v2372
    %v2408 = vadd.f32 %v2240, %v2376
    %v2409 = vadd.f32 %v2241, %v2372
    %v2410 = vadd.f32 %v2242, %v2376
    %v2411 = vadd.f32 %v2243, %v2372
    %v2412 = vadd.f32 %v2244, %v2376
    %v2413 = vadd.f32 %v2245, %v2372
    %v2414 = vadd.f32 %v2246, %v2376
    %v2415 = vadd.f32 %v2247, %v2372
    %v2416 = vadd.f32 %v2248, %v2376
    %v2417 = vadd.f32 %v2249, %v2372
    %v2418 = vadd.f32 %v2250, %v2376
    %v2419 = vadd.f32 %v2251, %v2372
    %v2420 = vadd.f32 %v2252, %v2376
    %v2421 = vadd.f32 %v2253, %v2372
    %v2422 = vadd.f32 %v2254, %v2376
    %v2423 = vadd.f32 %v2255, %v2372
    %v2424 = vadd.f32 %v2256, %v2376
    %v2425 = vadd.f32 %v2257, %v2372
    %v2426 = vadd.f32 %v2258, %v2376
    %v2427 = vadd.f32 %v2259, %v2372
    %v2428 = vadd.f32 %v2260, %v2376
    %v2429 = vadd.f32 %v2261, %v2372
    %v2430 = vadd.f32 %v2262, %v2376
    %v2431 = vadd.f32 %v2263, %v2372
    %v2432 = vadd.f32 %v2264, %v2376
    %v2433 = vadd.f32 %v2265, %v2372
    %v2434 = vadd.f32 %v2266, %v2376
    %v2435 = vadd.f32 %v2267, %v2372
    %v2436 = vadd.f32 %v2268, %v2376
    %v2437 = vadd.f32 %v2269, %v2372
    %v2438 = vadd.f32 %v2270, %v2376
    %v2439 = vadd.f32 %v2271, %v2372
    %v2440 = vadd.f32 %v2272, %v2376
    %v2441 = vadd.f32 %v2273, %v2372
    %v2442 = vadd.f32 %v2274, %v2376
    %v2443 = vadd.f32 %v2275, %v2372
    %v2444 = vadd.f32 %v2276, %v2376
    %v2445 = vadd.f32 %v2277, %v2372
    %v2446 = vadd.f32 %v2278, %v2376
    %v2447 = vadd.f32 %v2279, %v2372
    %v2448 = vadd.f32 %v2280, %v2376
    %v2449 = vadd.f32 %v2281, %v2372
    %v2450 = vadd.f32 %v2282, %v2376
    %v2451 = vadd.f32 %v2283, %v2372
    %v2452 = vadd.f32 %v2284, %v2376
    %v2453 = vadd.f32 %v2285, %v2372
    %v2454 = vadd.f32 %v2286, %v2376
    %v2455 = vadd.f32 %v2287, %v2372
    %v2456 = vadd.f32 %v2288, %v2376
    %v2457 = vadd.f32 %v2289, %v2372
    %v2458 = vadd.f32 %v2290, %v2376
    %v2459 = vadd.f32 %v2291, %v2372
    %v2460 = vadd.f32 %v2292, %v2376
    %v2461 = vadd.f32 %v2293, %v2372
    %v2462 = vadd.f32 %v2294, %v2376
    %v2463 = vadd.f32 %v2295, %v2372
    %v2464 = vadd.f32 %v2296, %v2376
    %v2465 = vadd.f32 %v2297, %v2372
    %v2466 = vadd.f32 %v2298, %v2376
    %v2467 = vadd.f32 %v2299, %v2372
    %v2468 = vadd.f32 %v2300, %v2376
    %v2469 = vadd.f32 %v2301, %v2372
    %v2470 = vadd.f32 %v2302, %v2376
    %v2471 = vadd.f32 %v2303, %v2372
    %v2472 = vadd.f32 %v2304, %v2376
    %v2473 = vadd.f32 %v2305, %v2372
    %v2474 = vadd.f32 %v2306, %v2376
    %v2475 = vadd.f32 %v2307, %v2372
    %v2476 = vadd.f32 %v2308, %v2376
    %v2477 = vadd.f32 %v2309, %v2372
    %v2478 = vadd.f32 %v2310, %v2376
    %v2479 = vadd.f32 %v2311, %v2372
    %v2480 = vadd.f32 %v2312, %v2376
    %v2481 = vadd.f32 %v2313, %v2372
    %v2482 = vadd.f32 %v2314, %v2376
    %v2483 = vadd.f32 %v2315, %v2372
    %v2484 = vadd.f32 %v2316, %v2376
    %v2485 = vadd.f32 %v2317, %v2372
    %v2486 = vadd.f32 %v2318, %v2376
    %v2487 = vadd.f32 %v2319, %v2372
    %v2488 = vadd.f32 %v2320, %v2376
    %v2489 = vadd.f32 %v2321, %v2372
    %v2490 = vadd.f32 %v2322, %v2376
    %v2491 = vadd.f32 %v2323, %v2372
    %v2492 = vadd.f32 %v2324, %v2376
    %v2493 = vadd.f32 %v2325, %v2372
    %v2494 = vadd.f32 %v2326, %v2376
    %v2495 = vadd.f32 %v2327, %v2372
    %v2496 = vadd.f32 %v2328, %v2376
    %v2497 = vadd.f32 %v2329, %v2372
    %v2498 = vadd.f32 %v2330, %v2376
    %v2499 = vadd.f32 %v2331, %v2372
    %v2500 = vadd.f32 %v2332, %v2376
    %v2501 = vadd.f32 %v2333, %v2372
    %v2502 = vadd.f32 %v2334, %v2376
    %v2503 = vadd.f32 %v2335, %v2372
    %v2504 = vadd.f32 %v2336, %v2376
    %v2505 = vadd.f32 %v2337, %v2372
    %v2506 = vadd.f32 %v2338, %v2376
    %v2507 = vadd.f32 %v2339, %v2372
    %v2508 = vadd.f32 %v2340, %v2376
    %v2509 = vadd.f32 %v2341, %v2372
    %v2510 = vadd.f32 %v2342, %v2376
    %v2511 = vadd.f32 %v2343, %v2372
    %v2512 = vadd.f32 %v2344, %v2376
    %v2513 = vadd.f32 %v2345, %v2372
    %v2514 = vadd.f32 %v2346, %v2376
    %v2515 = vadd.f32 %v2347, %v2372
    %v2516 = vadd.f32 %v2348, %v2376
    %v2517 = vadd.f32 %v2349, %v2372
    %v2518 = vadd.f32 %v2350, %v2376
    %v2519 = vadd.f32 %v2351, %v2372
    %v2520 = vadd.f32 %v2352, %v2376
    %v2521 = vadd.f32 %v2353, %v2372
    %v2522 = vadd.f32 %v2354, %v2376
    %v2523 = vadd.f32 %v2355, %v2372
    %v2524 = vadd.f32 %v2356, %v2376
    %v2525 = vadd.f32 %v2357, %v2372
    %v2526 = vadd.f32 %v2358, %v2376
    %v2527 = vadd.f32 %v2359, %v2372
    %v2528 = vadd.f32 %v2360, %v2376
    %v2529 = vadd.f32 %v2361, %v2372
    %v2530 = vadd.f32 %v2362, %v2376
    %v2531 = vadd.f32 %v2363, %v2372
    %v2532 = vadd.f32 %v2364, %v2376
    %v2533 = vadd.f32 %v2365, %v2372
    %v2534 = vadd.f32 %v2366, %v2376
    %v2535 = vmax.f32 %v2379, 0.0
    %v2536 = vmax.f32 %v2380, 0.0
    %v2537 = vmax.f32 %v2381, 0.0
    %v2538 = vmax.f32 %v2382, 0.0
    %v2539 = vmax.f32 %v2383, 0.0
    %v2540 = vmax.f32 %v2384, 0.0
    %v2541 = vmax.f32 %v2385, 0.0
    %v2542 = vmax.f32 %v2386, 0.0
    %v2543 = vmax.f32 %v2387, 0.0
    %v2544 = vmax.f32 %v2388, 0.0
    %v2545 = vmax.f32 %v2389, 0.0
    %v2546 = vmax.f32 %v2390, 0.0
    %v2547 = vmax.f32 %v2391, 0.0
    %v2548 = vmax.f32 %v2392, 0.0
    %v2549 = vmax.f32 %v2393, 0.0
    %v2550 = vmax.f32 %v2394, 0.0
    %v2551 = vmax.f32 %v2395, 0.0
    %v2552 = vmax.f32 %v2396, 0.0
    %v2553 = vmax.f32 %v2397, 0.0
    %v2554 = vmax.f32 %v2398, 0.0
    %v2555 = vmax.f32 %v2399, 0.0
    %v2556 = vmax.f32 %v2400, 0.0
    %v2557 = vmax.f32 %v2401, 0.0
    %v2558 = vmax.f32 %v2402, 0.0
    %v2559 = vmax.f32 %v2403, 0.0
    %v2560 = vmax.f32 %v2404, 0.0
    %v2561 = vmax.f32 %v2405, 0.0
    %v2562 = vmax.f32 %v2406, 0.0
    %v2563 = vmax.f32 %v2407, 0.0
    %v2564 = vmax.f32 %v2408, 0.0
    %v2565 = vmax.f32 %v2409, 0.0
    %v2566 = vmax.f32 %v2410, 0.0
    %v2567 = vmax.f32 %v2411, 0.0
    %v2568 = vmax.f32 %v2412, 0.0
    %v2569 = vmax.f32 %v2413, 0.0
    %v2570 = vmax.f32 %v2414, 0.0
    %v2571 = vmax.f32 %v2415, 0.0
    %v2572 = vmax.f32 %v2416, 0.0
    %v2573 = vmax.f32 %v2417, 0.0
    %v2574 = vmax.f32 %v2418, 0.0
    %v2575 = vmax.f32 %v2419, 0.0
    %v2576 = vmax.f32 %v2420, 0.0
    %v2577 = vmax.f32 %v2421, 0.0
    %v2578 = vmax.f32 %v2422, 0.0
    %v2579 = vmax.f32 %v2423, 0.0
    %v2580 = vmax.f32 %v2424, 0.0
    %v2581 = vmax.f32 %v2425, 0.0
    %v2582 = vmax.f32 %v2426, 0.0
    %v2583 = vmax.f32 %v2427, 0.0
    %v2584 = vmax.f32 %v2428, 0.0
    %v2585 = vmax.f32 %v2429, 0.0
    %v2586 = vmax.f32 %v2430, 0.0
    %v2587 = vmax.f32 %v2431, 0.0
    %v2588 = vmax.f32 %v2432, 0.0
    %v2589 = vmax.f32 %v2433, 0.0
    %v2590 = vmax.f32 %v2434, 0.0
    %v2591 = vmax.f32 %v2435, 0.0
    %v2592 = vmax.f32 %v2436, 0.0
    %v2593 = vmax.f32 %v2437, 0.0
    %v2594 = vmax.f32 %v2438, 0.0
    %v2595 = vmax.f32 %v2439, 0.0
    %v2596 = vmax.f32 %v2440, 0.0
    %v2597 = vmax.f32 %v2441, 0.0
    %v2598 = vmax.f32 %v2442, 0.0
    %v2599 = vmax.f32 %v2443, 0.0
    %v2600 = vmax.f32 %v2444, 0.0
    %v2601 = vmax.f32 %v2445, 0.0
    %v2602 = vmax.f32 %v2446, 0.0
    %v2603 = vmax.f32 %v2447, 0.0
    %v2604 = vmax.f32 %v2448, 0.0
    %v2605 = vmax.f32 %v2449, 0.0
    %v2606 = vmax.f32 %v2450, 0.0
    %v2607 = vmax.f32 %v2451, 0.0
    %v2608 = vmax.f32 %v2452, 0.0
    %v2609 = vmax.f32 %v2453, 0.0
    %v2610 = vmax.f32 %v2454, 0.0
    %v2611 = vmax.f32 %v2455, 0.0
    %v2612 = vmax.f32 %v2456, 0.0
    %v2613 = vmax.f32 %v2457, 0.0
    %v2614 = vmax.f32 %v2458, 0.0
    %v2615 = vmax.f32 %v2459, 0.0
    %v2616 = vmax.f32 %v2460, 0.0
    %v2617 = vmax.f32 %v2461, 0.0
    %v2618 = vmax.f32 %v2462, 0.0
    %v2619 = vmax.f32 %v2463, 0.0
    %v2620 = vmax.f32 %v2464, 0.0
    %v2621 = vmax.f32 %v2465, 0.0
    %v2622 = vmax.f32 %v2466, 0.0
    %v2623 = vmax.f32 %v2467, 0.0
    %v2624 = vmax.f32 %v2468, 0.0
    %v2625 = vmax.f32 %v2469, 0.0
    %v2626 = vmax.f32 %v2470, 0.0
    %v2627 = vmax.f32 %v2471, 0.0
    %v2628 = vmax.f32 %v2472, 0.0
    %v2629 = vmax.f32 %v2473, 0.0
    %v2630 = vmax.f32 %v2474, 0.0
    %v2631 = vmax.f32 %v2475, 0.0
    %v2632 = vmax.f32 %v2476, 0.0
    %v2633 = vmax.f32 %v2477, 0.0
    %v2634 = vmax.f32 %v2478, 0.0
    %v2635 = vmax.f32 %v2479, 0.0
    %v2636 = vmax.f32 %v2480, 0.0
    %v2637 = vmax.f32 %v2481, 0.0
    %v2638 = vmax.f32 %v2482, 0.0
    %v2639 = vmax.f32 %v2483, 0.0
    %v2640 = vmax.f32 %v2484, 0.0
    %v2641 = vmax.f32 %v2485, 0.0
    %v2642 = vmax.f32 %v2486, 0.0
    %v2643 = vmax.f32 %v2487, 0.0
    %v2644 = vmax.f32 %v2488, 0.0
    %v2645 = vmax.f32 %v2489, 0.0
    %v2646 = vmax.f32 %v2490, 0.0
    %v2647 = vmax.f32 %v2491, 0.0
    %v2648 = vmax.f32 %v2492, 0.0
    %v2649 = vmax.f32 %v2493, 0.0
    %v2650 = vmax.f32 %v2494, 0.0
    %v2651 = vmax.f32 %v2495, 0.0
    %v2652 = vmax.f32 %v2496, 0.0
    %v2653 = vmax.f32 %v2497, 0.0
    %v2654 = vmax.f32 %v2498, 0.0
    %v2655 = vmax.f32 %v2499, 0.0
    %v2656 = vmax.f32 %v2500, 0.0
    %v2657 = vmax.f32 %v2501, 0.0
    %v2658 = vmax.f32 %v2502, 0.0
    %v2659 = vmax.f32 %v2503, 0.0
    %v2660 = vmax.f32 %v2504, 0.0
    %v2661 = vmax.f32 %v2505, 0.0
    %v2662 = vmax.f32 %v2506, 0.0
    %v2663 = vmax.f32 %v2507, 0.0
    %v2664 = vmax.f32 %v2508, 0.0
    %v2665 = vmax.f32 %v2509, 0.0
    %v2666 = vmax.f32 %v2510, 0.0
    %v2667 = vmax.f32 %v2511, 0.0
    %v2668 = vmax.f32 %v2512, 0.0
    %v2669 = vmax.f32 %v2513, 0.0
    %v2670 = vmax.f32 %v2514, 0.0
    %v2671 = vmax.f32 %v2515, 0.0
    %v2672 = vmax.f32 %v2516, 0.0
    %v2673 = vmax.f32 %v2517, 0.0
    %v2674 = vmax.f32 %v2518, 0.0
    %v2675 = vmax.f32 %v2519, 0.0
    %v2676 = vmax.f32 %v2520, 0.0
    %v2677 = vmax.f32 %v2521, 0.0
    %v2678 = vmax.f32 %v2522, 0.0
    %v2679 = vmax.f32 %v2523, 0.0
    %v2680 = vmax.f32 %v2524, 0.0
    %v2681 = vmax.f32 %v2525, 0.0
    %v2682 = vmax.f32 %v2526, 0.0
    %v2683 = vmax.f32 %v2527, 0.0
    %v2684 = vmax.f32 %v2528, 0.0
    %v2685 = vmax.f32 %v2529, 0.0
    %v2686 = vmax.f32 %v2530, 0.0
    %v2687 = vmax.f32 %v2531, 0.0
    %v2688 = vmax.f32 %v2532, 0.0
    %v2689 = vmax.f32 %v2533, 0.0
    %v2690 = vmax.f32 %v2534, 0.0
    %v2691 = vpack.c.bf16 %v2537, %v2535
    %v2692 = vpack.c.bf16 %v2538, %v2536
    %v2693 = vpack.c.bf16 %v2541, %v2539
    %v2694 = vpack.c.bf16 %v2542, %v2540
    %v2695 = vpack.c.bf16 %v2545, %v2543
    %v2696 = vpack.c.bf16 %v2546, %v2544
    %v2697 = vpack.c.bf16 %v2549, %v2547
    %v2698 = vpack.c.bf16 %v2550, %v2548
    %v2699 = vpack.c.bf16 %v2553, %v2551
    %v2700 = vpack.c.bf16 %v2554, %v2552
    %v2701 = vpack.c.bf16 %v2557, %v2555
    %v2702 = vpack.c.bf16 %v2558, %v2556
    %v2703 = vpack.c.bf16 %v2561, %v2559
    %v2704 = vpack.c.bf16 %v2562, %v2560
    %v2705 = vpack.c.bf16 %v2565, %v2563
    %v2706 = vpack.c.bf16 %v2566, %v2564
    %v2707 = vpack.c.bf16 %v2569, %v2567
    %v2708 = vpack.c.bf16 %v2570, %v2568
    %v2709 = vpack.c.bf16 %v2573, %v2571
    %v2710 = vpack.c.bf16 %v2574, %v2572
    %v2711 = vpack.c.bf16 %v2577, %v2575
    %v2712 = vpack.c.bf16 %v2578, %v2576
    %v2713 = vpack.c.bf16 %v2581, %v2579
    %v2714 = vpack.c.bf16 %v2582, %v2580
    %v2715 = vpack.c.bf16 %v2585, %v2583
    %v2716 = vpack.c.bf16 %v2586, %v2584
    %v2717 = vpack.c.bf16 %v2589, %v2587
    %v2718 = vpack.c.bf16 %v2590, %v2588
    %v2719 = vpack.c.bf16 %v2593, %v2591
    %v2720 = vpack.c.bf16 %v2594, %v2592
    %v2721 = vpack.c.bf16 %v2597, %v2595
    %v2722 = vpack.c.bf16 %v2598, %v2596
    %v2723 = vpack.c.bf16 %v2601, %v2599
    %v2724 = vpack.c.bf16 %v2602, %v2600
    %v2725 = vpack.c.bf16 %v2605, %v2603
    %v2726 = vpack.c.bf16 %v2606, %v2604
    %v2727 = vpack.c.bf16 %v2609, %v2607
    %v2728 = vpack.c.bf16 %v2610, %v2608
    %v2729 = vpack.c.bf16 %v2613, %v2611
    %v2730 = vpack.c.bf16 %v2614, %v2612
    %v2731 = vpack.c.bf16 %v2617, %v2615
    %v2732 = vpack.c.bf16 %v2618, %v2616
    %v2733 = vpack.c.bf16 %v2621, %v2619
    %v2734 = vpack.c.bf16 %v2622, %v2620
    %v2735 = vpack.c.bf16 %v2625, %v2623
    %v2736 = vpack.c.bf16 %v2626, %v2624
    %v2737 = vpack.c.bf16 %v2629, %v2627
    %v2738 = vpack.c.bf16 %v2630, %v2628
    %v2739 = vpack.c.bf16 %v2633, %v2631
    %v2740 = vpack.c.bf16 %v2634, %v2632
    %v2741 = vpack.c.bf16 %v2637, %v2635
    %v2742 = vpack.c.bf16 %v2638, %v2636
    %v2743 = vpack.c.bf16 %v2641, %v2639
    %v2744 = vpack.c.bf16 %v2642, %v2640
    %v2745 = vpack.c.bf16 %v2645, %v2643
    %v2746 = vpack.c.bf16 %v2646, %v2644
    %v2747 = vpack.c.bf16 %v2649, %v2647
    %v2748 = vpack.c.bf16 %v2650, %v2648
    %v2749 = vpack.c.bf16 %v2653, %v2651
    %v2750 = vpack.c.bf16 %v2654, %v2652
    %v2751 = vpack.c.bf16 %v2657, %v2655
    %v2752 = vpack.c.bf16 %v2658, %v2656
    %v2753 = vpack.c.bf16 %v2661, %v2659
    %v2754 = vpack.c.bf16 %v2662, %v2660
    %v2755 = vpack.c.bf16 %v2665, %v2663
    %v2756 = vpack.c.bf16 %v2666, %v2664
    %v2757 = vpack.c.bf16 %v2669, %v2667
    %v2758 = vpack.c.bf16 %v2670, %v2668
    %v2759 = vpack.c.bf16 %v2673, %v2671
    %v2760 = vpack.c.bf16 %v2674, %v2672
    %v2761 = vpack.c.bf16 %v2677, %v2675
    %v2762 = vpack.c.bf16 %v2678, %v2676
    %v2763 = vpack.c.bf16 %v2681, %v2679
    %v2764 = vpack.c.bf16 %v2682, %v2680
    %v2765 = vpack.c.bf16 %v2685, %v2683
    %v2766 = vpack.c.bf16 %v2686, %v2684
    %v2767 = vpack.c.bf16 %v2689, %v2687
    %v2768 = vpack.c.bf16 %v2690, %v2688
    %s2769 = scalar_lea.vmem [#allocation3], 16
    %2770 = vst [vmem:[%s2769] sm:$0xff] %v2691
    %2771 = vst.msk [vmem:[%s2769 + $0x8] sm:$0xff] %vm176, %v2692
    %2772 = vst [vmem:[%s2769 + $0x10] sm:$0xff] %v2693
    %2773 = vst.msk [vmem:[%s2769 + $0x18] sm:$0xff] %vm176, %v2694
    %2774 = vst [vmem:[%s2769 + $0x20] sm:$0xff] %v2695
    %2775 = vst.msk [vmem:[%s2769 + $0x28] sm:$0xff] %vm176, %v2696
    %2776 = vst [vmem:[%s2769 + $0x30] sm:$0xff] %v2697
    %2777 = vst.msk [vmem:[%s2769 + $0x38] sm:$0xff] %vm176, %v2698
    %2778 = vst [vmem:[%s2769 + $0x40] sm:$0xff] %v2699
    %2779 = vst.msk [vmem:[%s2769 + $0x48] sm:$0xff] %vm176, %v2700
    %2780 = vst [vmem:[%s2769 + $0x50] sm:$0xff] %v2701
    %2781 = vst.msk [vmem:[%s2769 + $0x58] sm:$0xff] %vm176, %v2702
    %2782 = vst [vmem:[%s2769 + $0x60] sm:$0xff] %v2703
    %2783 = vst.msk [vmem:[%s2769 + $0x68] sm:$0xff] %vm176, %v2704
    %2784 = vst [vmem:[%s2769 + $0x70] sm:$0xff] %v2705
    %2785 = vst.msk [vmem:[%s2769 + $0x78] sm:$0xff] %vm176, %v2706
    %2786 = vst [vmem:[%s2769 + $0x80] sm:$0xff] %v2707
    %2787 = vst.msk [vmem:[%s2769 + $0x88] sm:$0xff] %vm176, %v2708
    %2788 = vst [vmem:[%s2769 + $0x90] sm:$0xff] %v2709
    %2789 = vst.msk [vmem:[%s2769 + $0x98] sm:$0xff] %vm176, %v2710
    %2790 = vst [vmem:[%s2769 + $0xa0] sm:$0xff] %v2711
    %2791 = vst.msk [vmem:[%s2769 + $0xa8] sm:$0xff] %vm176, %v2712
    %2792 = vst [vmem:[%s2769 + $0xb0] sm:$0xff] %v2713
    %2793 = vst.msk [vmem:[%s2769 + $0xb8] sm:$0xff] %vm176, %v2714
    %2794 = vst [vmem:[%s2769 + $0xc0] sm:$0xff] %v2715
    %2795 = vst.msk [vmem:[%s2769 + $0xc8] sm:$0xff] %vm176, %v2716
    %2796 = vst [vmem:[%s2769 + $0xd0] sm:$0xff] %v2717
    %2797 = vst.msk [vmem:[%s2769 + $0xd8] sm:$0xff] %vm176, %v2718
    %2798 = vst [vmem:[%s2769 + $0xe0] sm:$0xff] %v2719
    %2799 = vst.msk [vmem:[%s2769 + $0xe8] sm:$0xff] %vm176, %v2720
    %2800 = vst [vmem:[%s2769 + $0xf0] sm:$0xff] %v2721
    %2801 = vst.msk [vmem:[%s2769 + $0xf8] sm:$0xff] %vm176, %v2722
    %2802 = vst [vmem:[%s2769 + $0x100] sm:$0xff] %v2723
    %2803 = vst.msk [vmem:[%s2769 + $0x108] sm:$0xff] %vm176, %v2724
    %2804 = vst [vmem:[%s2769 + $0x110] sm:$0xff] %v2725
    %2805 = vst.msk [vmem:[%s2769 + $0x118] sm:$0xff] %vm176, %v2726
    %2806 = vst [vmem:[%s2769 + $0x120] sm:$0xff] %v2727
    %2807 = vst.msk [vmem:[%s2769 + $0x128] sm:$0xff] %vm176, %v2728
    %2808 = vst [vmem:[%s2769 + $0x130] sm:$0xff] %v2729
    %2809 = vst.msk [vmem:[%s2769 + $0x138] sm:$0xff] %vm176, %v2730
    %2810 = vst [vmem:[%s2769 + $0x140] sm:$0xff] %v2731
    %2811 = vst.msk [vmem:[%s2769 + $0x148] sm:$0xff] %vm176, %v2732
    %2812 = vst [vmem:[%s2769 + $0x150] sm:$0xff] %v2733
    %2813 = vst.msk [vmem:[%s2769 + $0x158] sm:$0xff] %vm176, %v2734
    %2814 = vst [vmem:[%s2769 + $0x160] sm:$0xff] %v2735
    %2815 = vst.msk [vmem:[%s2769 + $0x168] sm:$0xff] %vm176, %v2736
    %2816 = vst [vmem:[%s2769 + $0x170] sm:$0xff] %v2737
    %2817 = vst.msk [vmem:[%s2769 + $0x178] sm:$0xff] %vm176, %v2738
    %2818 = vst [vmem:[%s2769 + $0x180] sm:$0xff] %v2739
    %2819 = vst.msk [vmem:[%s2769 + $0x188] sm:$0xff] %vm176, %v2740
    %2820 = vst [vmem:[%s2769 + $0x190] sm:$0xff] %v2741
    %2821 = vst.msk [vmem:[%s2769 + $0x198] sm:$0xff] %vm176, %v2742
    %2822 = vst [vmem:[%s2769 + $0x1a0] sm:$0xff] %v2743
    %2823 = vst.msk [vmem:[%s2769 + $0x1a8] sm:$0xff] %vm176, %v2744
    %2824 = vst [vmem:[%s2769 + $0x1b0] sm:$0xff] %v2745
    %2825 = vst.msk [vmem:[%s2769 + $0x1b8] sm:$0xff] %vm176, %v2746
    %2826 = vst [vmem:[%s2769 + $0x1c0] sm:$0xff] %v2747
    %2827 = vst.msk [vmem:[%s2769 + $0x1c8] sm:$0xff] %vm176, %v2748
    %2828 = vst [vmem:[%s2769 + $0x1d0] sm:$0xff] %v2749
    %2829 = vst.msk [vmem:[%s2769 + $0x1d8] sm:$0xff] %vm176, %v2750
    %2830 = vst [vmem:[%s2769 + $0x1e0] sm:$0xff] %v2751
    %2831 = vst.msk [vmem:[%s2769 + $0x1e8] sm:$0xff] %vm176, %v2752
    %2832 = vst [vmem:[%s2769 + $0x1f0] sm:$0xff] %v2753
    %2833 = vst.msk [vmem:[%s2769 + $0x1f8] sm:$0xff] %vm176, %v2754
    %2834 = vst [vmem:[%s2769 + $0x200] sm:$0xff] %v2755
    %2835 = vst.msk [vmem:[%s2769 + $0x208] sm:$0xff] %vm176, %v2756
    %2836 = vst [vmem:[%s2769 + $0x210] sm:$0xff] %v2757
    %2837 = vst.msk [vmem:[%s2769 + $0x218] sm:$0xff] %vm176, %v2758
    %2838 = vst [vmem:[%s2769 + $0x220] sm:$0xff] %v2759
    %2839 = vst.msk [vmem:[%s2769 + $0x228] sm:$0xff] %vm176, %v2760
    %2840 = vst [vmem:[%s2769 + $0x230] sm:$0xff] %v2761
    %2841 = vst.msk [vmem:[%s2769 + $0x238] sm:$0xff] %vm176, %v2762
    %2842 = vst [vmem:[%s2769 + $0x240] sm:$0xff] %v2763
    %2843 = vst.msk [vmem:[%s2769 + $0x248] sm:$0xff] %vm176, %v2764
    %2844 = vst [vmem:[%s2769 + $0x250] sm:$0xff] %v2765
    %2845 = vst.msk [vmem:[%s2769 + $0x258] sm:$0xff] %vm176, %v2766
    %2846 = vst [vmem:[%s2769 + $0x260] sm:$0xff] %v2767
    %2847 = vst.msk [vmem:[%s2769 + $0x268] sm:$0xff] %vm176, %v2768
    %v2848 = vld [vmem:[#allocation3] sm:$0xff]
    %v2849 = vld [vmem:[#allocation3 + $0x8] sm:$0xff]
    %v2850 = vld [vmem:[#allocation3 + $0x10] sm:$0xff]
    %v2851 = vld [vmem:[#allocation3 + $0x18] sm:$0xff]
    %v2852 = vld [vmem:[#allocation3 + $0x20] sm:$0xff]
    %v2853 = vld [vmem:[#allocation3 + $0x28] sm:$0xff]
    %v2854 = vld [vmem:[#allocation3 + $0x30] sm:$0xff]
    %v2855 = vld [vmem:[#allocation3 + $0x38] sm:$0xff]
    %v2856 = vld [vmem:[#allocation3 + $0x40] sm:$0xff]
    %v2857 = vld [vmem:[#allocation3 + $0x48] sm:$0xff]
    %v2858 = vld [vmem:[#allocation3 + $0x50] sm:$0xff]
    %v2859 = vld [vmem:[#allocation3 + $0x58] sm:$0xff]
    %v2860 = vld [vmem:[#allocation3 + $0x60] sm:$0xff]
    %v2861 = vld [vmem:[#allocation3 + $0x68] sm:$0xff]
    %v2862 = vld [vmem:[#allocation3 + $0x70] sm:$0xff]
    %v2863 = vld [vmem:[#allocation3 + $0x78] sm:$0xff]
    %v2864 = vld [vmem:[#allocation3 + $0x80] sm:$0xff]
    %v2865 = vld [vmem:[#allocation3 + $0x88] sm:$0xff]
    %v2866 = vld [vmem:[#allocation3 + $0x90] sm:$0xff]
    %v2867 = vld [vmem:[#allocation3 + $0x98] sm:$0xff]
    %v2868 = vld [vmem:[#allocation3 + $0xa0] sm:$0xff]
    %v2869 = vld [vmem:[#allocation3 + $0xa8] sm:$0xff]
    %v2870 = vld [vmem:[#allocation3 + $0xb0] sm:$0xff]
    %v2871 = vld [vmem:[#allocation3 + $0xb8] sm:$0xff]
    %v2872 = vld [vmem:[#allocation3 + $0xc0] sm:$0xff]
    %v2873 = vld [vmem:[#allocation3 + $0xc8] sm:$0xff]
    %v2874 = vld [vmem:[#allocation3 + $0xd0] sm:$0xff]
    %v2875 = vld [vmem:[#allocation3 + $0xd8] sm:$0xff]
    %v2876 = vld [vmem:[#allocation3 + $0xe0] sm:$0xff]
    %v2877 = vld [vmem:[#allocation3 + $0xe8] sm:$0xff]
    %v2878 = vld [vmem:[#allocation3 + $0xf0] sm:$0xff]
    %v2879 = vld [vmem:[#allocation3 + $0xf8] sm:$0xff]
    %v2880 = vld [vmem:[#allocation3 + $0x100] sm:$0xff]
    %v2881 = vld [vmem:[#allocation3 + $0x108] sm:$0xff]
    %v2882 = vld [vmem:[#allocation3 + $0x110] sm:$0xff]
    %v2883 = vld [vmem:[#allocation3 + $0x118] sm:$0xff]
    %v2884 = vld [vmem:[#allocation3 + $0x120] sm:$0xff]
    %v2885 = vld [vmem:[#allocation3 + $0x128] sm:$0xff]
    %v2886 = vld [vmem:[#allocation3 + $0x130] sm:$0xff]
    %v2887 = vld [vmem:[#allocation3 + $0x138] sm:$0xff]
    %v2888 = vld [vmem:[#allocation3 + $0x140] sm:$0xff]
    %v2889 = vld [vmem:[#allocation3 + $0x148] sm:$0xff]
    %v2890 = vld [vmem:[#allocation3 + $0x150] sm:$0xff]
    %v2891 = vld [vmem:[#allocation3 + $0x158] sm:$0xff]
    %v2892 = vld [vmem:[#allocation3 + $0x160] sm:$0xff]
    %v2893 = vld [vmem:[#allocation3 + $0x168] sm:$0xff]
    %v2894 = vld [vmem:[#allocation3 + $0x170] sm:$0xff]
    %v2895 = vld [vmem:[#allocation3 + $0x178] sm:$0xff]
    %v2896 = vld [vmem:[#allocation3 + $0x180] sm:$0xff]
    %v2897 = vld [vmem:[#allocation3 + $0x188] sm:$0xff]
    %v2898 = vld [vmem:[#allocation3 + $0x190] sm:$0xff]
    %v2899 = vld [vmem:[#allocation3 + $0x198] sm:$0xff]
    %v2900 = vld [vmem:[#allocation3 + $0x1a0] sm:$0xff]
    %v2901 = vld [vmem:[#allocation3 + $0x1a8] sm:$0xff]
    %v2902 = vld [vmem:[#allocation3 + $0x1b0] sm:$0xff]
    %v2903 = vld [vmem:[#allocation3 + $0x1b8] sm:$0xff]
    %v2904 = vld [vmem:[#allocation3 + $0x1c0] sm:$0xff]
    %v2905 = vld [vmem:[#allocation3 + $0x1c8] sm:$0xff]
    %v2906 = vld [vmem:[#allocation3 + $0x1d0] sm:$0xff]
    %v2907 = vld [vmem:[#allocation3 + $0x1d8] sm:$0xff]
    %v2908 = vld [vmem:[#allocation3 + $0x1e0] sm:$0xff]
    %v2909 = vld [vmem:[#allocation3 + $0x1e8] sm:$0xff]
    %v2910 = vld [vmem:[#allocation3 + $0x1f0] sm:$0xff]
    %v2911 = vld [vmem:[#allocation3 + $0x1f8] sm:$0xff]
    %v2912 = vld [vmem:[#allocation3 + $0x200] sm:$0xff]
    %v2913 = vld [vmem:[#allocation3 + $0x208] sm:$0xff]
    %v2914 = vld [vmem:[#allocation3 + $0x210] sm:$0xff]
    %v2915 = vld [vmem:[#allocation3 + $0x218] sm:$0xff]
    %v2916 = vld [vmem:[#allocation3 + $0x220] sm:$0xff]
    %v2917 = vld [vmem:[#allocation3 + $0x228] sm:$0xff]
    %v2918 = vld [vmem:[#allocation3 + $0x230] sm:$0xff]
    %v2919 = vld [vmem:[#allocation3 + $0x238] sm:$0xff]
    %v2920 = vld [vmem:[#allocation3 + $0x240] sm:$0xff]
    %v2921 = vld [vmem:[#allocation3 + $0x248] sm:$0xff]
    %v2922 = vld [vmem:[#allocation3 + $0x250] sm:$0xff]
    %v2923 = vld [vmem:[#allocation3 + $0x258] sm:$0xff]
    %v2924 = vld [vmem:[#allocation3 + $0x260] sm:$0xff]
    %v2925 = vld [vmem:[#allocation3 + $0x268] sm:$0xff]
    %v2926 = vld [vmem:[%s3] sm:$0xff]
    %v2927 = vld [vmem:[%s3 + $0x8] sm:$0xff]
    %v2928 = vld [vmem:[%s3 + $0x10] sm:$0xff]
    %v2929 = vld [vmem:[%s3 + $0x18] sm:$0xff]
    %v2930 = vld [vmem:[%s3 + $0x20] sm:$0xff]
    %v2931 = vld [vmem:[%s3 + $0x28] sm:$0xff]
    %v2932 = vld [vmem:[%s3 + $0x30] sm:$0xff]
    %v2933 = vld [vmem:[%s3 + $0x38] sm:$0xff]
    %v2934 = vld [vmem:[%s3 + $0x40] sm:$0xff]
    %v2935 = vld [vmem:[%s3 + $0x48] sm:$0xff]
    %v2936 = vld [vmem:[%s3 + $0x50] sm:$0xff]
    %v2937 = vld [vmem:[%s3 + $0x58] sm:$0xff]
    %v2938 = vld [vmem:[%s3 + $0x60] sm:$0xff]
    %v2939 = vld [vmem:[%s3 + $0x68] sm:$0xff]
    %v2940 = vld [vmem:[%s3 + $0x70] sm:$0xff]
    %v2941 = vld [vmem:[%s3 + $0x78] sm:$0xff]
    %v2942 = vld [vmem:[%s3 + $0x80] sm:$0xff]
    %v2943 = vld [vmem:[%s3 + $0x88] sm:$0xff]
    %v2944 = vld [vmem:[%s3 + $0x90] sm:$0xff]
    %v2945 = vld [vmem:[%s3 + $0x98] sm:$0x33]
    %v2946 = vld [vmem:[%s2769] sm:$0xff]
    %v2947 = vld [vmem:[%s2769 + $0x8] sm:$0xff]
    %v2948 = vld [vmem:[%s2769 + $0x10] sm:$0xff]
    %v2949 = vld [vmem:[%s2769 + $0x18] sm:$0xff]
    %v2950 = vld [vmem:[%s2769 + $0x20] sm:$0xff]
    %v2951 = vld [vmem:[%s2769 + $0x28] sm:$0xff]
    %v2952 = vld [vmem:[%s2769 + $0x30] sm:$0xff]
    %v2953 = vld [vmem:[%s2769 + $0x38] sm:$0xff]
    %v2954 = vld [vmem:[%s2769 + $0x40] sm:$0xff]
    %v2955 = vld [vmem:[%s2769 + $0x48] sm:$0xff]
    %v2956 = vld [vmem:[%s2769 + $0x50] sm:$0xff]
    %v2957 = vld [vmem:[%s2769 + $0x58] sm:$0xff]
    %v2958 = vld [vmem:[%s2769 + $0x60] sm:$0xff]
    %v2959 = vld [vmem:[%s2769 + $0x68] sm:$0xff]
    %v2960 = vld [vmem:[%s2769 + $0x70] sm:$0xff]
    %v2961 = vld [vmem:[%s2769 + $0x78] sm:$0xff]
    %v2962 = vld [vmem:[%s2769 + $0x80] sm:$0xff]
    %v2963 = vld [vmem:[%s2769 + $0x88] sm:$0xff]
    %v2964 = vld [vmem:[%s2769 + $0x90] sm:$0xff]
    %v2965 = vld [vmem:[%s2769 + $0x98] sm:$0xff]
    %v2966 = vld [vmem:[%s2769 + $0xa0] sm:$0xff]
    %v2967 = vld [vmem:[%s2769 + $0xa8] sm:$0xff]
    %v2968 = vld [vmem:[%s2769 + $0xb0] sm:$0xff]
    %v2969 = vld [vmem:[%s2769 + $0xb8] sm:$0xff]
    %v2970 = vld [vmem:[%s2769 + $0xc0] sm:$0xff]
    %v2971 = vld [vmem:[%s2769 + $0xc8] sm:$0xff]
    %v2972 = vld [vmem:[%s2769 + $0xd0] sm:$0xff]
    %v2973 = vld [vmem:[%s2769 + $0xd8] sm:$0xff]
    %v2974 = vld [vmem:[%s2769 + $0xe0] sm:$0xff]
    %v2975 = vld [vmem:[%s2769 + $0xe8] sm:$0xff]
    %v2976 = vld [vmem:[%s2769 + $0xf0] sm:$0xff]
    %v2977 = vld [vmem:[%s2769 + $0xf8] sm:$0xff]
    %v2978 = vld [vmem:[%s2769 + $0x100] sm:$0xff]
    %v2979 = vld [vmem:[%s2769 + $0x108] sm:$0xff]
    %v2980 = vld [vmem:[%s2769 + $0x110] sm:$0xff]
    %v2981 = vld [vmem:[%s2769 + $0x118] sm:$0xff]
    %v2982 = vld [vmem:[%s2769 + $0x120] sm:$0xff]
    %v2983 = vld [vmem:[%s2769 + $0x128] sm:$0xff]
    %v2984 = vld [vmem:[%s2769 + $0x130] sm:$0xff]
    %v2985 = vld [vmem:[%s2769 + $0x138] sm:$0xff]
    %v2986 = vld [vmem:[%s2769 + $0x140] sm:$0xff]
    %v2987 = vld [vmem:[%s2769 + $0x148] sm:$0xff]
    %v2988 = vld [vmem:[%s2769 + $0x150] sm:$0xff]
    %v2989 = vld [vmem:[%s2769 + $0x158] sm:$0xff]
    %v2990 = vld [vmem:[%s2769 + $0x160] sm:$0xff]
    %v2991 = vld [vmem:[%s2769 + $0x168] sm:$0xff]
    %v2992 = vld [vmem:[%s2769 + $0x170] sm:$0xff]
    %v2993 = vld [vmem:[%s2769 + $0x178] sm:$0xff]
    %v2994 = vld [vmem:[%s2769 + $0x180] sm:$0xff]
    %v2995 = vld [vmem:[%s2769 + $0x188] sm:$0xff]
    %v2996 = vld [vmem:[%s2769 + $0x190] sm:$0xff]
    %v2997 = vld [vmem:[%s2769 + $0x198] sm:$0xff]
    %v2998 = vld [vmem:[%s2769 + $0x1a0] sm:$0xff]
    %v2999 = vld [vmem:[%s2769 + $0x1a8] sm:$0xff]
    %v3000 = vld [vmem:[%s2769 + $0x1b0] sm:$0xff]
    %v3001 = vld [vmem:[%s2769 + $0x1b8] sm:$0xff]
    %v3002 = vld [vmem:[%s2769 + $0x1c0] sm:$0xff]
    %v3003 = vld [vmem:[%s2769 + $0x1c8] sm:$0xff]
    %v3004 = vld [vmem:[%s2769 + $0x1d0] sm:$0xff]
    %v3005 = vld [vmem:[%s2769 + $0x1d8] sm:$0xff]
    %v3006 = vld [vmem:[%s2769 + $0x1e0] sm:$0xff]
    %v3007 = vld [vmem:[%s2769 + $0x1e8] sm:$0xff]
    %v3008 = vld [vmem:[%s2769 + $0x1f0] sm:$0xff]
    %v3009 = vld [vmem:[%s2769 + $0x1f8] sm:$0xff]
    %v3010 = vld [vmem:[%s2769 + $0x200] sm:$0xff]
    %v3011 = vld [vmem:[%s2769 + $0x208] sm:$0xff]
    %v3012 = vld [vmem:[%s2769 + $0x210] sm:$0xff]
    %v3013 = vld [vmem:[%s2769 + $0x218] sm:$0xff]
    %v3014 = vld [vmem:[%s2769 + $0x220] sm:$0xff]
    %v3015 = vld [vmem:[%s2769 + $0x228] sm:$0xff]
    %v3016 = vld [vmem:[%s2769 + $0x230] sm:$0xff]
    %v3017 = vld [vmem:[%s2769 + $0x238] sm:$0xff]
    %v3018 = vld [vmem:[%s2769 + $0x240] sm:$0xff]
    %v3019 = vld [vmem:[%s2769 + $0x248] sm:$0xff]
    %v3020 = vld [vmem:[%s2769 + $0x250] sm:$0xff]
    %v3021 = vld [vmem:[%s2769 + $0x258] sm:$0xff]
    %v3022 = vld [vmem:[%s2769 + $0x260] sm:$0xff]
    %v3023 = vld [vmem:[%s2769 + $0x268] sm:$0xff]
    %s3024 = scalar_lea.vmem %s3, 160
    %v3025 = vld [vmem:[%s3024] sm:$0xff]
    %v3026 = vld [vmem:[%s3024 + $0x8] sm:$0xff]
    %v3027 = vld [vmem:[%s3024 + $0x10] sm:$0xff]
    %v3028 = vld [vmem:[%s3024 + $0x18] sm:$0xff]
    %v3029 = vld [vmem:[%s3024 + $0x20] sm:$0xff]
    %v3030 = vld [vmem:[%s3024 + $0x28] sm:$0xff]
    %v3031 = vld [vmem:[%s3024 + $0x30] sm:$0xff]
    %v3032 = vld [vmem:[%s3024 + $0x38] sm:$0xff]
    %v3033 = vld [vmem:[%s3024 + $0x40] sm:$0xff]
    %v3034 = vld [vmem:[%s3024 + $0x48] sm:$0xff]
    %v3035 = vld [vmem:[%s3024 + $0x50] sm:$0xff]
    %v3036 = vld [vmem:[%s3024 + $0x58] sm:$0xff]
    %v3037 = vld [vmem:[%s3024 + $0x60] sm:$0xff]
    %v3038 = vld [vmem:[%s3024 + $0x68] sm:$0xff]
    %v3039 = vld [vmem:[%s3024 + $0x70] sm:$0xff]
    %v3040 = vld [vmem:[%s3024 + $0x78] sm:$0xff]
    %v3041 = vld [vmem:[%s3024 + $0x80] sm:$0xff]
    %v3042 = vld [vmem:[%s3024 + $0x88] sm:$0xff]
    %v3043 = vld [vmem:[%s3024 + $0x90] sm:$0xff]
    %v3044 = vld [vmem:[%s3024 + $0x98] sm:$0x33]
    %v3065 = vunpack.c.l.b16 %v3025
    %v3066 = vunpack.c.h.b16 %v3025
    %v3067 = vunpack.c.l.b16 %v3026
    %v3068 = vunpack.c.h.b16 %v3026
    %v3069 = vunpack.c.l.b16 %v3027
    %v3070 = vunpack.c.h.b16 %v3027
    %v3071 = vunpack.c.l.b16 %v3028
    %v3072 = vunpack.c.h.b16 %v3028
    %v3073 = vunpack.c.l.b16 %v3029
    %v3074 = vunpack.c.h.b16 %v3029
    %v3075 = vunpack.c.l.b16 %v3030
    %v3076 = vunpack.c.h.b16 %v3030
    %v3077 = vunpack.c.l.b16 %v3031
    %v3078 = vunpack.c.h.b16 %v3031
    %v3079 = vunpack.c.l.b16 %v3032
    %v3080 = vunpack.c.h.b16 %v3032
    %v3081 = vunpack.c.l.b16 %v3033
    %v3082 = vunpack.c.h.b16 %v3033
    %v3083 = vunpack.c.l.b16 %v3034
    %v3084 = vunpack.c.h.b16 %v3034
    %v3085 = vunpack.c.l.b16 %v3035
    %v3086 = vunpack.c.h.b16 %v3035
    %v3087 = vunpack.c.l.b16 %v3036
    %v3088 = vunpack.c.h.b16 %v3036
    %v3089 = vunpack.c.l.b16 %v3037
    %v3090 = vunpack.c.h.b16 %v3037
    %v3091 = vunpack.c.l.b16 %v3038
    %v3092 = vunpack.c.h.b16 %v3038
    %v3093 = vunpack.c.l.b16 %v3039
    %v3094 = vunpack.c.h.b16 %v3039
    %v3095 = vunpack.c.l.b16 %v3040
    %v3096 = vunpack.c.h.b16 %v3040
    %v3097 = vunpack.c.l.b16 %v3041
    %v3098 = vunpack.c.h.b16 %v3041
    %v3099 = vunpack.c.l.b16 %v3042
    %v3100 = vunpack.c.h.b16 %v3042
    %v3101 = vunpack.c.l.b16 %v3043
    %v3102 = vunpack.c.h.b16 %v3043
    %v3103 = vunpack.c.l.b16 %v3044
    %v3104 = vunpack.c.h.b16 %v3044
    %v3105 = vpack.c.b16 %v3067, %v3065
    %v3106 = vpack.c.b16 %v3068, %v3066
    %v3107 = vpack.c.b16 %v3071, %v3069
    %v3108 = vpack.c.b16 %v3072, %v3070
    %v3109 = vpack.c.b16 %v3075, %v3073
    %v3110 = vpack.c.b16 %v3076, %v3074
    %v3111 = vpack.c.b16 %v3079, %v3077
    %v3112 = vpack.c.b16 %v3080, %v3078
    %v3113 = vpack.c.b16 %v3083, %v3081
    %v3114 = vpack.c.b16 %v3084, %v3082
    %v3115 = vpack.c.b16 %v3087, %v3085
    %v3116 = vpack.c.b16 %v3088, %v3086
    %v3117 = vpack.c.b16 %v3091, %v3089
    %v3118 = vpack.c.b16 %v3092, %v3090
    %v3119 = vpack.c.b16 %v3095, %v3093
    %v3120 = vpack.c.b16 %v3096, %v3094
    %v3121 = vpack.c.b16 %v3099, %v3097
    %v3122 = vpack.c.b16 %v3100, %v3098
    %v3123 = vpack.c.b16 %v3103, %v3101
    %v3124 = vpack.c.b16 %v3104, %v3102
    %v3144 = vsel %vm176, %v2947, 0
    %v3147 = vsel %vm176, %v2949, 0
    %v3150 = vsel %vm176, %v2951, 0
    %v3153 = vsel %vm176, %v2953, 0
    %v3156 = vsel %vm176, %v2955, 0
    %v3159 = vsel %vm176, %v2957, 0
    %v3162 = vsel %vm176, %v2959, 0
    %v3165 = vsel %vm176, %v2961, 0
    %v3168 = vsel %vm176, %v2963, 0
    %v3171 = vsel %vm176, %v2965, 0
    %v3174 = vsel %vm176, %v2967, 0
    %v3177 = vsel %vm176, %v2969, 0
    %v3180 = vsel %vm176, %v2971, 0
    %v3183 = vsel %vm176, %v2973, 0
    %v3186 = vsel %vm176, %v2975, 0
    %v3189 = vsel %vm176, %v2977, 0
    %v3192 = vsel %vm176, %v2979, 0
    %v3195 = vsel %vm176, %v2981, 0
    %v3198 = vsel %vm176, %v2983, 0
    %v3201 = vsel %vm176, %v2985, 0
    %v3204 = vsel %vm176, %v2987, 0
    %v3207 = vsel %vm176, %v2989, 0
    %v3210 = vsel %vm176, %v2991, 0
    %v3213 = vsel %vm176, %v2993, 0
    %v3216 = vsel %vm176, %v2995, 0
    %v3219 = vsel %vm176, %v2997, 0
    %v3222 = vsel %vm176, %v2999, 0
    %v3225 = vsel %vm176, %v3001, 0
    %v3228 = vsel %vm176, %v3003, 0
    %v3231 = vsel %vm176, %v3005, 0
    %v3234 = vsel %vm176, %v3007, 0
    %v3237 = vsel %vm176, %v3009, 0
    %v3240 = vsel %vm176, %v3011, 0
    %v3243 = vsel %vm176, %v3013, 0
    %v3246 = vsel %vm176, %v3015, 0
    %v3249 = vsel %vm176, %v3017, 0
    %v3252 = vsel %vm176, %v3019, 0
    %v3255 = vsel %vm176, %v3021, 0
    %v3258 = vsel %vm176, %v3023, 0
    %vm3260 = vcmask 1045504
    %v3262 = vsel %vm3260, %v3123, 0
    %v3265 = vsel %vm3260, %v3124, 0
    %3267 = vmatprep.subr.bf16.mxu0 %v3106
    %3268 = vmatpush1.bf16.msra.mxu0 %v3105
    %3269 = vmatprep.subr.bf16.mxu0 %v3108
    %3270 = vmatpush1.bf16.msra.mxu0 %v3107
    %3271 = vmatprep.subr.bf16.mxu0 %v3110
    %3272 = vmatpush1.bf16.msra.mxu0 %v3109
    %3273 = vmatprep.subr.bf16.mxu0 %v3112
    %3274 = vmatpush1.bf16.msra.mxu0 %v3111
    %3275 = vmatprep.subr.bf16.mxu0 %v3114
    %3276 = vmatpush1.bf16.msra.mxu0 %v3113
    %3277 = vmatprep.subr.bf16.mxu0 %v3116
    %3278 = vmatpush1.bf16.msra.mxu0 %v3115
    %3279 = vmatprep.subr.bf16.mxu0 %v3118
    %3280 = vmatpush1.bf16.msra.mxu0 %v3117
    %3281 = vmatprep.subr.bf16.mxu0 %v3120
    %3282 = vmatpush1.bf16.msra.mxu0 %v3119
    %3283 = vmatprep.subr.bf16.mxu0 %v3122
    %3284 = vmatpush1.bf16.msra.mxu0 %v3121
    %3285 = vmatprep.subr.bf16.mxu0 %v3265
    %3286 = vmatpush1.bf16.msra.mxu0 %v3262
    %3287 = vmatprep.subr.bf16.mxu0 0
    %3288 = vmatpush1.bf16.msra.mxu0 0
    %3289 = vmatprep.subr.bf16.mxu0 0
    %3290 = vmatpush1.bf16.msra.mxu0 0
    %3291 = vmatprep.subr.bf16.mxu0 0
    %3292 = vmatpush1.bf16.msra.mxu0 0
    %3293 = vmatprep.subr.bf16.mxu0 0
    %3294 = vmatpush1.bf16.msra.mxu0 0
    %3295 = vmatprep.subr.bf16.mxu0 0
    %3296 = vmatpush1.bf16.msra.mxu0 0
    %3297 = vmatprep.subr.bf16.mxu0 0
    %3298 = vmatpush1.bf16.msra.mxu0 0
    %3299 = vmatprep.mubr.bf16.mxu0 %v3144
    %3300 = vmatmul.mubr.bf16.gmra.mrb[0].mxu0 %v2946
    %v3301 = vpop.f32.mrb[0].mxu0
    %v3302 = vadd.f32 0.0, %v3301
    %v3303 = vpop.f32.mrb[0].mxu0
    %v3304 = vadd.f32 0.0, %v3303
    %v3305 = vpop.f32.mrb[0].mxu0
    %v3306 = vadd.f32 0.0, %v3305
    %v3307 = vpop.f32.mrb[0].mxu0
    %v3308 = vadd.f32 0.0, %v3307
    %3309 = vmatprep.mubr.bf16.mxu0 %v3147
    %3310 = vmatmul.mubr.bf16.gmra.mrb[0].mxu0 %v2948
    %v3311 = vpop.f32.mrb[0].mxu0
    %v3312 = vadd.f32 0.0, %v3311
    %v3313 = vpop.f32.mrb[0].mxu0
    %v3314 = vadd.f32 0.0, %v3313
    %v3315 = vpop.f32.mrb[0].mxu0
    %v3316 = vadd.f32 0.0, %v3315
    %v3317 = vpop.f32.mrb[0].mxu0
    %v3318 = vadd.f32 0.0, %v3317
    %3319 = vmatprep.mubr.bf16.mxu0 %v3150
    %3320 = vmatmul.mubr.bf16.gmra.mrb[0].mxu0 %v2950
    %v3321 = vpop.f32.mrb[0].mxu0
    %v3322 = vadd.f32 0.0, %v3321
    %v3323 = vpop.f32.mrb[0].mxu0
    %v3324 = vadd.f32 0.0, %v3323
    %v3325 = vpop.f32.mrb[0].mxu0
    %v3326 = vadd.f32 0.0, %v3325
    %v3327 = vpop.f32.mrb[0].mxu0
    %v3328 = vadd.f32 0.0, %v3327
    %3329 = vmatprep.mubr.bf16.mxu0 %v3153
    %3330 = vmatmul.mubr.bf16.gmra.mrb[0].mxu0 %v2952
    %v3331 = vpop.f32.mrb[0].mxu0
    %v3332 = vadd.f32 0.0, %v3331
    %v3333 = vpop.f32.mrb[0].mxu0
    %v3334 = vadd.f32 0.0, %v3333
    %v3335 = vpop.f32.mrb[0].mxu0
    %v3336 = vadd.f32 0.0, %v3335
    %v3337 = vpop.f32.mrb[0].mxu0
    %v3338 = vadd.f32 0.0, %v3337
    %3339 = vmatprep.mubr.bf16.mxu0 %v3156
    %3340 = vmatmul.mubr.bf16.gmra.mrb[0].mxu0 %v2954
    %v3341 = vpop.f32.mrb[0].mxu0
    %v3342 = vadd.f32 0.0, %v3341
    %v3343 = vpop.f32.mrb[0].mxu0
    %v3344 = vadd.f32 0.0, %v3343
    %v3345 = vpop.f32.mrb[0].mxu0
    %v3346 = vadd.f32 0.0, %v3345
    %v3347 = vpop.f32.mrb[0].mxu0
    %v3348 = vadd.f32 0.0, %v3347
    %3349 = vmatprep.mubr.bf16.mxu0 %v3159
    %3350 = vmatmul.mubr.bf16.gmra.mrb[0].mxu0 %v2956
    %v3351 = vpop.f32.mrb[0].mxu0
    %v3352 = vadd.f32 0.0, %v3351
    %v3353 = vpop.f32.mrb[0].mxu0
    %v3354 = vadd.f32 0.0, %v3353
    %v3355 = vpop.f32.mrb[0].mxu0
    %v3356 = vadd.f32 0.0, %v3355
    %v3357 = vpop.f32.mrb[0].mxu0
    %v3358 = vadd.f32 0.0, %v3357
    %3359 = vmatprep.mubr.bf16.mxu0 %v3162
    %3360 = vmatmul.mubr.bf16.gmra.mrb[0].mxu0 %v2958
    %v3361 = vpop.f32.mrb[0].mxu0
    %v3362 = vadd.f32 0.0, %v3361
    %v3363 = vpop.f32.mrb[0].mxu0
    %v3364 = vadd.f32 0.0, %v3363
    %v3365 = vpop.f32.mrb[0].mxu0
    %v3366 = vadd.f32 0.0, %v3365
    %v3367 = vpop.f32.mrb[0].mxu0
    %v3368 = vadd.f32 0.0, %v3367
    %3369 = vmatprep.mubr.bf16.mxu0 %v3165
    %3370 = vmatmul.mubr.bf16.gmra.mrb[0].mxu0 %v2960
    %v3371 = vpop.f32.mrb[0].mxu0
    %v3372 = vadd.f32 0.0, %v3371
    %v3373 = vpop.f32.mrb[0].mxu0
    %v3374 = vadd.f32 0.0, %v3373
    %v3375 = vpop.f32.mrb[0].mxu0
    %v3376 = vadd.f32 0.0, %v3375
    %v3377 = vpop.f32.mrb[0].mxu0
    %v3378 = vadd.f32 0.0, %v3377
    %3379 = vmatprep.mubr.bf16.mxu0 %v3168
    %3380 = vmatmul.mubr.bf16.gmra.mrb[0].mxu0 %v2962
    %v3381 = vpop.f32.mrb[0].mxu0
    %v3382 = vadd.f32 0.0, %v3381
    %v3383 = vpop.f32.mrb[0].mxu0
    %v3384 = vadd.f32 0.0, %v3383
    %v3385 = vpop.f32.mrb[0].mxu0
    %v3386 = vadd.f32 0.0, %v3385
    %v3387 = vpop.f32.mrb[0].mxu0
    %v3388 = vadd.f32 0.0, %v3387
    %3389 = vmatprep.mubr.bf16.mxu0 %v3171
    %3390 = vmatmul.mubr.bf16.gmra.mrb[0].mxu0 %v2964
    %v3391 = vpop.f32.mrb[0].mxu0
    %v3392 = vadd.f32 0.0, %v3391
    %v3393 = vpop.f32.mrb[0].mxu0
    %v3394 = vadd.f32 0.0, %v3393
    %v3395 = vpop.f32.mrb[0].mxu0
    %v3396 = vadd.f32 0.0, %v3395
    %v3397 = vpop.f32.mrb[0].mxu0
    %v3398 = vadd.f32 0.0, %v3397
    %3399 = vmatprep.mubr.bf16.mxu0 %v3174
    %3400 = vmatmul.mubr.bf16.gmra.mrb[0].mxu0 %v2966
    %v3401 = vpop.f32.mrb[0].mxu0
    %v3402 = vadd.f32 0.0, %v3401
    %v3403 = vpop.f32.mrb[0].mxu0
    %v3404 = vadd.f32 0.0, %v3403
    %v3405 = vpop.f32.mrb[0].mxu0
    %v3406 = vadd.f32 0.0, %v3405
    %v3407 = vpop.f32.mrb[0].mxu0
    %v3408 = vadd.f32 0.0, %v3407
    %3409 = vmatprep.mubr.bf16.mxu0 %v3177
    %3410 = vmatmul.mubr.bf16.gmra.mrb[0].mxu0 %v2968
    %v3411 = vpop.f32.mrb[0].mxu0
    %v3412 = vadd.f32 0.0, %v3411
    %v3413 = vpop.f32.mrb[0].mxu0
    %v3414 = vadd.f32 0.0, %v3413
    %v3415 = vpop.f32.mrb[0].mxu0
    %v3416 = vadd.f32 0.0, %v3415
    %v3417 = vpop.f32.mrb[0].mxu0
    %v3418 = vadd.f32 0.0, %v3417
    %3419 = vmatprep.mubr.bf16.mxu0 %v3180
    %3420 = vmatmul.mubr.bf16.gmra.mrb[0].mxu0 %v2970
    %v3421 = vpop.f32.mrb[0].mxu0
    %v3422 = vadd.f32 0.0, %v3421
    %v3423 = vpop.f32.mrb[0].mxu0
    %v3424 = vadd.f32 0.0, %v3423
    %v3425 = vpop.f32.mrb[0].mxu0
    %v3426 = vadd.f32 0.0, %v3425
    %v3427 = vpop.f32.mrb[0].mxu0
    %v3428 = vadd.f32 0.0, %v3427
    %3429 = vmatprep.mubr.bf16.mxu0 %v3183
    %3430 = vmatmul.mubr.bf16.gmra.mrb[0].mxu0 %v2972
    %v3431 = vpop.f32.mrb[0].mxu0
    %v3432 = vadd.f32 0.0, %v3431
    %v3433 = vpop.f32.mrb[0].mxu0
    %v3434 = vadd.f32 0.0, %v3433
    %v3435 = vpop.f32.mrb[0].mxu0
    %v3436 = vadd.f32 0.0, %v3435
    %v3437 = vpop.f32.mrb[0].mxu0
    %v3438 = vadd.f32 0.0, %v3437
    %3439 = vmatprep.mubr.bf16.mxu0 %v3186
    %3440 = vmatmul.mubr.bf16.gmra.mrb[0].mxu0 %v2974
    %v3441 = vpop.f32.mrb[0].mxu0
    %v3442 = vadd.f32 0.0, %v3441
    %v3443 = vpop.f32.mrb[0].mxu0
    %v3444 = vadd.f32 0.0, %v3443
    %v3445 = vpop.f32.mrb[0].mxu0
    %v3446 = vadd.f32 0.0, %v3445
    %v3447 = vpop.f32.mrb[0].mxu0
    %v3448 = vadd.f32 0.0, %v3447
    %3449 = vmatprep.mubr.bf16.mxu0 %v3189
    %3450 = vmatmul.mubr.bf16.gmra.mrb[0].mxu0 %v2976
    %v3451 = vpop.f32.mrb[0].mxu0
    %v3452 = vadd.f32 0.0, %v3451
    %v3453 = vpop.f32.mrb[0].mxu0
    %v3454 = vadd.f32 0.0, %v3453
    %v3455 = vpop.f32.mrb[0].mxu0
    %v3456 = vadd.f32 0.0, %v3455
    %v3457 = vpop.f32.mrb[0].mxu0
    %v3458 = vadd.f32 0.0, %v3457
    %3459 = vmatprep.mubr.bf16.mxu0 %v3192
    %3460 = vmatmul.mubr.bf16.gmra.mrb[0].mxu0 %v2978
    %v3461 = vpop.f32.mrb[0].mxu0
    %v3462 = vadd.f32 0.0, %v3461
    %v3463 = vpop.f32.mrb[0].mxu0
    %v3464 = vadd.f32 0.0, %v3463
    %v3465 = vpop.f32.mrb[0].mxu0
    %v3466 = vadd.f32 0.0, %v3465
    %v3467 = vpop.f32.mrb[0].mxu0
    %v3468 = vadd.f32 0.0, %v3467
    %3469 = vmatprep.mubr.bf16.mxu0 %v3195
    %3470 = vmatmul.mubr.bf16.gmra.mrb[0].mxu0 %v2980
    %v3471 = vpop.f32.mrb[0].mxu0
    %v3472 = vadd.f32 0.0, %v3471
    %v3473 = vpop.f32.mrb[0].mxu0
    %v3474 = vadd.f32 0.0, %v3473
    %v3475 = vpop.f32.mrb[0].mxu0
    %v3476 = vadd.f32 0.0, %v3475
    %v3477 = vpop.f32.mrb[0].mxu0
    %v3478 = vadd.f32 0.0, %v3477
    %3479 = vmatprep.mubr.bf16.mxu0 %v3198
    %3480 = vmatmul.mubr.bf16.gmra.mrb[0].mxu0 %v2982
    %v3481 = vpop.f32.mrb[0].mxu0
    %v3482 = vadd.f32 0.0, %v3481
    %v3483 = vpop.f32.mrb[0].mxu0
    %v3484 = vadd.f32 0.0, %v3483
    %v3485 = vpop.f32.mrb[0].mxu0
    %v3486 = vadd.f32 0.0, %v3485
    %v3487 = vpop.f32.mrb[0].mxu0
    %v3488 = vadd.f32 0.0, %v3487
    %3489 = vmatprep.mubr.bf16.mxu0 %v3201
    %3490 = vmatmul.mubr.bf16.gmra.mrb[0].mxu0 %v2984
    %v3491 = vpop.f32.mrb[0].mxu0
    %v3492 = vadd.f32 0.0, %v3491
    %v3493 = vpop.f32.mrb[0].mxu0
    %v3494 = vadd.f32 0.0, %v3493
    %v3495 = vpop.f32.mrb[0].mxu0
    %v3496 = vadd.f32 0.0, %v3495
    %v3497 = vpop.f32.mrb[0].mxu0
    %v3498 = vadd.f32 0.0, %v3497
    %3499 = vmatprep.mubr.bf16.mxu0 %v3204
    %3500 = vmatmul.mubr.bf16.gmra.mrb[0].mxu0 %v2986
    %v3501 = vpop.f32.mrb[0].mxu0
    %v3502 = vadd.f32 0.0, %v3501
    %v3503 = vpop.f32.mrb[0].mxu0
    %v3504 = vadd.f32 0.0, %v3503
    %v3505 = vpop.f32.mrb[0].mxu0
    %v3506 = vadd.f32 0.0, %v3505
    %v3507 = vpop.f32.mrb[0].mxu0
    %v3508 = vadd.f32 0.0, %v3507
    %3509 = vmatprep.mubr.bf16.mxu0 %v3207
    %3510 = vmatmul.mubr.bf16.gmra.mrb[0].mxu0 %v2988
    %v3511 = vpop.f32.mrb[0].mxu0
    %v3512 = vadd.f32 0.0, %v3511
    %v3513 = vpop.f32.mrb[0].mxu0
    %v3514 = vadd.f32 0.0, %v3513
    %v3515 = vpop.f32.mrb[0].mxu0
    %v3516 = vadd.f32 0.0, %v3515
    %v3517 = vpop.f32.mrb[0].mxu0
    %v3518 = vadd.f32 0.0, %v3517
    %3519 = vmatprep.mubr.bf16.mxu0 %v3210
    %3520 = vmatmul.mubr.bf16.gmra.mrb[0].mxu0 %v2990
    %v3521 = vpop.f32.mrb[0].mxu0
    %v3522 = vadd.f32 0.0, %v3521
    %v3523 = vpop.f32.mrb[0].mxu0
    %v3524 = vadd.f32 0.0, %v3523
    %v3525 = vpop.f32.mrb[0].mxu0
    %v3526 = vadd.f32 0.0, %v3525
    %v3527 = vpop.f32.mrb[0].mxu0
    %v3528 = vadd.f32 0.0, %v3527
    %3529 = vmatprep.mubr.bf16.mxu0 %v3213
    %3530 = vmatmul.mubr.bf16.gmra.mrb[0].mxu0 %v2992
    %v3531 = vpop.f32.mrb[0].mxu0
    %v3532 = vadd.f32 0.0, %v3531
    %v3533 = vpop.f32.mrb[0].mxu0
    %v3534 = vadd.f32 0.0, %v3533
    %v3535 = vpop.f32.mrb[0].mxu0
    %v3536 = vadd.f32 0.0, %v3535
    %v3537 = vpop.f32.mrb[0].mxu0
    %v3538 = vadd.f32 0.0, %v3537
    %3539 = vmatprep.mubr.bf16.mxu0 %v3216
    %3540 = vmatmul.mubr.bf16.gmra.mrb[0].mxu0 %v2994
    %v3541 = vpop.f32.mrb[0].mxu0
    %v3542 = vadd.f32 0.0, %v3541
    %v3543 = vpop.f32.mrb[0].mxu0
    %v3544 = vadd.f32 0.0, %v3543
    %v3545 = vpop.f32.mrb[0].mxu0
    %v3546 = vadd.f32 0.0, %v3545
    %v3547 = vpop.f32.mrb[0].mxu0
    %v3548 = vadd.f32 0.0, %v3547
    %3549 = vmatprep.mubr.bf16.mxu0 %v3219
    %3550 = vmatmul.mubr.bf16.gmra.mrb[0].mxu0 %v2996
    %v3551 = vpop.f32.mrb[0].mxu0
    %v3552 = vadd.f32 0.0, %v3551
    %v3553 = vpop.f32.mrb[0].mxu0
    %v3554 = vadd.f32 0.0, %v3553
    %v3555 = vpop.f32.mrb[0].mxu0
    %v3556 = vadd.f32 0.0, %v3555
    %v3557 = vpop.f32.mrb[0].mxu0
    %v3558 = vadd.f32 0.0, %v3557
    %3559 = vmatprep.mubr.bf16.mxu0 %v3222
    %3560 = vmatmul.mubr.bf16.gmra.mrb[0].mxu0 %v2998
    %v3561 = vpop.f32.mrb[0].mxu0
    %v3562 = vadd.f32 0.0, %v3561
    %v3563 = vpop.f32.mrb[0].mxu0
    %v3564 = vadd.f32 0.0, %v3563
    %v3565 = vpop.f32.mrb[0].mxu0
    %v3566 = vadd.f32 0.0, %v3565
    %v3567 = vpop.f32.mrb[0].mxu0
    %v3568 = vadd.f32 0.0, %v3567
    %3569 = vmatprep.mubr.bf16.mxu0 %v3225
    %3570 = vmatmul.mubr.bf16.gmra.mrb[0].mxu0 %v3000
    %v3571 = vpop.f32.mrb[0].mxu0
    %v3572 = vadd.f32 0.0, %v3571
    %v3573 = vpop.f32.mrb[0].mxu0
    %v3574 = vadd.f32 0.0, %v3573
    %v3575 = vpop.f32.mrb[0].mxu0
    %v3576 = vadd.f32 0.0, %v3575
    %v3577 = vpop.f32.mrb[0].mxu0
    %v3578 = vadd.f32 0.0, %v3577
    %3579 = vmatprep.mubr.bf16.mxu0 %v3228
    %3580 = vmatmul.mubr.bf16.gmra.mrb[0].mxu0 %v3002
    %v3581 = vpop.f32.mrb[0].mxu0
    %v3582 = vadd.f32 0.0, %v3581
    %v3583 = vpop.f32.mrb[0].mxu0
    %v3584 = vadd.f32 0.0, %v3583
    %v3585 = vpop.f32.mrb[0].mxu0
    %v3586 = vadd.f32 0.0, %v3585
    %v3587 = vpop.f32.mrb[0].mxu0
    %v3588 = vadd.f32 0.0, %v3587
    %3589 = vmatprep.mubr.bf16.mxu0 %v3231
    %3590 = vmatmul.mubr.bf16.gmra.mrb[0].mxu0 %v3004
    %v3591 = vpop.f32.mrb[0].mxu0
    %v3592 = vadd.f32 0.0, %v3591
    %v3593 = vpop.f32.mrb[0].mxu0
    %v3594 = vadd.f32 0.0, %v3593
    %v3595 = vpop.f32.mrb[0].mxu0
    %v3596 = vadd.f32 0.0, %v3595
    %v3597 = vpop.f32.mrb[0].mxu0
    %v3598 = vadd.f32 0.0, %v3597
    %3599 = vmatprep.mubr.bf16.mxu0 %v3234
    %3600 = vmatmul.mubr.bf16.gmra.mrb[0].mxu0 %v3006
    %v3601 = vpop.f32.mrb[0].mxu0
    %v3602 = vadd.f32 0.0, %v3601
    %v3603 = vpop.f32.mrb[0].mxu0
    %v3604 = vadd.f32 0.0, %v3603
    %v3605 = vpop.f32.mrb[0].mxu0
    %v3606 = vadd.f32 0.0, %v3605
    %v3607 = vpop.f32.mrb[0].mxu0
    %v3608 = vadd.f32 0.0, %v3607
    %3609 = vmatprep.mubr.bf16.mxu0 %v3237
    %3610 = vmatmul.mubr.bf16.gmra.mrb[0].mxu0 %v3008
    %v3611 = vpop.f32.mrb[0].mxu0
    %v3612 = vadd.f32 0.0, %v3611
    %v3613 = vpop.f32.mrb[0].mxu0
    %v3614 = vadd.f32 0.0, %v3613
    %v3615 = vpop.f32.mrb[0].mxu0
    %v3616 = vadd.f32 0.0, %v3615
    %v3617 = vpop.f32.mrb[0].mxu0
    %v3618 = vadd.f32 0.0, %v3617
    %3619 = vmatprep.mubr.bf16.mxu0 %v3240
    %3620 = vmatmul.mubr.bf16.gmra.mrb[0].mxu0 %v3010
    %v3621 = vpop.f32.mrb[0].mxu0
    %v3622 = vadd.f32 0.0, %v3621
    %v3623 = vpop.f32.mrb[0].mxu0
    %v3624 = vadd.f32 0.0, %v3623
    %v3625 = vpop.f32.mrb[0].mxu0
    %v3626 = vadd.f32 0.0, %v3625
    %v3627 = vpop.f32.mrb[0].mxu0
    %v3628 = vadd.f32 0.0, %v3627
    %3629 = vmatprep.mubr.bf16.mxu0 %v3243
    %3630 = vmatmul.mubr.bf16.gmra.mrb[0].mxu0 %v3012
    %v3631 = vpop.f32.mrb[0].mxu0
    %v3632 = vadd.f32 0.0, %v3631
    %v3633 = vpop.f32.mrb[0].mxu0
    %v3634 = vadd.f32 0.0, %v3633
    %v3635 = vpop.f32.mrb[0].mxu0
    %v3636 = vadd.f32 0.0, %v3635
    %v3637 = vpop.f32.mrb[0].mxu0
    %v3638 = vadd.f32 0.0, %v3637
    %3639 = vmatprep.mubr.bf16.mxu0 %v3246
    %3640 = vmatmul.mubr.bf16.gmra.mrb[0].mxu0 %v3014
    %v3641 = vpop.f32.mrb[0].mxu0
    %v3642 = vadd.f32 0.0, %v3641
    %v3643 = vpop.f32.mrb[0].mxu0
    %v3644 = vadd.f32 0.0, %v3643
    %v3645 = vpop.f32.mrb[0].mxu0
    %v3646 = vadd.f32 0.0, %v3645
    %v3647 = vpop.f32.mrb[0].mxu0
    %v3648 = vadd.f32 0.0, %v3647
    %3649 = vmatprep.mubr.bf16.mxu0 %v3249
    %3650 = vmatmul.mubr.bf16.gmra.mrb[0].mxu0 %v3016
    %v3651 = vpop.f32.mrb[0].mxu0
    %v3652 = vadd.f32 0.0, %v3651
    %v3653 = vpop.f32.mrb[0].mxu0
    %v3654 = vadd.f32 0.0, %v3653
    %v3655 = vpop.f32.mrb[0].mxu0
    %v3656 = vadd.f32 0.0, %v3655
    %v3657 = vpop.f32.mrb[0].mxu0
    %v3658 = vadd.f32 0.0, %v3657
    %3659 = vmatprep.mubr.bf16.mxu0 %v3252
    %3660 = vmatmul.mubr.bf16.gmra.mrb[0].mxu0 %v3018
    %v3661 = vpop.f32.mrb[0].mxu0
    %v3662 = vadd.f32 0.0, %v3661
    %v3663 = vpop.f32.mrb[0].mxu0
    %v3664 = vadd.f32 0.0, %v3663
    %v3665 = vpop.f32.mrb[0].mxu0
    %v3666 = vadd.f32 0.0, %v3665
    %v3667 = vpop.f32.mrb[0].mxu0
    %v3668 = vadd.f32 0.0, %v3667
    %3669 = vmatprep.mubr.bf16.mxu0 %v3255
    %3670 = vmatmul.mubr.bf16.gmra.mrb[0].mxu0 %v3020
    %v3671 = vpop.f32.mrb[0].mxu0
    %v3672 = vadd.f32 0.0, %v3671
    %v3673 = vpop.f32.mrb[0].mxu0
    %v3674 = vadd.f32 0.0, %v3673
    %v3675 = vpop.f32.mrb[0].mxu0
    %v3676 = vadd.f32 0.0, %v3675
    %v3677 = vpop.f32.mrb[0].mxu0
    %v3678 = vadd.f32 0.0, %v3677
    %3679 = vmatprep.mubr.bf16.mxu0 %v3258
    %3680 = vmatmul.mubr.bf16.gmra.mrb[0].mxu0 %v3022
    %v3681 = vpop.f32.mrb[0].mxu0
    %v3682 = vadd.f32 0.0, %v3681
    %v3683 = vpop.f32.mrb[0].mxu0
    %v3684 = vadd.f32 0.0, %v3683
    %v3685 = vpop.f32.mrb[0].mxu0
    %v3686 = vadd.f32 0.0, %v3685
    %v3687 = vpop.f32.mrb[0].mxu0
    %v3688 = vadd.f32 0.0, %v3687
    %3689 = vdwg.mxu0
    %v3710 = vunpack.c.l.b16 %v2926
    %v3711 = vunpack.c.h.b16 %v2926
    %v3712 = vunpack.c.l.b16 %v2927
    %v3713 = vunpack.c.h.b16 %v2927
    %v3714 = vunpack.c.l.b16 %v2928
    %v3715 = vunpack.c.h.b16 %v2928
    %v3716 = vunpack.c.l.b16 %v2929
    %v3717 = vunpack.c.h.b16 %v2929
    %v3718 = vunpack.c.l.b16 %v2930
    %v3719 = vunpack.c.h.b16 %v2930
    %v3720 = vunpack.c.l.b16 %v2931
    %v3721 = vunpack.c.h.b16 %v2931
    %v3722 = vunpack.c.l.b16 %v2932
    %v3723 = vunpack.c.h.b16 %v2932
    %v3724 = vunpack.c.l.b16 %v2933
    %v3725 = vunpack.c.h.b16 %v2933
    %v3726 = vunpack.c.l.b16 %v2934
    %v3727 = vunpack.c.h.b16 %v2934
    %v3728 = vunpack.c.l.b16 %v2935
    %v3729 = vunpack.c.h.b16 %v2935
    %v3730 = vunpack.c.l.b16 %v2936
    %v3731 = vunpack.c.h.b16 %v2936
    %v3732 = vunpack.c.l.b16 %v2937
    %v3733 = vunpack.c.h.b16 %v2937
    %v3734 = vunpack.c.l.b16 %v2938
    %v3735 = vunpack.c.h.b16 %v2938
    %v3736 = vunpack.c.l.b16 %v2939
    %v3737 = vunpack.c.h.b16 %v2939
    %v3738 = vunpack.c.l.b16 %v2940
    %v3739 = vunpack.c.h.b16 %v2940
    %v3740 = vunpack.c.l.b16 %v2941
    %v3741 = vunpack.c.h.b16 %v2941
    %v3742 = vunpack.c.l.b16 %v2942
    %v3743 = vunpack.c.h.b16 %v2942
    %v3744 = vunpack.c.l.b16 %v2943
    %v3745 = vunpack.c.h.b16 %v2943
    %v3746 = vunpack.c.l.b16 %v2944
    %v3747 = vunpack.c.h.b16 %v2944
    %v3748 = vunpack.c.l.b16 %v2945
    %v3749 = vunpack.c.h.b16 %v2945
    %v3750 = vpack.c.b16 %v3712, %v3710
    %v3751 = vpack.c.b16 %v3713, %v3711
    %v3752 = vpack.c.b16 %v3716, %v3714
    %v3753 = vpack.c.b16 %v3717, %v3715
    %v3754 = vpack.c.b16 %v3720, %v3718
    %v3755 = vpack.c.b16 %v3721, %v3719
    %v3756 = vpack.c.b16 %v3724, %v3722
    %v3757 = vpack.c.b16 %v3725, %v3723
    %v3758 = vpack.c.b16 %v3728, %v3726
    %v3759 = vpack.c.b16 %v3729, %v3727
    %v3760 = vpack.c.b16 %v3732, %v3730
    %v3761 = vpack.c.b16 %v3733, %v3731
    %v3762 = vpack.c.b16 %v3736, %v3734
    %v3763 = vpack.c.b16 %v3737, %v3735
    %v3764 = vpack.c.b16 %v3740, %v3738
    %v3765 = vpack.c.b16 %v3741, %v3739
    %v3766 = vpack.c.b16 %v3744, %v3742
    %v3767 = vpack.c.b16 %v3745, %v3743
    %v3768 = vpack.c.b16 %v3748, %v3746
    %v3769 = vpack.c.b16 %v3749, %v3747
    %v3789 = vsel %vm176, %v2849, 0
    %v3792 = vsel %vm176, %v2851, 0
    %v3795 = vsel %vm176, %v2853, 0
    %v3798 = vsel %vm176, %v2855, 0
    %v3801 = vsel %vm176, %v2857, 0
    %v3804 = vsel %vm176, %v2859, 0
    %v3807 = vsel %vm176, %v2861, 0
    %v3810 = vsel %vm176, %v2863, 0
    %v3813 = vsel %vm176, %v2865, 0
    %v3816 = vsel %vm176, %v2867, 0
    %v3819 = vsel %vm176, %v2869, 0
    %v3822 = vsel %vm176, %v2871, 0
    %v3825 = vsel %vm176, %v2873, 0
    %v3828 = vsel %vm176, %v2875, 0
    %v3831 = vsel %vm176, %v2877, 0
    %v3834 = vsel %vm176, %v2879, 0
    %v3837 = vsel %vm176, %v2881, 0
    %v3840 = vsel %vm176, %v2883, 0
    %v3843 = vsel %vm176, %v2885, 0
    %v3846 = vsel %vm176, %v2887, 0
    %v3849 = vsel %vm176, %v2889, 0
    %v3852 = vsel %vm176, %v2891, 0
    %v3855 = vsel %vm176, %v2893, 0
    %v3858 = vsel %vm176, %v2895, 0
    %v3861 = vsel %vm176, %v2897, 0
    %v3864 = vsel %vm176, %v2899, 0
    %v3867 = vsel %vm176, %v2901, 0
    %v3870 = vsel %vm176, %v2903, 0
    %v3873 = vsel %vm176, %v2905, 0
    %v3876 = vsel %vm176, %v2907, 0
    %v3879 = vsel %vm176, %v2909, 0
    %v3882 = vsel %vm176, %v2911, 0
    %v3885 = vsel %vm176, %v2913, 0
    %v3888 = vsel %vm176, %v2915, 0
    %v3891 = vsel %vm176, %v2917, 0
    %v3894 = vsel %vm176, %v2919, 0
    %v3897 = vsel %vm176, %v2921, 0
    %v3900 = vsel %vm176, %v2923, 0
    %v3903 = vsel %vm176, %v2925, 0
    %v3906 = vsel %vm3260, %v3768, 0
    %v3909 = vsel %vm3260, %v3769, 0
    %3911 = vmatprep.subr.bf16.mxu0 %v3751
    %3912 = vmatpush1.bf16.msra.mxu0 %v3750
    %3913 = vmatprep.subr.bf16.mxu0 %v3753
    %3914 = vmatpush1.bf16.msra.mxu0 %v3752
    %3915 = vmatprep.subr.bf16.mxu0 %v3755
    %3916 = vmatpush1.bf16.msra.mxu0 %v3754
    %3917 = vmatprep.subr.bf16.mxu0 %v3757
    %3918 = vmatpush1.bf16.msra.mxu0 %v3756
    %3919 = vmatprep.subr.bf16.mxu0 %v3759
    %3920 = vmatpush1.bf16.msra.mxu0 %v3758
    %3921 = vmatprep.subr.bf16.mxu0 %v3761
    %3922 = vmatpush1.bf16.msra.mxu0 %v3760
    %3923 = vmatprep.subr.bf16.mxu0 %v3763
    %3924 = vmatpush1.bf16.msra.mxu0 %v3762
    %3925 = vmatprep.subr.bf16.mxu0 %v3765
    %3926 = vmatpush1.bf16.msra.mxu0 %v3764
    %3927 = vmatprep.subr.bf16.mxu0 %v3767
    %3928 = vmatpush1.bf16.msra.mxu0 %v3766
    %3929 = vmatprep.subr.bf16.mxu0 %v3909
    %3930 = vmatpush1.bf16.msra.mxu0 %v3906
    %3931 = vmatprep.subr.bf16.mxu0 0
    %3932 = vmatpush1.bf16.msra.mxu0 0
    %3933 = vmatprep.subr.bf16.mxu0 0
    %3934 = vmatpush1.bf16.msra.mxu0 0
    %3935 = vmatprep.subr.bf16.mxu0 0
    %3936 = vmatpush1.bf16.msra.mxu0 0
    %3937 = vmatprep.subr.bf16.mxu0 0
    %3938 = vmatpush1.bf16.msra.mxu0 0
    %3939 = vmatprep.subr.bf16.mxu0 0
    %3940 = vmatpush1.bf16.msra.mxu0 0
    %3941 = vmatprep.subr.bf16.mxu0 0
    %3942 = vmatpush1.bf16.msra.mxu0 0
    %3943 = vmatprep.mubr.bf16.mxu0 %v3789
    %3944 = vmatmul.mubr.bf16.gmra.mrb[0].mxu0 %v2848
    %v3945 = vpop.f32.mrb[0].mxu0
    %v3946 = vadd.f32 %v3302, %v3945
    %v3947 = vpop.f32.mrb[0].mxu0
    %v3948 = vadd.f32 %v3304, %v3947
    %v3949 = vpop.f32.mrb[0].mxu0
    %v3950 = vadd.f32 %v3306, %v3949
    %v3951 = vpop.f32.mrb[0].mxu0
    %v3952 = vadd.f32 %v3308, %v3951
    %3953 = vmatprep.mubr.bf16.mxu0 %v3792
    %3954 = vmatmul.mubr.bf16.gmra.mrb[0].mxu0 %v2850
    %v3955 = vpop.f32.mrb[0].mxu0
    %v3956 = vadd.f32 %v3312, %v3955
    %v3957 = vpop.f32.mrb[0].mxu0
    %v3958 = vadd.f32 %v3314, %v3957
    %v3959 = vpop.f32.mrb[0].mxu0
    %v3960 = vadd.f32 %v3316, %v3959
    %v3961 = vpop.f32.mrb[0].mxu0
    %v3962 = vadd.f32 %v3318, %v3961
    %3963 = vmatprep.mubr.bf16.mxu0 %v3795
    %3964 = vmatmul.mubr.bf16.gmra.mrb[0].mxu0 %v2852
    %v3965 = vpop.f32.mrb[0].mxu0
    %v3966 = vadd.f32 %v3322, %v3965
    %v3967 = vpop.f32.mrb[0].mxu0
    %v3968 = vadd.f32 %v3324, %v3967
    %v3969 = vpop.f32.mrb[0].mxu0
    %v3970 = vadd.f32 %v3326, %v3969
    %v3971 = vpop.f32.mrb[0].mxu0
    %v3972 = vadd.f32 %v3328, %v3971
    %3973 = vmatprep.mubr.bf16.mxu0 %v3798
    %3974 = vmatmul.mubr.bf16.gmra.mrb[0].mxu0 %v2854
    %v3975 = vpop.f32.mrb[0].mxu0
    %v3976 = vadd.f32 %v3332, %v3975
    %v3977 = vpop.f32.mrb[0].mxu0
    %v3978 = vadd.f32 %v3334, %v3977
    %v3979 = vpop.f32.mrb[0].mxu0
    %v3980 = vadd.f32 %v3336, %v3979
    %v3981 = vpop.f32.mrb[0].mxu0
    %v3982 = vadd.f32 %v3338, %v3981
    %3983 = vmatprep.mubr.bf16.mxu0 %v3801
    %3984 = vmatmul.mubr.bf16.gmra.mrb[0].mxu0 %v2856
    %v3985 = vpop.f32.mrb[0].mxu0
    %v3986 = vadd.f32 %v3342, %v3985
    %v3987 = vpop.f32.mrb[0].mxu0
    %v3988 = vadd.f32 %v3344, %v3987
    %v3989 = vpop.f32.mrb[0].mxu0
    %v3990 = vadd.f32 %v3346, %v3989
    %v3991 = vpop.f32.mrb[0].mxu0
    %v3992 = vadd.f32 %v3348, %v3991
    %3993 = vmatprep.mubr.bf16.mxu0 %v3804
    %3994 = vmatmul.mubr.bf16.gmra.mrb[0].mxu0 %v2858
    %v3995 = vpop.f32.mrb[0].mxu0
    %v3996 = vadd.f32 %v3352, %v3995
    %v3997 = vpop.f32.mrb[0].mxu0
    %v3998 = vadd.f32 %v3354, %v3997
    %v3999 = vpop.f32.mrb[0].mxu0
    %v4000 = vadd.f32 %v3356, %v3999
    %v4001 = vpop.f32.mrb[0].mxu0
    %v4002 = vadd.f32 %v3358, %v4001
    %4003 = vmatprep.mubr.bf16.mxu0 %v3807
    %4004 = vmatmul.mubr.bf16.gmra.mrb[0].mxu0 %v2860
    %v4005 = vpop.f32.mrb[0].mxu0
    %v4006 = vadd.f32 %v3362, %v4005
    %v4007 = vpop.f32.mrb[0].mxu0
    %v4008 = vadd.f32 %v3364, %v4007
    %v4009 = vpop.f32.mrb[0].mxu0
    %v4010 = vadd.f32 %v3366, %v4009
    %v4011 = vpop.f32.mrb[0].mxu0
    %v4012 = vadd.f32 %v3368, %v4011
    %4013 = vmatprep.mubr.bf16.mxu0 %v3810
    %4014 = vmatmul.mubr.bf16.gmra.mrb[0].mxu0 %v2862
    %v4015 = vpop.f32.mrb[0].mxu0
    %v4016 = vadd.f32 %v3372, %v4015
    %v4017 = vpop.f32.mrb[0].mxu0
    %v4018 = vadd.f32 %v3374, %v4017
    %v4019 = vpop.f32.mrb[0].mxu0
    %v4020 = vadd.f32 %v3376, %v4019
    %v4021 = vpop.f32.mrb[0].mxu0
    %v4022 = vadd.f32 %v3378, %v4021
    %4023 = vmatprep.mubr.bf16.mxu0 %v3813
    %4024 = vmatmul.mubr.bf16.gmra.mrb[0].mxu0 %v2864
    %v4025 = vpop.f32.mrb[0].mxu0
    %v4026 = vadd.f32 %v3382, %v4025
    %v4027 = vpop.f32.mrb[0].mxu0
    %v4028 = vadd.f32 %v3384, %v4027
    %v4029 = vpop.f32.mrb[0].mxu0
    %v4030 = vadd.f32 %v3386, %v4029
    %v4031 = vpop.f32.mrb[0].mxu0
    %v4032 = vadd.f32 %v3388, %v4031
    %4033 = vmatprep.mubr.bf16.mxu0 %v3816
    %4034 = vmatmul.mubr.bf16.gmra.mrb[0].mxu0 %v2866
    %v4035 = vpop.f32.mrb[0].mxu0
    %v4036 = vadd.f32 %v3392, %v4035
    %v4037 = vpop.f32.mrb[0].mxu0
    %v4038 = vadd.f32 %v3394, %v4037
    %v4039 = vpop.f32.mrb[0].mxu0
    %v4040 = vadd.f32 %v3396, %v4039
    %v4041 = vpop.f32.mrb[0].mxu0
    %v4042 = vadd.f32 %v3398, %v4041
    %4043 = vmatprep.mubr.bf16.mxu0 %v3819
    %4044 = vmatmul.mubr.bf16.gmra.mrb[0].mxu0 %v2868
    %v4045 = vpop.f32.mrb[0].mxu0
    %v4046 = vadd.f32 %v3402, %v4045
    %v4047 = vpop.f32.mrb[0].mxu0
    %v4048 = vadd.f32 %v3404, %v4047
    %v4049 = vpop.f32.mrb[0].mxu0
    %v4050 = vadd.f32 %v3406, %v4049
    %v4051 = vpop.f32.mrb[0].mxu0
    %v4052 = vadd.f32 %v3408, %v4051
    %4053 = vmatprep.mubr.bf16.mxu0 %v3822
    %4054 = vmatmul.mubr.bf16.gmra.mrb[0].mxu0 %v2870
    %v4055 = vpop.f32.mrb[0].mxu0
    %v4056 = vadd.f32 %v3412, %v4055
    %v4057 = vpop.f32.mrb[0].mxu0
    %v4058 = vadd.f32 %v3414, %v4057
    %v4059 = vpop.f32.mrb[0].mxu0
    %v4060 = vadd.f32 %v3416, %v4059
    %v4061 = vpop.f32.mrb[0].mxu0
    %v4062 = vadd.f32 %v3418, %v4061
    %4063 = vmatprep.mubr.bf16.mxu0 %v3825
    %4064 = vmatmul.mubr.bf16.gmra.mrb[0].mxu0 %v2872
    %v4065 = vpop.f32.mrb[0].mxu0
    %v4066 = vadd.f32 %v3422, %v4065
    %v4067 = vpop.f32.mrb[0].mxu0
    %v4068 = vadd.f32 %v3424, %v4067
    %v4069 = vpop.f32.mrb[0].mxu0
    %v4070 = vadd.f32 %v3426, %v4069
    %v4071 = vpop.f32.mrb[0].mxu0
    %v4072 = vadd.f32 %v3428, %v4071
    %4073 = vmatprep.mubr.bf16.mxu0 %v3828
    %4074 = vmatmul.mubr.bf16.gmra.mrb[0].mxu0 %v2874
    %v4075 = vpop.f32.mrb[0].mxu0
    %v4076 = vadd.f32 %v3432, %v4075
    %v4077 = vpop.f32.mrb[0].mxu0
    %v4078 = vadd.f32 %v3434, %v4077
    %v4079 = vpop.f32.mrb[0].mxu0
    %v4080 = vadd.f32 %v3436, %v4079
    %v4081 = vpop.f32.mrb[0].mxu0
    %v4082 = vadd.f32 %v3438, %v4081
    %4083 = vmatprep.mubr.bf16.mxu0 %v3831
    %4084 = vmatmul.mubr.bf16.gmra.mrb[0].mxu0 %v2876
    %v4085 = vpop.f32.mrb[0].mxu0
    %v4086 = vadd.f32 %v3442, %v4085
    %v4087 = vpop.f32.mrb[0].mxu0
    %v4088 = vadd.f32 %v3444, %v4087
    %v4089 = vpop.f32.mrb[0].mxu0
    %v4090 = vadd.f32 %v3446, %v4089
    %v4091 = vpop.f32.mrb[0].mxu0
    %v4092 = vadd.f32 %v3448, %v4091
    %4093 = vmatprep.mubr.bf16.mxu0 %v3834
    %4094 = vmatmul.mubr.bf16.gmra.mrb[0].mxu0 %v2878
    %v4095 = vpop.f32.mrb[0].mxu0
    %v4096 = vadd.f32 %v3452, %v4095
    %v4097 = vpop.f32.mrb[0].mxu0
    %v4098 = vadd.f32 %v3454, %v4097
    %v4099 = vpop.f32.mrb[0].mxu0
    %v4100 = vadd.f32 %v3456, %v4099
    %v4101 = vpop.f32.mrb[0].mxu0
    %v4102 = vadd.f32 %v3458, %v4101
    %4103 = vmatprep.mubr.bf16.mxu0 %v3837
    %4104 = vmatmul.mubr.bf16.gmra.mrb[0].mxu0 %v2880
    %v4105 = vpop.f32.mrb[0].mxu0
    %v4106 = vadd.f32 %v3462, %v4105
    %v4107 = vpop.f32.mrb[0].mxu0
    %v4108 = vadd.f32 %v3464, %v4107
    %v4109 = vpop.f32.mrb[0].mxu0
    %v4110 = vadd.f32 %v3466, %v4109
    %v4111 = vpop.f32.mrb[0].mxu0
    %v4112 = vadd.f32 %v3468, %v4111
    %4113 = vmatprep.mubr.bf16.mxu0 %v3840
    %4114 = vmatmul.mubr.bf16.gmra.mrb[0].mxu0 %v2882
    %v4115 = vpop.f32.mrb[0].mxu0
    %v4116 = vadd.f32 %v3472, %v4115
    %v4117 = vpop.f32.mrb[0].mxu0
    %v4118 = vadd.f32 %v3474, %v4117
    %v4119 = vpop.f32.mrb[0].mxu0
    %v4120 = vadd.f32 %v3476, %v4119
    %v4121 = vpop.f32.mrb[0].mxu0
    %v4122 = vadd.f32 %v3478, %v4121
    %4123 = vmatprep.mubr.bf16.mxu0 %v3843
    %4124 = vmatmul.mubr.bf16.gmra.mrb[0].mxu0 %v2884
    %v4125 = vpop.f32.mrb[0].mxu0
    %v4126 = vadd.f32 %v3482, %v4125
    %v4127 = vpop.f32.mrb[0].mxu0
    %v4128 = vadd.f32 %v3484, %v4127
    %v4129 = vpop.f32.mrb[0].mxu0
    %v4130 = vadd.f32 %v3486, %v4129
    %v4131 = vpop.f32.mrb[0].mxu0
    %v4132 = vadd.f32 %v3488, %v4131
    %4133 = vmatprep.mubr.bf16.mxu0 %v3846
    %4134 = vmatmul.mubr.bf16.gmra.mrb[0].mxu0 %v2886
    %v4135 = vpop.f32.mrb[0].mxu0
    %v4136 = vadd.f32 %v3492, %v4135
    %v4137 = vpop.f32.mrb[0].mxu0
    %v4138 = vadd.f32 %v3494, %v4137
    %v4139 = vpop.f32.mrb[0].mxu0
    %v4140 = vadd.f32 %v3496, %v4139
    %v4141 = vpop.f32.mrb[0].mxu0
    %v4142 = vadd.f32 %v3498, %v4141
    %4143 = vmatprep.mubr.bf16.mxu0 %v3849
    %4144 = vmatmul.mubr.bf16.gmra.mrb[0].mxu0 %v2888
    %v4145 = vpop.f32.mrb[0].mxu0
    %v4146 = vadd.f32 %v3502, %v4145
    %v4147 = vpop.f32.mrb[0].mxu0
    %v4148 = vadd.f32 %v3504, %v4147
    %v4149 = vpop.f32.mrb[0].mxu0
    %v4150 = vadd.f32 %v3506, %v4149
    %v4151 = vpop.f32.mrb[0].mxu0
    %v4152 = vadd.f32 %v3508, %v4151
    %4153 = vmatprep.mubr.bf16.mxu0 %v3852
    %4154 = vmatmul.mubr.bf16.gmra.mrb[0].mxu0 %v2890
    %v4155 = vpop.f32.mrb[0].mxu0
    %v4156 = vadd.f32 %v3512, %v4155
    %v4157 = vpop.f32.mrb[0].mxu0
    %v4158 = vadd.f32 %v3514, %v4157
    %v4159 = vpop.f32.mrb[0].mxu0
    %v4160 = vadd.f32 %v3516, %v4159
    %v4161 = vpop.f32.mrb[0].mxu0
    %v4162 = vadd.f32 %v3518, %v4161
    %4163 = vmatprep.mubr.bf16.mxu0 %v3855
    %4164 = vmatmul.mubr.bf16.gmra.mrb[0].mxu0 %v2892
    %v4165 = vpop.f32.mrb[0].mxu0
    %v4166 = vadd.f32 %v3522, %v4165
    %v4167 = vpop.f32.mrb[0].mxu0
    %v4168 = vadd.f32 %v3524, %v4167
    %v4169 = vpop.f32.mrb[0].mxu0
    %v4170 = vadd.f32 %v3526, %v4169
    %v4171 = vpop.f32.mrb[0].mxu0
    %v4172 = vadd.f32 %v3528, %v4171
    %4173 = vmatprep.mubr.bf16.mxu0 %v3858
    %4174 = vmatmul.mubr.bf16.gmra.mrb[0].mxu0 %v2894
    %v4175 = vpop.f32.mrb[0].mxu0
    %v4176 = vadd.f32 %v3532, %v4175
    %v4177 = vpop.f32.mrb[0].mxu0
    %v4178 = vadd.f32 %v3534, %v4177
    %v4179 = vpop.f32.mrb[0].mxu0
    %v4180 = vadd.f32 %v3536, %v4179
    %v4181 = vpop.f32.mrb[0].mxu0
    %v4182 = vadd.f32 %v3538, %v4181
    %4183 = vmatprep.mubr.bf16.mxu0 %v3861
    %4184 = vmatmul.mubr.bf16.gmra.mrb[0].mxu0 %v2896
    %v4185 = vpop.f32.mrb[0].mxu0
    %v4186 = vadd.f32 %v3542, %v4185
    %v4187 = vpop.f32.mrb[0].mxu0
    %v4188 = vadd.f32 %v3544, %v4187
    %v4189 = vpop.f32.mrb[0].mxu0
    %v4190 = vadd.f32 %v3546, %v4189
    %v4191 = vpop.f32.mrb[0].mxu0
    %v4192 = vadd.f32 %v3548, %v4191
    %4193 = vmatprep.mubr.bf16.mxu0 %v3864
    %4194 = vmatmul.mubr.bf16.gmra.mrb[0].mxu0 %v2898
    %v4195 = vpop.f32.mrb[0].mxu0
    %v4196 = vadd.f32 %v3552, %v4195
    %v4197 = vpop.f32.mrb[0].mxu0
    %v4198 = vadd.f32 %v3554, %v4197
    %v4199 = vpop.f32.mrb[0].mxu0
    %v4200 = vadd.f32 %v3556, %v4199
    %v4201 = vpop.f32.mrb[0].mxu0
    %v4202 = vadd.f32 %v3558, %v4201
    %4203 = vmatprep.mubr.bf16.mxu0 %v3867
    %4204 = vmatmul.mubr.bf16.gmra.mrb[0].mxu0 %v2900
    %v4205 = vpop.f32.mrb[0].mxu0
    %v4206 = vadd.f32 %v3562, %v4205
    %v4207 = vpop.f32.mrb[0].mxu0
    %v4208 = vadd.f32 %v3564, %v4207
    %v4209 = vpop.f32.mrb[0].mxu0
    %v4210 = vadd.f32 %v3566, %v4209
    %v4211 = vpop.f32.mrb[0].mxu0
    %v4212 = vadd.f32 %v3568, %v4211
    %4213 = vmatprep.mubr.bf16.mxu0 %v3870
    %4214 = vmatmul.mubr.bf16.gmra.mrb[0].mxu0 %v2902
    %v4215 = vpop.f32.mrb[0].mxu0
    %v4216 = vadd.f32 %v3572, %v4215
    %v4217 = vpop.f32.mrb[0].mxu0
    %v4218 = vadd.f32 %v3574, %v4217
    %v4219 = vpop.f32.mrb[0].mxu0
    %v4220 = vadd.f32 %v3576, %v4219
    %v4221 = vpop.f32.mrb[0].mxu0
    %v4222 = vadd.f32 %v3578, %v4221
    %4223 = vmatprep.mubr.bf16.mxu0 %v3873
    %4224 = vmatmul.mubr.bf16.gmra.mrb[0].mxu0 %v2904
    %v4225 = vpop.f32.mrb[0].mxu0
    %v4226 = vadd.f32 %v3582, %v4225
    %v4227 = vpop.f32.mrb[0].mxu0
    %v4228 = vadd.f32 %v3584, %v4227
    %v4229 = vpop.f32.mrb[0].mxu0
    %v4230 = vadd.f32 %v3586, %v4229
    %v4231 = vpop.f32.mrb[0].mxu0
    %v4232 = vadd.f32 %v3588, %v4231
    %4233 = vmatprep.mubr.bf16.mxu0 %v3876
    %4234 = vmatmul.mubr.bf16.gmra.mrb[0].mxu0 %v2906
    %v4235 = vpop.f32.mrb[0].mxu0
    %v4236 = vadd.f32 %v3592, %v4235
    %v4237 = vpop.f32.mrb[0].mxu0
    %v4238 = vadd.f32 %v3594, %v4237
    %v4239 = vpop.f32.mrb[0].mxu0
    %v4240 = vadd.f32 %v3596, %v4239
    %v4241 = vpop.f32.mrb[0].mxu0
    %v4242 = vadd.f32 %v3598, %v4241
    %4243 = vmatprep.mubr.bf16.mxu0 %v3879
    %4244 = vmatmul.mubr.bf16.gmra.mrb[0].mxu0 %v2908
    %v4245 = vpop.f32.mrb[0].mxu0
    %v4246 = vadd.f32 %v3602, %v4245
    %v4247 = vpop.f32.mrb[0].mxu0
    %v4248 = vadd.f32 %v3604, %v4247
    %v4249 = vpop.f32.mrb[0].mxu0
    %v4250 = vadd.f32 %v3606, %v4249
    %v4251 = vpop.f32.mrb[0].mxu0
    %v4252 = vadd.f32 %v3608, %v4251
    %4253 = vmatprep.mubr.bf16.mxu0 %v3882
    %4254 = vmatmul.mubr.bf16.gmra.mrb[0].mxu0 %v2910
    %v4255 = vpop.f32.mrb[0].mxu0
    %v4256 = vadd.f32 %v3612, %v4255
    %v4257 = vpop.f32.mrb[0].mxu0
    %v4258 = vadd.f32 %v3614, %v4257
    %v4259 = vpop.f32.mrb[0].mxu0
    %v4260 = vadd.f32 %v3616, %v4259
    %v4261 = vpop.f32.mrb[0].mxu0
    %v4262 = vadd.f32 %v3618, %v4261
    %4263 = vmatprep.mubr.bf16.mxu0 %v3885
    %4264 = vmatmul.mubr.bf16.gmra.mrb[0].mxu0 %v2912
    %v4265 = vpop.f32.mrb[0].mxu0
    %v4266 = vadd.f32 %v3622, %v4265
    %v4267 = vpop.f32.mrb[0].mxu0
    %v4268 = vadd.f32 %v3624, %v4267
    %v4269 = vpop.f32.mrb[0].mxu0
    %v4270 = vadd.f32 %v3626, %v4269
    %v4271 = vpop.f32.mrb[0].mxu0
    %v4272 = vadd.f32 %v3628, %v4271
    %4273 = vmatprep.mubr.bf16.mxu0 %v3888
    %4274 = vmatmul.mubr.bf16.gmra.mrb[0].mxu0 %v2914
    %v4275 = vpop.f32.mrb[0].mxu0
    %v4276 = vadd.f32 %v3632, %v4275
    %v4277 = vpop.f32.mrb[0].mxu0
    %v4278 = vadd.f32 %v3634, %v4277
    %v4279 = vpop.f32.mrb[0].mxu0
    %v4280 = vadd.f32 %v3636, %v4279
    %v4281 = vpop.f32.mrb[0].mxu0
    %v4282 = vadd.f32 %v3638, %v4281
    %4283 = vmatprep.mubr.bf16.mxu0 %v3891
    %4284 = vmatmul.mubr.bf16.gmra.mrb[0].mxu0 %v2916
    %v4285 = vpop.f32.mrb[0].mxu0
    %v4286 = vadd.f32 %v3642, %v4285
    %v4287 = vpop.f32.mrb[0].mxu0
    %v4288 = vadd.f32 %v3644, %v4287
    %v4289 = vpop.f32.mrb[0].mxu0
    %v4290 = vadd.f32 %v3646, %v4289
    %v4291 = vpop.f32.mrb[0].mxu0
    %v4292 = vadd.f32 %v3648, %v4291
    %4293 = vmatprep.mubr.bf16.mxu0 %v3894
    %4294 = vmatmul.mubr.bf16.gmra.mrb[0].mxu0 %v2918
    %v4295 = vpop.f32.mrb[0].mxu0
    %v4296 = vadd.f32 %v3652, %v4295
    %v4297 = vpop.f32.mrb[0].mxu0
    %v4298 = vadd.f32 %v3654, %v4297
    %v4299 = vpop.f32.mrb[0].mxu0
    %v4300 = vadd.f32 %v3656, %v4299
    %v4301 = vpop.f32.mrb[0].mxu0
    %v4302 = vadd.f32 %v3658, %v4301
    %4303 = vmatprep.mubr.bf16.mxu0 %v3897
    %4304 = vmatmul.mubr.bf16.gmra.mrb[0].mxu0 %v2920
    %v4305 = vpop.f32.mrb[0].mxu0
    %v4306 = vadd.f32 %v3662, %v4305
    %v4307 = vpop.f32.mrb[0].mxu0
    %v4308 = vadd.f32 %v3664, %v4307
    %v4309 = vpop.f32.mrb[0].mxu0
    %v4310 = vadd.f32 %v3666, %v4309
    %v4311 = vpop.f32.mrb[0].mxu0
    %v4312 = vadd.f32 %v3668, %v4311
    %4313 = vmatprep.mubr.bf16.mxu0 %v3900
    %4314 = vmatmul.mubr.bf16.gmra.mrb[0].mxu0 %v2922
    %v4315 = vpop.f32.mrb[0].mxu0
    %v4316 = vadd.f32 %v3672, %v4315
    %v4317 = vpop.f32.mrb[0].mxu0
    %v4318 = vadd.f32 %v3674, %v4317
    %v4319 = vpop.f32.mrb[0].mxu0
    %v4320 = vadd.f32 %v3676, %v4319
    %v4321 = vpop.f32.mrb[0].mxu0
    %v4322 = vadd.f32 %v3678, %v4321
    %4323 = vmatprep.mubr.bf16.mxu0 %v3903
    %4324 = vmatmul.mubr.bf16.gmra.mrb[0].mxu0 %v2924
    %v4325 = vpop.f32.mrb[0].mxu0
    %v4326 = vadd.f32 %v3682, %v4325
    %v4327 = vpop.f32.mrb[0].mxu0
    %v4328 = vadd.f32 %v3684, %v4327
    %v4329 = vpop.f32.mrb[0].mxu0
    %v4330 = vadd.f32 %v3686, %v4329
    %v4331 = vpop.f32.mrb[0].mxu0
    %v4332 = vadd.f32 %v3688, %v4331
    %4333 = vdwg.mxu0
    %s4334 = scalar_lea.vmem [#allocation3], 32
    %v4335 = vld [vmem:[%s4334] sm:$0xff]
    %v4336 = vld [vmem:[%s4334 + $0x8] sm:$0xff]
    %v4337 = vld [vmem:[%s4334 + $0x10] sm:$0xff]
    %v4338 = vld [vmem:[%s4334 + $0x18] sm:$0xff]
    %v4339 = vld [vmem:[%s4334 + $0x20] sm:$0xff]
    %v4340 = vld [vmem:[%s4334 + $0x28] sm:$0xff]
    %v4341 = vld [vmem:[%s4334 + $0x30] sm:$0xff]
    %v4342 = vld [vmem:[%s4334 + $0x38] sm:$0xff]
    %v4343 = vld [vmem:[%s4334 + $0x40] sm:$0xff]
    %v4344 = vld [vmem:[%s4334 + $0x48] sm:$0xff]
    %v4345 = vld [vmem:[%s4334 + $0x50] sm:$0xff]
    %v4346 = vld [vmem:[%s4334 + $0x58] sm:$0xff]
    %v4347 = vld [vmem:[%s4334 + $0x60] sm:$0xff]
    %v4348 = vld [vmem:[%s4334 + $0x68] sm:$0xff]
    %v4349 = vld [vmem:[%s4334 + $0x70] sm:$0xff]
    %v4350 = vld [vmem:[%s4334 + $0x78] sm:$0xff]
    %v4351 = vld [vmem:[%s4334 + $0x80] sm:$0xff]
    %v4352 = vld [vmem:[%s4334 + $0x88] sm:$0xff]
    %v4353 = vld [vmem:[%s4334 + $0x90] sm:$0xff]
    %v4354 = vld [vmem:[%s4334 + $0x98] sm:$0xff]
    %v4355 = vld [vmem:[%s4334 + $0xa0] sm:$0xff]
    %v4356 = vld [vmem:[%s4334 + $0xa8] sm:$0xff]
    %v4357 = vld [vmem:[%s4334 + $0xb0] sm:$0xff]
    %v4358 = vld [vmem:[%s4334 + $0xb8] sm:$0xff]
    %v4359 = vld [vmem:[%s4334 + $0xc0] sm:$0xff]
    %v4360 = vld [vmem:[%s4334 + $0xc8] sm:$0xff]
    %v4361 = vld [vmem:[%s4334 + $0xd0] sm:$0xff]
    %v4362 = vld [vmem:[%s4334 + $0xd8] sm:$0xff]
    %v4363 = vld [vmem:[%s4334 + $0xe0] sm:$0xff]
    %v4364 = vld [vmem:[%s4334 + $0xe8] sm:$0xff]
    %v4365 = vld [vmem:[%s4334 + $0xf0] sm:$0xff]
    %v4366 = vld [vmem:[%s4334 + $0xf8] sm:$0xff]
    %v4367 = vld [vmem:[%s4334 + $0x100] sm:$0xff]
    %v4368 = vld [vmem:[%s4334 + $0x108] sm:$0xff]
    %v4369 = vld [vmem:[%s4334 + $0x110] sm:$0xff]
    %v4370 = vld [vmem:[%s4334 + $0x118] sm:$0xff]
    %v4371 = vld [vmem:[%s4334 + $0x120] sm:$0xff]
    %v4372 = vld [vmem:[%s4334 + $0x128] sm:$0xff]
    %v4373 = vld [vmem:[%s4334 + $0x130] sm:$0xff]
    %v4374 = vld [vmem:[%s4334 + $0x138] sm:$0xff]
    %v4375 = vld [vmem:[%s4334 + $0x140] sm:$0xff]
    %v4376 = vld [vmem:[%s4334 + $0x148] sm:$0xff]
    %v4377 = vld [vmem:[%s4334 + $0x150] sm:$0xff]
    %v4378 = vld [vmem:[%s4334 + $0x158] sm:$0xff]
    %v4379 = vld [vmem:[%s4334 + $0x160] sm:$0xff]
    %v4380 = vld [vmem:[%s4334 + $0x168] sm:$0xff]
    %v4381 = vld [vmem:[%s4334 + $0x170] sm:$0xff]
    %v4382 = vld [vmem:[%s4334 + $0x178] sm:$0xff]
    %v4383 = vld [vmem:[%s4334 + $0x180] sm:$0xff]
    %v4384 = vld [vmem:[%s4334 + $0x188] sm:$0xff]
    %v4385 = vld [vmem:[%s4334 + $0x190] sm:$0xff]
    %v4386 = vld [vmem:[%s4334 + $0x198] sm:$0xff]
    %v4387 = vld [vmem:[%s4334 + $0x1a0] sm:$0xff]
    %v4388 = vld [vmem:[%s4334 + $0x1a8] sm:$0xff]
    %v4389 = vld [vmem:[%s4334 + $0x1b0] sm:$0xff]
    %v4390 = vld [vmem:[%s4334 + $0x1b8] sm:$0xff]
    %v4391 = vld [vmem:[%s4334 + $0x1c0] sm:$0xff]
    %v4392 = vld [vmem:[%s4334 + $0x1c8] sm:$0xff]
    %v4393 = vld [vmem:[%s4334 + $0x1d0] sm:$0xff]
    %v4394 = vld [vmem:[%s4334 + $0x1d8] sm:$0xff]
    %v4395 = vld [vmem:[%s4334 + $0x1e0] sm:$0xff]
    %v4396 = vld [vmem:[%s4334 + $0x1e8] sm:$0xff]
    %v4397 = vld [vmem:[%s4334 + $0x1f0] sm:$0xff]
    %v4398 = vld [vmem:[%s4334 + $0x1f8] sm:$0xff]
    %v4399 = vld [vmem:[%s4334 + $0x200] sm:$0xff]
    %v4400 = vld [vmem:[%s4334 + $0x208] sm:$0xff]
    %v4401 = vld [vmem:[%s4334 + $0x210] sm:$0xff]
    %v4402 = vld [vmem:[%s4334 + $0x218] sm:$0xff]
    %v4403 = vld [vmem:[%s4334 + $0x220] sm:$0xff]
    %v4404 = vld [vmem:[%s4334 + $0x228] sm:$0xff]
    %v4405 = vld [vmem:[%s4334 + $0x230] sm:$0xff]
    %v4406 = vld [vmem:[%s4334 + $0x238] sm:$0xff]
    %v4407 = vld [vmem:[%s4334 + $0x240] sm:$0xff]
    %v4408 = vld [vmem:[%s4334 + $0x248] sm:$0xff]
    %v4409 = vld [vmem:[%s4334 + $0x250] sm:$0xff]
    %v4410 = vld [vmem:[%s4334 + $0x258] sm:$0xff]
    %v4411 = vld [vmem:[%s4334 + $0x260] sm:$0xff]
    %v4412 = vld [vmem:[%s4334 + $0x268] sm:$0xff]
    %s4413 = scalar_lea.vmem %s3, 320
    %v4414 = vld [vmem:[%s4413] sm:$0xff]
    %v4415 = vld [vmem:[%s4413 + $0x8] sm:$0xff]
    %v4416 = vld [vmem:[%s4413 + $0x10] sm:$0xff]
    %v4417 = vld [vmem:[%s4413 + $0x18] sm:$0xff]
    %v4418 = vld [vmem:[%s4413 + $0x20] sm:$0xff]
    %v4419 = vld [vmem:[%s4413 + $0x28] sm:$0xff]
    %v4420 = vld [vmem:[%s4413 + $0x30] sm:$0xff]
    %v4421 = vld [vmem:[%s4413 + $0x38] sm:$0xff]
    %v4422 = vld [vmem:[%s4413 + $0x40] sm:$0xff]
    %v4423 = vld [vmem:[%s4413 + $0x48] sm:$0xff]
    %v4424 = vld [vmem:[%s4413 + $0x50] sm:$0xff]
    %v4425 = vld [vmem:[%s4413 + $0x58] sm:$0xff]
    %v4426 = vld [vmem:[%s4413 + $0x60] sm:$0xff]
    %v4427 = vld [vmem:[%s4413 + $0x68] sm:$0xff]
    %v4428 = vld [vmem:[%s4413 + $0x70] sm:$0xff]
    %v4429 = vld [vmem:[%s4413 + $0x78] sm:$0xff]
    %v4430 = vld [vmem:[%s4413 + $0x80] sm:$0xff]
    %v4431 = vld [vmem:[%s4413 + $0x88] sm:$0xff]
    %v4432 = vld [vmem:[%s4413 + $0x90] sm:$0xff]
    %v4433 = vld [vmem:[%s4413 + $0x98] sm:$0x33]
    %v4454 = vunpack.c.l.b16 %v4414
    %v4455 = vunpack.c.h.b16 %v4414
    %v4456 = vunpack.c.l.b16 %v4415
    %v4457 = vunpack.c.h.b16 %v4415
    %v4458 = vunpack.c.l.b16 %v4416
    %v4459 = vunpack.c.h.b16 %v4416
    %v4460 = vunpack.c.l.b16 %v4417
    %v4461 = vunpack.c.h.b16 %v4417
    %v4462 = vunpack.c.l.b16 %v4418
    %v4463 = vunpack.c.h.b16 %v4418
    %v4464 = vunpack.c.l.b16 %v4419
    %v4465 = vunpack.c.h.b16 %v4419
    %v4466 = vunpack.c.l.b16 %v4420
    %v4467 = vunpack.c.h.b16 %v4420
    %v4468 = vunpack.c.l.b16 %v4421
    %v4469 = vunpack.c.h.b16 %v4421
    %v4470 = vunpack.c.l.b16 %v4422
    %v4471 = vunpack.c.h.b16 %v4422
    %v4472 = vunpack.c.l.b16 %v4423
    %v4473 = vunpack.c.h.b16 %v4423
    %v4474 = vunpack.c.l.b16 %v4424
    %v4475 = vunpack.c.h.b16 %v4424
    %v4476 = vunpack.c.l.b16 %v4425
    %v4477 = vunpack.c.h.b16 %v4425
    %v4478 = vunpack.c.l.b16 %v4426
    %v4479 = vunpack.c.h.b16 %v4426
    %v4480 = vunpack.c.l.b16 %v4427
    %v4481 = vunpack.c.h.b16 %v4427
    %v4482 = vunpack.c.l.b16 %v4428
    %v4483 = vunpack.c.h.b16 %v4428
    %v4484 = vunpack.c.l.b16 %v4429
    %v4485 = vunpack.c.h.b16 %v4429
    %v4486 = vunpack.c.l.b16 %v4430
    %v4487 = vunpack.c.h.b16 %v4430
    %v4488 = vunpack.c.l.b16 %v4431
    %v4489 = vunpack.c.h.b16 %v4431
    %v4490 = vunpack.c.l.b16 %v4432
    %v4491 = vunpack.c.h.b16 %v4432
    %v4492 = vunpack.c.l.b16 %v4433
    %v4493 = vunpack.c.h.b16 %v4433
    %v4494 = vpack.c.b16 %v4456, %v4454
    %v4495 = vpack.c.b16 %v4457, %v4455
    %v4496 = vpack.c.b16 %v4460, %v4458
    %v4497 = vpack.c.b16 %v4461, %v4459
    %v4498 = vpack.c.b16 %v4464, %v4462
    %v4499 = vpack.c.b16 %v4465, %v4463
    %v4500 = vpack.c.b16 %v4468, %v4466
    %v4501 = vpack.c.b16 %v4469, %v4467
    %v4502 = vpack.c.b16 %v4472, %v4470
    %v4503 = vpack.c.b16 %v4473, %v4471
    %v4504 = vpack.c.b16 %v4476, %v4474
    %v4505 = vpack.c.b16 %v4477, %v4475
    %v4506 = vpack.c.b16 %v4480, %v4478
    %v4507 = vpack.c.b16 %v4481, %v4479
    %v4508 = vpack.c.b16 %v4484, %v4482
    %v4509 = vpack.c.b16 %v4485, %v4483
    %v4510 = vpack.c.b16 %v4488, %v4486
    %v4511 = vpack.c.b16 %v4489, %v4487
    %v4512 = vpack.c.b16 %v4492, %v4490
    %v4513 = vpack.c.b16 %v4493, %v4491
    %v4533 = vsel %vm176, %v4336, 0
    %v4536 = vsel %vm176, %v4338, 0
    %v4539 = vsel %vm176, %v4340, 0
    %v4542 = vsel %vm176, %v4342, 0
    %v4545 = vsel %vm176, %v4344, 0
    %v4548 = vsel %vm176, %v4346, 0
    %v4551 = vsel %vm176, %v4348, 0
    %v4554 = vsel %vm176, %v4350, 0
    %v4557 = vsel %vm176, %v4352, 0
    %v4560 = vsel %vm176, %v4354, 0
    %v4563 = vsel %vm176, %v4356, 0
    %v4566 = vsel %vm176, %v4358, 0
    %v4569 = vsel %vm176, %v4360, 0
    %v4572 = vsel %vm176, %v4362, 0
    %v4575 = vsel %vm176, %v4364, 0
    %v4578 = vsel %vm176, %v4366, 0
    %v4581 = vsel %vm176, %v4368, 0
    %v4584 = vsel %vm176, %v4370, 0
    %v4587 = vsel %vm176, %v4372, 0
    %v4590 = vsel %vm176, %v4374, 0
    %v4593 = vsel %vm176, %v4376, 0
    %v4596 = vsel %vm176, %v4378, 0
    %v4599 = vsel %vm176, %v4380, 0
    %v4602 = vsel %vm176, %v4382, 0
    %v4605 = vsel %vm176, %v4384, 0
    %v4608 = vsel %vm176, %v4386, 0
    %v4611 = vsel %vm176, %v4388, 0
    %v4614 = vsel %vm176, %v4390, 0
    %v4617 = vsel %vm176, %v4392, 0
    %v4620 = vsel %vm176, %v4394, 0
    %v4623 = vsel %vm176, %v4396, 0
    %v4626 = vsel %vm176, %v4398, 0
    %v4629 = vsel %vm176, %v4400, 0
    %v4632 = vsel %vm176, %v4402, 0
    %v4635 = vsel %vm176, %v4404, 0
    %v4638 = vsel %vm176, %v4406, 0
    %v4641 = vsel %vm176, %v4408, 0
    %v4644 = vsel %vm176, %v4410, 0
    %v4647 = vsel %vm176, %v4412, 0
    %v4650 = vsel %vm3260, %v4512, 0
    %v4653 = vsel %vm3260, %v4513, 0
    %4655 = vmatprep.subr.bf16.mxu0 %v4495
    %4656 = vmatpush1.bf16.msra.mxu0 %v4494
    %4657 = vmatprep.subr.bf16.mxu0 %v4497
    %4658 = vmatpush1.bf16.msra.mxu0 %v4496
    %4659 = vmatprep.subr.bf16.mxu0 %v4499
    %4660 = vmatpush1.bf16.msra.mxu0 %v4498
    %4661 = vmatprep.subr.bf16.mxu0 %v4501
    %4662 = vmatpush1.bf16.msra.mxu0 %v4500
    %4663 = vmatprep.subr.bf16.mxu0 %v4503
    %4664 = vmatpush1.bf16.msra.mxu0 %v4502
    %4665 = vmatprep.subr.bf16.mxu0 %v4505
    %4666 = vmatpush1.bf16.msra.mxu0 %v4504
    %4667 = vmatprep.subr.bf16.mxu0 %v4507
    %4668 = vmatpush1.bf16.msra.mxu0 %v4506
    %4669 = vmatprep.subr.bf16.mxu0 %v4509
    %4670 = vmatpush1.bf16.msra.mxu0 %v4508
    %4671 = vmatprep.subr.bf16.mxu0 %v4511
    %4672 = vmatpush1.bf16.msra.mxu0 %v4510
    %4673 = vmatprep.subr.bf16.mxu0 %v4653
    %4674 = vmatpush1.bf16.msra.mxu0 %v4650
    %4675 = vmatprep.subr.bf16.mxu0 0
    %4676 = vmatpush1.bf16.msra.mxu0 0
    %4677 = vmatprep.subr.bf16.mxu0 0
    %4678 = vmatpush1.bf16.msra.mxu0 0
    %4679 = vmatprep.subr.bf16.mxu0 0
    %4680 = vmatpush1.bf16.msra.mxu0 0
    %4681 = vmatprep.subr.bf16.mxu0 0
    %4682 = vmatpush1.bf16.msra.mxu0 0
    %4683 = vmatprep.subr.bf16.mxu0 0
    %4684 = vmatpush1.bf16.msra.mxu0 0
    %4685 = vmatprep.subr.bf16.mxu0 0
    %4686 = vmatpush1.bf16.msra.mxu0 0
    %4687 = vmatprep.mubr.bf16.mxu0 %v4533
    %4688 = vmatmul.mubr.bf16.gmra.mrb[0].mxu0 %v4335
    %v4689 = vpop.f32.mrb[0].mxu0
    %v4690 = vadd.f32 0.0, %v4689
    %v4691 = vpop.f32.mrb[0].mxu0
    %v4692 = vadd.f32 0.0, %v4691
    %v4693 = vpop.f32.mrb[0].mxu0
    %v4694 = vadd.f32 0.0, %v4693
    %v4695 = vpop.f32.mrb[0].mxu0
    %v4696 = vadd.f32 0.0, %v4695
    %4697 = vmatprep.mubr.bf16.mxu0 %v4536
    %4698 = vmatmul.mubr.bf16.gmra.mrb[0].mxu0 %v4337
    %v4699 = vpop.f32.mrb[0].mxu0
    %v4700 = vadd.f32 0.0, %v4699
    %v4701 = vpop.f32.mrb[0].mxu0
    %v4702 = vadd.f32 0.0, %v4701
    %v4703 = vpop.f32.mrb[0].mxu0
    %v4704 = vadd.f32 0.0, %v4703
    %v4705 = vpop.f32.mrb[0].mxu0
    %v4706 = vadd.f32 0.0, %v4705
    %4707 = vmatprep.mubr.bf16.mxu0 %v4539
    %4708 = vmatmul.mubr.bf16.gmra.mrb[0].mxu0 %v4339
    %v4709 = vpop.f32.mrb[0].mxu0
    %v4710 = vadd.f32 0.0, %v4709
    %v4711 = vpop.f32.mrb[0].mxu0
    %v4712 = vadd.f32 0.0, %v4711
    %v4713 = vpop.f32.mrb[0].mxu0
    %v4714 = vadd.f32 0.0, %v4713
    %v4715 = vpop.f32.mrb[0].mxu0
    %v4716 = vadd.f32 0.0, %v4715
    %4717 = vmatprep.mubr.bf16.mxu0 %v4542
    %4718 = vmatmul.mubr.bf16.gmra.mrb[0].mxu0 %v4341
    %v4719 = vpop.f32.mrb[0].mxu0
    %v4720 = vadd.f32 0.0, %v4719
    %v4721 = vpop.f32.mrb[0].mxu0
    %v4722 = vadd.f32 0.0, %v4721
    %v4723 = vpop.f32.mrb[0].mxu0
    %v4724 = vadd.f32 0.0, %v4723
    %v4725 = vpop.f32.mrb[0].mxu0
    %v4726 = vadd.f32 0.0, %v4725
    %4727 = vmatprep.mubr.bf16.mxu0 %v4545
    %4728 = vmatmul.mubr.bf16.gmra.mrb[0].mxu0 %v4343
    %v4729 = vpop.f32.mrb[0].mxu0
    %v4730 = vadd.f32 0.0, %v4729
    %v4731 = vpop.f32.mrb[0].mxu0
    %v4732 = vadd.f32 0.0, %v4731
    %v4733 = vpop.f32.mrb[0].mxu0
    %v4734 = vadd.f32 0.0, %v4733
    %v4735 = vpop.f32.mrb[0].mxu0
    %v4736 = vadd.f32 0.0, %v4735
    %4737 = vmatprep.mubr.bf16.mxu0 %v4548
    %4738 = vmatmul.mubr.bf16.gmra.mrb[0].mxu0 %v4345
    %v4739 = vpop.f32.mrb[0].mxu0
    %v4740 = vadd.f32 0.0, %v4739
    %v4741 = vpop.f32.mrb[0].mxu0
    %v4742 = vadd.f32 0.0, %v4741
    %v4743 = vpop.f32.mrb[0].mxu0
    %v4744 = vadd.f32 0.0, %v4743
    %v4745 = vpop.f32.mrb[0].mxu0
    %v4746 = vadd.f32 0.0, %v4745
    %4747 = vmatprep.mubr.bf16.mxu0 %v4551
    %4748 = vmatmul.mubr.bf16.gmra.mrb[0].mxu0 %v4347
    %v4749 = vpop.f32.mrb[0].mxu0
    %v4750 = vadd.f32 0.0, %v4749
    %v4751 = vpop.f32.mrb[0].mxu0
    %v4752 = vadd.f32 0.0, %v4751
    %v4753 = vpop.f32.mrb[0].mxu0
    %v4754 = vadd.f32 0.0, %v4753
    %v4755 = vpop.f32.mrb[0].mxu0
    %v4756 = vadd.f32 0.0, %v4755
    %4757 = vmatprep.mubr.bf16.mxu0 %v4554
    %4758 = vmatmul.mubr.bf16.gmra.mrb[0].mxu0 %v4349
    %v4759 = vpop.f32.mrb[0].mxu0
    %v4760 = vadd.f32 0.0, %v4759
    %v4761 = vpop.f32.mrb[0].mxu0
    %v4762 = vadd.f32 0.0, %v4761
    %v4763 = vpop.f32.mrb[0].mxu0
    %v4764 = vadd.f32 0.0, %v4763
    %v4765 = vpop.f32.mrb[0].mxu0
    %v4766 = vadd.f32 0.0, %v4765
    %4767 = vmatprep.mubr.bf16.mxu0 %v4557
    %4768 = vmatmul.mubr.bf16.gmra.mrb[0].mxu0 %v4351
    %v4769 = vpop.f32.mrb[0].mxu0
    %v4770 = vadd.f32 0.0, %v4769
    %v4771 = vpop.f32.mrb[0].mxu0
    %v4772 = vadd.f32 0.0, %v4771
    %v4773 = vpop.f32.mrb[0].mxu0
    %v4774 = vadd.f32 0.0, %v4773
    %v4775 = vpop.f32.mrb[0].mxu0
    %v4776 = vadd.f32 0.0, %v4775
    %4777 = vmatprep.mubr.bf16.mxu0 %v4560
    %4778 = vmatmul.mubr.bf16.gmra.mrb[0].mxu0 %v4353
    %v4779 = vpop.f32.mrb[0].mxu0
    %v4780 = vadd.f32 0.0, %v4779
    %v4781 = vpop.f32.mrb[0].mxu0
    %v4782 = vadd.f32 0.0, %v4781
    %v4783 = vpop.f32.mrb[0].mxu0
    %v4784 = vadd.f32 0.0, %v4783
    %v4785 = vpop.f32.mrb[0].mxu0
    %v4786 = vadd.f32 0.0, %v4785
    %4787 = vmatprep.mubr.bf16.mxu0 %v4563
    %4788 = vmatmul.mubr.bf16.gmra.mrb[0].mxu0 %v4355
    %v4789 = vpop.f32.mrb[0].mxu0
    %v4790 = vadd.f32 0.0, %v4789
    %v4791 = vpop.f32.mrb[0].mxu0
    %v4792 = vadd.f32 0.0, %v4791
    %v4793 = vpop.f32.mrb[0].mxu0
    %v4794 = vadd.f32 0.0, %v4793
    %v4795 = vpop.f32.mrb[0].mxu0
    %v4796 = vadd.f32 0.0, %v4795
    %4797 = vmatprep.mubr.bf16.mxu0 %v4566
    %4798 = vmatmul.mubr.bf16.gmra.mrb[0].mxu0 %v4357
    %v4799 = vpop.f32.mrb[0].mxu0
    %v4800 = vadd.f32 0.0, %v4799
    %v4801 = vpop.f32.mrb[0].mxu0
    %v4802 = vadd.f32 0.0, %v4801
    %v4803 = vpop.f32.mrb[0].mxu0
    %v4804 = vadd.f32 0.0, %v4803
    %v4805 = vpop.f32.mrb[0].mxu0
    %v4806 = vadd.f32 0.0, %v4805
    %4807 = vmatprep.mubr.bf16.mxu0 %v4569
    %4808 = vmatmul.mubr.bf16.gmra.mrb[0].mxu0 %v4359
    %v4809 = vpop.f32.mrb[0].mxu0
    %v4810 = vadd.f32 0.0, %v4809
    %v4811 = vpop.f32.mrb[0].mxu0
    %v4812 = vadd.f32 0.0, %v4811
    %v4813 = vpop.f32.mrb[0].mxu0
    %v4814 = vadd.f32 0.0, %v4813
    %v4815 = vpop.f32.mrb[0].mxu0
    %v4816 = vadd.f32 0.0, %v4815
    %4817 = vmatprep.mubr.bf16.mxu0 %v4572
    %4818 = vmatmul.mubr.bf16.gmra.mrb[0].mxu0 %v4361
    %v4819 = vpop.f32.mrb[0].mxu0
    %v4820 = vadd.f32 0.0, %v4819
    %v4821 = vpop.f32.mrb[0].mxu0
    %v4822 = vadd.f32 0.0, %v4821
    %v4823 = vpop.f32.mrb[0].mxu0
    %v4824 = vadd.f32 0.0, %v4823
    %v4825 = vpop.f32.mrb[0].mxu0
    %v4826 = vadd.f32 0.0, %v4825
    %4827 = vmatprep.mubr.bf16.mxu0 %v4575
    %4828 = vmatmul.mubr.bf16.gmra.mrb[0].mxu0 %v4363
    %v4829 = vpop.f32.mrb[0].mxu0
    %v4830 = vadd.f32 0.0, %v4829
    %v4831 = vpop.f32.mrb[0].mxu0
    %v4832 = vadd.f32 0.0, %v4831
    %v4833 = vpop.f32.mrb[0].mxu0
    %v4834 = vadd.f32 0.0, %v4833
    %v4835 = vpop.f32.mrb[0].mxu0
    %v4836 = vadd.f32 0.0, %v4835
    %4837 = vmatprep.mubr.bf16.mxu0 %v4578
    %4838 = vmatmul.mubr.bf16.gmra.mrb[0].mxu0 %v4365
    %v4839 = vpop.f32.mrb[0].mxu0
    %v4840 = vadd.f32 0.0, %v4839
    %v4841 = vpop.f32.mrb[0].mxu0
    %v4842 = vadd.f32 0.0, %v4841
    %v4843 = vpop.f32.mrb[0].mxu0
    %v4844 = vadd.f32 0.0, %v4843
    %v4845 = vpop.f32.mrb[0].mxu0
    %v4846 = vadd.f32 0.0, %v4845
    %4847 = vmatprep.mubr.bf16.mxu0 %v4581
    %4848 = vmatmul.mubr.bf16.gmra.mrb[0].mxu0 %v4367
    %v4849 = vpop.f32.mrb[0].mxu0
    %v4850 = vadd.f32 0.0, %v4849
    %v4851 = vpop.f32.mrb[0].mxu0
    %v4852 = vadd.f32 0.0, %v4851
    %v4853 = vpop.f32.mrb[0].mxu0
    %v4854 = vadd.f32 0.0, %v4853
    %v4855 = vpop.f32.mrb[0].mxu0
    %v4856 = vadd.f32 0.0, %v4855
    %4857 = vmatprep.mubr.bf16.mxu0 %v4584
    %4858 = vmatmul.mubr.bf16.gmra.mrb[0].mxu0 %v4369
    %v4859 = vpop.f32.mrb[0].mxu0
    %v4860 = vadd.f32 0.0, %v4859
    %v4861 = vpop.f32.mrb[0].mxu0
    %v4862 = vadd.f32 0.0, %v4861
    %v4863 = vpop.f32.mrb[0].mxu0
    %v4864 = vadd.f32 0.0, %v4863
    %v4865 = vpop.f32.mrb[0].mxu0
    %v4866 = vadd.f32 0.0, %v4865
    %4867 = vmatprep.mubr.bf16.mxu0 %v4587
    %4868 = vmatmul.mubr.bf16.gmra.mrb[0].mxu0 %v4371
    %v4869 = vpop.f32.mrb[0].mxu0
    %v4870 = vadd.f32 0.0, %v4869
    %v4871 = vpop.f32.mrb[0].mxu0
    %v4872 = vadd.f32 0.0, %v4871
    %v4873 = vpop.f32.mrb[0].mxu0
    %v4874 = vadd.f32 0.0, %v4873
    %v4875 = vpop.f32.mrb[0].mxu0
    %v4876 = vadd.f32 0.0, %v4875
    %4877 = vmatprep.mubr.bf16.mxu0 %v4590
    %4878 = vmatmul.mubr.bf16.gmra.mrb[0].mxu0 %v4373
    %v4879 = vpop.f32.mrb[0].mxu0
    %v4880 = vadd.f32 0.0, %v4879
    %v4881 = vpop.f32.mrb[0].mxu0
    %v4882 = vadd.f32 0.0, %v4881
    %v4883 = vpop.f32.mrb[0].mxu0
    %v4884 = vadd.f32 0.0, %v4883
    %v4885 = vpop.f32.mrb[0].mxu0
    %v4886 = vadd.f32 0.0, %v4885
    %4887 = vmatprep.mubr.bf16.mxu0 %v4593
    %4888 = vmatmul.mubr.bf16.gmra.mrb[0].mxu0 %v4375
    %v4889 = vpop.f32.mrb[0].mxu0
    %v4890 = vadd.f32 0.0, %v4889
    %v4891 = vpop.f32.mrb[0].mxu0
    %v4892 = vadd.f32 0.0, %v4891
    %v4893 = vpop.f32.mrb[0].mxu0
    %v4894 = vadd.f32 0.0, %v4893
    %v4895 = vpop.f32.mrb[0].mxu0
    %v4896 = vadd.f32 0.0, %v4895
    %4897 = vmatprep.mubr.bf16.mxu0 %v4596
    %4898 = vmatmul.mubr.bf16.gmra.mrb[0].mxu0 %v4377
    %v4899 = vpop.f32.mrb[0].mxu0
    %v4900 = vadd.f32 0.0, %v4899
    %v4901 = vpop.f32.mrb[0].mxu0
    %v4902 = vadd.f32 0.0, %v4901
    %v4903 = vpop.f32.mrb[0].mxu0
    %v4904 = vadd.f32 0.0, %v4903
    %v4905 = vpop.f32.mrb[0].mxu0
    %v4906 = vadd.f32 0.0, %v4905
    %4907 = vmatprep.mubr.bf16.mxu0 %v4599
    %4908 = vmatmul.mubr.bf16.gmra.mrb[0].mxu0 %v4379
    %v4909 = vpop.f32.mrb[0].mxu0
    %v4910 = vadd.f32 0.0, %v4909
    %v4911 = vpop.f32.mrb[0].mxu0
    %v4912 = vadd.f32 0.0, %v4911
    %v4913 = vpop.f32.mrb[0].mxu0
    %v4914 = vadd.f32 0.0, %v4913
    %v4915 = vpop.f32.mrb[0].mxu0
    %v4916 = vadd.f32 0.0, %v4915
    %4917 = vmatprep.mubr.bf16.mxu0 %v4602
    %4918 = vmatmul.mubr.bf16.gmra.mrb[0].mxu0 %v4381
    %v4919 = vpop.f32.mrb[0].mxu0
    %v4920 = vadd.f32 0.0, %v4919
    %v4921 = vpop.f32.mrb[0].mxu0
    %v4922 = vadd.f32 0.0, %v4921
    %v4923 = vpop.f32.mrb[0].mxu0
    %v4924 = vadd.f32 0.0, %v4923
    %v4925 = vpop.f32.mrb[0].mxu0
    %v4926 = vadd.f32 0.0, %v4925
    %4927 = vmatprep.mubr.bf16.mxu0 %v4605
    %4928 = vmatmul.mubr.bf16.gmra.mrb[0].mxu0 %v4383
    %v4929 = vpop.f32.mrb[0].mxu0
    %v4930 = vadd.f32 0.0, %v4929
    %v4931 = vpop.f32.mrb[0].mxu0
    %v4932 = vadd.f32 0.0, %v4931
    %v4933 = vpop.f32.mrb[0].mxu0
    %v4934 = vadd.f32 0.0, %v4933
    %v4935 = vpop.f32.mrb[0].mxu0
    %v4936 = vadd.f32 0.0, %v4935
    %4937 = vmatprep.mubr.bf16.mxu0 %v4608
    %4938 = vmatmul.mubr.bf16.gmra.mrb[0].mxu0 %v4385
    %v4939 = vpop.f32.mrb[0].mxu0
    %v4940 = vadd.f32 0.0, %v4939
    %v4941 = vpop.f32.mrb[0].mxu0
    %v4942 = vadd.f32 0.0, %v4941
    %v4943 = vpop.f32.mrb[0].mxu0
    %v4944 = vadd.f32 0.0, %v4943
    %v4945 = vpop.f32.mrb[0].mxu0
    %v4946 = vadd.f32 0.0, %v4945
    %4947 = vmatprep.mubr.bf16.mxu0 %v4611
    %4948 = vmatmul.mubr.bf16.gmra.mrb[0].mxu0 %v4387
    %v4949 = vpop.f32.mrb[0].mxu0
    %v4950 = vadd.f32 0.0, %v4949
    %v4951 = vpop.f32.mrb[0].mxu0
    %v4952 = vadd.f32 0.0, %v4951
    %v4953 = vpop.f32.mrb[0].mxu0
    %v4954 = vadd.f32 0.0, %v4953
    %v4955 = vpop.f32.mrb[0].mxu0
    %v4956 = vadd.f32 0.0, %v4955
    %4957 = vmatprep.mubr.bf16.mxu0 %v4614
    %4958 = vmatmul.mubr.bf16.gmra.mrb[0].mxu0 %v4389
    %v4959 = vpop.f32.mrb[0].mxu0
    %v4960 = vadd.f32 0.0, %v4959
    %v4961 = vpop.f32.mrb[0].mxu0
    %v4962 = vadd.f32 0.0, %v4961
    %v4963 = vpop.f32.mrb[0].mxu0
    %v4964 = vadd.f32 0.0, %v4963
    %v4965 = vpop.f32.mrb[0].mxu0
    %v4966 = vadd.f32 0.0, %v4965
    %4967 = vmatprep.mubr.bf16.mxu0 %v4617
    %4968 = vmatmul.mubr.bf16.gmra.mrb[0].mxu0 %v4391
    %v4969 = vpop.f32.mrb[0].mxu0
    %v4970 = vadd.f32 0.0, %v4969
    %v4971 = vpop.f32.mrb[0].mxu0
    %v4972 = vadd.f32 0.0, %v4971
    %v4973 = vpop.f32.mrb[0].mxu0
    %v4974 = vadd.f32 0.0, %v4973
    %v4975 = vpop.f32.mrb[0].mxu0
    %v4976 = vadd.f32 0.0, %v4975
    %4977 = vmatprep.mubr.bf16.mxu0 %v4620
    %4978 = vmatmul.mubr.bf16.gmra.mrb[0].mxu0 %v4393
    %v4979 = vpop.f32.mrb[0].mxu0
    %v4980 = vadd.f32 0.0, %v4979
    %v4981 = vpop.f32.mrb[0].mxu0
    %v4982 = vadd.f32 0.0, %v4981
    %v4983 = vpop.f32.mrb[0].mxu0
    %v4984 = vadd.f32 0.0, %v4983
    %v4985 = vpop.f32.mrb[0].mxu0
    %v4986 = vadd.f32 0.0, %v4985
    %4987 = vmatprep.mubr.bf16.mxu0 %v4623
    %4988 = vmatmul.mubr.bf16.gmra.mrb[0].mxu0 %v4395
    %v4989 = vpop.f32.mrb[0].mxu0
    %v4990 = vadd.f32 0.0, %v4989
    %v4991 = vpop.f32.mrb[0].mxu0
    %v4992 = vadd.f32 0.0, %v4991
    %v4993 = vpop.f32.mrb[0].mxu0
    %v4994 = vadd.f32 0.0, %v4993
    %v4995 = vpop.f32.mrb[0].mxu0
    %v4996 = vadd.f32 0.0, %v4995
    %4997 = vmatprep.mubr.bf16.mxu0 %v4626
    %4998 = vmatmul.mubr.bf16.gmra.mrb[0].mxu0 %v4397
    %v4999 = vpop.f32.mrb[0].mxu0
    %v5000 = vadd.f32 0.0, %v4999
    %v5001 = vpop.f32.mrb[0].mxu0
    %v5002 = vadd.f32 0.0, %v5001
    %v5003 = vpop.f32.mrb[0].mxu0
    %v5004 = vadd.f32 0.0, %v5003
    %v5005 = vpop.f32.mrb[0].mxu0
    %v5006 = vadd.f32 0.0, %v5005
    %5007 = vmatprep.mubr.bf16.mxu0 %v4629
    %5008 = vmatmul.mubr.bf16.gmra.mrb[0].mxu0 %v4399
    %v5009 = vpop.f32.mrb[0].mxu0
    %v5010 = vadd.f32 0.0, %v5009
    %v5011 = vpop.f32.mrb[0].mxu0
    %v5012 = vadd.f32 0.0, %v5011
    %v5013 = vpop.f32.mrb[0].mxu0
    %v5014 = vadd.f32 0.0, %v5013
    %v5015 = vpop.f32.mrb[0].mxu0
    %v5016 = vadd.f32 0.0, %v5015
    %5017 = vmatprep.mubr.bf16.mxu0 %v4632
    %5018 = vmatmul.mubr.bf16.gmra.mrb[0].mxu0 %v4401
    %v5019 = vpop.f32.mrb[0].mxu0
    %v5020 = vadd.f32 0.0, %v5019
    %v5021 = vpop.f32.mrb[0].mxu0
    %v5022 = vadd.f32 0.0, %v5021
    %v5023 = vpop.f32.mrb[0].mxu0
    %v5024 = vadd.f32 0.0, %v5023
    %v5025 = vpop.f32.mrb[0].mxu0
    %v5026 = vadd.f32 0.0, %v5025
    %5027 = vmatprep.mubr.bf16.mxu0 %v4635
    %5028 = vmatmul.mubr.bf16.gmra.mrb[0].mxu0 %v4403
    %v5029 = vpop.f32.mrb[0].mxu0
    %v5030 = vadd.f32 0.0, %v5029
    %v5031 = vpop.f32.mrb[0].mxu0
    %v5032 = vadd.f32 0.0, %v5031
    %v5033 = vpop.f32.mrb[0].mxu0
    %v5034 = vadd.f32 0.0, %v5033
    %v5035 = vpop.f32.mrb[0].mxu0
    %v5036 = vadd.f32 0.0, %v5035
    %5037 = vmatprep.mubr.bf16.mxu0 %v4638
    %5038 = vmatmul.mubr.bf16.gmra.mrb[0].mxu0 %v4405
    %v5039 = vpop.f32.mrb[0].mxu0
    %v5040 = vadd.f32 0.0, %v5039
    %v5041 = vpop.f32.mrb[0].mxu0
    %v5042 = vadd.f32 0.0, %v5041
    %v5043 = vpop.f32.mrb[0].mxu0
    %v5044 = vadd.f32 0.0, %v5043
    %v5045 = vpop.f32.mrb[0].mxu0
    %v5046 = vadd.f32 0.0, %v5045
    %5047 = vmatprep.mubr.bf16.mxu0 %v4641
    %5048 = vmatmul.mubr.bf16.gmra.mrb[0].mxu0 %v4407
    %v5049 = vpop.f32.mrb[0].mxu0
    %v5050 = vadd.f32 0.0, %v5049
    %v5051 = vpop.f32.mrb[0].mxu0
    %v5052 = vadd.f32 0.0, %v5051
    %v5053 = vpop.f32.mrb[0].mxu0
    %v5054 = vadd.f32 0.0, %v5053
    %v5055 = vpop.f32.mrb[0].mxu0
    %v5056 = vadd.f32 0.0, %v5055
    %5057 = vmatprep.mubr.bf16.mxu0 %v4644
    %5058 = vmatmul.mubr.bf16.gmra.mrb[0].mxu0 %v4409
    %v5059 = vpop.f32.mrb[0].mxu0
    %v5060 = vadd.f32 0.0, %v5059
    %v5061 = vpop.f32.mrb[0].mxu0
    %v5062 = vadd.f32 0.0, %v5061
    %v5063 = vpop.f32.mrb[0].mxu0
    %v5064 = vadd.f32 0.0, %v5063
    %v5065 = vpop.f32.mrb[0].mxu0
    %v5066 = vadd.f32 0.0, %v5065
    %5067 = vmatprep.mubr.bf16.mxu0 %v4647
    %5068 = vmatmul.mubr.bf16.gmra.mrb[0].mxu0 %v4411
    %v5069 = vpop.f32.mrb[0].mxu0
    %v5070 = vadd.f32 0.0, %v5069
    %v5071 = vpop.f32.mrb[0].mxu0
    %v5072 = vadd.f32 0.0, %v5071
    %v5073 = vpop.f32.mrb[0].mxu0
    %v5074 = vadd.f32 0.0, %v5073
    %v5075 = vpop.f32.mrb[0].mxu0
    %v5076 = vadd.f32 0.0, %v5075
    %5077 = vdwg.mxu0
    %v5078 = vadd.f32 %v3946, %v4690
    %v5079 = vadd.f32 %v3948, %v4692
    %v5080 = vadd.f32 %v3950, %v4694
    %v5081 = vadd.f32 %v3952, %v4696
    %v5082 = vadd.f32 %v3956, %v4700
    %v5083 = vadd.f32 %v3958, %v4702
    %v5084 = vadd.f32 %v3960, %v4704
    %v5085 = vadd.f32 %v3962, %v4706
    %v5086 = vadd.f32 %v3966, %v4710
    %v5087 = vadd.f32 %v3968, %v4712
    %v5088 = vadd.f32 %v3970, %v4714
    %v5089 = vadd.f32 %v3972, %v4716
    %v5090 = vadd.f32 %v3976, %v4720
    %v5091 = vadd.f32 %v3978, %v4722
    %v5092 = vadd.f32 %v3980, %v4724
    %v5093 = vadd.f32 %v3982, %v4726
    %v5094 = vadd.f32 %v3986, %v4730
    %v5095 = vadd.f32 %v3988, %v4732
    %v5096 = vadd.f32 %v3990, %v4734
    %v5097 = vadd.f32 %v3992, %v4736
    %v5098 = vadd.f32 %v3996, %v4740
    %v5099 = vadd.f32 %v3998, %v4742
    %v5100 = vadd.f32 %v4000, %v4744
    %v5101 = vadd.f32 %v4002, %v4746
    %v5102 = vadd.f32 %v4006, %v4750
    %v5103 = vadd.f32 %v4008, %v4752
    %v5104 = vadd.f32 %v4010, %v4754
    %v5105 = vadd.f32 %v4012, %v4756
    %v5106 = vadd.f32 %v4016, %v4760
    %v5107 = vadd.f32 %v4018, %v4762
    %v5108 = vadd.f32 %v4020, %v4764
    %v5109 = vadd.f32 %v4022, %v4766
    %v5110 = vadd.f32 %v4026, %v4770
    %v5111 = vadd.f32 %v4028, %v4772
    %v5112 = vadd.f32 %v4030, %v4774
    %v5113 = vadd.f32 %v4032, %v4776
    %v5114 = vadd.f32 %v4036, %v4780
    %v5115 = vadd.f32 %v4038, %v4782
    %v5116 = vadd.f32 %v4040, %v4784
    %v5117 = vadd.f32 %v4042, %v4786
    %v5118 = vadd.f32 %v4046, %v4790
    %v5119 = vadd.f32 %v4048, %v4792
    %v5120 = vadd.f32 %v4050, %v4794
    %v5121 = vadd.f32 %v4052, %v4796
    %v5122 = vadd.f32 %v4056, %v4800
    %v5123 = vadd.f32 %v4058, %v4802
    %v5124 = vadd.f32 %v4060, %v4804
    %v5125 = vadd.f32 %v4062, %v4806
    %v5126 = vadd.f32 %v4066, %v4810
    %v5127 = vadd.f32 %v4068, %v4812
    %v5128 = vadd.f32 %v4070, %v4814
    %v5129 = vadd.f32 %v4072, %v4816
    %v5130 = vadd.f32 %v4076, %v4820
    %v5131 = vadd.f32 %v4078, %v4822
    %v5132 = vadd.f32 %v4080, %v4824
    %v5133 = vadd.f32 %v4082, %v4826
    %v5134 = vadd.f32 %v4086, %v4830
    %v5135 = vadd.f32 %v4088, %v4832
    %v5136 = vadd.f32 %v4090, %v4834
    %v5137 = vadd.f32 %v4092, %v4836
    %v5138 = vadd.f32 %v4096, %v4840
    %v5139 = vadd.f32 %v4098, %v4842
    %v5140 = vadd.f32 %v4100, %v4844
    %v5141 = vadd.f32 %v4102, %v4846
    %v5142 = vadd.f32 %v4106, %v4850
    %v5143 = vadd.f32 %v4108, %v4852
    %v5144 = vadd.f32 %v4110, %v4854
    %v5145 = vadd.f32 %v4112, %v4856
    %v5146 = vadd.f32 %v4116, %v4860
    %v5147 = vadd.f32 %v4118, %v4862
    %v5148 = vadd.f32 %v4120, %v4864
    %v5149 = vadd.f32 %v4122, %v4866
    %v5150 = vadd.f32 %v4126, %v4870
    %v5151 = vadd.f32 %v4128, %v4872
    %v5152 = vadd.f32 %v4130, %v4874
    %v5153 = vadd.f32 %v4132, %v4876
    %v5154 = vadd.f32 %v4136, %v4880
    %v5155 = vadd.f32 %v4138, %v4882
    %v5156 = vadd.f32 %v4140, %v4884
    %v5157 = vadd.f32 %v4142, %v4886
    %v5158 = vadd.f32 %v4146, %v4890
    %v5159 = vadd.f32 %v4148, %v4892
    %v5160 = vadd.f32 %v4150, %v4894
    %v5161 = vadd.f32 %v4152, %v4896
    %v5162 = vadd.f32 %v4156, %v4900
    %v5163 = vadd.f32 %v4158, %v4902
    %v5164 = vadd.f32 %v4160, %v4904
    %v5165 = vadd.f32 %v4162, %v4906
    %v5166 = vadd.f32 %v4166, %v4910
    %v5167 = vadd.f32 %v4168, %v4912
    %v5168 = vadd.f32 %v4170, %v4914
    %v5169 = vadd.f32 %v4172, %v4916
    %v5170 = vadd.f32 %v4176, %v4920
    %v5171 = vadd.f32 %v4178, %v4922
    %v5172 = vadd.f32 %v4180, %v4924
    %v5173 = vadd.f32 %v4182, %v4926
    %v5174 = vadd.f32 %v4186, %v4930
    %v5175 = vadd.f32 %v4188, %v4932
    %v5176 = vadd.f32 %v4190, %v4934
    %v5177 = vadd.f32 %v4192, %v4936
    %v5178 = vadd.f32 %v4196, %v4940
    %v5179 = vadd.f32 %v4198, %v4942
    %v5180 = vadd.f32 %v4200, %v4944
    %v5181 = vadd.f32 %v4202, %v4946
    %v5182 = vadd.f32 %v4206, %v4950
    %v5183 = vadd.f32 %v4208, %v4952
    %v5184 = vadd.f32 %v4210, %v4954
    %v5185 = vadd.f32 %v4212, %v4956
    %v5186 = vadd.f32 %v4216, %v4960
    %v5187 = vadd.f32 %v4218, %v4962
    %v5188 = vadd.f32 %v4220, %v4964
    %v5189 = vadd.f32 %v4222, %v4966
    %v5190 = vadd.f32 %v4226, %v4970
    %v5191 = vadd.f32 %v4228, %v4972
    %v5192 = vadd.f32 %v4230, %v4974
    %v5193 = vadd.f32 %v4232, %v4976
    %v5194 = vadd.f32 %v4236, %v4980
    %v5195 = vadd.f32 %v4238, %v4982
    %v5196 = vadd.f32 %v4240, %v4984
    %v5197 = vadd.f32 %v4242, %v4986
    %v5198 = vadd.f32 %v4246, %v4990
    %v5199 = vadd.f32 %v4248, %v4992
    %v5200 = vadd.f32 %v4250, %v4994
    %v5201 = vadd.f32 %v4252, %v4996
    %v5202 = vadd.f32 %v4256, %v5000
    %v5203 = vadd.f32 %v4258, %v5002
    %v5204 = vadd.f32 %v4260, %v5004
    %v5205 = vadd.f32 %v4262, %v5006
    %v5206 = vadd.f32 %v4266, %v5010
    %v5207 = vadd.f32 %v4268, %v5012
    %v5208 = vadd.f32 %v4270, %v5014
    %v5209 = vadd.f32 %v4272, %v5016
    %v5210 = vadd.f32 %v4276, %v5020
    %v5211 = vadd.f32 %v4278, %v5022
    %v5212 = vadd.f32 %v4280, %v5024
    %v5213 = vadd.f32 %v4282, %v5026
    %v5214 = vadd.f32 %v4286, %v5030
    %v5215 = vadd.f32 %v4288, %v5032
    %v5216 = vadd.f32 %v4290, %v5034
    %v5217 = vadd.f32 %v4292, %v5036
    %v5218 = vadd.f32 %v4296, %v5040
    %v5219 = vadd.f32 %v4298, %v5042
    %v5220 = vadd.f32 %v4300, %v5044
    %v5221 = vadd.f32 %v4302, %v5046
    %v5222 = vadd.f32 %v4306, %v5050
    %v5223 = vadd.f32 %v4308, %v5052
    %v5224 = vadd.f32 %v4310, %v5054
    %v5225 = vadd.f32 %v4312, %v5056
    %v5226 = vadd.f32 %v4316, %v5060
    %v5227 = vadd.f32 %v4318, %v5062
    %v5228 = vadd.f32 %v4320, %v5064
    %v5229 = vadd.f32 %v4322, %v5066
    %v5230 = vadd.f32 %v4326, %v5070
    %v5231 = vadd.f32 %v4328, %v5072
    %v5232 = vadd.f32 %v4330, %v5074
    %v5233 = vadd.f32 %v4332, %v5076
    %v5234 = vld [vmem:[%s4] sm:$0x3]
    %v5236 = vlaneseq
    %v5237 = vshrl.u32 %v5236, 7
    %v5238 = vsub.s32 0, %v5237
    %v5239 = vrot.slane %v5234, %v5238
    %v5240 = vlaneseq
    %v5241 = vshrl.u32 %v5240, 7
    %v5242 = vsub.s32 1, %v5241
    %v5243 = vrot.slane %v5234, %v5242
    %v5246 = vadd.f32 %v5078, %v5239
    %v5247 = vadd.f32 %v5079, %v5243
    %v5248 = vadd.f32 %v5080, %v5239
    %v5249 = vadd.f32 %v5081, %v5243
    %v5250 = vadd.f32 %v5082, %v5239
    %v5251 = vadd.f32 %v5083, %v5243
    %v5252 = vadd.f32 %v5084, %v5239
    %v5253 = vadd.f32 %v5085, %v5243
    %v5254 = vadd.f32 %v5086, %v5239
    %v5255 = vadd.f32 %v5087, %v5243
    %v5256 = vadd.f32 %v5088, %v5239
    %v5257 = vadd.f32 %v5089, %v5243
    %v5258 = vadd.f32 %v5090, %v5239
    %v5259 = vadd.f32 %v5091, %v5243
    %v5260 = vadd.f32 %v5092, %v5239
    %v5261 = vadd.f32 %v5093, %v5243
    %v5262 = vadd.f32 %v5094, %v5239
    %v5263 = vadd.f32 %v5095, %v5243
    %v5264 = vadd.f32 %v5096, %v5239
    %v5265 = vadd.f32 %v5097, %v5243
    %v5266 = vadd.f32 %v5098, %v5239
    %v5267 = vadd.f32 %v5099, %v5243
    %v5268 = vadd.f32 %v5100, %v5239
    %v5269 = vadd.f32 %v5101, %v5243
    %v5270 = vadd.f32 %v5102, %v5239
    %v5271 = vadd.f32 %v5103, %v5243
    %v5272 = vadd.f32 %v5104, %v5239
    %v5273 = vadd.f32 %v5105, %v5243
    %v5274 = vadd.f32 %v5106, %v5239
    %v5275 = vadd.f32 %v5107, %v5243
    %v5276 = vadd.f32 %v5108, %v5239
    %v5277 = vadd.f32 %v5109, %v5243
    %v5278 = vadd.f32 %v5110, %v5239
    %v5279 = vadd.f32 %v5111, %v5243
    %v5280 = vadd.f32 %v5112, %v5239
    %v5281 = vadd.f32 %v5113, %v5243
    %v5282 = vadd.f32 %v5114, %v5239
    %v5283 = vadd.f32 %v5115, %v5243
    %v5284 = vadd.f32 %v5116, %v5239
    %v5285 = vadd.f32 %v5117, %v5243
    %v5286 = vadd.f32 %v5118, %v5239
    %v5287 = vadd.f32 %v5119, %v5243
    %v5288 = vadd.f32 %v5120, %v5239
    %v5289 = vadd.f32 %v5121, %v5243
    %v5290 = vadd.f32 %v5122, %v5239
    %v5291 = vadd.f32 %v5123, %v5243
    %v5292 = vadd.f32 %v5124, %v5239
    %v5293 = vadd.f32 %v5125, %v5243
    %v5294 = vadd.f32 %v5126, %v5239
    %v5295 = vadd.f32 %v5127, %v5243
    %v5296 = vadd.f32 %v5128, %v5239
    %v5297 = vadd.f32 %v5129, %v5243
    %v5298 = vadd.f32 %v5130, %v5239
    %v5299 = vadd.f32 %v5131, %v5243
    %v5300 = vadd.f32 %v5132, %v5239
    %v5301 = vadd.f32 %v5133, %v5243
    %v5302 = vadd.f32 %v5134, %v5239
    %v5303 = vadd.f32 %v5135, %v5243
    %v5304 = vadd.f32 %v5136, %v5239
    %v5305 = vadd.f32 %v5137, %v5243
    %v5306 = vadd.f32 %v5138, %v5239
    %v5307 = vadd.f32 %v5139, %v5243
    %v5308 = vadd.f32 %v5140, %v5239
    %v5309 = vadd.f32 %v5141, %v5243
    %v5310 = vadd.f32 %v5142, %v5239
    %v5311 = vadd.f32 %v5143, %v5243
    %v5312 = vadd.f32 %v5144, %v5239
    %v5313 = vadd.f32 %v5145, %v5243
    %v5314 = vadd.f32 %v5146, %v5239
    %v5315 = vadd.f32 %v5147, %v5243
    %v5316 = vadd.f32 %v5148, %v5239
    %v5317 = vadd.f32 %v5149, %v5243
    %v5318 = vadd.f32 %v5150, %v5239
    %v5319 = vadd.f32 %v5151, %v5243
    %v5320 = vadd.f32 %v5152, %v5239
    %v5321 = vadd.f32 %v5153, %v5243
    %v5322 = vadd.f32 %v5154, %v5239
    %v5323 = vadd.f32 %v5155, %v5243
    %v5324 = vadd.f32 %v5156, %v5239
    %v5325 = vadd.f32 %v5157, %v5243
    %v5326 = vadd.f32 %v5158, %v5239
    %v5327 = vadd.f32 %v5159, %v5243
    %v5328 = vadd.f32 %v5160, %v5239
    %v5329 = vadd.f32 %v5161, %v5243
    %v5330 = vadd.f32 %v5162, %v5239
    %v5331 = vadd.f32 %v5163, %v5243
    %v5332 = vadd.f32 %v5164, %v5239
    %v5333 = vadd.f32 %v5165, %v5243
    %v5334 = vadd.f32 %v5166, %v5239
    %v5335 = vadd.f32 %v5167, %v5243
    %v5336 = vadd.f32 %v5168, %v5239
    %v5337 = vadd.f32 %v5169, %v5243
    %v5338 = vadd.f32 %v5170, %v5239
    %v5339 = vadd.f32 %v5171, %v5243
    %v5340 = vadd.f32 %v5172, %v5239
    %v5341 = vadd.f32 %v5173, %v5243
    %v5342 = vadd.f32 %v5174, %v5239
    %v5343 = vadd.f32 %v5175, %v5243
    %v5344 = vadd.f32 %v5176, %v5239
    %v5345 = vadd.f32 %v5177, %v5243
    %v5346 = vadd.f32 %v5178, %v5239
    %v5347 = vadd.f32 %v5179, %v5243
    %v5348 = vadd.f32 %v5180, %v5239
    %v5349 = vadd.f32 %v5181, %v5243
    %v5350 = vadd.f32 %v5182, %v5239
    %v5351 = vadd.f32 %v5183, %v5243
    %v5352 = vadd.f32 %v5184, %v5239
    %v5353 = vadd.f32 %v5185, %v5243
    %v5354 = vadd.f32 %v5186, %v5239
    %v5355 = vadd.f32 %v5187, %v5243
    %v5356 = vadd.f32 %v5188, %v5239
    %v5357 = vadd.f32 %v5189, %v5243
    %v5358 = vadd.f32 %v5190, %v5239
    %v5359 = vadd.f32 %v5191, %v5243
    %v5360 = vadd.f32 %v5192, %v5239
    %v5361 = vadd.f32 %v5193, %v5243
    %v5362 = vadd.f32 %v5194, %v5239
    %v5363 = vadd.f32 %v5195, %v5243
    %v5364 = vadd.f32 %v5196, %v5239
    %v5365 = vadd.f32 %v5197, %v5243
    %v5366 = vadd.f32 %v5198, %v5239
    %v5367 = vadd.f32 %v5199, %v5243
    %v5368 = vadd.f32 %v5200, %v5239
    %v5369 = vadd.f32 %v5201, %v5243
    %v5370 = vadd.f32 %v5202, %v5239
    %v5371 = vadd.f32 %v5203, %v5243
    %v5372 = vadd.f32 %v5204, %v5239
    %v5373 = vadd.f32 %v5205, %v5243
    %v5374 = vadd.f32 %v5206, %v5239
    %v5375 = vadd.f32 %v5207, %v5243
    %v5376 = vadd.f32 %v5208, %v5239
    %v5377 = vadd.f32 %v5209, %v5243
    %v5378 = vadd.f32 %v5210, %v5239
    %v5379 = vadd.f32 %v5211, %v5243
    %v5380 = vadd.f32 %v5212, %v5239
    %v5381 = vadd.f32 %v5213, %v5243
    %v5382 = vadd.f32 %v5214, %v5239
    %v5383 = vadd.f32 %v5215, %v5243
    %v5384 = vadd.f32 %v5216, %v5239
    %v5385 = vadd.f32 %v5217, %v5243
    %v5386 = vadd.f32 %v5218, %v5239
    %v5387 = vadd.f32 %v5219, %v5243
    %v5388 = vadd.f32 %v5220, %v5239
    %v5389 = vadd.f32 %v5221, %v5243
    %v5390 = vadd.f32 %v5222, %v5239
    %v5391 = vadd.f32 %v5223, %v5243
    %v5392 = vadd.f32 %v5224, %v5239
    %v5393 = vadd.f32 %v5225, %v5243
    %v5394 = vadd.f32 %v5226, %v5239
    %v5395 = vadd.f32 %v5227, %v5243
    %v5396 = vadd.f32 %v5228, %v5239
    %v5397 = vadd.f32 %v5229, %v5243
    %v5398 = vadd.f32 %v5230, %v5239
    %v5399 = vadd.f32 %v5231, %v5243
    %v5400 = vadd.f32 %v5232, %v5239
    %v5401 = vadd.f32 %v5233, %v5243
    %v5402 = vmax.f32 %v5246, 0.0
    %v5403 = vmax.f32 %v5247, 0.0
    %v5404 = vmax.f32 %v5248, 0.0
    %v5405 = vmax.f32 %v5249, 0.0
    %v5406 = vmax.f32 %v5250, 0.0
    %v5407 = vmax.f32 %v5251, 0.0
    %v5408 = vmax.f32 %v5252, 0.0
    %v5409 = vmax.f32 %v5253, 0.0
    %v5410 = vmax.f32 %v5254, 0.0
    %v5411 = vmax.f32 %v5255, 0.0
    %v5412 = vmax.f32 %v5256, 0.0
    %v5413 = vmax.f32 %v5257, 0.0
    %v5414 = vmax.f32 %v5258, 0.0
    %v5415 = vmax.f32 %v5259, 0.0
    %v5416 = vmax.f32 %v5260, 0.0
    %v5417 = vmax.f32 %v5261, 0.0
    %v5418 = vmax.f32 %v5262, 0.0
    %v5419 = vmax.f32 %v5263, 0.0
    %v5420 = vmax.f32 %v5264, 0.0
    %v5421 = vmax.f32 %v5265, 0.0
    %v5422 = vmax.f32 %v5266, 0.0
    %v5423 = vmax.f32 %v5267, 0.0
    %v5424 = vmax.f32 %v5268, 0.0
    %v5425 = vmax.f32 %v5269, 0.0
    %v5426 = vmax.f32 %v5270, 0.0
    %v5427 = vmax.f32 %v5271, 0.0
    %v5428 = vmax.f32 %v5272, 0.0
    %v5429 = vmax.f32 %v5273, 0.0
    %v5430 = vmax.f32 %v5274, 0.0
    %v5431 = vmax.f32 %v5275, 0.0
    %v5432 = vmax.f32 %v5276, 0.0
    %v5433 = vmax.f32 %v5277, 0.0
    %v5434 = vmax.f32 %v5278, 0.0
    %v5435 = vmax.f32 %v5279, 0.0
    %v5436 = vmax.f32 %v5280, 0.0
    %v5437 = vmax.f32 %v5281, 0.0
    %v5438 = vmax.f32 %v5282, 0.0
    %v5439 = vmax.f32 %v5283, 0.0
    %v5440 = vmax.f32 %v5284, 0.0
    %v5441 = vmax.f32 %v5285, 0.0
    %v5442 = vmax.f32 %v5286, 0.0
    %v5443 = vmax.f32 %v5287, 0.0
    %v5444 = vmax.f32 %v5288, 0.0
    %v5445 = vmax.f32 %v5289, 0.0
    %v5446 = vmax.f32 %v5290, 0.0
    %v5447 = vmax.f32 %v5291, 0.0
    %v5448 = vmax.f32 %v5292, 0.0
    %v5449 = vmax.f32 %v5293, 0.0
    %v5450 = vmax.f32 %v5294, 0.0
    %v5451 = vmax.f32 %v5295, 0.0
    %v5452 = vmax.f32 %v5296, 0.0
    %v5453 = vmax.f32 %v5297, 0.0
    %v5454 = vmax.f32 %v5298, 0.0
    %v5455 = vmax.f32 %v5299, 0.0
    %v5456 = vmax.f32 %v5300, 0.0
    %v5457 = vmax.f32 %v5301, 0.0
    %v5458 = vmax.f32 %v5302, 0.0
    %v5459 = vmax.f32 %v5303, 0.0
    %v5460 = vmax.f32 %v5304, 0.0
    %v5461 = vmax.f32 %v5305, 0.0
    %v5462 = vmax.f32 %v5306, 0.0
    %v5463 = vmax.f32 %v5307, 0.0
    %v5464 = vmax.f32 %v5308, 0.0
    %v5465 = vmax.f32 %v5309, 0.0
    %v5466 = vmax.f32 %v5310, 0.0
    %v5467 = vmax.f32 %v5311, 0.0
    %v5468 = vmax.f32 %v5312, 0.0
    %v5469 = vmax.f32 %v5313, 0.0
    %v5470 = vmax.f32 %v5314, 0.0
    %v5471 = vmax.f32 %v5315, 0.0
    %v5472 = vmax.f32 %v5316, 0.0
    %v5473 = vmax.f32 %v5317, 0.0
    %v5474 = vmax.f32 %v5318, 0.0
    %v5475 = vmax.f32 %v5319, 0.0
    %v5476 = vmax.f32 %v5320, 0.0
    %v5477 = vmax.f32 %v5321, 0.0
    %v5478 = vmax.f32 %v5322, 0.0
    %v5479 = vmax.f32 %v5323, 0.0
    %v5480 = vmax.f32 %v5324, 0.0
    %v5481 = vmax.f32 %v5325, 0.0
    %v5482 = vmax.f32 %v5326, 0.0
    %v5483 = vmax.f32 %v5327, 0.0
    %v5484 = vmax.f32 %v5328, 0.0
    %v5485 = vmax.f32 %v5329, 0.0
    %v5486 = vmax.f32 %v5330, 0.0
    %v5487 = vmax.f32 %v5331, 0.0
    %v5488 = vmax.f32 %v5332, 0.0
    %v5489 = vmax.f32 %v5333, 0.0
    %v5490 = vmax.f32 %v5334, 0.0
    %v5491 = vmax.f32 %v5335, 0.0
    %v5492 = vmax.f32 %v5336, 0.0
    %v5493 = vmax.f32 %v5337, 0.0
    %v5494 = vmax.f32 %v5338, 0.0
    %v5495 = vmax.f32 %v5339, 0.0
    %v5496 = vmax.f32 %v5340, 0.0
    %v5497 = vmax.f32 %v5341, 0.0
    %v5498 = vmax.f32 %v5342, 0.0
    %v5499 = vmax.f32 %v5343, 0.0
    %v5500 = vmax.f32 %v5344, 0.0
    %v5501 = vmax.f32 %v5345, 0.0
    %v5502 = vmax.f32 %v5346, 0.0
    %v5503 = vmax.f32 %v5347, 0.0
    %v5504 = vmax.f32 %v5348, 0.0
    %v5505 = vmax.f32 %v5349, 0.0
    %v5506 = vmax.f32 %v5350, 0.0
    %v5507 = vmax.f32 %v5351, 0.0
    %v5508 = vmax.f32 %v5352, 0.0
    %v5509 = vmax.f32 %v5353, 0.0
    %v5510 = vmax.f32 %v5354, 0.0
    %v5511 = vmax.f32 %v5355, 0.0
    %v5512 = vmax.f32 %v5356, 0.0
    %v5513 = vmax.f32 %v5357, 0.0
    %v5514 = vmax.f32 %v5358, 0.0
    %v5515 = vmax.f32 %v5359, 0.0
    %v5516 = vmax.f32 %v5360, 0.0
    %v5517 = vmax.f32 %v5361, 0.0
    %v5518 = vmax.f32 %v5362, 0.0
    %v5519 = vmax.f32 %v5363, 0.0
    %v5520 = vmax.f32 %v5364, 0.0
    %v5521 = vmax.f32 %v5365, 0.0
    %v5522 = vmax.f32 %v5366, 0.0
    %v5523 = vmax.f32 %v5367, 0.0
    %v5524 = vmax.f32 %v5368, 0.0
    %v5525 = vmax.f32 %v5369, 0.0
    %v5526 = vmax.f32 %v5370, 0.0
    %v5527 = vmax.f32 %v5371, 0.0
    %v5528 = vmax.f32 %v5372, 0.0
    %v5529 = vmax.f32 %v5373, 0.0
    %v5530 = vmax.f32 %v5374, 0.0
    %v5531 = vmax.f32 %v5375, 0.0
    %v5532 = vmax.f32 %v5376, 0.0
    %v5533 = vmax.f32 %v5377, 0.0
    %v5534 = vmax.f32 %v5378, 0.0
    %v5535 = vmax.f32 %v5379, 0.0
    %v5536 = vmax.f32 %v5380, 0.0
    %v5537 = vmax.f32 %v5381, 0.0
    %v5538 = vmax.f32 %v5382, 0.0
    %v5539 = vmax.f32 %v5383, 0.0
    %v5540 = vmax.f32 %v5384, 0.0
    %v5541 = vmax.f32 %v5385, 0.0
    %v5542 = vmax.f32 %v5386, 0.0
    %v5543 = vmax.f32 %v5387, 0.0
    %v5544 = vmax.f32 %v5388, 0.0
    %v5545 = vmax.f32 %v5389, 0.0
    %v5546 = vmax.f32 %v5390, 0.0
    %v5547 = vmax.f32 %v5391, 0.0
    %v5548 = vmax.f32 %v5392, 0.0
    %v5549 = vmax.f32 %v5393, 0.0
    %v5550 = vmax.f32 %v5394, 0.0
    %v5551 = vmax.f32 %v5395, 0.0
    %v5552 = vmax.f32 %v5396, 0.0
    %v5553 = vmax.f32 %v5397, 0.0
    %v5554 = vmax.f32 %v5398, 0.0
    %v5555 = vmax.f32 %v5399, 0.0
    %v5556 = vmax.f32 %v5400, 0.0
    %v5557 = vmax.f32 %v5401, 0.0
    %v5558 = vpack.c.bf16 %v5404, %v5402
    %v5559 = vpack.c.bf16 %v5405, %v5403
    %v5560 = vpack.c.bf16 %v5408, %v5406
    %v5561 = vpack.c.bf16 %v5409, %v5407
    %v5562 = vpack.c.bf16 %v5412, %v5410
    %v5563 = vpack.c.bf16 %v5413, %v5411
    %v5564 = vpack.c.bf16 %v5416, %v5414
    %v5565 = vpack.c.bf16 %v5417, %v5415
    %v5566 = vpack.c.bf16 %v5420, %v5418
    %v5567 = vpack.c.bf16 %v5421, %v5419
    %v5568 = vpack.c.bf16 %v5424, %v5422
    %v5569 = vpack.c.bf16 %v5425, %v5423
    %v5570 = vpack.c.bf16 %v5428, %v5426
    %v5571 = vpack.c.bf16 %v5429, %v5427
    %v5572 = vpack.c.bf16 %v5432, %v5430
    %v5573 = vpack.c.bf16 %v5433, %v5431
    %v5574 = vpack.c.bf16 %v5436, %v5434
    %v5575 = vpack.c.bf16 %v5437, %v5435
    %v5576 = vpack.c.bf16 %v5440, %v5438
    %v5577 = vpack.c.bf16 %v5441, %v5439
    %v5578 = vpack.c.bf16 %v5444, %v5442
    %v5579 = vpack.c.bf16 %v5445, %v5443
    %v5580 = vpack.c.bf16 %v5448, %v5446
    %v5581 = vpack.c.bf16 %v5449, %v5447
    %v5582 = vpack.c.bf16 %v5452, %v5450
    %v5583 = vpack.c.bf16 %v5453, %v5451
    %v5584 = vpack.c.bf16 %v5456, %v5454
    %v5585 = vpack.c.bf16 %v5457, %v5455
    %v5586 = vpack.c.bf16 %v5460, %v5458
    %v5587 = vpack.c.bf16 %v5461, %v5459
    %v5588 = vpack.c.bf16 %v5464, %v5462
    %v5589 = vpack.c.bf16 %v5465, %v5463
    %v5590 = vpack.c.bf16 %v5468, %v5466
    %v5591 = vpack.c.bf16 %v5469, %v5467
    %v5592 = vpack.c.bf16 %v5472, %v5470
    %v5593 = vpack.c.bf16 %v5473, %v5471
    %v5594 = vpack.c.bf16 %v5476, %v5474
    %v5595 = vpack.c.bf16 %v5477, %v5475
    %v5596 = vpack.c.bf16 %v5480, %v5478
    %v5597 = vpack.c.bf16 %v5481, %v5479
    %v5598 = vpack.c.bf16 %v5484, %v5482
    %v5599 = vpack.c.bf16 %v5485, %v5483
    %v5600 = vpack.c.bf16 %v5488, %v5486
    %v5601 = vpack.c.bf16 %v5489, %v5487
    %v5602 = vpack.c.bf16 %v5492, %v5490
    %v5603 = vpack.c.bf16 %v5493, %v5491
    %v5604 = vpack.c.bf16 %v5496, %v5494
    %v5605 = vpack.c.bf16 %v5497, %v5495
    %v5606 = vpack.c.bf16 %v5500, %v5498
    %v5607 = vpack.c.bf16 %v5501, %v5499
    %v5608 = vpack.c.bf16 %v5504, %v5502
    %v5609 = vpack.c.bf16 %v5505, %v5503
    %v5610 = vpack.c.bf16 %v5508, %v5506
    %v5611 = vpack.c.bf16 %v5509, %v5507
    %v5612 = vpack.c.bf16 %v5512, %v5510
    %v5613 = vpack.c.bf16 %v5513, %v5511
    %v5614 = vpack.c.bf16 %v5516, %v5514
    %v5615 = vpack.c.bf16 %v5517, %v5515
    %v5616 = vpack.c.bf16 %v5520, %v5518
    %v5617 = vpack.c.bf16 %v5521, %v5519
    %v5618 = vpack.c.bf16 %v5524, %v5522
    %v5619 = vpack.c.bf16 %v5525, %v5523
    %v5620 = vpack.c.bf16 %v5528, %v5526
    %v5621 = vpack.c.bf16 %v5529, %v5527
    %v5622 = vpack.c.bf16 %v5532, %v5530
    %v5623 = vpack.c.bf16 %v5533, %v5531
    %v5624 = vpack.c.bf16 %v5536, %v5534
    %v5625 = vpack.c.bf16 %v5537, %v5535
    %v5626 = vpack.c.bf16 %v5540, %v5538
    %v5627 = vpack.c.bf16 %v5541, %v5539
    %v5628 = vpack.c.bf16 %v5544, %v5542
    %v5629 = vpack.c.bf16 %v5545, %v5543
    %v5630 = vpack.c.bf16 %v5548, %v5546
    %v5631 = vpack.c.bf16 %v5549, %v5547
    %v5632 = vpack.c.bf16 %v5552, %v5550
    %v5633 = vpack.c.bf16 %v5553, %v5551
    %v5634 = vpack.c.bf16 %v5556, %v5554
    %v5635 = vpack.c.bf16 %v5557, %v5555
    %s5636 = scalar_lea.vmem [#allocation4], 16
    %5637 = vst [vmem:[%s5636] sm:$0xff] %v5558
    %5638 = vst.msk [vmem:[%s5636 + $0x8] sm:$0xff] %vm176, %v5559
    %5639 = vst [vmem:[%s5636 + $0x10] sm:$0xff] %v5560
    %5640 = vst.msk [vmem:[%s5636 + $0x18] sm:$0xff] %vm176, %v5561
    %5641 = vst [vmem:[%s5636 + $0x20] sm:$0xff] %v5562
    %5642 = vst.msk [vmem:[%s5636 + $0x28] sm:$0xff] %vm176, %v5563
    %5643 = vst [vmem:[%s5636 + $0x30] sm:$0xff] %v5564
    %5644 = vst.msk [vmem:[%s5636 + $0x38] sm:$0xff] %vm176, %v5565
    %5645 = vst [vmem:[%s5636 + $0x40] sm:$0xff] %v5566
    %5646 = vst.msk [vmem:[%s5636 + $0x48] sm:$0xff] %vm176, %v5567
    %5647 = vst [vmem:[%s5636 + $0x50] sm:$0xff] %v5568
    %5648 = vst.msk [vmem:[%s5636 + $0x58] sm:$0xff] %vm176, %v5569
    %5649 = vst [vmem:[%s5636 + $0x60] sm:$0xff] %v5570
    %5650 = vst.msk [vmem:[%s5636 + $0x68] sm:$0xff] %vm176, %v5571
    %5651 = vst [vmem:[%s5636 + $0x70] sm:$0xff] %v5572
    %5652 = vst.msk [vmem:[%s5636 + $0x78] sm:$0xff] %vm176, %v5573
    %5653 = vst [vmem:[%s5636 + $0x80] sm:$0xff] %v5574
    %5654 = vst.msk [vmem:[%s5636 + $0x88] sm:$0xff] %vm176, %v5575
    %5655 = vst [vmem:[%s5636 + $0x90] sm:$0xff] %v5576
    %5656 = vst.msk [vmem:[%s5636 + $0x98] sm:$0xff] %vm176, %v5577
    %5657 = vst [vmem:[%s5636 + $0xa0] sm:$0xff] %v5578
    %5658 = vst.msk [vmem:[%s5636 + $0xa8] sm:$0xff] %vm176, %v5579
    %5659 = vst [vmem:[%s5636 + $0xb0] sm:$0xff] %v5580
    %5660 = vst.msk [vmem:[%s5636 + $0xb8] sm:$0xff] %vm176, %v5581
    %5661 = vst [vmem:[%s5636 + $0xc0] sm:$0xff] %v5582
    %5662 = vst.msk [vmem:[%s5636 + $0xc8] sm:$0xff] %vm176, %v5583
    %5663 = vst [vmem:[%s5636 + $0xd0] sm:$0xff] %v5584
    %5664 = vst.msk [vmem:[%s5636 + $0xd8] sm:$0xff] %vm176, %v5585
    %5665 = vst [vmem:[%s5636 + $0xe0] sm:$0xff] %v5586
    %5666 = vst.msk [vmem:[%s5636 + $0xe8] sm:$0xff] %vm176, %v5587
    %5667 = vst [vmem:[%s5636 + $0xf0] sm:$0xff] %v5588
    %5668 = vst.msk [vmem:[%s5636 + $0xf8] sm:$0xff] %vm176, %v5589
    %5669 = vst [vmem:[%s5636 + $0x100] sm:$0xff] %v5590
    %5670 = vst.msk [vmem:[%s5636 + $0x108] sm:$0xff] %vm176, %v5591
    %5671 = vst [vmem:[%s5636 + $0x110] sm:$0xff] %v5592
    %5672 = vst.msk [vmem:[%s5636 + $0x118] sm:$0xff] %vm176, %v5593
    %5673 = vst [vmem:[%s5636 + $0x120] sm:$0xff] %v5594
    %5674 = vst.msk [vmem:[%s5636 + $0x128] sm:$0xff] %vm176, %v5595
    %5675 = vst [vmem:[%s5636 + $0x130] sm:$0xff] %v5596
    %5676 = vst.msk [vmem:[%s5636 + $0x138] sm:$0xff] %vm176, %v5597
    %5677 = vst [vmem:[%s5636 + $0x140] sm:$0xff] %v5598
    %5678 = vst.msk [vmem:[%s5636 + $0x148] sm:$0xff] %vm176, %v5599
    %5679 = vst [vmem:[%s5636 + $0x150] sm:$0xff] %v5600
    %5680 = vst.msk [vmem:[%s5636 + $0x158] sm:$0xff] %vm176, %v5601
    %5681 = vst [vmem:[%s5636 + $0x160] sm:$0xff] %v5602
    %5682 = vst.msk [vmem:[%s5636 + $0x168] sm:$0xff] %vm176, %v5603
    %5683 = vst [vmem:[%s5636 + $0x170] sm:$0xff] %v5604
    %5684 = vst.msk [vmem:[%s5636 + $0x178] sm:$0xff] %vm176, %v5605
    %5685 = vst [vmem:[%s5636 + $0x180] sm:$0xff] %v5606
    %5686 = vst.msk [vmem:[%s5636 + $0x188] sm:$0xff] %vm176, %v5607
    %5687 = vst [vmem:[%s5636 + $0x190] sm:$0xff] %v5608
    %5688 = vst.msk [vmem:[%s5636 + $0x198] sm:$0xff] %vm176, %v5609
    %5689 = vst [vmem:[%s5636 + $0x1a0] sm:$0xff] %v5610
    %5690 = vst.msk [vmem:[%s5636 + $0x1a8] sm:$0xff] %vm176, %v5611
    %5691 = vst [vmem:[%s5636 + $0x1b0] sm:$0xff] %v5612
    %5692 = vst.msk [vmem:[%s5636 + $0x1b8] sm:$0xff] %vm176, %v5613
    %5693 = vst [vmem:[%s5636 + $0x1c0] sm:$0xff] %v5614
    %5694 = vst.msk [vmem:[%s5636 + $0x1c8] sm:$0xff] %vm176, %v5615
    %5695 = vst [vmem:[%s5636 + $0x1d0] sm:$0xff] %v5616
    %5696 = vst.msk [vmem:[%s5636 + $0x1d8] sm:$0xff] %vm176, %v5617
    %5697 = vst [vmem:[%s5636 + $0x1e0] sm:$0xff] %v5618
    %5698 = vst.msk [vmem:[%s5636 + $0x1e8] sm:$0xff] %vm176, %v5619
    %5699 = vst [vmem:[%s5636 + $0x1f0] sm:$0xff] %v5620
    %5700 = vst.msk [vmem:[%s5636 + $0x1f8] sm:$0xff] %vm176, %v5621
    %5701 = vst [vmem:[%s5636 + $0x200] sm:$0xff] %v5622
    %5702 = vst.msk [vmem:[%s5636 + $0x208] sm:$0xff] %vm176, %v5623
    %5703 = vst [vmem:[%s5636 + $0x210] sm:$0xff] %v5624
    %5704 = vst.msk [vmem:[%s5636 + $0x218] sm:$0xff] %vm176, %v5625
    %5705 = vst [vmem:[%s5636 + $0x220] sm:$0xff] %v5626
    %5706 = vst.msk [vmem:[%s5636 + $0x228] sm:$0xff] %vm176, %v5627
    %5707 = vst [vmem:[%s5636 + $0x230] sm:$0xff] %v5628
    %5708 = vst.msk [vmem:[%s5636 + $0x238] sm:$0xff] %vm176, %v5629
    %5709 = vst [vmem:[%s5636 + $0x240] sm:$0xff] %v5630
    %5710 = vst.msk [vmem:[%s5636 + $0x248] sm:$0xff] %vm176, %v5631
    %5711 = vst [vmem:[%s5636 + $0x250] sm:$0xff] %v5632
    %5712 = vst.msk [vmem:[%s5636 + $0x258] sm:$0xff] %vm176, %v5633
    %5713 = vst [vmem:[%s5636 + $0x260] sm:$0xff] %v5634
    %5714 = vst.msk [vmem:[%s5636 + $0x268] sm:$0xff] %vm176, %v5635
    %v5715 = vld [vmem:[#allocation4] sm:$0xff]
    %v5716 = vld [vmem:[#allocation4 + $0x8] sm:$0xff]
    %v5717 = vld [vmem:[#allocation4 + $0x20] sm:$0xff]
    %v5718 = vld [vmem:[#allocation4 + $0x28] sm:$0xff]
    %v5719 = vld [vmem:[#allocation4 + $0x40] sm:$0xff]
    %v5720 = vld [vmem:[#allocation4 + $0x48] sm:$0xff]
    %v5721 = vld [vmem:[#allocation4 + $0x60] sm:$0xff]
    %v5722 = vld [vmem:[#allocation4 + $0x68] sm:$0xff]
    %v5723 = vld [vmem:[#allocation4 + $0x80] sm:$0xff]
    %v5724 = vld [vmem:[#allocation4 + $0x88] sm:$0xff]
    %v5725 = vld [vmem:[#allocation4 + $0xa0] sm:$0xff]
    %v5726 = vld [vmem:[#allocation4 + $0xa8] sm:$0xff]
    %v5727 = vld [vmem:[#allocation4 + $0xc0] sm:$0xff]
    %v5728 = vld [vmem:[#allocation4 + $0xc8] sm:$0xff]
    %v5729 = vld [vmem:[#allocation4 + $0xe0] sm:$0xff]
    %v5730 = vld [vmem:[#allocation4 + $0xe8] sm:$0xff]
    %v5731 = vld [vmem:[#allocation4 + $0x100] sm:$0xff]
    %v5732 = vld [vmem:[#allocation4 + $0x108] sm:$0xff]
    %v5733 = vld [vmem:[#allocation4 + $0x120] sm:$0xff]
    %v5734 = vld [vmem:[#allocation4 + $0x128] sm:$0xff]
    %v5735 = vld [vmem:[#allocation4 + $0x140] sm:$0xff]
    %v5736 = vld [vmem:[#allocation4 + $0x148] sm:$0xff]
    %v5737 = vld [vmem:[#allocation4 + $0x160] sm:$0xff]
    %v5738 = vld [vmem:[#allocation4 + $0x168] sm:$0xff]
    %v5739 = vld [vmem:[#allocation4 + $0x180] sm:$0xff]
    %v5740 = vld [vmem:[#allocation4 + $0x188] sm:$0xff]
    %v5741 = vld [vmem:[#allocation4 + $0x1a0] sm:$0xff]
    %v5742 = vld [vmem:[#allocation4 + $0x1a8] sm:$0xff]
    %v5743 = vld [vmem:[#allocation4 + $0x1c0] sm:$0xff]
    %v5744 = vld [vmem:[#allocation4 + $0x1c8] sm:$0xff]
    %v5745 = vld [vmem:[#allocation4 + $0x1e0] sm:$0xff]
    %v5746 = vld [vmem:[#allocation4 + $0x1e8] sm:$0xff]
    %v5747 = vld [vmem:[#allocation4 + $0x200] sm:$0xff]
    %v5748 = vld [vmem:[#allocation4 + $0x208] sm:$0xff]
    %v5749 = vld [vmem:[#allocation4 + $0x220] sm:$0xff]
    %v5750 = vld [vmem:[#allocation4 + $0x228] sm:$0xff]
    %v5751 = vld [vmem:[#allocation4 + $0x240] sm:$0xff]
    %v5752 = vld [vmem:[#allocation4 + $0x248] sm:$0xff]
    %v5753 = vld [vmem:[#allocation4 + $0x260] sm:$0xff]
    %v5754 = vld [vmem:[#allocation4 + $0x268] sm:$0xff]
    %v5755 = vld [vmem:[%s5] sm:$0xff]
    %v5756 = vld [vmem:[%s5 + $0x8] sm:$0xff]
    %v5757 = vld [vmem:[%s5 + $0x10] sm:$0xff]
    %v5758 = vld [vmem:[%s5 + $0x18] sm:$0xff]
    %v5759 = vld [vmem:[%s5 + $0x20] sm:$0xff]
    %v5760 = vld [vmem:[%s5 + $0x28] sm:$0xff]
    %v5761 = vld [vmem:[%s5 + $0x30] sm:$0xff]
    %v5762 = vld [vmem:[%s5 + $0x38] sm:$0xff]
    %v5763 = vld [vmem:[%s5 + $0x40] sm:$0xff]
    %v5764 = vld [vmem:[%s5 + $0x48] sm:$0xff]
    %v5765 = vld [vmem:[%s5 + $0x50] sm:$0xff]
    %v5766 = vld [vmem:[%s5 + $0x58] sm:$0xff]
    %v5767 = vld [vmem:[%s5 + $0x60] sm:$0xff]
    %v5768 = vld [vmem:[%s5 + $0x68] sm:$0xff]
    %v5769 = vld [vmem:[%s5 + $0x70] sm:$0xff]
    %v5770 = vld [vmem:[%s5 + $0x78] sm:$0xff]
    %v5771 = vld [vmem:[%s5 + $0x80] sm:$0xff]
    %v5772 = vld [vmem:[%s5 + $0x88] sm:$0xff]
    %v5773 = vld [vmem:[%s5 + $0x90] sm:$0xff]
    %v5774 = vld [vmem:[%s5 + $0x98] sm:$0x33]
    %v5775 = vld [vmem:[%s5636] sm:$0xff]
    %v5776 = vld [vmem:[%s5636 + $0x8] sm:$0xff]
    %v5777 = vld [vmem:[%s5636 + $0x20] sm:$0xff]
    %v5778 = vld [vmem:[%s5636 + $0x28] sm:$0xff]
    %v5779 = vld [vmem:[%s5636 + $0x40] sm:$0xff]
    %v5780 = vld [vmem:[%s5636 + $0x48] sm:$0xff]
    %v5781 = vld [vmem:[%s5636 + $0x60] sm:$0xff]
    %v5782 = vld [vmem:[%s5636 + $0x68] sm:$0xff]
    %v5783 = vld [vmem:[%s5636 + $0x80] sm:$0xff]
    %v5784 = vld [vmem:[%s5636 + $0x88] sm:$0xff]
    %v5785 = vld [vmem:[%s5636 + $0xa0] sm:$0xff]
    %v5786 = vld [vmem:[%s5636 + $0xa8] sm:$0xff]
    %v5787 = vld [vmem:[%s5636 + $0xc0] sm:$0xff]
    %v5788 = vld [vmem:[%s5636 + $0xc8] sm:$0xff]
    %v5789 = vld [vmem:[%s5636 + $0xe0] sm:$0xff]
    %v5790 = vld [vmem:[%s5636 + $0xe8] sm:$0xff]
    %v5791 = vld [vmem:[%s5636 + $0x100] sm:$0xff]
    %v5792 = vld [vmem:[%s5636 + $0x108] sm:$0xff]
    %v5793 = vld [vmem:[%s5636 + $0x120] sm:$0xff]
    %v5794 = vld [vmem:[%s5636 + $0x128] sm:$0xff]
    %v5795 = vld [vmem:[%s5636 + $0x140] sm:$0xff]
    %v5796 = vld [vmem:[%s5636 + $0x148] sm:$0xff]
    %v5797 = vld [vmem:[%s5636 + $0x160] sm:$0xff]
    %v5798 = vld [vmem:[%s5636 + $0x168] sm:$0xff]
    %v5799 = vld [vmem:[%s5636 + $0x180] sm:$0xff]
    %v5800 = vld [vmem:[%s5636 + $0x188] sm:$0xff]
    %v5801 = vld [vmem:[%s5636 + $0x1a0] sm:$0xff]
    %v5802 = vld [vmem:[%s5636 + $0x1a8] sm:$0xff]
    %v5803 = vld [vmem:[%s5636 + $0x1c0] sm:$0xff]
    %v5804 = vld [vmem:[%s5636 + $0x1c8] sm:$0xff]
    %v5805 = vld [vmem:[%s5636 + $0x1e0] sm:$0xff]
    %v5806 = vld [vmem:[%s5636 + $0x1e8] sm:$0xff]
    %v5807 = vld [vmem:[%s5636 + $0x200] sm:$0xff]
    %v5808 = vld [vmem:[%s5636 + $0x208] sm:$0xff]
    %v5809 = vld [vmem:[%s5636 + $0x220] sm:$0xff]
    %v5810 = vld [vmem:[%s5636 + $0x228] sm:$0xff]
    %v5811 = vld [vmem:[%s5636 + $0x240] sm:$0xff]
    %v5812 = vld [vmem:[%s5636 + $0x248] sm:$0xff]
    %v5813 = vld [vmem:[%s5636 + $0x260] sm:$0xff]
    %v5814 = vld [vmem:[%s5636 + $0x268] sm:$0xff]
    %s5815 = scalar_lea.vmem %s5, 160
    %v5816 = vld [vmem:[%s5815] sm:$0xff]
    %v5817 = vld [vmem:[%s5815 + $0x8] sm:$0xff]
    %v5818 = vld [vmem:[%s5815 + $0x10] sm:$0xff]
    %v5819 = vld [vmem:[%s5815 + $0x18] sm:$0xff]
    %v5820 = vld [vmem:[%s5815 + $0x20] sm:$0xff]
    %v5821 = vld [vmem:[%s5815 + $0x28] sm:$0xff]
    %v5822 = vld [vmem:[%s5815 + $0x30] sm:$0xff]
    %v5823 = vld [vmem:[%s5815 + $0x38] sm:$0xff]
    %v5824 = vld [vmem:[%s5815 + $0x40] sm:$0xff]
    %v5825 = vld [vmem:[%s5815 + $0x48] sm:$0xff]
    %v5826 = vld [vmem:[%s5815 + $0x50] sm:$0xff]
    %v5827 = vld [vmem:[%s5815 + $0x58] sm:$0xff]
    %v5828 = vld [vmem:[%s5815 + $0x60] sm:$0xff]
    %v5829 = vld [vmem:[%s5815 + $0x68] sm:$0xff]
    %v5830 = vld [vmem:[%s5815 + $0x70] sm:$0xff]
    %v5831 = vld [vmem:[%s5815 + $0x78] sm:$0xff]
    %v5832 = vld [vmem:[%s5815 + $0x80] sm:$0xff]
    %v5833 = vld [vmem:[%s5815 + $0x88] sm:$0xff]
    %v5834 = vld [vmem:[%s5815 + $0x90] sm:$0xff]
    %v5835 = vld [vmem:[%s5815 + $0x98] sm:$0x33]
    %v5856 = vunpack.c.l.b16 %v5816
    %v5857 = vunpack.c.h.b16 %v5816
    %v5858 = vunpack.c.l.b16 %v5817
    %v5859 = vunpack.c.h.b16 %v5817
    %v5860 = vunpack.c.l.b16 %v5818
    %v5861 = vunpack.c.h.b16 %v5818
    %v5862 = vunpack.c.l.b16 %v5819
    %v5863 = vunpack.c.h.b16 %v5819
    %v5864 = vunpack.c.l.b16 %v5820
    %v5865 = vunpack.c.h.b16 %v5820
    %v5866 = vunpack.c.l.b16 %v5821
    %v5867 = vunpack.c.h.b16 %v5821
    %v5868 = vunpack.c.l.b16 %v5822
    %v5869 = vunpack.c.h.b16 %v5822
    %v5870 = vunpack.c.l.b16 %v5823
    %v5871 = vunpack.c.h.b16 %v5823
    %v5872 = vunpack.c.l.b16 %v5824
    %v5873 = vunpack.c.h.b16 %v5824
    %v5874 = vunpack.c.l.b16 %v5825
    %v5875 = vunpack.c.h.b16 %v5825
    %v5876 = vunpack.c.l.b16 %v5826
    %v5877 = vunpack.c.h.b16 %v5826
    %v5878 = vunpack.c.l.b16 %v5827
    %v5879 = vunpack.c.h.b16 %v5827
    %v5880 = vunpack.c.l.b16 %v5828
    %v5881 = vunpack.c.h.b16 %v5828
    %v5882 = vunpack.c.l.b16 %v5829
    %v5883 = vunpack.c.h.b16 %v5829
    %v5884 = vunpack.c.l.b16 %v5830
    %v5885 = vunpack.c.h.b16 %v5830
    %v5886 = vunpack.c.l.b16 %v5831
    %v5887 = vunpack.c.h.b16 %v5831
    %v5888 = vunpack.c.l.b16 %v5832
    %v5889 = vunpack.c.h.b16 %v5832
    %v5890 = vunpack.c.l.b16 %v5833
    %v5891 = vunpack.c.h.b16 %v5833
    %v5892 = vunpack.c.l.b16 %v5834
    %v5893 = vunpack.c.h.b16 %v5834
    %v5894 = vunpack.c.l.b16 %v5835
    %v5895 = vunpack.c.h.b16 %v5835
    %v5896 = vpack.c.b16 %v5858, %v5856
    %v5897 = vpack.c.b16 %v5859, %v5857
    %v5898 = vpack.c.b16 %v5862, %v5860
    %v5899 = vpack.c.b16 %v5863, %v5861
    %v5900 = vpack.c.b16 %v5866, %v5864
    %v5901 = vpack.c.b16 %v5867, %v5865
    %v5902 = vpack.c.b16 %v5870, %v5868
    %v5903 = vpack.c.b16 %v5871, %v5869
    %v5904 = vpack.c.b16 %v5874, %v5872
    %v5905 = vpack.c.b16 %v5875, %v5873
    %v5906 = vpack.c.b16 %v5878, %v5876
    %v5907 = vpack.c.b16 %v5879, %v5877
    %v5908 = vpack.c.b16 %v5882, %v5880
    %v5909 = vpack.c.b16 %v5883, %v5881
    %v5910 = vpack.c.b16 %v5886, %v5884
    %v5911 = vpack.c.b16 %v5887, %v5885
    %v5912 = vpack.c.b16 %v5890, %v5888
    %v5913 = vpack.c.b16 %v5891, %v5889
    %v5914 = vpack.c.b16 %v5894, %v5892
    %v5915 = vpack.c.b16 %v5895, %v5893
    %v5935 = vsel %vm176, %v5776, 0
    %v5938 = vsel %vm176, %v5778, 0
    %v5941 = vsel %vm176, %v5780, 0
    %v5944 = vsel %vm176, %v5782, 0
    %v5947 = vsel %vm176, %v5784, 0
    %v5950 = vsel %vm176, %v5786, 0
    %v5953 = vsel %vm176, %v5788, 0
    %v5956 = vsel %vm176, %v5790, 0
    %v5959 = vsel %vm176, %v5792, 0
    %v5962 = vsel %vm176, %v5794, 0
    %v5965 = vsel %vm176, %v5796, 0
    %v5968 = vsel %vm176, %v5798, 0
    %v5971 = vsel %vm176, %v5800, 0
    %v5974 = vsel %vm176, %v5802, 0
    %v5977 = vsel %vm176, %v5804, 0
    %v5980 = vsel %vm176, %v5806, 0
    %v5983 = vsel %vm176, %v5808, 0
    %v5986 = vsel %vm176, %v5810, 0
    %v5989 = vsel %vm176, %v5812, 0
    %v5992 = vsel %vm176, %v5814, 0
    %v5995 = vsel %vm3260, %v5914, 0
    %v5998 = vsel %vm3260, %v5915, 0
    %6000 = vmatprep.subr.bf16.mxu0 %v5897
    %6001 = vmatpush1.bf16.msra.mxu0 %v5896
    %6002 = vmatprep.subr.bf16.mxu0 %v5899
    %6003 = vmatpush1.bf16.msra.mxu0 %v5898
    %6004 = vmatprep.subr.bf16.mxu0 %v5901
    %6005 = vmatpush1.bf16.msra.mxu0 %v5900
    %6006 = vmatprep.subr.bf16.mxu0 %v5903
    %6007 = vmatpush1.bf16.msra.mxu0 %v5902
    %6008 = vmatprep.subr.bf16.mxu0 %v5905
    %6009 = vmatpush1.bf16.msra.mxu0 %v5904
    %6010 = vmatprep.subr.bf16.mxu0 %v5907
    %6011 = vmatpush1.bf16.msra.mxu0 %v5906
    %6012 = vmatprep.subr.bf16.mxu0 %v5909
    %6013 = vmatpush1.bf16.msra.mxu0 %v5908
    %6014 = vmatprep.subr.bf16.mxu0 %v5911
    %6015 = vmatpush1.bf16.msra.mxu0 %v5910
    %6016 = vmatprep.subr.bf16.mxu0 %v5913
    %6017 = vmatpush1.bf16.msra.mxu0 %v5912
    %6018 = vmatprep.subr.bf16.mxu0 %v5998
    %6019 = vmatpush1.bf16.msra.mxu0 %v5995
    %6020 = vmatprep.subr.bf16.mxu0 0
    %6021 = vmatpush1.bf16.msra.mxu0 0
    %6022 = vmatprep.subr.bf16.mxu0 0
    %6023 = vmatpush1.bf16.msra.mxu0 0
    %6024 = vmatprep.subr.bf16.mxu0 0
    %6025 = vmatpush1.bf16.msra.mxu0 0
    %6026 = vmatprep.subr.bf16.mxu0 0
    %6027 = vmatpush1.bf16.msra.mxu0 0
    %6028 = vmatprep.subr.bf16.mxu0 0
    %6029 = vmatpush1.bf16.msra.mxu0 0
    %6030 = vmatprep.subr.bf16.mxu0 0
    %6031 = vmatpush1.bf16.msra.mxu0 0
    %6032 = vmatprep.mubr.bf16.mxu0 %v5935
    %6033 = vmatmul.mubr.bf16.gmra.mrb[0].mxu0 %v5775
    %v6034 = vpop.f32.mrb[0].mxu0
    %v6035 = vadd.f32 0.0, %v6034
    %v6036 = vpop.f32.mrb[0].mxu0
    %v6037 = vadd.f32 0.0, %v6036
    %v6038 = vpop.f32.mrb[0].mxu0
    %v6039 = vadd.f32 0.0, %v6038
    %v6040 = vpop.f32.mrb[0].mxu0
    %v6041 = vadd.f32 0.0, %v6040
    %6042 = vmatprep.mubr.bf16.mxu0 %v5938
    %6043 = vmatmul.mubr.bf16.gmra.mrb[0].mxu0 %v5777
    %v6044 = vpop.f32.mrb[0].mxu0
    %v6045 = vadd.f32 0.0, %v6044
    %v6046 = vpop.f32.mrb[0].mxu0
    %v6047 = vadd.f32 0.0, %v6046
    %v6048 = vpop.f32.mrb[0].mxu0
    %v6049 = vadd.f32 0.0, %v6048
    %v6050 = vpop.f32.mrb[0].mxu0
    %v6051 = vadd.f32 0.0, %v6050
    %6052 = vmatprep.mubr.bf16.mxu0 %v5941
    %6053 = vmatmul.mubr.bf16.gmra.mrb[0].mxu0 %v5779
    %v6054 = vpop.f32.mrb[0].mxu0
    %v6055 = vadd.f32 0.0, %v6054
    %v6056 = vpop.f32.mrb[0].mxu0
    %v6057 = vadd.f32 0.0, %v6056
    %v6058 = vpop.f32.mrb[0].mxu0
    %v6059 = vadd.f32 0.0, %v6058
    %v6060 = vpop.f32.mrb[0].mxu0
    %v6061 = vadd.f32 0.0, %v6060
    %6062 = vmatprep.mubr.bf16.mxu0 %v5944
    %6063 = vmatmul.mubr.bf16.gmra.mrb[0].mxu0 %v5781
    %v6064 = vpop.f32.mrb[0].mxu0
    %v6065 = vadd.f32 0.0, %v6064
    %v6066 = vpop.f32.mrb[0].mxu0
    %v6067 = vadd.f32 0.0, %v6066
    %v6068 = vpop.f32.mrb[0].mxu0
    %v6069 = vadd.f32 0.0, %v6068
    %v6070 = vpop.f32.mrb[0].mxu0
    %v6071 = vadd.f32 0.0, %v6070
    %6072 = vmatprep.mubr.bf16.mxu0 %v5947
    %6073 = vmatmul.mubr.bf16.gmra.mrb[0].mxu0 %v5783
    %v6074 = vpop.f32.mrb[0].mxu0
    %v6075 = vadd.f32 0.0, %v6074
    %v6076 = vpop.f32.mrb[0].mxu0
    %v6077 = vadd.f32 0.0, %v6076
    %v6078 = vpop.f32.mrb[0].mxu0
    %v6079 = vadd.f32 0.0, %v6078
    %v6080 = vpop.f32.mrb[0].mxu0
    %v6081 = vadd.f32 0.0, %v6080
    %6082 = vmatprep.mubr.bf16.mxu0 %v5950
    %6083 = vmatmul.mubr.bf16.gmra.mrb[0].mxu0 %v5785
    %v6084 = vpop.f32.mrb[0].mxu0
    %v6085 = vadd.f32 0.0, %v6084
    %v6086 = vpop.f32.mrb[0].mxu0
    %v6087 = vadd.f32 0.0, %v6086
    %v6088 = vpop.f32.mrb[0].mxu0
    %v6089 = vadd.f32 0.0, %v6088
    %v6090 = vpop.f32.mrb[0].mxu0
    %v6091 = vadd.f32 0.0, %v6090
    %6092 = vmatprep.mubr.bf16.mxu0 %v5953
    %6093 = vmatmul.mubr.bf16.gmra.mrb[0].mxu0 %v5787
    %v6094 = vpop.f32.mrb[0].mxu0
    %v6095 = vadd.f32 0.0, %v6094
    %v6096 = vpop.f32.mrb[0].mxu0
    %v6097 = vadd.f32 0.0, %v6096
    %v6098 = vpop.f32.mrb[0].mxu0
    %v6099 = vadd.f32 0.0, %v6098
    %v6100 = vpop.f32.mrb[0].mxu0
    %v6101 = vadd.f32 0.0, %v6100
    %6102 = vmatprep.mubr.bf16.mxu0 %v5956
    %6103 = vmatmul.mubr.bf16.gmra.mrb[0].mxu0 %v5789
    %v6104 = vpop.f32.mrb[0].mxu0
    %v6105 = vadd.f32 0.0, %v6104
    %v6106 = vpop.f32.mrb[0].mxu0
    %v6107 = vadd.f32 0.0, %v6106
    %v6108 = vpop.f32.mrb[0].mxu0
    %v6109 = vadd.f32 0.0, %v6108
    %v6110 = vpop.f32.mrb[0].mxu0
    %v6111 = vadd.f32 0.0, %v6110
    %6112 = vmatprep.mubr.bf16.mxu0 %v5959
    %6113 = vmatmul.mubr.bf16.gmra.mrb[0].mxu0 %v5791
    %v6114 = vpop.f32.mrb[0].mxu0
    %v6115 = vadd.f32 0.0, %v6114
    %v6116 = vpop.f32.mrb[0].mxu0
    %v6117 = vadd.f32 0.0, %v6116
    %v6118 = vpop.f32.mrb[0].mxu0
    %v6119 = vadd.f32 0.0, %v6118
    %v6120 = vpop.f32.mrb[0].mxu0
    %v6121 = vadd.f32 0.0, %v6120
    %6122 = vmatprep.mubr.bf16.mxu0 %v5962
    %6123 = vmatmul.mubr.bf16.gmra.mrb[0].mxu0 %v5793
    %v6124 = vpop.f32.mrb[0].mxu0
    %v6125 = vadd.f32 0.0, %v6124
    %v6126 = vpop.f32.mrb[0].mxu0
    %v6127 = vadd.f32 0.0, %v6126
    %v6128 = vpop.f32.mrb[0].mxu0
    %v6129 = vadd.f32 0.0, %v6128
    %v6130 = vpop.f32.mrb[0].mxu0
    %v6131 = vadd.f32 0.0, %v6130
    %6132 = vmatprep.mubr.bf16.mxu0 %v5965
    %6133 = vmatmul.mubr.bf16.gmra.mrb[0].mxu0 %v5795
    %v6134 = vpop.f32.mrb[0].mxu0
    %v6135 = vadd.f32 0.0, %v6134
    %v6136 = vpop.f32.mrb[0].mxu0
    %v6137 = vadd.f32 0.0, %v6136
    %v6138 = vpop.f32.mrb[0].mxu0
    %v6139 = vadd.f32 0.0, %v6138
    %v6140 = vpop.f32.mrb[0].mxu0
    %v6141 = vadd.f32 0.0, %v6140
    %6142 = vmatprep.mubr.bf16.mxu0 %v5968
    %6143 = vmatmul.mubr.bf16.gmra.mrb[0].mxu0 %v5797
    %v6144 = vpop.f32.mrb[0].mxu0
    %v6145 = vadd.f32 0.0, %v6144
    %v6146 = vpop.f32.mrb[0].mxu0
    %v6147 = vadd.f32 0.0, %v6146
    %v6148 = vpop.f32.mrb[0].mxu0
    %v6149 = vadd.f32 0.0, %v6148
    %v6150 = vpop.f32.mrb[0].mxu0
    %v6151 = vadd.f32 0.0, %v6150
    %6152 = vmatprep.mubr.bf16.mxu0 %v5971
    %6153 = vmatmul.mubr.bf16.gmra.mrb[0].mxu0 %v5799
    %v6154 = vpop.f32.mrb[0].mxu0
    %v6155 = vadd.f32 0.0, %v6154
    %v6156 = vpop.f32.mrb[0].mxu0
    %v6157 = vadd.f32 0.0, %v6156
    %v6158 = vpop.f32.mrb[0].mxu0
    %v6159 = vadd.f32 0.0, %v6158
    %v6160 = vpop.f32.mrb[0].mxu0
    %v6161 = vadd.f32 0.0, %v6160
    %6162 = vmatprep.mubr.bf16.mxu0 %v5974
    %6163 = vmatmul.mubr.bf16.gmra.mrb[0].mxu0 %v5801
    %v6164 = vpop.f32.mrb[0].mxu0
    %v6165 = vadd.f32 0.0, %v6164
    %v6166 = vpop.f32.mrb[0].mxu0
    %v6167 = vadd.f32 0.0, %v6166
    %v6168 = vpop.f32.mrb[0].mxu0
    %v6169 = vadd.f32 0.0, %v6168
    %v6170 = vpop.f32.mrb[0].mxu0
    %v6171 = vadd.f32 0.0, %v6170
    %6172 = vmatprep.mubr.bf16.mxu0 %v5977
    %6173 = vmatmul.mubr.bf16.gmra.mrb[0].mxu0 %v5803
    %v6174 = vpop.f32.mrb[0].mxu0
    %v6175 = vadd.f32 0.0, %v6174
    %v6176 = vpop.f32.mrb[0].mxu0
    %v6177 = vadd.f32 0.0, %v6176
    %v6178 = vpop.f32.mrb[0].mxu0
    %v6179 = vadd.f32 0.0, %v6178
    %v6180 = vpop.f32.mrb[0].mxu0
    %v6181 = vadd.f32 0.0, %v6180
    %6182 = vmatprep.mubr.bf16.mxu0 %v5980
    %6183 = vmatmul.mubr.bf16.gmra.mrb[0].mxu0 %v5805
    %v6184 = vpop.f32.mrb[0].mxu0
    %v6185 = vadd.f32 0.0, %v6184
    %v6186 = vpop.f32.mrb[0].mxu0
    %v6187 = vadd.f32 0.0, %v6186
    %v6188 = vpop.f32.mrb[0].mxu0
    %v6189 = vadd.f32 0.0, %v6188
    %v6190 = vpop.f32.mrb[0].mxu0
    %v6191 = vadd.f32 0.0, %v6190
    %6192 = vmatprep.mubr.bf16.mxu0 %v5983
    %6193 = vmatmul.mubr.bf16.gmra.mrb[0].mxu0 %v5807
    %v6194 = vpop.f32.mrb[0].mxu0
    %v6195 = vadd.f32 0.0, %v6194
    %v6196 = vpop.f32.mrb[0].mxu0
    %v6197 = vadd.f32 0.0, %v6196
    %v6198 = vpop.f32.mrb[0].mxu0
    %v6199 = vadd.f32 0.0, %v6198
    %v6200 = vpop.f32.mrb[0].mxu0
    %v6201 = vadd.f32 0.0, %v6200
    %6202 = vmatprep.mubr.bf16.mxu0 %v5986
    %6203 = vmatmul.mubr.bf16.gmra.mrb[0].mxu0 %v5809
    %v6204 = vpop.f32.mrb[0].mxu0
    %v6205 = vadd.f32 0.0, %v6204
    %v6206 = vpop.f32.mrb[0].mxu0
    %v6207 = vadd.f32 0.0, %v6206
    %v6208 = vpop.f32.mrb[0].mxu0
    %v6209 = vadd.f32 0.0, %v6208
    %v6210 = vpop.f32.mrb[0].mxu0
    %v6211 = vadd.f32 0.0, %v6210
    %6212 = vmatprep.mubr.bf16.mxu0 %v5989
    %6213 = vmatmul.mubr.bf16.gmra.mrb[0].mxu0 %v5811
    %v6214 = vpop.f32.mrb[0].mxu0
    %v6215 = vadd.f32 0.0, %v6214
    %v6216 = vpop.f32.mrb[0].mxu0
    %v6217 = vadd.f32 0.0, %v6216
    %v6218 = vpop.f32.mrb[0].mxu0
    %v6219 = vadd.f32 0.0, %v6218
    %v6220 = vpop.f32.mrb[0].mxu0
    %v6221 = vadd.f32 0.0, %v6220
    %6222 = vmatprep.mubr.bf16.mxu0 %v5992
    %6223 = vmatmul.mubr.bf16.gmra.mrb[0].mxu0 %v5813
    %v6224 = vpop.f32.mrb[0].mxu0
    %v6225 = vadd.f32 0.0, %v6224
    %v6226 = vpop.f32.mrb[0].mxu0
    %v6227 = vadd.f32 0.0, %v6226
    %v6228 = vpop.f32.mrb[0].mxu0
    %v6229 = vadd.f32 0.0, %v6228
    %v6230 = vpop.f32.mrb[0].mxu0
    %v6231 = vadd.f32 0.0, %v6230
    %6232 = vdwg.mxu0
    %v6253 = vunpack.c.l.b16 %v5755
    %v6254 = vunpack.c.h.b16 %v5755
    %v6255 = vunpack.c.l.b16 %v5756
    %v6256 = vunpack.c.h.b16 %v5756
    %v6257 = vunpack.c.l.b16 %v5757
    %v6258 = vunpack.c.h.b16 %v5757
    %v6259 = vunpack.c.l.b16 %v5758
    %v6260 = vunpack.c.h.b16 %v5758
    %v6261 = vunpack.c.l.b16 %v5759
    %v6262 = vunpack.c.h.b16 %v5759
    %v6263 = vunpack.c.l.b16 %v5760
    %v6264 = vunpack.c.h.b16 %v5760
    %v6265 = vunpack.c.l.b16 %v5761
    %v6266 = vunpack.c.h.b16 %v5761
    %v6267 = vunpack.c.l.b16 %v5762
    %v6268 = vunpack.c.h.b16 %v5762
    %v6269 = vunpack.c.l.b16 %v5763
    %v6270 = vunpack.c.h.b16 %v5763
    %v6271 = vunpack.c.l.b16 %v5764
    %v6272 = vunpack.c.h.b16 %v5764
    %v6273 = vunpack.c.l.b16 %v5765
    %v6274 = vunpack.c.h.b16 %v5765
    %v6275 = vunpack.c.l.b16 %v5766
    %v6276 = vunpack.c.h.b16 %v5766
    %v6277 = vunpack.c.l.b16 %v5767
    %v6278 = vunpack.c.h.b16 %v5767
    %v6279 = vunpack.c.l.b16 %v5768
    %v6280 = vunpack.c.h.b16 %v5768
    %v6281 = vunpack.c.l.b16 %v5769
    %v6282 = vunpack.c.h.b16 %v5769
    %v6283 = vunpack.c.l.b16 %v5770
    %v6284 = vunpack.c.h.b16 %v5770
    %v6285 = vunpack.c.l.b16 %v5771
    %v6286 = vunpack.c.h.b16 %v5771
    %v6287 = vunpack.c.l.b16 %v5772
    %v6288 = vunpack.c.h.b16 %v5772
    %v6289 = vunpack.c.l.b16 %v5773
    %v6290 = vunpack.c.h.b16 %v5773
    %v6291 = vunpack.c.l.b16 %v5774
    %v6292 = vunpack.c.h.b16 %v5774
    %v6293 = vpack.c.b16 %v6255, %v6253
    %v6294 = vpack.c.b16 %v6256, %v6254
    %v6295 = vpack.c.b16 %v6259, %v6257
    %v6296 = vpack.c.b16 %v6260, %v6258
    %v6297 = vpack.c.b16 %v6263, %v6261
    %v6298 = vpack.c.b16 %v6264, %v6262
    %v6299 = vpack.c.b16 %v6267, %v6265
    %v6300 = vpack.c.b16 %v6268, %v6266
    %v6301 = vpack.c.b16 %v6271, %v6269
    %v6302 = vpack.c.b16 %v6272, %v6270
    %v6303 = vpack.c.b16 %v6275, %v6273
    %v6304 = vpack.c.b16 %v6276, %v6274
    %v6305 = vpack.c.b16 %v6279, %v6277
    %v6306 = vpack.c.b16 %v6280, %v6278
    %v6307 = vpack.c.b16 %v6283, %v6281
    %v6308 = vpack.c.b16 %v6284, %v6282
    %v6309 = vpack.c.b16 %v6287, %v6285
    %v6310 = vpack.c.b16 %v6288, %v6286
    %v6311 = vpack.c.b16 %v6291, %v6289
    %v6312 = vpack.c.b16 %v6292, %v6290
    %v6332 = vsel %vm176, %v5716, 0
    %v6335 = vsel %vm176, %v5718, 0
    %v6338 = vsel %vm176, %v5720, 0
    %v6341 = vsel %vm176, %v5722, 0
    %v6344 = vsel %vm176, %v5724, 0
    %v6347 = vsel %vm176, %v5726, 0
    %v6350 = vsel %vm176, %v5728, 0
    %v6353 = vsel %vm176, %v5730, 0
    %v6356 = vsel %vm176, %v5732, 0
    %v6359 = vsel %vm176, %v5734, 0
    %v6362 = vsel %vm176, %v5736, 0
    %v6365 = vsel %vm176, %v5738, 0
    %v6368 = vsel %vm176, %v5740, 0
    %v6371 = vsel %vm176, %v5742, 0
    %v6374 = vsel %vm176, %v5744, 0
    %v6377 = vsel %vm176, %v5746, 0
    %v6380 = vsel %vm176, %v5748, 0
    %v6383 = vsel %vm176, %v5750, 0
    %v6386 = vsel %vm176, %v5752, 0
    %v6389 = vsel %vm176, %v5754, 0
    %v6392 = vsel %vm3260, %v6311, 0
    %v6395 = vsel %vm3260, %v6312, 0
    %6397 = vmatprep.subr.bf16.mxu0 %v6294
    %6398 = vmatpush1.bf16.msra.mxu0 %v6293
    %6399 = vmatprep.subr.bf16.mxu0 %v6296
    %6400 = vmatpush1.bf16.msra.mxu0 %v6295
    %6401 = vmatprep.subr.bf16.mxu0 %v6298
    %6402 = vmatpush1.bf16.msra.mxu0 %v6297
    %6403 = vmatprep.subr.bf16.mxu0 %v6300
    %6404 = vmatpush1.bf16.msra.mxu0 %v6299
    %6405 = vmatprep.subr.bf16.mxu0 %v6302
    %6406 = vmatpush1.bf16.msra.mxu0 %v6301
    %6407 = vmatprep.subr.bf16.mxu0 %v6304
    %6408 = vmatpush1.bf16.msra.mxu0 %v6303
    %6409 = vmatprep.subr.bf16.mxu0 %v6306
    %6410 = vmatpush1.bf16.msra.mxu0 %v6305
    %6411 = vmatprep.subr.bf16.mxu0 %v6308
    %6412 = vmatpush1.bf16.msra.mxu0 %v6307
    %6413 = vmatprep.subr.bf16.mxu0 %v6310
    %6414 = vmatpush1.bf16.msra.mxu0 %v6309
    %6415 = vmatprep.subr.bf16.mxu0 %v6395
    %6416 = vmatpush1.bf16.msra.mxu0 %v6392
    %6417 = vmatprep.subr.bf16.mxu0 0
    %6418 = vmatpush1.bf16.msra.mxu0 0
    %6419 = vmatprep.subr.bf16.mxu0 0
    %6420 = vmatpush1.bf16.msra.mxu0 0
    %6421 = vmatprep.subr.bf16.mxu0 0
    %6422 = vmatpush1.bf16.msra.mxu0 0
    %6423 = vmatprep.subr.bf16.mxu0 0
    %6424 = vmatpush1.bf16.msra.mxu0 0
    %6425 = vmatprep.subr.bf16.mxu0 0
    %6426 = vmatpush1.bf16.msra.mxu0 0
    %6427 = vmatprep.subr.bf16.mxu0 0
    %6428 = vmatpush1.bf16.msra.mxu0 0
    %6429 = vmatprep.mubr.bf16.mxu0 %v6332
    %6430 = vmatmul.mubr.bf16.gmra.mrb[0].mxu0 %v5715
    %v6431 = vpop.f32.mrb[0].mxu0
    %v6432 = vadd.f32 %v6035, %v6431
    %v6433 = vpop.f32.mrb[0].mxu0
    %v6434 = vadd.f32 %v6037, %v6433
    %v6435 = vpop.f32.mrb[0].mxu0
    %v6436 = vadd.f32 %v6039, %v6435
    %v6437 = vpop.f32.mrb[0].mxu0
    %v6438 = vadd.f32 %v6041, %v6437
    %6439 = vmatprep.mubr.bf16.mxu0 %v6335
    %6440 = vmatmul.mubr.bf16.gmra.mrb[0].mxu0 %v5717
    %v6441 = vpop.f32.mrb[0].mxu0
    %v6442 = vadd.f32 %v6045, %v6441
    %v6443 = vpop.f32.mrb[0].mxu0
    %v6444 = vadd.f32 %v6047, %v6443
    %v6445 = vpop.f32.mrb[0].mxu0
    %v6446 = vadd.f32 %v6049, %v6445
    %v6447 = vpop.f32.mrb[0].mxu0
    %v6448 = vadd.f32 %v6051, %v6447
    %6449 = vmatprep.mubr.bf16.mxu0 %v6338
    %6450 = vmatmul.mubr.bf16.gmra.mrb[0].mxu0 %v5719
    %v6451 = vpop.f32.mrb[0].mxu0
    %v6452 = vadd.f32 %v6055, %v6451
    %v6453 = vpop.f32.mrb[0].mxu0
    %v6454 = vadd.f32 %v6057, %v6453
    %v6455 = vpop.f32.mrb[0].mxu0
    %v6456 = vadd.f32 %v6059, %v6455
    %v6457 = vpop.f32.mrb[0].mxu0
    %v6458 = vadd.f32 %v6061, %v6457
    %6459 = vmatprep.mubr.bf16.mxu0 %v6341
    %6460 = vmatmul.mubr.bf16.gmra.mrb[0].mxu0 %v5721
    %v6461 = vpop.f32.mrb[0].mxu0
    %v6462 = vadd.f32 %v6065, %v6461
    %v6463 = vpop.f32.mrb[0].mxu0
    %v6464 = vadd.f32 %v6067, %v6463
    %v6465 = vpop.f32.mrb[0].mxu0
    %v6466 = vadd.f32 %v6069, %v6465
    %v6467 = vpop.f32.mrb[0].mxu0
    %v6468 = vadd.f32 %v6071, %v6467
    %6469 = vmatprep.mubr.bf16.mxu0 %v6344
    %6470 = vmatmul.mubr.bf16.gmra.mrb[0].mxu0 %v5723
    %v6471 = vpop.f32.mrb[0].mxu0
    %v6472 = vadd.f32 %v6075, %v6471
    %v6473 = vpop.f32.mrb[0].mxu0
    %v6474 = vadd.f32 %v6077, %v6473
    %v6475 = vpop.f32.mrb[0].mxu0
    %v6476 = vadd.f32 %v6079, %v6475
    %v6477 = vpop.f32.mrb[0].mxu0
    %v6478 = vadd.f32 %v6081, %v6477
    %6479 = vmatprep.mubr.bf16.mxu0 %v6347
    %6480 = vmatmul.mubr.bf16.gmra.mrb[0].mxu0 %v5725
    %v6481 = vpop.f32.mrb[0].mxu0
    %v6482 = vadd.f32 %v6085, %v6481
    %v6483 = vpop.f32.mrb[0].mxu0
    %v6484 = vadd.f32 %v6087, %v6483
    %v6485 = vpop.f32.mrb[0].mxu0
    %v6486 = vadd.f32 %v6089, %v6485
    %v6487 = vpop.f32.mrb[0].mxu0
    %v6488 = vadd.f32 %v6091, %v6487
    %6489 = vmatprep.mubr.bf16.mxu0 %v6350
    %6490 = vmatmul.mubr.bf16.gmra.mrb[0].mxu0 %v5727
    %v6491 = vpop.f32.mrb[0].mxu0
    %v6492 = vadd.f32 %v6095, %v6491
    %v6493 = vpop.f32.mrb[0].mxu0
    %v6494 = vadd.f32 %v6097, %v6493
    %v6495 = vpop.f32.mrb[0].mxu0
    %v6496 = vadd.f32 %v6099, %v6495
    %v6497 = vpop.f32.mrb[0].mxu0
    %v6498 = vadd.f32 %v6101, %v6497
    %6499 = vmatprep.mubr.bf16.mxu0 %v6353
    %6500 = vmatmul.mubr.bf16.gmra.mrb[0].mxu0 %v5729
    %v6501 = vpop.f32.mrb[0].mxu0
    %v6502 = vadd.f32 %v6105, %v6501
    %v6503 = vpop.f32.mrb[0].mxu0
    %v6504 = vadd.f32 %v6107, %v6503
    %v6505 = vpop.f32.mrb[0].mxu0
    %v6506 = vadd.f32 %v6109, %v6505
    %v6507 = vpop.f32.mrb[0].mxu0
    %v6508 = vadd.f32 %v6111, %v6507
    %6509 = vmatprep.mubr.bf16.mxu0 %v6356
    %6510 = vmatmul.mubr.bf16.gmra.mrb[0].mxu0 %v5731
    %v6511 = vpop.f32.mrb[0].mxu0
    %v6512 = vadd.f32 %v6115, %v6511
    %v6513 = vpop.f32.mrb[0].mxu0
    %v6514 = vadd.f32 %v6117, %v6513
    %v6515 = vpop.f32.mrb[0].mxu0
    %v6516 = vadd.f32 %v6119, %v6515
    %v6517 = vpop.f32.mrb[0].mxu0
    %v6518 = vadd.f32 %v6121, %v6517
    %6519 = vmatprep.mubr.bf16.mxu0 %v6359
    %6520 = vmatmul.mubr.bf16.gmra.mrb[0].mxu0 %v5733
    %v6521 = vpop.f32.mrb[0].mxu0
    %v6522 = vadd.f32 %v6125, %v6521
    %v6523 = vpop.f32.mrb[0].mxu0
    %v6524 = vadd.f32 %v6127, %v6523
    %v6525 = vpop.f32.mrb[0].mxu0
    %v6526 = vadd.f32 %v6129, %v6525
    %v6527 = vpop.f32.mrb[0].mxu0
    %v6528 = vadd.f32 %v6131, %v6527
    %6529 = vmatprep.mubr.bf16.mxu0 %v6362
    %6530 = vmatmul.mubr.bf16.gmra.mrb[0].mxu0 %v5735
    %v6531 = vpop.f32.mrb[0].mxu0
    %v6532 = vadd.f32 %v6135, %v6531
    %v6533 = vpop.f32.mrb[0].mxu0
    %v6534 = vadd.f32 %v6137, %v6533
    %v6535 = vpop.f32.mrb[0].mxu0
    %v6536 = vadd.f32 %v6139, %v6535
    %v6537 = vpop.f32.mrb[0].mxu0
    %v6538 = vadd.f32 %v6141, %v6537
    %6539 = vmatprep.mubr.bf16.mxu0 %v6365
    %6540 = vmatmul.mubr.bf16.gmra.mrb[0].mxu0 %v5737
    %v6541 = vpop.f32.mrb[0].mxu0
    %v6542 = vadd.f32 %v6145, %v6541
    %v6543 = vpop.f32.mrb[0].mxu0
    %v6544 = vadd.f32 %v6147, %v6543
    %v6545 = vpop.f32.mrb[0].mxu0
    %v6546 = vadd.f32 %v6149, %v6545
    %v6547 = vpop.f32.mrb[0].mxu0
    %v6548 = vadd.f32 %v6151, %v6547
    %6549 = vmatprep.mubr.bf16.mxu0 %v6368
    %6550 = vmatmul.mubr.bf16.gmra.mrb[0].mxu0 %v5739
    %v6551 = vpop.f32.mrb[0].mxu0
    %v6552 = vadd.f32 %v6155, %v6551
    %v6553 = vpop.f32.mrb[0].mxu0
    %v6554 = vadd.f32 %v6157, %v6553
    %v6555 = vpop.f32.mrb[0].mxu0
    %v6556 = vadd.f32 %v6159, %v6555
    %v6557 = vpop.f32.mrb[0].mxu0
    %v6558 = vadd.f32 %v6161, %v6557
    %6559 = vmatprep.mubr.bf16.mxu0 %v6371
    %6560 = vmatmul.mubr.bf16.gmra.mrb[0].mxu0 %v5741
    %v6561 = vpop.f32.mrb[0].mxu0
    %v6562 = vadd.f32 %v6165, %v6561
    %v6563 = vpop.f32.mrb[0].mxu0
    %v6564 = vadd.f32 %v6167, %v6563
    %v6565 = vpop.f32.mrb[0].mxu0
    %v6566 = vadd.f32 %v6169, %v6565
    %v6567 = vpop.f32.mrb[0].mxu0
    %v6568 = vadd.f32 %v6171, %v6567
    %6569 = vmatprep.mubr.bf16.mxu0 %v6374
    %6570 = vmatmul.mubr.bf16.gmra.mrb[0].mxu0 %v5743
    %v6571 = vpop.f32.mrb[0].mxu0
    %v6572 = vadd.f32 %v6175, %v6571
    %v6573 = vpop.f32.mrb[0].mxu0
    %v6574 = vadd.f32 %v6177, %v6573
    %v6575 = vpop.f32.mrb[0].mxu0
    %v6576 = vadd.f32 %v6179, %v6575
    %v6577 = vpop.f32.mrb[0].mxu0
    %v6578 = vadd.f32 %v6181, %v6577
    %6579 = vmatprep.mubr.bf16.mxu0 %v6377
    %6580 = vmatmul.mubr.bf16.gmra.mrb[0].mxu0 %v5745
    %v6581 = vpop.f32.mrb[0].mxu0
    %v6582 = vadd.f32 %v6185, %v6581
    %v6583 = vpop.f32.mrb[0].mxu0
    %v6584 = vadd.f32 %v6187, %v6583
    %v6585 = vpop.f32.mrb[0].mxu0
    %v6586 = vadd.f32 %v6189, %v6585
    %v6587 = vpop.f32.mrb[0].mxu0
    %v6588 = vadd.f32 %v6191, %v6587
    %6589 = vmatprep.mubr.bf16.mxu0 %v6380
    %6590 = vmatmul.mubr.bf16.gmra.mrb[0].mxu0 %v5747
    %v6591 = vpop.f32.mrb[0].mxu0
    %v6592 = vadd.f32 %v6195, %v6591
    %v6593 = vpop.f32.mrb[0].mxu0
    %v6594 = vadd.f32 %v6197, %v6593
    %v6595 = vpop.f32.mrb[0].mxu0
    %v6596 = vadd.f32 %v6199, %v6595
    %v6597 = vpop.f32.mrb[0].mxu0
    %v6598 = vadd.f32 %v6201, %v6597
    %6599 = vmatprep.mubr.bf16.mxu0 %v6383
    %6600 = vmatmul.mubr.bf16.gmra.mrb[0].mxu0 %v5749
    %v6601 = vpop.f32.mrb[0].mxu0
    %v6602 = vadd.f32 %v6205, %v6601
    %v6603 = vpop.f32.mrb[0].mxu0
    %v6604 = vadd.f32 %v6207, %v6603
    %v6605 = vpop.f32.mrb[0].mxu0
    %v6606 = vadd.f32 %v6209, %v6605
    %v6607 = vpop.f32.mrb[0].mxu0
    %v6608 = vadd.f32 %v6211, %v6607
    %6609 = vmatprep.mubr.bf16.mxu0 %v6386
    %6610 = vmatmul.mubr.bf16.gmra.mrb[0].mxu0 %v5751
    %v6611 = vpop.f32.mrb[0].mxu0
    %v6612 = vadd.f32 %v6215, %v6611
    %v6613 = vpop.f32.mrb[0].mxu0
    %v6614 = vadd.f32 %v6217, %v6613
    %v6615 = vpop.f32.mrb[0].mxu0
    %v6616 = vadd.f32 %v6219, %v6615
    %v6617 = vpop.f32.mrb[0].mxu0
    %v6618 = vadd.f32 %v6221, %v6617
    %6619 = vmatprep.mubr.bf16.mxu0 %v6389
    %6620 = vmatmul.mubr.bf16.gmra.mrb[0].mxu0 %v5753
    %v6621 = vpop.f32.mrb[0].mxu0
    %v6622 = vadd.f32 %v6225, %v6621
    %v6623 = vpop.f32.mrb[0].mxu0
    %v6624 = vadd.f32 %v6227, %v6623
    %v6625 = vpop.f32.mrb[0].mxu0
    %v6626 = vadd.f32 %v6229, %v6625
    %v6627 = vpop.f32.mrb[0].mxu0
    %v6628 = vadd.f32 %v6231, %v6627
    %6629 = vdwg.mxu0
    %s6630 = scalar_lea.vmem [#allocation4], 32
    %v6631 = vld [vmem:[%s6630] sm:$0xff]
    %v6632 = vld [vmem:[%s6630 + $0x8] sm:$0xff]
    %v6633 = vld [vmem:[%s6630 + $0x20] sm:$0xff]
    %v6634 = vld [vmem:[%s6630 + $0x28] sm:$0xff]
    %v6635 = vld [vmem:[%s6630 + $0x40] sm:$0xff]
    %v6636 = vld [vmem:[%s6630 + $0x48] sm:$0xff]
    %v6637 = vld [vmem:[%s6630 + $0x60] sm:$0xff]
    %v6638 = vld [vmem:[%s6630 + $0x68] sm:$0xff]
    %v6639 = vld [vmem:[%s6630 + $0x80] sm:$0xff]
    %v6640 = vld [vmem:[%s6630 + $0x88] sm:$0xff]
    %v6641 = vld [vmem:[%s6630 + $0xa0] sm:$0xff]
    %v6642 = vld [vmem:[%s6630 + $0xa8] sm:$0xff]
    %v6643 = vld [vmem:[%s6630 + $0xc0] sm:$0xff]
    %v6644 = vld [vmem:[%s6630 + $0xc8] sm:$0xff]
    %v6645 = vld [vmem:[%s6630 + $0xe0] sm:$0xff]
    %v6646 = vld [vmem:[%s6630 + $0xe8] sm:$0xff]
    %v6647 = vld [vmem:[%s6630 + $0x100] sm:$0xff]
    %v6648 = vld [vmem:[%s6630 + $0x108] sm:$0xff]
    %v6649 = vld [vmem:[%s6630 + $0x120] sm:$0xff]
    %v6650 = vld [vmem:[%s6630 + $0x128] sm:$0xff]
    %v6651 = vld [vmem:[%s6630 + $0x140] sm:$0xff]
    %v6652 = vld [vmem:[%s6630 + $0x148] sm:$0xff]
    %v6653 = vld [vmem:[%s6630 + $0x160] sm:$0xff]
    %v6654 = vld [vmem:[%s6630 + $0x168] sm:$0xff]
    %v6655 = vld [vmem:[%s6630 + $0x180] sm:$0xff]
    %v6656 = vld [vmem:[%s6630 + $0x188] sm:$0xff]
    %v6657 = vld [vmem:[%s6630 + $0x1a0] sm:$0xff]
    %v6658 = vld [vmem:[%s6630 + $0x1a8] sm:$0xff]
    %v6659 = vld [vmem:[%s6630 + $0x1c0] sm:$0xff]
    %v6660 = vld [vmem:[%s6630 + $0x1c8] sm:$0xff]
    %v6661 = vld [vmem:[%s6630 + $0x1e0] sm:$0xff]
    %v6662 = vld [vmem:[%s6630 + $0x1e8] sm:$0xff]
    %v6663 = vld [vmem:[%s6630 + $0x200] sm:$0xff]
    %v6664 = vld [vmem:[%s6630 + $0x208] sm:$0xff]
    %v6665 = vld [vmem:[%s6630 + $0x220] sm:$0xff]
    %v6666 = vld [vmem:[%s6630 + $0x228] sm:$0xff]
    %v6667 = vld [vmem:[%s6630 + $0x240] sm:$0xff]
    %v6668 = vld [vmem:[%s6630 + $0x248] sm:$0xff]
    %v6669 = vld [vmem:[%s6630 + $0x260] sm:$0xff]
    %v6670 = vld [vmem:[%s6630 + $0x268] sm:$0xff]
    %s6671 = scalar_lea.vmem %s5, 320
    %v6672 = vld [vmem:[%s6671] sm:$0xff]
    %v6673 = vld [vmem:[%s6671 + $0x8] sm:$0xff]
    %v6674 = vld [vmem:[%s6671 + $0x10] sm:$0xff]
    %v6675 = vld [vmem:[%s6671 + $0x18] sm:$0xff]
    %v6676 = vld [vmem:[%s6671 + $0x20] sm:$0xff]
    %v6677 = vld [vmem:[%s6671 + $0x28] sm:$0xff]
    %v6678 = vld [vmem:[%s6671 + $0x30] sm:$0xff]
    %v6679 = vld [vmem:[%s6671 + $0x38] sm:$0xff]
    %v6680 = vld [vmem:[%s6671 + $0x40] sm:$0xff]
    %v6681 = vld [vmem:[%s6671 + $0x48] sm:$0xff]
    %v6682 = vld [vmem:[%s6671 + $0x50] sm:$0xff]
    %v6683 = vld [vmem:[%s6671 + $0x58] sm:$0xff]
    %v6684 = vld [vmem:[%s6671 + $0x60] sm:$0xff]
    %v6685 = vld [vmem:[%s6671 + $0x68] sm:$0xff]
    %v6686 = vld [vmem:[%s6671 + $0x70] sm:$0xff]
    %v6687 = vld [vmem:[%s6671 + $0x78] sm:$0xff]
    %v6688 = vld [vmem:[%s6671 + $0x80] sm:$0xff]
    %v6689 = vld [vmem:[%s6671 + $0x88] sm:$0xff]
    %v6690 = vld [vmem:[%s6671 + $0x90] sm:$0xff]
    %v6691 = vld [vmem:[%s6671 + $0x98] sm:$0x33]
    %v6712 = vunpack.c.l.b16 %v6672
    %v6713 = vunpack.c.h.b16 %v6672
    %v6714 = vunpack.c.l.b16 %v6673
    %v6715 = vunpack.c.h.b16 %v6673
    %v6716 = vunpack.c.l.b16 %v6674
    %v6717 = vunpack.c.h.b16 %v6674
    %v6718 = vunpack.c.l.b16 %v6675
    %v6719 = vunpack.c.h.b16 %v6675
    %v6720 = vunpack.c.l.b16 %v6676
    %v6721 = vunpack.c.h.b16 %v6676
    %v6722 = vunpack.c.l.b16 %v6677
    %v6723 = vunpack.c.h.b16 %v6677
    %v6724 = vunpack.c.l.b16 %v6678
    %v6725 = vunpack.c.h.b16 %v6678
    %v6726 = vunpack.c.l.b16 %v6679
    %v6727 = vunpack.c.h.b16 %v6679
    %v6728 = vunpack.c.l.b16 %v6680
    %v6729 = vunpack.c.h.b16 %v6680
    %v6730 = vunpack.c.l.b16 %v6681
    %v6731 = vunpack.c.h.b16 %v6681
    %v6732 = vunpack.c.l.b16 %v6682
    %v6733 = vunpack.c.h.b16 %v6682
    %v6734 = vunpack.c.l.b16 %v6683
    %v6735 = vunpack.c.h.b16 %v6683
    %v6736 = vunpack.c.l.b16 %v6684
    %v6737 = vunpack.c.h.b16 %v6684
    %v6738 = vunpack.c.l.b16 %v6685
    %v6739 = vunpack.c.h.b16 %v6685
    %v6740 = vunpack.c.l.b16 %v6686
    %v6741 = vunpack.c.h.b16 %v6686
    %v6742 = vunpack.c.l.b16 %v6687
    %v6743 = vunpack.c.h.b16 %v6687
    %v6744 = vunpack.c.l.b16 %v6688
    %v6745 = vunpack.c.h.b16 %v6688
    %v6746 = vunpack.c.l.b16 %v6689
    %v6747 = vunpack.c.h.b16 %v6689
    %v6748 = vunpack.c.l.b16 %v6690
    %v6749 = vunpack.c.h.b16 %v6690
    %v6750 = vunpack.c.l.b16 %v6691
    %v6751 = vunpack.c.h.b16 %v6691
    %v6752 = vpack.c.b16 %v6714, %v6712
    %v6753 = vpack.c.b16 %v6715, %v6713
    %v6754 = vpack.c.b16 %v6718, %v6716
    %v6755 = vpack.c.b16 %v6719, %v6717
    %v6756 = vpack.c.b16 %v6722, %v6720
    %v6757 = vpack.c.b16 %v6723, %v6721
    %v6758 = vpack.c.b16 %v6726, %v6724
    %v6759 = vpack.c.b16 %v6727, %v6725
    %v6760 = vpack.c.b16 %v6730, %v6728
    %v6761 = vpack.c.b16 %v6731, %v6729
    %v6762 = vpack.c.b16 %v6734, %v6732
    %v6763 = vpack.c.b16 %v6735, %v6733
    %v6764 = vpack.c.b16 %v6738, %v6736
    %v6765 = vpack.c.b16 %v6739, %v6737
    %v6766 = vpack.c.b16 %v6742, %v6740
    %v6767 = vpack.c.b16 %v6743, %v6741
    %v6768 = vpack.c.b16 %v6746, %v6744
    %v6769 = vpack.c.b16 %v6747, %v6745
    %v6770 = vpack.c.b16 %v6750, %v6748
    %v6771 = vpack.c.b16 %v6751, %v6749
    %v6791 = vsel %vm176, %v6632, 0
    %v6794 = vsel %vm176, %v6634, 0
    %v6797 = vsel %vm176, %v6636, 0
    %v6800 = vsel %vm176, %v6638, 0
    %v6803 = vsel %vm176, %v6640, 0
    %v6806 = vsel %vm176, %v6642, 0
    %v6809 = vsel %vm176, %v6644, 0
    %v6812 = vsel %vm176, %v6646, 0
    %v6815 = vsel %vm176, %v6648, 0
    %v6818 = vsel %vm176, %v6650, 0
    %v6821 = vsel %vm176, %v6652, 0
    %v6824 = vsel %vm176, %v6654, 0
    %v6827 = vsel %vm176, %v6656, 0
    %v6830 = vsel %vm176, %v6658, 0
    %v6833 = vsel %vm176, %v6660, 0
    %v6836 = vsel %vm176, %v6662, 0
    %v6839 = vsel %vm176, %v6664, 0
    %v6842 = vsel %vm176, %v6666, 0
    %v6845 = vsel %vm176, %v6668, 0
    %v6848 = vsel %vm176, %v6670, 0
    %v6851 = vsel %vm3260, %v6770, 0
    %v6854 = vsel %vm3260, %v6771, 0
    %6856 = vmatprep.subr.bf16.mxu0 %v6753
    %6857 = vmatpush1.bf16.msra.mxu0 %v6752
    %6858 = vmatprep.subr.bf16.mxu0 %v6755
    %6859 = vmatpush1.bf16.msra.mxu0 %v6754
    %6860 = vmatprep.subr.bf16.mxu0 %v6757
    %6861 = vmatpush1.bf16.msra.mxu0 %v6756
    %6862 = vmatprep.subr.bf16.mxu0 %v6759
    %6863 = vmatpush1.bf16.msra.mxu0 %v6758
    %6864 = vmatprep.subr.bf16.mxu0 %v6761
    %6865 = vmatpush1.bf16.msra.mxu0 %v6760
    %6866 = vmatprep.subr.bf16.mxu0 %v6763
    %6867 = vmatpush1.bf16.msra.mxu0 %v6762
    %6868 = vmatprep.subr.bf16.mxu0 %v6765
    %6869 = vmatpush1.bf16.msra.mxu0 %v6764
    %6870 = vmatprep.subr.bf16.mxu0 %v6767
    %6871 = vmatpush1.bf16.msra.mxu0 %v6766
    %6872 = vmatprep.subr.bf16.mxu0 %v6769
    %6873 = vmatpush1.bf16.msra.mxu0 %v6768
    %6874 = vmatprep.subr.bf16.mxu0 %v6854
    %6875 = vmatpush1.bf16.msra.mxu0 %v6851
    %6876 = vmatprep.subr.bf16.mxu0 0
    %6877 = vmatpush1.bf16.msra.mxu0 0
    %6878 = vmatprep.subr.bf16.mxu0 0
    %6879 = vmatpush1.bf16.msra.mxu0 0
    %6880 = vmatprep.subr.bf16.mxu0 0
    %6881 = vmatpush1.bf16.msra.mxu0 0
    %6882 = vmatprep.subr.bf16.mxu0 0
    %6883 = vmatpush1.bf16.msra.mxu0 0
    %6884 = vmatprep.subr.bf16.mxu0 0
    %6885 = vmatpush1.bf16.msra.mxu0 0
    %6886 = vmatprep.subr.bf16.mxu0 0
    %6887 = vmatpush1.bf16.msra.mxu0 0
    %6888 = vmatprep.mubr.bf16.mxu0 %v6791
    %6889 = vmatmul.mubr.bf16.gmra.mrb[0].mxu0 %v6631
    %v6890 = vpop.f32.mrb[0].mxu0
    %v6891 = vadd.f32 0.0, %v6890
    %v6892 = vpop.f32.mrb[0].mxu0
    %v6893 = vadd.f32 0.0, %v6892
    %v6894 = vpop.f32.mrb[0].mxu0
    %v6895 = vadd.f32 0.0, %v6894
    %v6896 = vpop.f32.mrb[0].mxu0
    %v6897 = vadd.f32 0.0, %v6896
    %6898 = vmatprep.mubr.bf16.mxu0 %v6794
    %6899 = vmatmul.mubr.bf16.gmra.mrb[0].mxu0 %v6633
    %v6900 = vpop.f32.mrb[0].mxu0
    %v6901 = vadd.f32 0.0, %v6900
    %v6902 = vpop.f32.mrb[0].mxu0
    %v6903 = vadd.f32 0.0, %v6902
    %v6904 = vpop.f32.mrb[0].mxu0
    %v6905 = vadd.f32 0.0, %v6904
    %v6906 = vpop.f32.mrb[0].mxu0
    %v6907 = vadd.f32 0.0, %v6906
    %6908 = vmatprep.mubr.bf16.mxu0 %v6797
    %6909 = vmatmul.mubr.bf16.gmra.mrb[0].mxu0 %v6635
    %v6910 = vpop.f32.mrb[0].mxu0
    %v6911 = vadd.f32 0.0, %v6910
    %v6912 = vpop.f32.mrb[0].mxu0
    %v6913 = vadd.f32 0.0, %v6912
    %v6914 = vpop.f32.mrb[0].mxu0
    %v6915 = vadd.f32 0.0, %v6914
    %v6916 = vpop.f32.mrb[0].mxu0
    %v6917 = vadd.f32 0.0, %v6916
    %6918 = vmatprep.mubr.bf16.mxu0 %v6800
    %6919 = vmatmul.mubr.bf16.gmra.mrb[0].mxu0 %v6637
    %v6920 = vpop.f32.mrb[0].mxu0
    %v6921 = vadd.f32 0.0, %v6920
    %v6922 = vpop.f32.mrb[0].mxu0
    %v6923 = vadd.f32 0.0, %v6922
    %v6924 = vpop.f32.mrb[0].mxu0
    %v6925 = vadd.f32 0.0, %v6924
    %v6926 = vpop.f32.mrb[0].mxu0
    %v6927 = vadd.f32 0.0, %v6926
    %6928 = vmatprep.mubr.bf16.mxu0 %v6803
    %6929 = vmatmul.mubr.bf16.gmra.mrb[0].mxu0 %v6639
    %v6930 = vpop.f32.mrb[0].mxu0
    %v6931 = vadd.f32 0.0, %v6930
    %v6932 = vpop.f32.mrb[0].mxu0
    %v6933 = vadd.f32 0.0, %v6932
    %v6934 = vpop.f32.mrb[0].mxu0
    %v6935 = vadd.f32 0.0, %v6934
    %v6936 = vpop.f32.mrb[0].mxu0
    %v6937 = vadd.f32 0.0, %v6936
    %6938 = vmatprep.mubr.bf16.mxu0 %v6806
    %6939 = vmatmul.mubr.bf16.gmra.mrb[0].mxu0 %v6641
    %v6940 = vpop.f32.mrb[0].mxu0
    %v6941 = vadd.f32 0.0, %v6940
    %v6942 = vpop.f32.mrb[0].mxu0
    %v6943 = vadd.f32 0.0, %v6942
    %v6944 = vpop.f32.mrb[0].mxu0
    %v6945 = vadd.f32 0.0, %v6944
    %v6946 = vpop.f32.mrb[0].mxu0
    %v6947 = vadd.f32 0.0, %v6946
    %6948 = vmatprep.mubr.bf16.mxu0 %v6809
    %6949 = vmatmul.mubr.bf16.gmra.mrb[0].mxu0 %v6643
    %v6950 = vpop.f32.mrb[0].mxu0
    %v6951 = vadd.f32 0.0, %v6950
    %v6952 = vpop.f32.mrb[0].mxu0
    %v6953 = vadd.f32 0.0, %v6952
    %v6954 = vpop.f32.mrb[0].mxu0
    %v6955 = vadd.f32 0.0, %v6954
    %v6956 = vpop.f32.mrb[0].mxu0
    %v6957 = vadd.f32 0.0, %v6956
    %6958 = vmatprep.mubr.bf16.mxu0 %v6812
    %6959 = vmatmul.mubr.bf16.gmra.mrb[0].mxu0 %v6645
    %v6960 = vpop.f32.mrb[0].mxu0
    %v6961 = vadd.f32 0.0, %v6960
    %v6962 = vpop.f32.mrb[0].mxu0
    %v6963 = vadd.f32 0.0, %v6962
    %v6964 = vpop.f32.mrb[0].mxu0
    %v6965 = vadd.f32 0.0, %v6964
    %v6966 = vpop.f32.mrb[0].mxu0
    %v6967 = vadd.f32 0.0, %v6966
    %6968 = vmatprep.mubr.bf16.mxu0 %v6815
    %6969 = vmatmul.mubr.bf16.gmra.mrb[0].mxu0 %v6647
    %v6970 = vpop.f32.mrb[0].mxu0
    %v6971 = vadd.f32 0.0, %v6970
    %v6972 = vpop.f32.mrb[0].mxu0
    %v6973 = vadd.f32 0.0, %v6972
    %v6974 = vpop.f32.mrb[0].mxu0
    %v6975 = vadd.f32 0.0, %v6974
    %v6976 = vpop.f32.mrb[0].mxu0
    %v6977 = vadd.f32 0.0, %v6976
    %6978 = vmatprep.mubr.bf16.mxu0 %v6818
    %6979 = vmatmul.mubr.bf16.gmra.mrb[0].mxu0 %v6649
    %v6980 = vpop.f32.mrb[0].mxu0
    %v6981 = vadd.f32 0.0, %v6980
    %v6982 = vpop.f32.mrb[0].mxu0
    %v6983 = vadd.f32 0.0, %v6982
    %v6984 = vpop.f32.mrb[0].mxu0
    %v6985 = vadd.f32 0.0, %v6984
    %v6986 = vpop.f32.mrb[0].mxu0
    %v6987 = vadd.f32 0.0, %v6986
    %6988 = vmatprep.mubr.bf16.mxu0 %v6821
    %6989 = vmatmul.mubr.bf16.gmra.mrb[0].mxu0 %v6651
    %v6990 = vpop.f32.mrb[0].mxu0
    %v6991 = vadd.f32 0.0, %v6990
    %v6992 = vpop.f32.mrb[0].mxu0
    %v6993 = vadd.f32 0.0, %v6992
    %v6994 = vpop.f32.mrb[0].mxu0
    %v6995 = vadd.f32 0.0, %v6994
    %v6996 = vpop.f32.mrb[0].mxu0
    %v6997 = vadd.f32 0.0, %v6996
    %6998 = vmatprep.mubr.bf16.mxu0 %v6824
    %6999 = vmatmul.mubr.bf16.gmra.mrb[0].mxu0 %v6653
    %v7000 = vpop.f32.mrb[0].mxu0
    %v7001 = vadd.f32 0.0, %v7000
    %v7002 = vpop.f32.mrb[0].mxu0
    %v7003 = vadd.f32 0.0, %v7002
    %v7004 = vpop.f32.mrb[0].mxu0
    %v7005 = vadd.f32 0.0, %v7004
    %v7006 = vpop.f32.mrb[0].mxu0
    %v7007 = vadd.f32 0.0, %v7006
    %7008 = vmatprep.mubr.bf16.mxu0 %v6827
    %7009 = vmatmul.mubr.bf16.gmra.mrb[0].mxu0 %v6655
    %v7010 = vpop.f32.mrb[0].mxu0
    %v7011 = vadd.f32 0.0, %v7010
    %v7012 = vpop.f32.mrb[0].mxu0
    %v7013 = vadd.f32 0.0, %v7012
    %v7014 = vpop.f32.mrb[0].mxu0
    %v7015 = vadd.f32 0.0, %v7014
    %v7016 = vpop.f32.mrb[0].mxu0
    %v7017 = vadd.f32 0.0, %v7016
    %7018 = vmatprep.mubr.bf16.mxu0 %v6830
    %7019 = vmatmul.mubr.bf16.gmra.mrb[0].mxu0 %v6657
    %v7020 = vpop.f32.mrb[0].mxu0
    %v7021 = vadd.f32 0.0, %v7020
    %v7022 = vpop.f32.mrb[0].mxu0
    %v7023 = vadd.f32 0.0, %v7022
    %v7024 = vpop.f32.mrb[0].mxu0
    %v7025 = vadd.f32 0.0, %v7024
    %v7026 = vpop.f32.mrb[0].mxu0
    %v7027 = vadd.f32 0.0, %v7026
    %7028 = vmatprep.mubr.bf16.mxu0 %v6833
    %7029 = vmatmul.mubr.bf16.gmra.mrb[0].mxu0 %v6659
    %v7030 = vpop.f32.mrb[0].mxu0
    %v7031 = vadd.f32 0.0, %v7030
    %v7032 = vpop.f32.mrb[0].mxu0
    %v7033 = vadd.f32 0.0, %v7032
    %v7034 = vpop.f32.mrb[0].mxu0
    %v7035 = vadd.f32 0.0, %v7034
    %v7036 = vpop.f32.mrb[0].mxu0
    %v7037 = vadd.f32 0.0, %v7036
    %7038 = vmatprep.mubr.bf16.mxu0 %v6836
    %7039 = vmatmul.mubr.bf16.gmra.mrb[0].mxu0 %v6661
    %v7040 = vpop.f32.mrb[0].mxu0
    %v7041 = vadd.f32 0.0, %v7040
    %v7042 = vpop.f32.mrb[0].mxu0
    %v7043 = vadd.f32 0.0, %v7042
    %v7044 = vpop.f32.mrb[0].mxu0
    %v7045 = vadd.f32 0.0, %v7044
    %v7046 = vpop.f32.mrb[0].mxu0
    %v7047 = vadd.f32 0.0, %v7046
    %7048 = vmatprep.mubr.bf16.mxu0 %v6839
    %7049 = vmatmul.mubr.bf16.gmra.mrb[0].mxu0 %v6663
    %v7050 = vpop.f32.mrb[0].mxu0
    %v7051 = vadd.f32 0.0, %v7050
    %v7052 = vpop.f32.mrb[0].mxu0
    %v7053 = vadd.f32 0.0, %v7052
    %v7054 = vpop.f32.mrb[0].mxu0
    %v7055 = vadd.f32 0.0, %v7054
    %v7056 = vpop.f32.mrb[0].mxu0
    %v7057 = vadd.f32 0.0, %v7056
    %7058 = vmatprep.mubr.bf16.mxu0 %v6842
    %7059 = vmatmul.mubr.bf16.gmra.mrb[0].mxu0 %v6665
    %v7060 = vpop.f32.mrb[0].mxu0
    %v7061 = vadd.f32 0.0, %v7060
    %v7062 = vpop.f32.mrb[0].mxu0
    %v7063 = vadd.f32 0.0, %v7062
    %v7064 = vpop.f32.mrb[0].mxu0
    %v7065 = vadd.f32 0.0, %v7064
    %v7066 = vpop.f32.mrb[0].mxu0
    %v7067 = vadd.f32 0.0, %v7066
    %7068 = vmatprep.mubr.bf16.mxu0 %v6845
    %7069 = vmatmul.mubr.bf16.gmra.mrb[0].mxu0 %v6667
    %v7070 = vpop.f32.mrb[0].mxu0
    %v7071 = vadd.f32 0.0, %v7070
    %v7072 = vpop.f32.mrb[0].mxu0
    %v7073 = vadd.f32 0.0, %v7072
    %v7074 = vpop.f32.mrb[0].mxu0
    %v7075 = vadd.f32 0.0, %v7074
    %v7076 = vpop.f32.mrb[0].mxu0
    %v7077 = vadd.f32 0.0, %v7076
    %7078 = vmatprep.mubr.bf16.mxu0 %v6848
    %7079 = vmatmul.mubr.bf16.gmra.mrb[0].mxu0 %v6669
    %v7080 = vpop.f32.mrb[0].mxu0
    %v7081 = vadd.f32 0.0, %v7080
    %v7082 = vpop.f32.mrb[0].mxu0
    %v7083 = vadd.f32 0.0, %v7082
    %v7084 = vpop.f32.mrb[0].mxu0
    %v7085 = vadd.f32 0.0, %v7084
    %v7086 = vpop.f32.mrb[0].mxu0
    %v7087 = vadd.f32 0.0, %v7086
    %7088 = vdwg.mxu0
    %v7089 = vadd.f32 %v6432, %v6891
    %v7090 = vadd.f32 %v6434, %v6893
    %v7091 = vadd.f32 %v6436, %v6895
    %v7092 = vadd.f32 %v6438, %v6897
    %v7093 = vadd.f32 %v6442, %v6901
    %v7094 = vadd.f32 %v6444, %v6903
    %v7095 = vadd.f32 %v6446, %v6905
    %v7096 = vadd.f32 %v6448, %v6907
    %v7097 = vadd.f32 %v6452, %v6911
    %v7098 = vadd.f32 %v6454, %v6913
    %v7099 = vadd.f32 %v6456, %v6915
    %v7100 = vadd.f32 %v6458, %v6917
    %v7101 = vadd.f32 %v6462, %v6921
    %v7102 = vadd.f32 %v6464, %v6923
    %v7103 = vadd.f32 %v6466, %v6925
    %v7104 = vadd.f32 %v6468, %v6927
    %v7105 = vadd.f32 %v6472, %v6931
    %v7106 = vadd.f32 %v6474, %v6933
    %v7107 = vadd.f32 %v6476, %v6935
    %v7108 = vadd.f32 %v6478, %v6937
    %v7109 = vadd.f32 %v6482, %v6941
    %v7110 = vadd.f32 %v6484, %v6943
    %v7111 = vadd.f32 %v6486, %v6945
    %v7112 = vadd.f32 %v6488, %v6947
    %v7113 = vadd.f32 %v6492, %v6951
    %v7114 = vadd.f32 %v6494, %v6953
    %v7115 = vadd.f32 %v6496, %v6955
    %v7116 = vadd.f32 %v6498, %v6957
    %v7117 = vadd.f32 %v6502, %v6961
    %v7118 = vadd.f32 %v6504, %v6963
    %v7119 = vadd.f32 %v6506, %v6965
    %v7120 = vadd.f32 %v6508, %v6967
    %v7121 = vadd.f32 %v6512, %v6971
    %v7122 = vadd.f32 %v6514, %v6973
    %v7123 = vadd.f32 %v6516, %v6975
    %v7124 = vadd.f32 %v6518, %v6977
    %v7125 = vadd.f32 %v6522, %v6981
    %v7126 = vadd.f32 %v6524, %v6983
    %v7127 = vadd.f32 %v6526, %v6985
    %v7128 = vadd.f32 %v6528, %v6987
    %v7129 = vadd.f32 %v6532, %v6991
    %v7130 = vadd.f32 %v6534, %v6993
    %v7131 = vadd.f32 %v6536, %v6995
    %v7132 = vadd.f32 %v6538, %v6997
    %v7133 = vadd.f32 %v6542, %v7001
    %v7134 = vadd.f32 %v6544, %v7003
    %v7135 = vadd.f32 %v6546, %v7005
    %v7136 = vadd.f32 %v6548, %v7007
    %v7137 = vadd.f32 %v6552, %v7011
    %v7138 = vadd.f32 %v6554, %v7013
    %v7139 = vadd.f32 %v6556, %v7015
    %v7140 = vadd.f32 %v6558, %v7017
    %v7141 = vadd.f32 %v6562, %v7021
    %v7142 = vadd.f32 %v6564, %v7023
    %v7143 = vadd.f32 %v6566, %v7025
    %v7144 = vadd.f32 %v6568, %v7027
    %v7145 = vadd.f32 %v6572, %v7031
    %v7146 = vadd.f32 %v6574, %v7033
    %v7147 = vadd.f32 %v6576, %v7035
    %v7148 = vadd.f32 %v6578, %v7037
    %v7149 = vadd.f32 %v6582, %v7041
    %v7150 = vadd.f32 %v6584, %v7043
    %v7151 = vadd.f32 %v6586, %v7045
    %v7152 = vadd.f32 %v6588, %v7047
    %v7153 = vadd.f32 %v6592, %v7051
    %v7154 = vadd.f32 %v6594, %v7053
    %v7155 = vadd.f32 %v6596, %v7055
    %v7156 = vadd.f32 %v6598, %v7057
    %v7157 = vadd.f32 %v6602, %v7061
    %v7158 = vadd.f32 %v6604, %v7063
    %v7159 = vadd.f32 %v6606, %v7065
    %v7160 = vadd.f32 %v6608, %v7067
    %v7161 = vadd.f32 %v6612, %v7071
    %v7162 = vadd.f32 %v6614, %v7073
    %v7163 = vadd.f32 %v6616, %v7075
    %v7164 = vadd.f32 %v6618, %v7077
    %v7165 = vadd.f32 %v6622, %v7081
    %v7166 = vadd.f32 %v6624, %v7083
    %v7167 = vadd.f32 %v6626, %v7085
    %v7168 = vadd.f32 %v6628, %v7087
    %v7169 = vld [vmem:[#allocation10] sm:$0x3]
    %v7171 = vlaneseq
    %v7172 = vshrl.u32 %v7171, 7
    %v7173 = vsub.s32 0, %v7172
    %v7174 = vrot.slane %v7169, %v7173
    %v7175 = vlaneseq
    %v7176 = vshrl.u32 %v7175, 7
    %v7177 = vsub.s32 1, %v7176
    %v7178 = vrot.slane %v7169, %v7177
    %v7181 = vadd.f32 %v7089, %v7174
    %v7182 = vadd.f32 %v7090, %v7178
    %v7183 = vadd.f32 %v7091, %v7174
    %v7184 = vadd.f32 %v7092, %v7178
    %v7185 = vadd.f32 %v7093, %v7174
    %v7186 = vadd.f32 %v7094, %v7178
    %v7187 = vadd.f32 %v7095, %v7174
    %v7188 = vadd.f32 %v7096, %v7178
    %v7189 = vadd.f32 %v7097, %v7174
    %v7190 = vadd.f32 %v7098, %v7178
    %v7191 = vadd.f32 %v7099, %v7174
    %v7192 = vadd.f32 %v7100, %v7178
    %v7193 = vadd.f32 %v7101, %v7174
    %v7194 = vadd.f32 %v7102, %v7178
    %v7195 = vadd.f32 %v7103, %v7174
    %v7196 = vadd.f32 %v7104, %v7178
    %v7197 = vadd.f32 %v7105, %v7174
    %v7198 = vadd.f32 %v7106, %v7178
    %v7199 = vadd.f32 %v7107, %v7174
    %v7200 = vadd.f32 %v7108, %v7178
    %v7201 = vadd.f32 %v7109, %v7174
    %v7202 = vadd.f32 %v7110, %v7178
    %v7203 = vadd.f32 %v7111, %v7174
    %v7204 = vadd.f32 %v7112, %v7178
    %v7205 = vadd.f32 %v7113, %v7174
    %v7206 = vadd.f32 %v7114, %v7178
    %v7207 = vadd.f32 %v7115, %v7174
    %v7208 = vadd.f32 %v7116, %v7178
    %v7209 = vadd.f32 %v7117, %v7174
    %v7210 = vadd.f32 %v7118, %v7178
    %v7211 = vadd.f32 %v7119, %v7174
    %v7212 = vadd.f32 %v7120, %v7178
    %v7213 = vadd.f32 %v7121, %v7174
    %v7214 = vadd.f32 %v7122, %v7178
    %v7215 = vadd.f32 %v7123, %v7174
    %v7216 = vadd.f32 %v7124, %v7178
    %v7217 = vadd.f32 %v7125, %v7174
    %v7218 = vadd.f32 %v7126, %v7178
    %v7219 = vadd.f32 %v7127, %v7174
    %v7220 = vadd.f32 %v7128, %v7178
    %v7221 = vadd.f32 %v7129, %v7174
    %v7222 = vadd.f32 %v7130, %v7178
    %v7223 = vadd.f32 %v7131, %v7174
    %v7224 = vadd.f32 %v7132, %v7178
    %v7225 = vadd.f32 %v7133, %v7174
    %v7226 = vadd.f32 %v7134, %v7178
    %v7227 = vadd.f32 %v7135, %v7174
    %v7228 = vadd.f32 %v7136, %v7178
    %v7229 = vadd.f32 %v7137, %v7174
    %v7230 = vadd.f32 %v7138, %v7178
    %v7231 = vadd.f32 %v7139, %v7174
    %v7232 = vadd.f32 %v7140, %v7178
    %v7233 = vadd.f32 %v7141, %v7174
    %v7234 = vadd.f32 %v7142, %v7178
    %v7235 = vadd.f32 %v7143, %v7174
    %v7236 = vadd.f32 %v7144, %v7178
    %v7237 = vadd.f32 %v7145, %v7174
    %v7238 = vadd.f32 %v7146, %v7178
    %v7239 = vadd.f32 %v7147, %v7174
    %v7240 = vadd.f32 %v7148, %v7178
    %v7241 = vadd.f32 %v7149, %v7174
    %v7242 = vadd.f32 %v7150, %v7178
    %v7243 = vadd.f32 %v7151, %v7174
    %v7244 = vadd.f32 %v7152, %v7178
    %v7245 = vadd.f32 %v7153, %v7174
    %v7246 = vadd.f32 %v7154, %v7178
    %v7247 = vadd.f32 %v7155, %v7174
    %v7248 = vadd.f32 %v7156, %v7178
    %v7249 = vadd.f32 %v7157, %v7174
    %v7250 = vadd.f32 %v7158, %v7178
    %v7251 = vadd.f32 %v7159, %v7174
    %v7252 = vadd.f32 %v7160, %v7178
    %v7253 = vadd.f32 %v7161, %v7174
    %v7254 = vadd.f32 %v7162, %v7178
    %v7255 = vadd.f32 %v7163, %v7174
    %v7256 = vadd.f32 %v7164, %v7178
    %v7257 = vadd.f32 %v7165, %v7174
    %v7258 = vadd.f32 %v7166, %v7178
    %v7259 = vadd.f32 %v7167, %v7174
    %v7260 = vadd.f32 %v7168, %v7178
    %v7261 = vmax.f32 %v7181, 0.0
    %v7262 = vmax.f32 %v7182, 0.0
    %v7263 = vmax.f32 %v7183, 0.0
    %v7264 = vmax.f32 %v7184, 0.0
    %v7265 = vmax.f32 %v7185, 0.0
    %v7266 = vmax.f32 %v7186, 0.0
    %v7267 = vmax.f32 %v7187, 0.0
    %v7268 = vmax.f32 %v7188, 0.0
    %v7269 = vmax.f32 %v7189, 0.0
    %v7270 = vmax.f32 %v7190, 0.0
    %v7271 = vmax.f32 %v7191, 0.0
    %v7272 = vmax.f32 %v7192, 0.0
    %v7273 = vmax.f32 %v7193, 0.0
    %v7274 = vmax.f32 %v7194, 0.0
    %v7275 = vmax.f32 %v7195, 0.0
    %v7276 = vmax.f32 %v7196, 0.0
    %v7277 = vmax.f32 %v7197, 0.0
    %v7278 = vmax.f32 %v7198, 0.0
    %v7279 = vmax.f32 %v7199, 0.0
    %v7280 = vmax.f32 %v7200, 0.0
    %v7281 = vmax.f32 %v7201, 0.0
    %v7282 = vmax.f32 %v7202, 0.0
    %v7283 = vmax.f32 %v7203, 0.0
    %v7284 = vmax.f32 %v7204, 0.0
    %v7285 = vmax.f32 %v7205, 0.0
    %v7286 = vmax.f32 %v7206, 0.0
    %v7287 = vmax.f32 %v7207, 0.0
    %v7288 = vmax.f32 %v7208, 0.0
    %v7289 = vmax.f32 %v7209, 0.0
    %v7290 = vmax.f32 %v7210, 0.0
    %v7291 = vmax.f32 %v7211, 0.0
    %v7292 = vmax.f32 %v7212, 0.0
    %v7293 = vmax.f32 %v7213, 0.0
    %v7294 = vmax.f32 %v7214, 0.0
    %v7295 = vmax.f32 %v7215, 0.0
    %v7296 = vmax.f32 %v7216, 0.0
    %v7297 = vmax.f32 %v7217, 0.0
    %v7298 = vmax.f32 %v7218, 0.0
    %v7299 = vmax.f32 %v7219, 0.0
    %v7300 = vmax.f32 %v7220, 0.0
    %v7301 = vmax.f32 %v7221, 0.0
    %v7302 = vmax.f32 %v7222, 0.0
    %v7303 = vmax.f32 %v7223, 0.0
    %v7304 = vmax.f32 %v7224, 0.0
    %v7305 = vmax.f32 %v7225, 0.0
    %v7306 = vmax.f32 %v7226, 0.0
    %v7307 = vmax.f32 %v7227, 0.0
    %v7308 = vmax.f32 %v7228, 0.0
    %v7309 = vmax.f32 %v7229, 0.0
    %v7310 = vmax.f32 %v7230, 0.0
    %v7311 = vmax.f32 %v7231, 0.0
    %v7312 = vmax.f32 %v7232, 0.0
    %v7313 = vmax.f32 %v7233, 0.0
    %v7314 = vmax.f32 %v7234, 0.0
    %v7315 = vmax.f32 %v7235, 0.0
    %v7316 = vmax.f32 %v7236, 0.0
    %v7317 = vmax.f32 %v7237, 0.0
    %v7318 = vmax.f32 %v7238, 0.0
    %v7319 = vmax.f32 %v7239, 0.0
    %v7320 = vmax.f32 %v7240, 0.0
    %v7321 = vmax.f32 %v7241, 0.0
    %v7322 = vmax.f32 %v7242, 0.0
    %v7323 = vmax.f32 %v7243, 0.0
    %v7324 = vmax.f32 %v7244, 0.0
    %v7325 = vmax.f32 %v7245, 0.0
    %v7326 = vmax.f32 %v7246, 0.0
    %v7327 = vmax.f32 %v7247, 0.0
    %v7328 = vmax.f32 %v7248, 0.0
    %v7329 = vmax.f32 %v7249, 0.0
    %v7330 = vmax.f32 %v7250, 0.0
    %v7331 = vmax.f32 %v7251, 0.0
    %v7332 = vmax.f32 %v7252, 0.0
    %v7333 = vmax.f32 %v7253, 0.0
    %v7334 = vmax.f32 %v7254, 0.0
    %v7335 = vmax.f32 %v7255, 0.0
    %v7336 = vmax.f32 %v7256, 0.0
    %v7337 = vmax.f32 %v7257, 0.0
    %v7338 = vmax.f32 %v7258, 0.0
    %v7339 = vmax.f32 %v7259, 0.0
    %v7340 = vmax.f32 %v7260, 0.0
    %v7341 = vpack.c.bf16 %v7263, %v7261
    %v7342 = vpack.c.bf16 %v7264, %v7262
    %v7343 = vpack.c.bf16 %v7267, %v7265
    %v7344 = vpack.c.bf16 %v7268, %v7266
    %v7345 = vpack.c.bf16 %v7271, %v7269
    %v7346 = vpack.c.bf16 %v7272, %v7270
    %v7347 = vpack.c.bf16 %v7275, %v7273
    %v7348 = vpack.c.bf16 %v7276, %v7274
    %v7349 = vpack.c.bf16 %v7279, %v7277
    %v7350 = vpack.c.bf16 %v7280, %v7278
    %v7351 = vpack.c.bf16 %v7283, %v7281
    %v7352 = vpack.c.bf16 %v7284, %v7282
    %v7353 = vpack.c.bf16 %v7287, %v7285
    %v7354 = vpack.c.bf16 %v7288, %v7286
    %v7355 = vpack.c.bf16 %v7291, %v7289
    %v7356 = vpack.c.bf16 %v7292, %v7290
    %v7357 = vpack.c.bf16 %v7295, %v7293
    %v7358 = vpack.c.bf16 %v7296, %v7294
    %v7359 = vpack.c.bf16 %v7299, %v7297
    %v7360 = vpack.c.bf16 %v7300, %v7298
    %v7361 = vpack.c.bf16 %v7303, %v7301
    %v7362 = vpack.c.bf16 %v7304, %v7302
    %v7363 = vpack.c.bf16 %v7307, %v7305
    %v7364 = vpack.c.bf16 %v7308, %v7306
    %v7365 = vpack.c.bf16 %v7311, %v7309
    %v7366 = vpack.c.bf16 %v7312, %v7310
    %v7367 = vpack.c.bf16 %v7315, %v7313
    %v7368 = vpack.c.bf16 %v7316, %v7314
    %v7369 = vpack.c.bf16 %v7319, %v7317
    %v7370 = vpack.c.bf16 %v7320, %v7318
    %v7371 = vpack.c.bf16 %v7323, %v7321
    %v7372 = vpack.c.bf16 %v7324, %v7322
    %v7373 = vpack.c.bf16 %v7327, %v7325
    %v7374 = vpack.c.bf16 %v7328, %v7326
    %v7375 = vpack.c.bf16 %v7331, %v7329
    %v7376 = vpack.c.bf16 %v7332, %v7330
    %v7377 = vpack.c.bf16 %v7335, %v7333
    %v7378 = vpack.c.bf16 %v7336, %v7334
    %v7379 = vpack.c.bf16 %v7339, %v7337
    %v7380 = vpack.c.bf16 %v7340, %v7338
    %s7381 = scalar_lea.vmem [#allocation5], 16
    %7382 = vst [vmem:[%s7381] sm:$0xff] %v7341
    %7383 = vst.msk [vmem:[%s7381 + $0x8] sm:$0xff] %vm187, %v7342
    %7384 = vst [vmem:[%s7381 + $0x10] sm:$0xff] %v7343
    %7385 = vst.msk [vmem:[%s7381 + $0x18] sm:$0xff] %vm187, %v7344
    %7386 = vst [vmem:[%s7381 + $0x20] sm:$0xff] %v7345
    %7387 = vst.msk [vmem:[%s7381 + $0x28] sm:$0xff] %vm187, %v7346
    %7388 = vst [vmem:[%s7381 + $0x30] sm:$0xff] %v7347
    %7389 = vst.msk [vmem:[%s7381 + $0x38] sm:$0xff] %vm187, %v7348
    %7390 = vst [vmem:[%s7381 + $0x40] sm:$0xff] %v7349
    %7391 = vst.msk [vmem:[%s7381 + $0x48] sm:$0xff] %vm187, %v7350
    %7392 = vst [vmem:[%s7381 + $0x50] sm:$0xff] %v7351
    %7393 = vst.msk [vmem:[%s7381 + $0x58] sm:$0xff] %vm187, %v7352
    %7394 = vst [vmem:[%s7381 + $0x60] sm:$0xff] %v7353
    %7395 = vst.msk [vmem:[%s7381 + $0x68] sm:$0xff] %vm187, %v7354
    %7396 = vst [vmem:[%s7381 + $0x70] sm:$0xff] %v7355
    %7397 = vst.msk [vmem:[%s7381 + $0x78] sm:$0xff] %vm187, %v7356
    %7398 = vst [vmem:[%s7381 + $0x80] sm:$0xff] %v7357
    %7399 = vst.msk [vmem:[%s7381 + $0x88] sm:$0xff] %vm187, %v7358
    %7400 = vst [vmem:[%s7381 + $0x90] sm:$0xff] %v7359
    %7401 = vst.msk [vmem:[%s7381 + $0x98] sm:$0xff] %vm187, %v7360
    %7402 = vst [vmem:[%s7381 + $0xa0] sm:$0xff] %v7361
    %7403 = vst.msk [vmem:[%s7381 + $0xa8] sm:$0xff] %vm187, %v7362
    %7404 = vst [vmem:[%s7381 + $0xb0] sm:$0xff] %v7363
    %7405 = vst.msk [vmem:[%s7381 + $0xb8] sm:$0xff] %vm187, %v7364
    %7406 = vst [vmem:[%s7381 + $0xc0] sm:$0xff] %v7365
    %7407 = vst.msk [vmem:[%s7381 + $0xc8] sm:$0xff] %vm187, %v7366
    %7408 = vst [vmem:[%s7381 + $0xd0] sm:$0xff] %v7367
    %7409 = vst.msk [vmem:[%s7381 + $0xd8] sm:$0xff] %vm187, %v7368
    %7410 = vst [vmem:[%s7381 + $0xe0] sm:$0xff] %v7369
    %7411 = vst.msk [vmem:[%s7381 + $0xe8] sm:$0xff] %vm187, %v7370
    %7412 = vst [vmem:[%s7381 + $0xf0] sm:$0xff] %v7371
    %7413 = vst.msk [vmem:[%s7381 + $0xf8] sm:$0xff] %vm187, %v7372
    %7414 = vst [vmem:[%s7381 + $0x100] sm:$0xff] %v7373
    %7415 = vst.msk [vmem:[%s7381 + $0x108] sm:$0xff] %vm187, %v7374
    %7416 = vst [vmem:[%s7381 + $0x110] sm:$0xff] %v7375
    %7417 = vst.msk [vmem:[%s7381 + $0x118] sm:$0xff] %vm187, %v7376
    %7418 = vst [vmem:[%s7381 + $0x120] sm:$0xff] %v7377
    %7419 = vst.msk [vmem:[%s7381 + $0x128] sm:$0xff] %vm187, %v7378
    %7420 = vst [vmem:[%s7381 + $0x130] sm:$0xff] %v7379
    %7421 = vst.msk [vmem:[%s7381 + $0x138] sm:$0xff] %vm187, %v7380
    %v7422 = vld [vmem:[#allocation5] sm:$0xff]
    %v7423 = vld [vmem:[#allocation5 + $0x8] sm:$0xff]
    %v7424 = vld [vmem:[#allocation5 + $0x20] sm:$0xff]
    %v7425 = vld [vmem:[#allocation5 + $0x28] sm:$0xff]
    %v7426 = vld [vmem:[#allocation5 + $0x40] sm:$0xff]
    %v7427 = vld [vmem:[#allocation5 + $0x48] sm:$0xff]
    %v7428 = vld [vmem:[#allocation5 + $0x60] sm:$0xff]
    %v7429 = vld [vmem:[#allocation5 + $0x68] sm:$0xff]
    %v7430 = vld [vmem:[#allocation5 + $0x80] sm:$0xff]
    %v7431 = vld [vmem:[#allocation5 + $0x88] sm:$0xff]
    %v7432 = vld [vmem:[#allocation5 + $0xa0] sm:$0xff]
    %v7433 = vld [vmem:[#allocation5 + $0xa8] sm:$0xff]
    %v7434 = vld [vmem:[#allocation5 + $0xc0] sm:$0xff]
    %v7435 = vld [vmem:[#allocation5 + $0xc8] sm:$0xff]
    %v7436 = vld [vmem:[#allocation5 + $0xe0] sm:$0xff]
    %v7437 = vld [vmem:[#allocation5 + $0xe8] sm:$0xff]
    %v7438 = vld [vmem:[#allocation5 + $0x100] sm:$0xff]
    %v7439 = vld [vmem:[#allocation5 + $0x108] sm:$0xff]
    %v7440 = vld [vmem:[#allocation5 + $0x120] sm:$0xff]
    %v7441 = vld [vmem:[#allocation5 + $0x128] sm:$0xff]
    %v7442 = vld [vmem:[#allocation12] sm:$0xff]
    %v7443 = vld [vmem:[#allocation12 + $0x8] sm:$0xff]
    %v7444 = vld [vmem:[#allocation12 + $0x10] sm:$0xff]
    %v7445 = vld [vmem:[#allocation12 + $0x18] sm:$0xff]
    %v7446 = vld [vmem:[#allocation12 + $0x20] sm:$0xff]
    %v7447 = vld [vmem:[#allocation12 + $0x28] sm:$0xff]
    %v7448 = vld [vmem:[#allocation12 + $0x30] sm:$0xff]
    %v7449 = vld [vmem:[#allocation12 + $0x38] sm:$0xff]
    %v7450 = vld [vmem:[#allocation12 + $0x40] sm:$0xff]
    %v7451 = vld [vmem:[#allocation12 + $0x48] sm:$0xff]
    %v7452 = vld [vmem:[#allocation12 + $0x50] sm:$0xff]
    %v7453 = vld [vmem:[#allocation12 + $0x58] sm:$0xff]
    %v7454 = vld [vmem:[#allocation12 + $0x60] sm:$0xff]
    %v7455 = vld [vmem:[#allocation12 + $0x68] sm:$0xff]
    %v7456 = vld [vmem:[#allocation12 + $0x70] sm:$0xff]
    %v7457 = vld [vmem:[#allocation12 + $0x78] sm:$0xff]
    %v7458 = vld [vmem:[#allocation12 + $0x80] sm:$0xff]
    %v7459 = vld [vmem:[#allocation12 + $0x88] sm:$0xff]
    %v7460 = vld [vmem:[#allocation12 + $0x90] sm:$0xff]
    %v7461 = vld [vmem:[#allocation12 + $0x98] sm:$0xff]
    %v7462 = vld [vmem:[%s7381] sm:$0xff]
    %v7463 = vld [vmem:[%s7381 + $0x8] sm:$0xff]
    %v7464 = vld [vmem:[%s7381 + $0x20] sm:$0xff]
    %v7465 = vld [vmem:[%s7381 + $0x28] sm:$0xff]
    %v7466 = vld [vmem:[%s7381 + $0x40] sm:$0xff]
    %v7467 = vld [vmem:[%s7381 + $0x48] sm:$0xff]
    %v7468 = vld [vmem:[%s7381 + $0x60] sm:$0xff]
    %v7469 = vld [vmem:[%s7381 + $0x68] sm:$0xff]
    %v7470 = vld [vmem:[%s7381 + $0x80] sm:$0xff]
    %v7471 = vld [vmem:[%s7381 + $0x88] sm:$0xff]
    %v7472 = vld [vmem:[%s7381 + $0xa0] sm:$0xff]
    %v7473 = vld [vmem:[%s7381 + $0xa8] sm:$0xff]
    %v7474 = vld [vmem:[%s7381 + $0xc0] sm:$0xff]
    %v7475 = vld [vmem:[%s7381 + $0xc8] sm:$0xff]
    %v7476 = vld [vmem:[%s7381 + $0xe0] sm:$0xff]
    %v7477 = vld [vmem:[%s7381 + $0xe8] sm:$0xff]
    %v7478 = vld [vmem:[%s7381 + $0x100] sm:$0xff]
    %v7479 = vld [vmem:[%s7381 + $0x108] sm:$0xff]
    %v7480 = vld [vmem:[%s7381 + $0x120] sm:$0xff]
    %v7481 = vld [vmem:[%s7381 + $0x128] sm:$0xff]
    %s7482 = scalar_lea.vmem [#allocation12], 160
    %v7483 = vld [vmem:[%s7482] sm:$0xff]
    %v7484 = vld [vmem:[%s7482 + $0x8] sm:$0xff]
    %v7485 = vld [vmem:[%s7482 + $0x10] sm:$0xff]
    %v7486 = vld [vmem:[%s7482 + $0x18] sm:$0xff]
    %v7487 = vld [vmem:[%s7482 + $0x20] sm:$0xff]
    %v7488 = vld [vmem:[%s7482 + $0x28] sm:$0xff]
    %v7489 = vld [vmem:[%s7482 + $0x30] sm:$0xff]
    %v7490 = vld [vmem:[%s7482 + $0x38] sm:$0xff]
    %v7491 = vld [vmem:[%s7482 + $0x40] sm:$0xff]
    %v7492 = vld [vmem:[%s7482 + $0x48] sm:$0xff]
    %v7493 = vld [vmem:[%s7482 + $0x50] sm:$0xff]
    %v7494 = vld [vmem:[%s7482 + $0x58] sm:$0xff]
    %v7495 = vld [vmem:[%s7482 + $0x60] sm:$0xff]
    %v7496 = vld [vmem:[%s7482 + $0x68] sm:$0xff]
    %v7497 = vld [vmem:[%s7482 + $0x70] sm:$0xff]
    %v7498 = vld [vmem:[%s7482 + $0x78] sm:$0xff]
    %v7499 = vld [vmem:[%s7482 + $0x80] sm:$0xff]
    %v7500 = vld [vmem:[%s7482 + $0x88] sm:$0xff]
    %v7501 = vld [vmem:[%s7482 + $0x90] sm:$0xff]
    %v7502 = vld [vmem:[%s7482 + $0x98] sm:$0xff]
    %v7523 = vunpack.c.l.b16 %v7483
    %v7524 = vunpack.c.h.b16 %v7483
    %v7525 = vunpack.c.l.b16 %v7484
    %v7526 = vunpack.c.h.b16 %v7484
    %v7527 = vunpack.c.l.b16 %v7485
    %v7528 = vunpack.c.h.b16 %v7485
    %v7529 = vunpack.c.l.b16 %v7486
    %v7530 = vunpack.c.h.b16 %v7486
    %v7531 = vunpack.c.l.b16 %v7487
    %v7532 = vunpack.c.h.b16 %v7487
    %v7533 = vunpack.c.l.b16 %v7488
    %v7534 = vunpack.c.h.b16 %v7488
    %v7535 = vunpack.c.l.b16 %v7489
    %v7536 = vunpack.c.h.b16 %v7489
    %v7537 = vunpack.c.l.b16 %v7490
    %v7538 = vunpack.c.h.b16 %v7490
    %v7539 = vunpack.c.l.b16 %v7491
    %v7540 = vunpack.c.h.b16 %v7491
    %v7541 = vunpack.c.l.b16 %v7492
    %v7542 = vunpack.c.h.b16 %v7492
    %v7543 = vunpack.c.l.b16 %v7493
    %v7544 = vunpack.c.h.b16 %v7493
    %v7545 = vunpack.c.l.b16 %v7494
    %v7546 = vunpack.c.h.b16 %v7494
    %v7547 = vunpack.c.l.b16 %v7495
    %v7548 = vunpack.c.h.b16 %v7495
    %v7549 = vunpack.c.l.b16 %v7496
    %v7550 = vunpack.c.h.b16 %v7496
    %v7551 = vunpack.c.l.b16 %v7497
    %v7552 = vunpack.c.h.b16 %v7497
    %v7553 = vunpack.c.l.b16 %v7498
    %v7554 = vunpack.c.h.b16 %v7498
    %v7555 = vunpack.c.l.b16 %v7499
    %v7556 = vunpack.c.h.b16 %v7499
    %v7557 = vunpack.c.l.b16 %v7500
    %v7558 = vunpack.c.h.b16 %v7500
    %v7559 = vunpack.c.l.b16 %v7501
    %v7560 = vunpack.c.h.b16 %v7501
    %v7561 = vunpack.c.l.b16 %v7502
    %v7562 = vunpack.c.h.b16 %v7502
    %v7563 = vpack.c.b16 %v7525, %v7523
    %v7564 = vpack.c.b16 %v7526, %v7524
    %v7565 = vpack.c.b16 %v7529, %v7527
    %v7566 = vpack.c.b16 %v7530, %v7528
    %v7567 = vpack.c.b16 %v7533, %v7531
    %v7568 = vpack.c.b16 %v7534, %v7532
    %v7569 = vpack.c.b16 %v7537, %v7535
    %v7570 = vpack.c.b16 %v7538, %v7536
    %v7571 = vpack.c.b16 %v7541, %v7539
    %v7572 = vpack.c.b16 %v7542, %v7540
    %v7573 = vpack.c.b16 %v7545, %v7543
    %v7574 = vpack.c.b16 %v7546, %v7544
    %v7575 = vpack.c.b16 %v7549, %v7547
    %v7576 = vpack.c.b16 %v7550, %v7548
    %v7577 = vpack.c.b16 %v7553, %v7551
    %v7578 = vpack.c.b16 %v7554, %v7552
    %v7579 = vpack.c.b16 %v7557, %v7555
    %v7580 = vpack.c.b16 %v7558, %v7556
    %v7581 = vpack.c.b16 %v7561, %v7559
    %v7582 = vpack.c.b16 %v7562, %v7560
    %v7604 = vsel %vm187, %v7463, 0
    %v7607 = vsel %vm187, %v7465, 0
    %v7610 = vsel %vm187, %v7467, 0
    %v7613 = vsel %vm187, %v7469, 0
    %v7616 = vsel %vm187, %v7471, 0
    %v7619 = vsel %vm187, %v7473, 0
    %v7622 = vsel %vm187, %v7475, 0
    %v7625 = vsel %vm187, %v7477, 0
    %v7628 = vsel %vm187, %v7479, 0
    %v7631 = vsel %vm187, %v7481, 0
    %7633 = vmatprep.subr.bf16.mxu0 %v7564
    %7634 = vmatpush1.bf16.msra.mxu0 %v7563
    %7635 = vmatprep.subr.bf16.mxu0 %v7566
    %7636 = vmatpush1.bf16.msra.mxu0 %v7565
    %7637 = vmatprep.subr.bf16.mxu0 %v7568
    %7638 = vmatpush1.bf16.msra.mxu0 %v7567
    %7639 = vmatprep.subr.bf16.mxu0 %v7570
    %7640 = vmatpush1.bf16.msra.mxu0 %v7569
    %7641 = vmatprep.subr.bf16.mxu0 %v7572
    %7642 = vmatpush1.bf16.msra.mxu0 %v7571
    %7643 = vmatprep.subr.bf16.mxu0 %v7574
    %7644 = vmatpush1.bf16.msra.mxu0 %v7573
    %7645 = vmatprep.subr.bf16.mxu0 %v7576
    %7646 = vmatpush1.bf16.msra.mxu0 %v7575
    %7647 = vmatprep.subr.bf16.mxu0 %v7578
    %7648 = vmatpush1.bf16.msra.mxu0 %v7577
    %7649 = vmatprep.subr.bf16.mxu0 %v7580
    %7650 = vmatpush1.bf16.msra.mxu0 %v7579
    %7651 = vmatprep.subr.bf16.mxu0 %v7582
    %7652 = vmatpush1.bf16.msra.mxu0 %v7581
    %7653 = vmatprep.subr.bf16.mxu0 0
    %7654 = vmatpush1.bf16.msra.mxu0 0
    %7655 = vmatprep.subr.bf16.mxu0 0
    %7656 = vmatpush1.bf16.msra.mxu0 0
    %7657 = vmatprep.subr.bf16.mxu0 0
    %7658 = vmatpush1.bf16.msra.mxu0 0
    %7659 = vmatprep.subr.bf16.mxu0 0
    %7660 = vmatpush1.bf16.msra.mxu0 0
    %7661 = vmatprep.subr.bf16.mxu0 0
    %7662 = vmatpush1.bf16.msra.mxu0 0
    %7663 = vmatprep.subr.bf16.mxu0 0
    %7664 = vmatpush1.bf16.msra.mxu0 0
    %7665 = vmatprep.mubr.bf16.mxu0 %v7604
    %7666 = vmatmul.mubr.bf16.gmra.mrb[0].mxu0 %v7462
    %v7667 = vpop.f32.mrb[0].mxu0
    %v7668 = vadd.f32 0.0, %v7667
    %v7669 = vpop.f32.mrb[0].mxu0
    %v7670 = vadd.f32 0.0, %v7669
    %v7671 = vpop.f32.mrb[0].mxu0
    %v7672 = vadd.f32 0.0, %v7671
    %v7673 = vpop.f32.mrb[0].mxu0
    %v7674 = vadd.f32 0.0, %v7673
    %7675 = vmatprep.mubr.bf16.mxu0 %v7607
    %7676 = vmatmul.mubr.bf16.gmra.mrb[0].mxu0 %v7464
    %v7677 = vpop.f32.mrb[0].mxu0
    %v7678 = vadd.f32 0.0, %v7677
    %v7679 = vpop.f32.mrb[0].mxu0
    %v7680 = vadd.f32 0.0, %v7679
    %v7681 = vpop.f32.mrb[0].mxu0
    %v7682 = vadd.f32 0.0, %v7681
    %v7683 = vpop.f32.mrb[0].mxu0
    %v7684 = vadd.f32 0.0, %v7683
    %7685 = vmatprep.mubr.bf16.mxu0 %v7610
    %7686 = vmatmul.mubr.bf16.gmra.mrb[0].mxu0 %v7466
    %v7687 = vpop.f32.mrb[0].mxu0
    %v7688 = vadd.f32 0.0, %v7687
    %v7689 = vpop.f32.mrb[0].mxu0
    %v7690 = vadd.f32 0.0, %v7689
    %v7691 = vpop.f32.mrb[0].mxu0
    %v7692 = vadd.f32 0.0, %v7691
    %v7693 = vpop.f32.mrb[0].mxu0
    %v7694 = vadd.f32 0.0, %v7693
    %7695 = vmatprep.mubr.bf16.mxu0 %v7613
    %7696 = vmatmul.mubr.bf16.gmra.mrb[0].mxu0 %v7468
    %v7697 = vpop.f32.mrb[0].mxu0
    %v7698 = vadd.f32 0.0, %v7697
    %v7699 = vpop.f32.mrb[0].mxu0
    %v7700 = vadd.f32 0.0, %v7699
    %v7701 = vpop.f32.mrb[0].mxu0
    %v7702 = vadd.f32 0.0, %v7701
    %v7703 = vpop.f32.mrb[0].mxu0
    %v7704 = vadd.f32 0.0, %v7703
    %7705 = vmatprep.mubr.bf16.mxu0 %v7616
    %7706 = vmatmul.mubr.bf16.gmra.mrb[0].mxu0 %v7470
    %v7707 = vpop.f32.mrb[0].mxu0
    %v7708 = vadd.f32 0.0, %v7707
    %v7709 = vpop.f32.mrb[0].mxu0
    %v7710 = vadd.f32 0.0, %v7709
    %v7711 = vpop.f32.mrb[0].mxu0
    %v7712 = vadd.f32 0.0, %v7711
    %v7713 = vpop.f32.mrb[0].mxu0
    %v7714 = vadd.f32 0.0, %v7713
    %7715 = vmatprep.mubr.bf16.mxu0 %v7619
    %7716 = vmatmul.mubr.bf16.gmra.mrb[0].mxu0 %v7472
    %v7717 = vpop.f32.mrb[0].mxu0
    %v7718 = vadd.f32 0.0, %v7717
    %v7719 = vpop.f32.mrb[0].mxu0
    %v7720 = vadd.f32 0.0, %v7719
    %v7721 = vpop.f32.mrb[0].mxu0
    %v7722 = vadd.f32 0.0, %v7721
    %v7723 = vpop.f32.mrb[0].mxu0
    %v7724 = vadd.f32 0.0, %v7723
    %7725 = vmatprep.mubr.bf16.mxu0 %v7622
    %7726 = vmatmul.mubr.bf16.gmra.mrb[0].mxu0 %v7474
    %v7727 = vpop.f32.mrb[0].mxu0
    %v7728 = vadd.f32 0.0, %v7727
    %v7729 = vpop.f32.mrb[0].mxu0
    %v7730 = vadd.f32 0.0, %v7729
    %v7731 = vpop.f32.mrb[0].mxu0
    %v7732 = vadd.f32 0.0, %v7731
    %v7733 = vpop.f32.mrb[0].mxu0
    %v7734 = vadd.f32 0.0, %v7733
    %7735 = vmatprep.mubr.bf16.mxu0 %v7625
    %7736 = vmatmul.mubr.bf16.gmra.mrb[0].mxu0 %v7476
    %v7737 = vpop.f32.mrb[0].mxu0
    %v7738 = vadd.f32 0.0, %v7737
    %v7739 = vpop.f32.mrb[0].mxu0
    %v7740 = vadd.f32 0.0, %v7739
    %v7741 = vpop.f32.mrb[0].mxu0
    %v7742 = vadd.f32 0.0, %v7741
    %v7743 = vpop.f32.mrb[0].mxu0
    %v7744 = vadd.f32 0.0, %v7743
    %7745 = vmatprep.mubr.bf16.mxu0 %v7628
    %7746 = vmatmul.mubr.bf16.gmra.mrb[0].mxu0 %v7478
    %v7747 = vpop.f32.mrb[0].mxu0
    %v7748 = vadd.f32 0.0, %v7747
    %v7749 = vpop.f32.mrb[0].mxu0
    %v7750 = vadd.f32 0.0, %v7749
    %v7751 = vpop.f32.mrb[0].mxu0
    %v7752 = vadd.f32 0.0, %v7751
    %v7753 = vpop.f32.mrb[0].mxu0
    %v7754 = vadd.f32 0.0, %v7753
    %7755 = vmatprep.mubr.bf16.mxu0 %v7631
    %7756 = vmatmul.mubr.bf16.gmra.mrb[0].mxu0 %v7480
    %v7757 = vpop.f32.mrb[0].mxu0
    %v7758 = vadd.f32 0.0, %v7757
    %v7759 = vpop.f32.mrb[0].mxu0
    %v7760 = vadd.f32 0.0, %v7759
    %v7761 = vpop.f32.mrb[0].mxu0
    %v7762 = vadd.f32 0.0, %v7761
    %v7763 = vpop.f32.mrb[0].mxu0
    %v7764 = vadd.f32 0.0, %v7763
    %7765 = vdwg.mxu0
    %v7786 = vunpack.c.l.b16 %v7442
    %v7787 = vunpack.c.h.b16 %v7442
    %v7788 = vunpack.c.l.b16 %v7443
    %v7789 = vunpack.c.h.b16 %v7443
    %v7790 = vunpack.c.l.b16 %v7444
    %v7791 = vunpack.c.h.b16 %v7444
    %v7792 = vunpack.c.l.b16 %v7445
    %v7793 = vunpack.c.h.b16 %v7445
    %v7794 = vunpack.c.l.b16 %v7446
    %v7795 = vunpack.c.h.b16 %v7446
    %v7796 = vunpack.c.l.b16 %v7447
    %v7797 = vunpack.c.h.b16 %v7447
    %v7798 = vunpack.c.l.b16 %v7448
    %v7799 = vunpack.c.h.b16 %v7448
    %v7800 = vunpack.c.l.b16 %v7449
    %v7801 = vunpack.c.h.b16 %v7449
    %v7802 = vunpack.c.l.b16 %v7450
    %v7803 = vunpack.c.h.b16 %v7450
    %v7804 = vunpack.c.l.b16 %v7451
    %v7805 = vunpack.c.h.b16 %v7451
    %v7806 = vunpack.c.l.b16 %v7452
    %v7807 = vunpack.c.h.b16 %v7452
    %v7808 = vunpack.c.l.b16 %v7453
    %v7809 = vunpack.c.h.b16 %v7453
    %v7810 = vunpack.c.l.b16 %v7454
    %v7811 = vunpack.c.h.b16 %v7454
    %v7812 = vunpack.c.l.b16 %v7455
    %v7813 = vunpack.c.h.b16 %v7455
    %v7814 = vunpack.c.l.b16 %v7456
    %v7815 = vunpack.c.h.b16 %v7456
    %v7816 = vunpack.c.l.b16 %v7457
    %v7817 = vunpack.c.h.b16 %v7457
    %v7818 = vunpack.c.l.b16 %v7458
    %v7819 = vunpack.c.h.b16 %v7458
    %v7820 = vunpack.c.l.b16 %v7459
    %v7821 = vunpack.c.h.b16 %v7459
    %v7822 = vunpack.c.l.b16 %v7460
    %v7823 = vunpack.c.h.b16 %v7460
    %v7824 = vunpack.c.l.b16 %v7461
    %v7825 = vunpack.c.h.b16 %v7461
    %v7826 = vpack.c.b16 %v7788, %v7786
    %v7827 = vpack.c.b16 %v7789, %v7787
    %v7828 = vpack.c.b16 %v7792, %v7790
    %v7829 = vpack.c.b16 %v7793, %v7791
    %v7830 = vpack.c.b16 %v7796, %v7794
    %v7831 = vpack.c.b16 %v7797, %v7795
    %v7832 = vpack.c.b16 %v7800, %v7798
    %v7833 = vpack.c.b16 %v7801, %v7799
    %v7834 = vpack.c.b16 %v7804, %v7802
    %v7835 = vpack.c.b16 %v7805, %v7803
    %v7836 = vpack.c.b16 %v7808, %v7806
    %v7837 = vpack.c.b16 %v7809, %v7807
    %v7838 = vpack.c.b16 %v7812, %v7810
    %v7839 = vpack.c.b16 %v7813, %v7811
    %v7840 = vpack.c.b16 %v7816, %v7814
    %v7841 = vpack.c.b16 %v7817, %v7815
    %v7842 = vpack.c.b16 %v7820, %v7818
    %v7843 = vpack.c.b16 %v7821, %v7819
    %v7844 = vpack.c.b16 %v7824, %v7822
    %v7845 = vpack.c.b16 %v7825, %v7823
    %v7867 = vsel %vm187, %v7423, 0
    %v7870 = vsel %vm187, %v7425, 0
    %v7873 = vsel %vm187, %v7427, 0
    %v7876 = vsel %vm187, %v7429, 0
    %v7879 = vsel %vm187, %v7431, 0
    %v7882 = vsel %vm187, %v7433, 0
    %v7885 = vsel %vm187, %v7435, 0
    %v7888 = vsel %vm187, %v7437, 0
    %v7891 = vsel %vm187, %v7439, 0
    %v7894 = vsel %vm187, %v7441, 0
    %7896 = vmatprep.subr.bf16.mxu0 %v7827
    %7897 = vmatpush1.bf16.msra.mxu0 %v7826
    %7898 = vmatprep.subr.bf16.mxu0 %v7829
    %7899 = vmatpush1.bf16.msra.mxu0 %v7828
    %7900 = vmatprep.subr.bf16.mxu0 %v7831
    %7901 = vmatpush1.bf16.msra.mxu0 %v7830
    %7902 = vmatprep.subr.bf16.mxu0 %v7833
    %7903 = vmatpush1.bf16.msra.mxu0 %v7832
    %7904 = vmatprep.subr.bf16.mxu0 %v7835
    %7905 = vmatpush1.bf16.msra.mxu0 %v7834
    %7906 = vmatprep.subr.bf16.mxu0 %v7837
    %7907 = vmatpush1.bf16.msra.mxu0 %v7836
    %7908 = vmatprep.subr.bf16.mxu0 %v7839
    %7909 = vmatpush1.bf16.msra.mxu0 %v7838
    %7910 = vmatprep.subr.bf16.mxu0 %v7841
    %7911 = vmatpush1.bf16.msra.mxu0 %v7840
    %7912 = vmatprep.subr.bf16.mxu0 %v7843
    %7913 = vmatpush1.bf16.msra.mxu0 %v7842
    %7914 = vmatprep.subr.bf16.mxu0 %v7845
    %7915 = vmatpush1.bf16.msra.mxu0 %v7844
    %7916 = vmatprep.subr.bf16.mxu0 0
    %7917 = vmatpush1.bf16.msra.mxu0 0
    %7918 = vmatprep.subr.bf16.mxu0 0
    %7919 = vmatpush1.bf16.msra.mxu0 0
    %7920 = vmatprep.subr.bf16.mxu0 0
    %7921 = vmatpush1.bf16.msra.mxu0 0
    %7922 = vmatprep.subr.bf16.mxu0 0
    %7923 = vmatpush1.bf16.msra.mxu0 0
    %7924 = vmatprep.subr.bf16.mxu0 0
    %7925 = vmatpush1.bf16.msra.mxu0 0
    %7926 = vmatprep.subr.bf16.mxu0 0
    %7927 = vmatpush1.bf16.msra.mxu0 0
    %7928 = vmatprep.mubr.bf16.mxu0 %v7867
    %7929 = vmatmul.mubr.bf16.gmra.mrb[0].mxu0 %v7422
    %v7930 = vpop.f32.mrb[0].mxu0
    %v7931 = vadd.f32 %v7668, %v7930
    %v7932 = vpop.f32.mrb[0].mxu0
    %v7933 = vadd.f32 %v7670, %v7932
    %v7934 = vpop.f32.mrb[0].mxu0
    %v7935 = vadd.f32 %v7672, %v7934
    %v7936 = vpop.f32.mrb[0].mxu0
    %v7937 = vadd.f32 %v7674, %v7936
    %7938 = vmatprep.mubr.bf16.mxu0 %v7870
    %7939 = vmatmul.mubr.bf16.gmra.mrb[0].mxu0 %v7424
    %v7940 = vpop.f32.mrb[0].mxu0
    %v7941 = vadd.f32 %v7678, %v7940
    %v7942 = vpop.f32.mrb[0].mxu0
    %v7943 = vadd.f32 %v7680, %v7942
    %v7944 = vpop.f32.mrb[0].mxu0
    %v7945 = vadd.f32 %v7682, %v7944
    %v7946 = vpop.f32.mrb[0].mxu0
    %v7947 = vadd.f32 %v7684, %v7946
    %7948 = vmatprep.mubr.bf16.mxu0 %v7873
    %7949 = vmatmul.mubr.bf16.gmra.mrb[0].mxu0 %v7426
    %v7950 = vpop.f32.mrb[0].mxu0
    %v7951 = vadd.f32 %v7688, %v7950
    %v7952 = vpop.f32.mrb[0].mxu0
    %v7953 = vadd.f32 %v7690, %v7952
    %v7954 = vpop.f32.mrb[0].mxu0
    %v7955 = vadd.f32 %v7692, %v7954
    %v7956 = vpop.f32.mrb[0].mxu0
    %v7957 = vadd.f32 %v7694, %v7956
    %7958 = vmatprep.mubr.bf16.mxu0 %v7876
    %7959 = vmatmul.mubr.bf16.gmra.mrb[0].mxu0 %v7428
    %v7960 = vpop.f32.mrb[0].mxu0
    %v7961 = vadd.f32 %v7698, %v7960
    %v7962 = vpop.f32.mrb[0].mxu0
    %v7963 = vadd.f32 %v7700, %v7962
    %v7964 = vpop.f32.mrb[0].mxu0
    %v7965 = vadd.f32 %v7702, %v7964
    %v7966 = vpop.f32.mrb[0].mxu0
    %v7967 = vadd.f32 %v7704, %v7966
    %7968 = vmatprep.mubr.bf16.mxu0 %v7879
    %7969 = vmatmul.mubr.bf16.gmra.mrb[0].mxu0 %v7430
    %v7970 = vpop.f32.mrb[0].mxu0
    %v7971 = vadd.f32 %v7708, %v7970
    %v7972 = vpop.f32.mrb[0].mxu0
    %v7973 = vadd.f32 %v7710, %v7972
    %v7974 = vpop.f32.mrb[0].mxu0
    %v7975 = vadd.f32 %v7712, %v7974
    %v7976 = vpop.f32.mrb[0].mxu0
    %v7977 = vadd.f32 %v7714, %v7976
    %7978 = vmatprep.mubr.bf16.mxu0 %v7882
    %7979 = vmatmul.mubr.bf16.gmra.mrb[0].mxu0 %v7432
    %v7980 = vpop.f32.mrb[0].mxu0
    %v7981 = vadd.f32 %v7718, %v7980
    %v7982 = vpop.f32.mrb[0].mxu0
    %v7983 = vadd.f32 %v7720, %v7982
    %v7984 = vpop.f32.mrb[0].mxu0
    %v7985 = vadd.f32 %v7722, %v7984
    %v7986 = vpop.f32.mrb[0].mxu0
    %v7987 = vadd.f32 %v7724, %v7986
    %7988 = vmatprep.mubr.bf16.mxu0 %v7885
    %7989 = vmatmul.mubr.bf16.gmra.mrb[0].mxu0 %v7434
    %v7990 = vpop.f32.mrb[0].mxu0
    %v7991 = vadd.f32 %v7728, %v7990
    %v7992 = vpop.f32.mrb[0].mxu0
    %v7993 = vadd.f32 %v7730, %v7992
    %v7994 = vpop.f32.mrb[0].mxu0
    %v7995 = vadd.f32 %v7732, %v7994
    %v7996 = vpop.f32.mrb[0].mxu0
    %v7997 = vadd.f32 %v7734, %v7996
    %7998 = vmatprep.mubr.bf16.mxu0 %v7888
    %7999 = vmatmul.mubr.bf16.gmra.mrb[0].mxu0 %v7436
    %v8000 = vpop.f32.mrb[0].mxu0
    %v8001 = vadd.f32 %v7738, %v8000
    %v8002 = vpop.f32.mrb[0].mxu0
    %v8003 = vadd.f32 %v7740, %v8002
    %v8004 = vpop.f32.mrb[0].mxu0
    %v8005 = vadd.f32 %v7742, %v8004
    %v8006 = vpop.f32.mrb[0].mxu0
    %v8007 = vadd.f32 %v7744, %v8006
    %8008 = vmatprep.mubr.bf16.mxu0 %v7891
    %8009 = vmatmul.mubr.bf16.gmra.mrb[0].mxu0 %v7438
    %v8010 = vpop.f32.mrb[0].mxu0
    %v8011 = vadd.f32 %v7748, %v8010
    %v8012 = vpop.f32.mrb[0].mxu0
    %v8013 = vadd.f32 %v7750, %v8012
    %v8014 = vpop.f32.mrb[0].mxu0
    %v8015 = vadd.f32 %v7752, %v8014
    %v8016 = vpop.f32.mrb[0].mxu0
    %v8017 = vadd.f32 %v7754, %v8016
    %8018 = vmatprep.mubr.bf16.mxu0 %v7894
    %8019 = vmatmul.mubr.bf16.gmra.mrb[0].mxu0 %v7440
    %v8020 = vpop.f32.mrb[0].mxu0
    %v8021 = vadd.f32 %v7758, %v8020
    %v8022 = vpop.f32.mrb[0].mxu0
    %v8023 = vadd.f32 %v7760, %v8022
    %v8024 = vpop.f32.mrb[0].mxu0
    %v8025 = vadd.f32 %v7762, %v8024
    %v8026 = vpop.f32.mrb[0].mxu0
    %v8027 = vadd.f32 %v7764, %v8026
    %8028 = vdwg.mxu0
    %s8029 = scalar_lea.vmem [#allocation5], 32
    %v8030 = vld [vmem:[%s8029] sm:$0xff]
    %v8031 = vld [vmem:[%s8029 + $0x8] sm:$0xff]
    %v8032 = vld [vmem:[%s8029 + $0x20] sm:$0xff]
    %v8033 = vld [vmem:[%s8029 + $0x28] sm:$0xff]
    %v8034 = vld [vmem:[%s8029 + $0x40] sm:$0xff]
    %v8035 = vld [vmem:[%s8029 + $0x48] sm:$0xff]
    %v8036 = vld [vmem:[%s8029 + $0x60] sm:$0xff]
    %v8037 = vld [vmem:[%s8029 + $0x68] sm:$0xff]
    %v8038 = vld [vmem:[%s8029 + $0x80] sm:$0xff]
    %v8039 = vld [vmem:[%s8029 + $0x88] sm:$0xff]
    %v8040 = vld [vmem:[%s8029 + $0xa0] sm:$0xff]
    %v8041 = vld [vmem:[%s8029 + $0xa8] sm:$0xff]
    %v8042 = vld [vmem:[%s8029 + $0xc0] sm:$0xff]
    %v8043 = vld [vmem:[%s8029 + $0xc8] sm:$0xff]
    %v8044 = vld [vmem:[%s8029 + $0xe0] sm:$0xff]
    %v8045 = vld [vmem:[%s8029 + $0xe8] sm:$0xff]
    %v8046 = vld [vmem:[%s8029 + $0x100] sm:$0xff]
    %v8047 = vld [vmem:[%s8029 + $0x108] sm:$0xff]
    %v8048 = vld [vmem:[%s8029 + $0x120] sm:$0xff]
    %v8049 = vld [vmem:[%s8029 + $0x128] sm:$0xff]
    %s8050 = scalar_lea.vmem [#allocation12], 320
    %v8051 = vld [vmem:[%s8050] sm:$0xff]
    %v8052 = vld [vmem:[%s8050 + $0x8] sm:$0xff]
    %v8053 = vld [vmem:[%s8050 + $0x10] sm:$0xff]
    %v8054 = vld [vmem:[%s8050 + $0x18] sm:$0xff]
    %v8055 = vld [vmem:[%s8050 + $0x20] sm:$0xff]
    %v8056 = vld [vmem:[%s8050 + $0x28] sm:$0xff]
    %v8057 = vld [vmem:[%s8050 + $0x30] sm:$0xff]
    %v8058 = vld [vmem:[%s8050 + $0x38] sm:$0xff]
    %v8059 = vld [vmem:[%s8050 + $0x40] sm:$0xff]
    %v8060 = vld [vmem:[%s8050 + $0x48] sm:$0xff]
    %v8061 = vld [vmem:[%s8050 + $0x50] sm:$0xff]
    %v8062 = vld [vmem:[%s8050 + $0x58] sm:$0xff]
    %v8063 = vld [vmem:[%s8050 + $0x60] sm:$0xff]
    %v8064 = vld [vmem:[%s8050 + $0x68] sm:$0xff]
    %v8065 = vld [vmem:[%s8050 + $0x70] sm:$0xff]
    %v8066 = vld [vmem:[%s8050 + $0x78] sm:$0xff]
    %v8067 = vld [vmem:[%s8050 + $0x80] sm:$0xff]
    %v8068 = vld [vmem:[%s8050 + $0x88] sm:$0xff]
    %v8069 = vld [vmem:[%s8050 + $0x90] sm:$0xff]
    %v8070 = vld [vmem:[%s8050 + $0x98] sm:$0xff]
    %v8091 = vunpack.c.l.b16 %v8051
    %v8092 = vunpack.c.h.b16 %v8051
    %v8093 = vunpack.c.l.b16 %v8052
    %v8094 = vunpack.c.h.b16 %v8052
    %v8095 = vunpack.c.l.b16 %v8053
    %v8096 = vunpack.c.h.b16 %v8053
    %v8097 = vunpack.c.l.b16 %v8054
    %v8098 = vunpack.c.h.b16 %v8054
    %v8099 = vunpack.c.l.b16 %v8055
    %v8100 = vunpack.c.h.b16 %v8055
    %v8101 = vunpack.c.l.b16 %v8056
    %v8102 = vunpack.c.h.b16 %v8056
    %v8103 = vunpack.c.l.b16 %v8057
    %v8104 = vunpack.c.h.b16 %v8057
    %v8105 = vunpack.c.l.b16 %v8058
    %v8106 = vunpack.c.h.b16 %v8058
    %v8107 = vunpack.c.l.b16 %v8059
    %v8108 = vunpack.c.h.b16 %v8059
    %v8109 = vunpack.c.l.b16 %v8060
    %v8110 = vunpack.c.h.b16 %v8060
    %v8111 = vunpack.c.l.b16 %v8061
    %v8112 = vunpack.c.h.b16 %v8061
    %v8113 = vunpack.c.l.b16 %v8062
    %v8114 = vunpack.c.h.b16 %v8062
    %v8115 = vunpack.c.l.b16 %v8063
    %v8116 = vunpack.c.h.b16 %v8063
    %v8117 = vunpack.c.l.b16 %v8064
    %v8118 = vunpack.c.h.b16 %v8064
    %v8119 = vunpack.c.l.b16 %v8065
    %v8120 = vunpack.c.h.b16 %v8065
    %v8121 = vunpack.c.l.b16 %v8066
    %v8122 = vunpack.c.h.b16 %v8066
    %v8123 = vunpack.c.l.b16 %v8067
    %v8124 = vunpack.c.h.b16 %v8067
    %v8125 = vunpack.c.l.b16 %v8068
    %v8126 = vunpack.c.h.b16 %v8068
    %v8127 = vunpack.c.l.b16 %v8069
    %v8128 = vunpack.c.h.b16 %v8069
    %v8129 = vunpack.c.l.b16 %v8070
    %v8130 = vunpack.c.h.b16 %v8070
    %v8131 = vpack.c.b16 %v8093, %v8091
    %v8132 = vpack.c.b16 %v8094, %v8092
    %v8133 = vpack.c.b16 %v8097, %v8095
    %v8134 = vpack.c.b16 %v8098, %v8096
    %v8135 = vpack.c.b16 %v8101, %v8099
    %v8136 = vpack.c.b16 %v8102, %v8100
    %v8137 = vpack.c.b16 %v8105, %v8103
    %v8138 = vpack.c.b16 %v8106, %v8104
    %v8139 = vpack.c.b16 %v8109, %v8107
    %v8140 = vpack.c.b16 %v8110, %v8108
    %v8141 = vpack.c.b16 %v8113, %v8111
    %v8142 = vpack.c.b16 %v8114, %v8112
    %v8143 = vpack.c.b16 %v8117, %v8115
    %v8144 = vpack.c.b16 %v8118, %v8116
    %v8145 = vpack.c.b16 %v8121, %v8119
    %v8146 = vpack.c.b16 %v8122, %v8120
    %v8147 = vpack.c.b16 %v8125, %v8123
    %v8148 = vpack.c.b16 %v8126, %v8124
    %v8149 = vpack.c.b16 %v8129, %v8127
    %v8150 = vpack.c.b16 %v8130, %v8128
    %v8172 = vsel %vm187, %v8031, 0
    %v8175 = vsel %vm187, %v8033, 0
    %v8178 = vsel %vm187, %v8035, 0
    %v8181 = vsel %vm187, %v8037, 0
    %v8184 = vsel %vm187, %v8039, 0
    %v8187 = vsel %vm187, %v8041, 0
    %v8190 = vsel %vm187, %v8043, 0
    %v8193 = vsel %vm187, %v8045, 0
    %v8196 = vsel %vm187, %v8047, 0
    %v8199 = vsel %vm187, %v8049, 0
    %8201 = vmatprep.subr.bf16.mxu0 %v8132
    %8202 = vmatpush1.bf16.msra.mxu0 %v8131
    %8203 = vmatprep.subr.bf16.mxu0 %v8134
    %8204 = vmatpush1.bf16.msra.mxu0 %v8133
    %8205 = vmatprep.subr.bf16.mxu0 %v8136
    %8206 = vmatpush1.bf16.msra.mxu0 %v8135
    %8207 = vmatprep.subr.bf16.mxu0 %v8138
    %8208 = vmatpush1.bf16.msra.mxu0 %v8137
    %8209 = vmatprep.subr.bf16.mxu0 %v8140
    %8210 = vmatpush1.bf16.msra.mxu0 %v8139
    %8211 = vmatprep.subr.bf16.mxu0 %v8142
    %8212 = vmatpush1.bf16.msra.mxu0 %v8141
    %8213 = vmatprep.subr.bf16.mxu0 %v8144
    %8214 = vmatpush1.bf16.msra.mxu0 %v8143
    %8215 = vmatprep.subr.bf16.mxu0 %v8146
    %8216 = vmatpush1.bf16.msra.mxu0 %v8145
    %8217 = vmatprep.subr.bf16.mxu0 %v8148
    %8218 = vmatpush1.bf16.msra.mxu0 %v8147
    %8219 = vmatprep.subr.bf16.mxu0 %v8150
    %8220 = vmatpush1.bf16.msra.mxu0 %v8149
    %8221 = vmatprep.subr.bf16.mxu0 0
    %8222 = vmatpush1.bf16.msra.mxu0 0
    %8223 = vmatprep.subr.bf16.mxu0 0
    %8224 = vmatpush1.bf16.msra.mxu0 0
    %8225 = vmatprep.subr.bf16.mxu0 0
    %8226 = vmatpush1.bf16.msra.mxu0 0
    %8227 = vmatprep.subr.bf16.mxu0 0
    %8228 = vmatpush1.bf16.msra.mxu0 0
    %8229 = vmatprep.subr.bf16.mxu0 0
    %8230 = vmatpush1.bf16.msra.mxu0 0
    %8231 = vmatprep.subr.bf16.mxu0 0
    %8232 = vmatpush1.bf16.msra.mxu0 0
    %8233 = vmatprep.mubr.bf16.mxu0 %v8172
    %8234 = vmatmul.mubr.bf16.gmra.mrb[0].mxu0 %v8030
    %v8235 = vpop.f32.mrb[0].mxu0
    %v8236 = vadd.f32 0.0, %v8235
    %v8237 = vpop.f32.mrb[0].mxu0
    %v8238 = vadd.f32 0.0, %v8237
    %v8239 = vpop.f32.mrb[0].mxu0
    %v8240 = vadd.f32 0.0, %v8239
    %v8241 = vpop.f32.mrb[0].mxu0
    %v8242 = vadd.f32 0.0, %v8241
    %8243 = vmatprep.mubr.bf16.mxu0 %v8175
    %8244 = vmatmul.mubr.bf16.gmra.mrb[0].mxu0 %v8032
    %v8245 = vpop.f32.mrb[0].mxu0
    %v8246 = vadd.f32 0.0, %v8245
    %v8247 = vpop.f32.mrb[0].mxu0
    %v8248 = vadd.f32 0.0, %v8247
    %v8249 = vpop.f32.mrb[0].mxu0
    %v8250 = vadd.f32 0.0, %v8249
    %v8251 = vpop.f32.mrb[0].mxu0
    %v8252 = vadd.f32 0.0, %v8251
    %8253 = vmatprep.mubr.bf16.mxu0 %v8178
    %8254 = vmatmul.mubr.bf16.gmra.mrb[0].mxu0 %v8034
    %v8255 = vpop.f32.mrb[0].mxu0
    %v8256 = vadd.f32 0.0, %v8255
    %v8257 = vpop.f32.mrb[0].mxu0
    %v8258 = vadd.f32 0.0, %v8257
    %v8259 = vpop.f32.mrb[0].mxu0
    %v8260 = vadd.f32 0.0, %v8259
    %v8261 = vpop.f32.mrb[0].mxu0
    %v8262 = vadd.f32 0.0, %v8261
    %8263 = vmatprep.mubr.bf16.mxu0 %v8181
    %8264 = vmatmul.mubr.bf16.gmra.mrb[0].mxu0 %v8036
    %v8265 = vpop.f32.mrb[0].mxu0
    %v8266 = vadd.f32 0.0, %v8265
    %v8267 = vpop.f32.mrb[0].mxu0
    %v8268 = vadd.f32 0.0, %v8267
    %v8269 = vpop.f32.mrb[0].mxu0
    %v8270 = vadd.f32 0.0, %v8269
    %v8271 = vpop.f32.mrb[0].mxu0
    %v8272 = vadd.f32 0.0, %v8271
    %8273 = vmatprep.mubr.bf16.mxu0 %v8184
    %8274 = vmatmul.mubr.bf16.gmra.mrb[0].mxu0 %v8038
    %v8275 = vpop.f32.mrb[0].mxu0
    %v8276 = vadd.f32 0.0, %v8275
    %v8277 = vpop.f32.mrb[0].mxu0
    %v8278 = vadd.f32 0.0, %v8277
    %v8279 = vpop.f32.mrb[0].mxu0
    %v8280 = vadd.f32 0.0, %v8279
    %v8281 = vpop.f32.mrb[0].mxu0
    %v8282 = vadd.f32 0.0, %v8281
    %8283 = vmatprep.mubr.bf16.mxu0 %v8187
    %8284 = vmatmul.mubr.bf16.gmra.mrb[0].mxu0 %v8040
    %v8285 = vpop.f32.mrb[0].mxu0
    %v8286 = vadd.f32 0.0, %v8285
    %v8287 = vpop.f32.mrb[0].mxu0
    %v8288 = vadd.f32 0.0, %v8287
    %v8289 = vpop.f32.mrb[0].mxu0
    %v8290 = vadd.f32 0.0, %v8289
    %v8291 = vpop.f32.mrb[0].mxu0
    %v8292 = vadd.f32 0.0, %v8291
    %8293 = vmatprep.mubr.bf16.mxu0 %v8190
    %8294 = vmatmul.mubr.bf16.gmra.mrb[0].mxu0 %v8042
    %v8295 = vpop.f32.mrb[0].mxu0
    %v8296 = vadd.f32 0.0, %v8295
    %v8297 = vpop.f32.mrb[0].mxu0
    %v8298 = vadd.f32 0.0, %v8297
    %v8299 = vpop.f32.mrb[0].mxu0
    %v8300 = vadd.f32 0.0, %v8299
    %v8301 = vpop.f32.mrb[0].mxu0
    %v8302 = vadd.f32 0.0, %v8301
    %8303 = vmatprep.mubr.bf16.mxu0 %v8193
    %8304 = vmatmul.mubr.bf16.gmra.mrb[0].mxu0 %v8044
    %v8305 = vpop.f32.mrb[0].mxu0
    %v8306 = vadd.f32 0.0, %v8305
    %v8307 = vpop.f32.mrb[0].mxu0
    %v8308 = vadd.f32 0.0, %v8307
    %v8309 = vpop.f32.mrb[0].mxu0
    %v8310 = vadd.f32 0.0, %v8309
    %v8311 = vpop.f32.mrb[0].mxu0
    %v8312 = vadd.f32 0.0, %v8311
    %8313 = vmatprep.mubr.bf16.mxu0 %v8196
    %8314 = vmatmul.mubr.bf16.gmra.mrb[0].mxu0 %v8046
    %v8315 = vpop.f32.mrb[0].mxu0
    %v8316 = vadd.f32 0.0, %v8315
    %v8317 = vpop.f32.mrb[0].mxu0
    %v8318 = vadd.f32 0.0, %v8317
    %v8319 = vpop.f32.mrb[0].mxu0
    %v8320 = vadd.f32 0.0, %v8319
    %v8321 = vpop.f32.mrb[0].mxu0
    %v8322 = vadd.f32 0.0, %v8321
    %8323 = vmatprep.mubr.bf16.mxu0 %v8199
    %8324 = vmatmul.mubr.bf16.gmra.mrb[0].mxu0 %v8048
    %v8325 = vpop.f32.mrb[0].mxu0
    %v8326 = vadd.f32 0.0, %v8325
    %v8327 = vpop.f32.mrb[0].mxu0
    %v8328 = vadd.f32 0.0, %v8327
    %v8329 = vpop.f32.mrb[0].mxu0
    %v8330 = vadd.f32 0.0, %v8329
    %v8331 = vpop.f32.mrb[0].mxu0
    %v8332 = vadd.f32 0.0, %v8331
    %8333 = vdwg.mxu0
    %v8334 = vadd.f32 %v7931, %v8236
    %v8335 = vadd.f32 %v7933, %v8238
    %v8336 = vadd.f32 %v7935, %v8240
    %v8337 = vadd.f32 %v7937, %v8242
    %v8338 = vadd.f32 %v7941, %v8246
    %v8339 = vadd.f32 %v7943, %v8248
    %v8340 = vadd.f32 %v7945, %v8250
    %v8341 = vadd.f32 %v7947, %v8252
    %v8342 = vadd.f32 %v7951, %v8256
    %v8343 = vadd.f32 %v7953, %v8258
    %v8344 = vadd.f32 %v7955, %v8260
    %v8345 = vadd.f32 %v7957, %v8262
    %v8346 = vadd.f32 %v7961, %v8266
    %v8347 = vadd.f32 %v7963, %v8268
    %v8348 = vadd.f32 %v7965, %v8270
    %v8349 = vadd.f32 %v7967, %v8272
    %v8350 = vadd.f32 %v7971, %v8276
    %v8351 = vadd.f32 %v7973, %v8278
    %v8352 = vadd.f32 %v7975, %v8280
    %v8353 = vadd.f32 %v7977, %v8282
    %v8354 = vadd.f32 %v7981, %v8286
    %v8355 = vadd.f32 %v7983, %v8288
    %v8356 = vadd.f32 %v7985, %v8290
    %v8357 = vadd.f32 %v7987, %v8292
    %v8358 = vadd.f32 %v7991, %v8296
    %v8359 = vadd.f32 %v7993, %v8298
    %v8360 = vadd.f32 %v7995, %v8300
    %v8361 = vadd.f32 %v7997, %v8302
    %v8362 = vadd.f32 %v8001, %v8306
    %v8363 = vadd.f32 %v8003, %v8308
    %v8364 = vadd.f32 %v8005, %v8310
    %v8365 = vadd.f32 %v8007, %v8312
    %v8366 = vadd.f32 %v8011, %v8316
    %v8367 = vadd.f32 %v8013, %v8318
    %v8368 = vadd.f32 %v8015, %v8320
    %v8369 = vadd.f32 %v8017, %v8322
    %v8370 = vadd.f32 %v8021, %v8326
    %v8371 = vadd.f32 %v8023, %v8328
    %v8372 = vadd.f32 %v8025, %v8330
    %v8373 = vadd.f32 %v8027, %v8332
    %v8374 = vld [vmem:[#allocation13] sm:$0x3]
    %v8376 = vlaneseq
    %v8377 = vshrl.u32 %v8376, 7
    %v8378 = vsub.s32 0, %v8377
    %v8379 = vrot.slane %v8374, %v8378
    %v8380 = vlaneseq
    %v8381 = vshrl.u32 %v8380, 7
    %v8382 = vsub.s32 1, %v8381
    %v8383 = vrot.slane %v8374, %v8382
    %v8386 = vadd.f32 %v8334, %v8379
    %v8387 = vadd.f32 %v8335, %v8383
    %v8388 = vadd.f32 %v8336, %v8379
    %v8389 = vadd.f32 %v8337, %v8383
    %v8390 = vadd.f32 %v8338, %v8379
    %v8391 = vadd.f32 %v8339, %v8383
    %v8392 = vadd.f32 %v8340, %v8379
    %v8393 = vadd.f32 %v8341, %v8383
    %v8394 = vadd.f32 %v8342, %v8379
    %v8395 = vadd.f32 %v8343, %v8383
    %v8396 = vadd.f32 %v8344, %v8379
    %v8397 = vadd.f32 %v8345, %v8383
    %v8398 = vadd.f32 %v8346, %v8379
    %v8399 = vadd.f32 %v8347, %v8383
    %v8400 = vadd.f32 %v8348, %v8379
    %v8401 = vadd.f32 %v8349, %v8383
    %v8402 = vadd.f32 %v8350, %v8379
    %v8403 = vadd.f32 %v8351, %v8383
    %v8404 = vadd.f32 %v8352, %v8379
    %v8405 = vadd.f32 %v8353, %v8383
    %v8406 = vadd.f32 %v8354, %v8379
    %v8407 = vadd.f32 %v8355, %v8383
    %v8408 = vadd.f32 %v8356, %v8379
    %v8409 = vadd.f32 %v8357, %v8383
    %v8410 = vadd.f32 %v8358, %v8379
    %v8411 = vadd.f32 %v8359, %v8383
    %v8412 = vadd.f32 %v8360, %v8379
    %v8413 = vadd.f32 %v8361, %v8383
    %v8414 = vadd.f32 %v8362, %v8379
    %v8415 = vadd.f32 %v8363, %v8383
    %v8416 = vadd.f32 %v8364, %v8379
    %v8417 = vadd.f32 %v8365, %v8383
    %v8418 = vadd.f32 %v8366, %v8379
    %v8419 = vadd.f32 %v8367, %v8383
    %v8420 = vadd.f32 %v8368, %v8379
    %v8421 = vadd.f32 %v8369, %v8383
    %v8422 = vadd.f32 %v8370, %v8379
    %v8423 = vadd.f32 %v8371, %v8383
    %v8424 = vadd.f32 %v8372, %v8379
    %v8425 = vadd.f32 %v8373, %v8383
    %v8426 = vmax.f32 %v8386, 0.0
    %v8427 = vmax.f32 %v8387, 0.0
    %v8428 = vmax.f32 %v8388, 0.0
    %v8429 = vmax.f32 %v8389, 0.0
    %v8430 = vmax.f32 %v8390, 0.0
    %v8431 = vmax.f32 %v8391, 0.0
    %v8432 = vmax.f32 %v8392, 0.0
    %v8433 = vmax.f32 %v8393, 0.0
    %v8434 = vmax.f32 %v8394, 0.0
    %v8435 = vmax.f32 %v8395, 0.0
    %v8436 = vmax.f32 %v8396, 0.0
    %v8437 = vmax.f32 %v8397, 0.0
    %v8438 = vmax.f32 %v8398, 0.0
    %v8439 = vmax.f32 %v8399, 0.0
    %v8440 = vmax.f32 %v8400, 0.0
    %v8441 = vmax.f32 %v8401, 0.0
    %v8442 = vmax.f32 %v8402, 0.0
    %v8443 = vmax.f32 %v8403, 0.0
    %v8444 = vmax.f32 %v8404, 0.0
    %v8445 = vmax.f32 %v8405, 0.0
    %v8446 = vmax.f32 %v8406, 0.0
    %v8447 = vmax.f32 %v8407, 0.0
    %v8448 = vmax.f32 %v8408, 0.0
    %v8449 = vmax.f32 %v8409, 0.0
    %v8450 = vmax.f32 %v8410, 0.0
    %v8451 = vmax.f32 %v8411, 0.0
    %v8452 = vmax.f32 %v8412, 0.0
    %v8453 = vmax.f32 %v8413, 0.0
    %v8454 = vmax.f32 %v8414, 0.0
    %v8455 = vmax.f32 %v8415, 0.0
    %v8456 = vmax.f32 %v8416, 0.0
    %v8457 = vmax.f32 %v8417, 0.0
    %v8458 = vmax.f32 %v8418, 0.0
    %v8459 = vmax.f32 %v8419, 0.0
    %v8460 = vmax.f32 %v8420, 0.0
    %v8461 = vmax.f32 %v8421, 0.0
    %v8462 = vmax.f32 %v8422, 0.0
    %v8463 = vmax.f32 %v8423, 0.0
    %v8464 = vmax.f32 %v8424, 0.0
    %v8465 = vmax.f32 %v8425, 0.0
    %v8466 = vpack.c.bf16 %v8428, %v8426
    %v8467 = vpack.c.bf16 %v8429, %v8427
    %v8468 = vpack.c.bf16 %v8432, %v8430
    %v8469 = vpack.c.bf16 %v8433, %v8431
    %v8470 = vpack.c.bf16 %v8436, %v8434
    %v8471 = vpack.c.bf16 %v8437, %v8435
    %v8472 = vpack.c.bf16 %v8440, %v8438
    %v8473 = vpack.c.bf16 %v8441, %v8439
    %v8474 = vpack.c.bf16 %v8444, %v8442
    %v8475 = vpack.c.bf16 %v8445, %v8443
    %v8476 = vpack.c.bf16 %v8448, %v8446
    %v8477 = vpack.c.bf16 %v8449, %v8447
    %v8478 = vpack.c.bf16 %v8452, %v8450
    %v8479 = vpack.c.bf16 %v8453, %v8451
    %v8480 = vpack.c.bf16 %v8456, %v8454
    %v8481 = vpack.c.bf16 %v8457, %v8455
    %v8482 = vpack.c.bf16 %v8460, %v8458
    %v8483 = vpack.c.bf16 %v8461, %v8459
    %v8484 = vpack.c.bf16 %v8464, %v8462
    %v8485 = vpack.c.bf16 %v8465, %v8463
    %s8486 = scalar_lea.vmem [#allocation6], 16
    %8487 = vst [vmem:[%s8486] sm:$0xff] %v8466
    %8488 = vst.msk [vmem:[%s8486 + $0x8] sm:$0xff] %vm187, %v8467
    %8489 = vst [vmem:[%s8486 + $0x10] sm:$0xff] %v8468
    %8490 = vst.msk [vmem:[%s8486 + $0x18] sm:$0xff] %vm187, %v8469
    %8491 = vst [vmem:[%s8486 + $0x20] sm:$0xff] %v8470
    %8492 = vst.msk [vmem:[%s8486 + $0x28] sm:$0xff] %vm187, %v8471
    %8493 = vst [vmem:[%s8486 + $0x30] sm:$0xff] %v8472
    %8494 = vst.msk [vmem:[%s8486 + $0x38] sm:$0xff] %vm187, %v8473
    %8495 = vst [vmem:[%s8486 + $0x40] sm:$0xff] %v8474
    %8496 = vst.msk [vmem:[%s8486 + $0x48] sm:$0xff] %vm187, %v8475
    %8497 = vst [vmem:[%s8486 + $0x50] sm:$0xff] %v8476
    %8498 = vst.msk [vmem:[%s8486 + $0x58] sm:$0xff] %vm187, %v8477
    %8499 = vst [vmem:[%s8486 + $0x60] sm:$0xff] %v8478
    %8500 = vst.msk [vmem:[%s8486 + $0x68] sm:$0xff] %vm187, %v8479
    %8501 = vst [vmem:[%s8486 + $0x70] sm:$0xff] %v8480
    %8502 = vst.msk [vmem:[%s8486 + $0x78] sm:$0xff] %vm187, %v8481
    %8503 = vst [vmem:[%s8486 + $0x80] sm:$0xff] %v8482
    %8504 = vst.msk [vmem:[%s8486 + $0x88] sm:$0xff] %vm187, %v8483
    %8505 = vst [vmem:[%s8486 + $0x90] sm:$0xff] %v8484
    %8506 = vst.msk [vmem:[%s8486 + $0x98] sm:$0xff] %vm187, %v8485
    %v8507 = vld [vmem:[#allocation6] sm:$0xff]
    %v8508 = vld [vmem:[#allocation6 + $0x8] sm:$0xff]
    %v8509 = vld [vmem:[#allocation6 + $0x20] sm:$0xff]
    %v8510 = vld [vmem:[#allocation6 + $0x28] sm:$0xff]
    %v8511 = vld [vmem:[#allocation6 + $0x40] sm:$0xff]
    %v8512 = vld [vmem:[#allocation6 + $0x48] sm:$0xff]
    %v8513 = vld [vmem:[#allocation6 + $0x60] sm:$0xff]
    %v8514 = vld [vmem:[#allocation6 + $0x68] sm:$0xff]
    %v8515 = vld [vmem:[#allocation6 + $0x80] sm:$0xff]
    %v8516 = vld [vmem:[#allocation6 + $0x88] sm:$0xff]
    %v8517 = vld [vmem:[#allocation15] sm:$0xff]
    %v8518 = vld [vmem:[#allocation15 + $0x8] sm:$0xff]
    %v8519 = vld [vmem:[#allocation15 + $0x10] sm:$0xff]
    %v8520 = vld [vmem:[#allocation15 + $0x18] sm:$0xff]
    %v8521 = vld [vmem:[#allocation15 + $0x20] sm:$0xff]
    %v8522 = vld [vmem:[#allocation15 + $0x28] sm:$0xff]
    %v8523 = vld [vmem:[#allocation15 + $0x30] sm:$0xff]
    %v8524 = vld [vmem:[#allocation15 + $0x38] sm:$0xff]
    %v8525 = vld [vmem:[#allocation15 + $0x40] sm:$0xff]
    %v8526 = vld [vmem:[#allocation15 + $0x48] sm:$0xff]
    %v8527 = vld [vmem:[#allocation15 + $0x50] sm:$0xff]
    %v8528 = vld [vmem:[#allocation15 + $0x58] sm:$0xff]
    %v8529 = vld [vmem:[#allocation15 + $0x60] sm:$0xff]
    %v8530 = vld [vmem:[#allocation15 + $0x68] sm:$0xff]
    %v8531 = vld [vmem:[#allocation15 + $0x70] sm:$0xff]
    %v8532 = vld [vmem:[#allocation15 + $0x78] sm:$0xff]
    %v8533 = vld [vmem:[#allocation15 + $0x80] sm:$0xff]
    %v8534 = vld [vmem:[#allocation15 + $0x88] sm:$0xff]
    %v8535 = vld [vmem:[#allocation15 + $0x90] sm:$0xff]
    %v8536 = vld [vmem:[#allocation15 + $0x98] sm:$0xff]
    %v8537 = vld [vmem:[%s8486] sm:$0xff]
    %v8538 = vld [vmem:[%s8486 + $0x8] sm:$0xff]
    %v8539 = vld [vmem:[%s8486 + $0x20] sm:$0xff]
    %v8540 = vld [vmem:[%s8486 + $0x28] sm:$0xff]
    %v8541 = vld [vmem:[%s8486 + $0x40] sm:$0xff]
    %v8542 = vld [vmem:[%s8486 + $0x48] sm:$0xff]
    %v8543 = vld [vmem:[%s8486 + $0x60] sm:$0xff]
    %v8544 = vld [vmem:[%s8486 + $0x68] sm:$0xff]
    %v8545 = vld [vmem:[%s8486 + $0x80] sm:$0xff]
    %v8546 = vld [vmem:[%s8486 + $0x88] sm:$0xff]
    %s8547 = scalar_lea.vmem [#allocation15], 160
    %v8548 = vld [vmem:[%s8547] sm:$0xff]
    %v8549 = vld [vmem:[%s8547 + $0x8] sm:$0xff]
    %v8550 = vld [vmem:[%s8547 + $0x10] sm:$0xff]
    %v8551 = vld [vmem:[%s8547 + $0x18] sm:$0xff]
    %v8552 = vld [vmem:[%s8547 + $0x20] sm:$0xff]
    %v8553 = vld [vmem:[%s8547 + $0x28] sm:$0xff]
    %v8554 = vld [vmem:[%s8547 + $0x30] sm:$0xff]
    %v8555 = vld [vmem:[%s8547 + $0x38] sm:$0xff]
    %v8556 = vld [vmem:[%s8547 + $0x40] sm:$0xff]
    %v8557 = vld [vmem:[%s8547 + $0x48] sm:$0xff]
    %v8558 = vld [vmem:[%s8547 + $0x50] sm:$0xff]
    %v8559 = vld [vmem:[%s8547 + $0x58] sm:$0xff]
    %v8560 = vld [vmem:[%s8547 + $0x60] sm:$0xff]
    %v8561 = vld [vmem:[%s8547 + $0x68] sm:$0xff]
    %v8562 = vld [vmem:[%s8547 + $0x70] sm:$0xff]
    %v8563 = vld [vmem:[%s8547 + $0x78] sm:$0xff]
    %v8564 = vld [vmem:[%s8547 + $0x80] sm:$0xff]
    %v8565 = vld [vmem:[%s8547 + $0x88] sm:$0xff]
    %v8566 = vld [vmem:[%s8547 + $0x90] sm:$0xff]
    %v8567 = vld [vmem:[%s8547 + $0x98] sm:$0xff]
    %v8588 = vunpack.c.l.b16 %v8548
    %v8589 = vunpack.c.h.b16 %v8548
    %v8590 = vunpack.c.l.b16 %v8549
    %v8591 = vunpack.c.h.b16 %v8549
    %v8592 = vunpack.c.l.b16 %v8550
    %v8593 = vunpack.c.h.b16 %v8550
    %v8594 = vunpack.c.l.b16 %v8551
    %v8595 = vunpack.c.h.b16 %v8551
    %v8596 = vunpack.c.l.b16 %v8552
    %v8597 = vunpack.c.h.b16 %v8552
    %v8598 = vunpack.c.l.b16 %v8553
    %v8599 = vunpack.c.h.b16 %v8553
    %v8600 = vunpack.c.l.b16 %v8554
    %v8601 = vunpack.c.h.b16 %v8554
    %v8602 = vunpack.c.l.b16 %v8555
    %v8603 = vunpack.c.h.b16 %v8555
    %v8604 = vunpack.c.l.b16 %v8556
    %v8605 = vunpack.c.h.b16 %v8556
    %v8606 = vunpack.c.l.b16 %v8557
    %v8607 = vunpack.c.h.b16 %v8557
    %v8608 = vunpack.c.l.b16 %v8558
    %v8609 = vunpack.c.h.b16 %v8558
    %v8610 = vunpack.c.l.b16 %v8559
    %v8611 = vunpack.c.h.b16 %v8559
    %v8612 = vunpack.c.l.b16 %v8560
    %v8613 = vunpack.c.h.b16 %v8560
    %v8614 = vunpack.c.l.b16 %v8561
    %v8615 = vunpack.c.h.b16 %v8561
    %v8616 = vunpack.c.l.b16 %v8562
    %v8617 = vunpack.c.h.b16 %v8562
    %v8618 = vunpack.c.l.b16 %v8563
    %v8619 = vunpack.c.h.b16 %v8563
    %v8620 = vunpack.c.l.b16 %v8564
    %v8621 = vunpack.c.h.b16 %v8564
    %v8622 = vunpack.c.l.b16 %v8565
    %v8623 = vunpack.c.h.b16 %v8565
    %v8624 = vunpack.c.l.b16 %v8566
    %v8625 = vunpack.c.h.b16 %v8566
    %v8626 = vunpack.c.l.b16 %v8567
    %v8627 = vunpack.c.h.b16 %v8567
    %v8628 = vpack.c.b16 %v8590, %v8588
    %v8629 = vpack.c.b16 %v8591, %v8589
    %v8630 = vpack.c.b16 %v8594, %v8592
    %v8631 = vpack.c.b16 %v8595, %v8593
    %v8632 = vpack.c.b16 %v8598, %v8596
    %v8633 = vpack.c.b16 %v8599, %v8597
    %v8634 = vpack.c.b16 %v8602, %v8600
    %v8635 = vpack.c.b16 %v8603, %v8601
    %v8636 = vpack.c.b16 %v8606, %v8604
    %v8637 = vpack.c.b16 %v8607, %v8605
    %v8638 = vpack.c.b16 %v8610, %v8608
    %v8639 = vpack.c.b16 %v8611, %v8609
    %v8640 = vpack.c.b16 %v8614, %v8612
    %v8641 = vpack.c.b16 %v8615, %v8613
    %v8642 = vpack.c.b16 %v8618, %v8616
    %v8643 = vpack.c.b16 %v8619, %v8617
    %v8644 = vpack.c.b16 %v8622, %v8620
    %v8645 = vpack.c.b16 %v8623, %v8621
    %v8646 = vpack.c.b16 %v8626, %v8624
    %v8647 = vpack.c.b16 %v8627, %v8625
    %v8669 = vsel %vm187, %v8538, 0
    %v8672 = vsel %vm187, %v8540, 0
    %v8675 = vsel %vm187, %v8542, 0
    %v8678 = vsel %vm187, %v8544, 0
    %v8681 = vsel %vm187, %v8546, 0
    %8683 = vmatprep.subr.bf16.mxu0 %v8629
    %8684 = vmatpush1.bf16.msra.mxu0 %v8628
    %8685 = vmatprep.subr.bf16.mxu0 %v8631
    %8686 = vmatpush1.bf16.msra.mxu0 %v8630
    %8687 = vmatprep.subr.bf16.mxu0 %v8633
    %8688 = vmatpush1.bf16.msra.mxu0 %v8632
    %8689 = vmatprep.subr.bf16.mxu0 %v8635
    %8690 = vmatpush1.bf16.msra.mxu0 %v8634
    %8691 = vmatprep.subr.bf16.mxu0 %v8637
    %8692 = vmatpush1.bf16.msra.mxu0 %v8636
    %8693 = vmatprep.subr.bf16.mxu0 %v8639
    %8694 = vmatpush1.bf16.msra.mxu0 %v8638
    %8695 = vmatprep.subr.bf16.mxu0 %v8641
    %8696 = vmatpush1.bf16.msra.mxu0 %v8640
    %8697 = vmatprep.subr.bf16.mxu0 %v8643
    %8698 = vmatpush1.bf16.msra.mxu0 %v8642
    %8699 = vmatprep.subr.bf16.mxu0 %v8645
    %8700 = vmatpush1.bf16.msra.mxu0 %v8644
    %8701 = vmatprep.subr.bf16.mxu0 %v8647
    %8702 = vmatpush1.bf16.msra.mxu0 %v8646
    %8703 = vmatprep.subr.bf16.mxu0 0
    %8704 = vmatpush1.bf16.msra.mxu0 0
    %8705 = vmatprep.subr.bf16.mxu0 0
    %8706 = vmatpush1.bf16.msra.mxu0 0
    %8707 = vmatprep.subr.bf16.mxu0 0
    %8708 = vmatpush1.bf16.msra.mxu0 0
    %8709 = vmatprep.subr.bf16.mxu0 0
    %8710 = vmatpush1.bf16.msra.mxu0 0
    %8711 = vmatprep.subr.bf16.mxu0 0
    %8712 = vmatpush1.bf16.msra.mxu0 0
    %8713 = vmatprep.subr.bf16.mxu0 0
    %8714 = vmatpush1.bf16.msra.mxu0 0
    %8715 = vmatprep.mubr.bf16.mxu0 %v8669
    %8716 = vmatmul.mubr.bf16.gmra.mrb[0].mxu0 %v8537
    %v8717 = vpop.f32.mrb[0].mxu0
    %v8718 = vadd.f32 0.0, %v8717
    %v8719 = vpop.f32.mrb[0].mxu0
    %v8720 = vadd.f32 0.0, %v8719
    %v8721 = vpop.f32.mrb[0].mxu0
    %v8722 = vadd.f32 0.0, %v8721
    %v8723 = vpop.f32.mrb[0].mxu0
    %v8724 = vadd.f32 0.0, %v8723
    %8725 = vmatprep.mubr.bf16.mxu0 %v8672
    %8726 = vmatmul.mubr.bf16.gmra.mrb[0].mxu0 %v8539
    %v8727 = vpop.f32.mrb[0].mxu0
    %v8728 = vadd.f32 0.0, %v8727
    %v8729 = vpop.f32.mrb[0].mxu0
    %v8730 = vadd.f32 0.0, %v8729
    %v8731 = vpop.f32.mrb[0].mxu0
    %v8732 = vadd.f32 0.0, %v8731
    %v8733 = vpop.f32.mrb[0].mxu0
    %v8734 = vadd.f32 0.0, %v8733
    %8735 = vmatprep.mubr.bf16.mxu0 %v8675
    %8736 = vmatmul.mubr.bf16.gmra.mrb[0].mxu0 %v8541
    %v8737 = vpop.f32.mrb[0].mxu0
    %v8738 = vadd.f32 0.0, %v8737
    %v8739 = vpop.f32.mrb[0].mxu0
    %v8740 = vadd.f32 0.0, %v8739
    %v8741 = vpop.f32.mrb[0].mxu0
    %v8742 = vadd.f32 0.0, %v8741
    %v8743 = vpop.f32.mrb[0].mxu0
    %v8744 = vadd.f32 0.0, %v8743
    %8745 = vmatprep.mubr.bf16.mxu0 %v8678
    %8746 = vmatmul.mubr.bf16.gmra.mrb[0].mxu0 %v8543
    %v8747 = vpop.f32.mrb[0].mxu0
    %v8748 = vadd.f32 0.0, %v8747
    %v8749 = vpop.f32.mrb[0].mxu0
    %v8750 = vadd.f32 0.0, %v8749
    %v8751 = vpop.f32.mrb[0].mxu0
    %v8752 = vadd.f32 0.0, %v8751
    %v8753 = vpop.f32.mrb[0].mxu0
    %v8754 = vadd.f32 0.0, %v8753
    %8755 = vmatprep.mubr.bf16.mxu0 %v8681
    %8756 = vmatmul.mubr.bf16.gmra.mrb[0].mxu0 %v8545
    %v8757 = vpop.f32.mrb[0].mxu0
    %v8758 = vadd.f32 0.0, %v8757
    %v8759 = vpop.f32.mrb[0].mxu0
    %v8760 = vadd.f32 0.0, %v8759
    %v8761 = vpop.f32.mrb[0].mxu0
    %v8762 = vadd.f32 0.0, %v8761
    %v8763 = vpop.f32.mrb[0].mxu0
    %v8764 = vadd.f32 0.0, %v8763
    %8765 = vdwg.mxu0
    %v8786 = vunpack.c.l.b16 %v8517
    %v8787 = vunpack.c.h.b16 %v8517
    %v8788 = vunpack.c.l.b16 %v8518
    %v8789 = vunpack.c.h.b16 %v8518
    %v8790 = vunpack.c.l.b16 %v8519
    %v8791 = vunpack.c.h.b16 %v8519
    %v8792 = vunpack.c.l.b16 %v8520
    %v8793 = vunpack.c.h.b16 %v8520
    %v8794 = vunpack.c.l.b16 %v8521
    %v8795 = vunpack.c.h.b16 %v8521
    %v8796 = vunpack.c.l.b16 %v8522
    %v8797 = vunpack.c.h.b16 %v8522
    %v8798 = vunpack.c.l.b16 %v8523
    %v8799 = vunpack.c.h.b16 %v8523
    %v8800 = vunpack.c.l.b16 %v8524
    %v8801 = vunpack.c.h.b16 %v8524
    %v8802 = vunpack.c.l.b16 %v8525
    %v8803 = vunpack.c.h.b16 %v8525
    %v8804 = vunpack.c.l.b16 %v8526
    %v8805 = vunpack.c.h.b16 %v8526
    %v8806 = vunpack.c.l.b16 %v8527
    %v8807 = vunpack.c.h.b16 %v8527
    %v8808 = vunpack.c.l.b16 %v8528
    %v8809 = vunpack.c.h.b16 %v8528
    %v8810 = vunpack.c.l.b16 %v8529
    %v8811 = vunpack.c.h.b16 %v8529
    %v8812 = vunpack.c.l.b16 %v8530
    %v8813 = vunpack.c.h.b16 %v8530
    %v8814 = vunpack.c.l.b16 %v8531
    %v8815 = vunpack.c.h.b16 %v8531
    %v8816 = vunpack.c.l.b16 %v8532
    %v8817 = vunpack.c.h.b16 %v8532
    %v8818 = vunpack.c.l.b16 %v8533
    %v8819 = vunpack.c.h.b16 %v8533
    %v8820 = vunpack.c.l.b16 %v8534
    %v8821 = vunpack.c.h.b16 %v8534
    %v8822 = vunpack.c.l.b16 %v8535
    %v8823 = vunpack.c.h.b16 %v8535
    %v8824 = vunpack.c.l.b16 %v8536
    %v8825 = vunpack.c.h.b16 %v8536
    %v8826 = vpack.c.b16 %v8788, %v8786
    %v8827 = vpack.c.b16 %v8789, %v8787
    %v8828 = vpack.c.b16 %v8792, %v8790
    %v8829 = vpack.c.b16 %v8793, %v8791
    %v8830 = vpack.c.b16 %v8796, %v8794
    %v8831 = vpack.c.b16 %v8797, %v8795
    %v8832 = vpack.c.b16 %v8800, %v8798
    %v8833 = vpack.c.b16 %v8801, %v8799
    %v8834 = vpack.c.b16 %v8804, %v8802
    %v8835 = vpack.c.b16 %v8805, %v8803
    %v8836 = vpack.c.b16 %v8808, %v8806
    %v8837 = vpack.c.b16 %v8809, %v8807
    %v8838 = vpack.c.b16 %v8812, %v8810
    %v8839 = vpack.c.b16 %v8813, %v8811
    %v8840 = vpack.c.b16 %v8816, %v8814
    %v8841 = vpack.c.b16 %v8817, %v8815
    %v8842 = vpack.c.b16 %v8820, %v8818
    %v8843 = vpack.c.b16 %v8821, %v8819
    %v8844 = vpack.c.b16 %v8824, %v8822
    %v8845 = vpack.c.b16 %v8825, %v8823
    %v8867 = vsel %vm187, %v8508, 0
    %v8870 = vsel %vm187, %v8510, 0
    %v8873 = vsel %vm187, %v8512, 0
    %v8876 = vsel %vm187, %v8514, 0
    %v8879 = vsel %vm187, %v8516, 0
    %8881 = vmatprep.subr.bf16.mxu0 %v8827
    %8882 = vmatpush1.bf16.msra.mxu0 %v8826
    %8883 = vmatprep.subr.bf16.mxu0 %v8829
    %8884 = vmatpush1.bf16.msra.mxu0 %v8828
    %8885 = vmatprep.subr.bf16.mxu0 %v8831
    %8886 = vmatpush1.bf16.msra.mxu0 %v8830
    %8887 = vmatprep.subr.bf16.mxu0 %v8833
    %8888 = vmatpush1.bf16.msra.mxu0 %v8832
    %8889 = vmatprep.subr.bf16.mxu0 %v8835
    %8890 = vmatpush1.bf16.msra.mxu0 %v8834
    %8891 = vmatprep.subr.bf16.mxu0 %v8837
    %8892 = vmatpush1.bf16.msra.mxu0 %v8836
    %8893 = vmatprep.subr.bf16.mxu0 %v8839
    %8894 = vmatpush1.bf16.msra.mxu0 %v8838
    %8895 = vmatprep.subr.bf16.mxu0 %v8841
    %8896 = vmatpush1.bf16.msra.mxu0 %v8840
    %8897 = vmatprep.subr.bf16.mxu0 %v8843
    %8898 = vmatpush1.bf16.msra.mxu0 %v8842
    %8899 = vmatprep.subr.bf16.mxu0 %v8845
    %8900 = vmatpush1.bf16.msra.mxu0 %v8844
    %8901 = vmatprep.subr.bf16.mxu0 0
    %8902 = vmatpush1.bf16.msra.mxu0 0
    %8903 = vmatprep.subr.bf16.mxu0 0
    %8904 = vmatpush1.bf16.msra.mxu0 0
    %8905 = vmatprep.subr.bf16.mxu0 0
    %8906 = vmatpush1.bf16.msra.mxu0 0
    %8907 = vmatprep.subr.bf16.mxu0 0
    %8908 = vmatpush1.bf16.msra.mxu0 0
    %8909 = vmatprep.subr.bf16.mxu0 0
    %8910 = vmatpush1.bf16.msra.mxu0 0
    %8911 = vmatprep.subr.bf16.mxu0 0
    %8912 = vmatpush1.bf16.msra.mxu0 0
    %8913 = vmatprep.mubr.bf16.mxu0 %v8867
    %8914 = vmatmul.mubr.bf16.gmra.mrb[0].mxu0 %v8507
    %v8915 = vpop.f32.mrb[0].mxu0
    %v8916 = vadd.f32 %v8718, %v8915
    %v8917 = vpop.f32.mrb[0].mxu0
    %v8918 = vadd.f32 %v8720, %v8917
    %v8919 = vpop.f32.mrb[0].mxu0
    %v8920 = vadd.f32 %v8722, %v8919
    %v8921 = vpop.f32.mrb[0].mxu0
    %v8922 = vadd.f32 %v8724, %v8921
    %8923 = vmatprep.mubr.bf16.mxu0 %v8870
    %8924 = vmatmul.mubr.bf16.gmra.mrb[0].mxu0 %v8509
    %v8925 = vpop.f32.mrb[0].mxu0
    %v8926 = vadd.f32 %v8728, %v8925
    %v8927 = vpop.f32.mrb[0].mxu0
    %v8928 = vadd.f32 %v8730, %v8927
    %v8929 = vpop.f32.mrb[0].mxu0
    %v8930 = vadd.f32 %v8732, %v8929
    %v8931 = vpop.f32.mrb[0].mxu0
    %v8932 = vadd.f32 %v8734, %v8931
    %8933 = vmatprep.mubr.bf16.mxu0 %v8873
    %8934 = vmatmul.mubr.bf16.gmra.mrb[0].mxu0 %v8511
    %v8935 = vpop.f32.mrb[0].mxu0
    %v8936 = vadd.f32 %v8738, %v8935
    %v8937 = vpop.f32.mrb[0].mxu0
    %v8938 = vadd.f32 %v8740, %v8937
    %v8939 = vpop.f32.mrb[0].mxu0
    %v8940 = vadd.f32 %v8742, %v8939
    %v8941 = vpop.f32.mrb[0].mxu0
    %v8942 = vadd.f32 %v8744, %v8941
    %8943 = vmatprep.mubr.bf16.mxu0 %v8876
    %8944 = vmatmul.mubr.bf16.gmra.mrb[0].mxu0 %v8513
    %v8945 = vpop.f32.mrb[0].mxu0
    %v8946 = vadd.f32 %v8748, %v8945
    %v8947 = vpop.f32.mrb[0].mxu0
    %v8948 = vadd.f32 %v8750, %v8947
    %v8949 = vpop.f32.mrb[0].mxu0
    %v8950 = vadd.f32 %v8752, %v8949
    %v8951 = vpop.f32.mrb[0].mxu0
    %v8952 = vadd.f32 %v8754, %v8951
    %8953 = vmatprep.mubr.bf16.mxu0 %v8879
    %8954 = vmatmul.mubr.bf16.gmra.mrb[0].mxu0 %v8515
    %v8955 = vpop.f32.mrb[0].mxu0
    %v8956 = vadd.f32 %v8758, %v8955
    %v8957 = vpop.f32.mrb[0].mxu0
    %v8958 = vadd.f32 %v8760, %v8957
    %v8959 = vpop.f32.mrb[0].mxu0
    %v8960 = vadd.f32 %v8762, %v8959
    %v8961 = vpop.f32.mrb[0].mxu0
    %v8962 = vadd.f32 %v8764, %v8961
    %8963 = vdwg.mxu0
    %s8964 = scalar_lea.vmem [#allocation6], 32
    %v8965 = vld [vmem:[%s8964] sm:$0xff]
    %v8966 = vld [vmem:[%s8964 + $0x8] sm:$0xff]
    %v8967 = vld [vmem:[%s8964 + $0x20] sm:$0xff]
    %v8968 = vld [vmem:[%s8964 + $0x28] sm:$0xff]
    %v8969 = vld [vmem:[%s8964 + $0x40] sm:$0xff]
    %v8970 = vld [vmem:[%s8964 + $0x48] sm:$0xff]
    %v8971 = vld [vmem:[%s8964 + $0x60] sm:$0xff]
    %v8972 = vld [vmem:[%s8964 + $0x68] sm:$0xff]
    %v8973 = vld [vmem:[%s8964 + $0x80] sm:$0xff]
    %v8974 = vld [vmem:[%s8964 + $0x88] sm:$0xff]
    %s8975 = scalar_lea.vmem [#allocation15], 320
    %v8976 = vld [vmem:[%s8975] sm:$0xff]
    %v8977 = vld [vmem:[%s8975 + $0x8] sm:$0xff]
    %v8978 = vld [vmem:[%s8975 + $0x10] sm:$0xff]
    %v8979 = vld [vmem:[%s8975 + $0x18] sm:$0xff]
    %v8980 = vld [vmem:[%s8975 + $0x20] sm:$0xff]
    %v8981 = vld [vmem:[%s8975 + $0x28] sm:$0xff]
    %v8982 = vld [vmem:[%s8975 + $0x30] sm:$0xff]
    %v8983 = vld [vmem:[%s8975 + $0x38] sm:$0xff]
    %v8984 = vld [vmem:[%s8975 + $0x40] sm:$0xff]
    %v8985 = vld [vmem:[%s8975 + $0x48] sm:$0xff]
    %v8986 = vld [vmem:[%s8975 + $0x50] sm:$0xff]
    %v8987 = vld [vmem:[%s8975 + $0x58] sm:$0xff]
    %v8988 = vld [vmem:[%s8975 + $0x60] sm:$0xff]
    %v8989 = vld [vmem:[%s8975 + $0x68] sm:$0xff]
    %v8990 = vld [vmem:[%s8975 + $0x70] sm:$0xff]
    %v8991 = vld [vmem:[%s8975 + $0x78] sm:$0xff]
    %v8992 = vld [vmem:[%s8975 + $0x80] sm:$0xff]
    %v8993 = vld [vmem:[%s8975 + $0x88] sm:$0xff]
    %v8994 = vld [vmem:[%s8975 + $0x90] sm:$0xff]
    %v8995 = vld [vmem:[%s8975 + $0x98] sm:$0xff]
    %v9016 = vunpack.c.l.b16 %v8976
    %v9017 = vunpack.c.h.b16 %v8976
    %v9018 = vunpack.c.l.b16 %v8977
    %v9019 = vunpack.c.h.b16 %v8977
    %v9020 = vunpack.c.l.b16 %v8978
    %v9021 = vunpack.c.h.b16 %v8978
    %v9022 = vunpack.c.l.b16 %v8979
    %v9023 = vunpack.c.h.b16 %v8979
    %v9024 = vunpack.c.l.b16 %v8980
    %v9025 = vunpack.c.h.b16 %v8980
    %v9026 = vunpack.c.l.b16 %v8981
    %v9027 = vunpack.c.h.b16 %v8981
    %v9028 = vunpack.c.l.b16 %v8982
    %v9029 = vunpack.c.h.b16 %v8982
    %v9030 = vunpack.c.l.b16 %v8983
    %v9031 = vunpack.c.h.b16 %v8983
    %v9032 = vunpack.c.l.b16 %v8984
    %v9033 = vunpack.c.h.b16 %v8984
    %v9034 = vunpack.c.l.b16 %v8985
    %v9035 = vunpack.c.h.b16 %v8985
    %v9036 = vunpack.c.l.b16 %v8986
    %v9037 = vunpack.c.h.b16 %v8986
    %v9038 = vunpack.c.l.b16 %v8987
    %v9039 = vunpack.c.h.b16 %v8987
    %v9040 = vunpack.c.l.b16 %v8988
    %v9041 = vunpack.c.h.b16 %v8988
    %v9042 = vunpack.c.l.b16 %v8989
    %v9043 = vunpack.c.h.b16 %v8989
    %v9044 = vunpack.c.l.b16 %v8990
    %v9045 = vunpack.c.h.b16 %v8990
    %v9046 = vunpack.c.l.b16 %v8991
    %v9047 = vunpack.c.h.b16 %v8991
    %v9048 = vunpack.c.l.b16 %v8992
    %v9049 = vunpack.c.h.b16 %v8992
    %v9050 = vunpack.c.l.b16 %v8993
    %v9051 = vunpack.c.h.b16 %v8993
    %v9052 = vunpack.c.l.b16 %v8994
    %v9053 = vunpack.c.h.b16 %v8994
    %v9054 = vunpack.c.l.b16 %v8995
    %v9055 = vunpack.c.h.b16 %v8995
    %v9056 = vpack.c.b16 %v9018, %v9016
    %v9057 = vpack.c.b16 %v9019, %v9017
    %v9058 = vpack.c.b16 %v9022, %v9020
    %v9059 = vpack.c.b16 %v9023, %v9021
    %v9060 = vpack.c.b16 %v9026, %v9024
    %v9061 = vpack.c.b16 %v9027, %v9025
    %v9062 = vpack.c.b16 %v9030, %v9028
    %v9063 = vpack.c.b16 %v9031, %v9029
    %v9064 = vpack.c.b16 %v9034, %v9032
    %v9065 = vpack.c.b16 %v9035, %v9033
    %v9066 = vpack.c.b16 %v9038, %v9036
    %v9067 = vpack.c.b16 %v9039, %v9037
    %v9068 = vpack.c.b16 %v9042, %v9040
    %v9069 = vpack.c.b16 %v9043, %v9041
    %v9070 = vpack.c.b16 %v9046, %v9044
    %v9071 = vpack.c.b16 %v9047, %v9045
    %v9072 = vpack.c.b16 %v9050, %v9048
    %v9073 = vpack.c.b16 %v9051, %v9049
    %v9074 = vpack.c.b16 %v9054, %v9052
    %v9075 = vpack.c.b16 %v9055, %v9053
    %v9097 = vsel %vm187, %v8966, 0
    %v9100 = vsel %vm187, %v8968, 0
    %v9103 = vsel %vm187, %v8970, 0
    %v9106 = vsel %vm187, %v8972, 0
    %v9109 = vsel %vm187, %v8974, 0
    %9111 = vmatprep.subr.bf16.mxu0 %v9057
    %9112 = vmatpush1.bf16.msra.mxu0 %v9056
    %9113 = vmatprep.subr.bf16.mxu0 %v9059
    %9114 = vmatpush1.bf16.msra.mxu0 %v9058
    %9115 = vmatprep.subr.bf16.mxu0 %v9061
    %9116 = vmatpush1.bf16.msra.mxu0 %v9060
    %9117 = vmatprep.subr.bf16.mxu0 %v9063
    %9118 = vmatpush1.bf16.msra.mxu0 %v9062
    %9119 = vmatprep.subr.bf16.mxu0 %v9065
    %9120 = vmatpush1.bf16.msra.mxu0 %v9064
    %9121 = vmatprep.subr.bf16.mxu0 %v9067
    %9122 = vmatpush1.bf16.msra.mxu0 %v9066
    %9123 = vmatprep.subr.bf16.mxu0 %v9069
    %9124 = vmatpush1.bf16.msra.mxu0 %v9068
    %9125 = vmatprep.subr.bf16.mxu0 %v9071
    %9126 = vmatpush1.bf16.msra.mxu0 %v9070
    %9127 = vmatprep.subr.bf16.mxu0 %v9073
    %9128 = vmatpush1.bf16.msra.mxu0 %v9072
    %9129 = vmatprep.subr.bf16.mxu0 %v9075
    %9130 = vmatpush1.bf16.msra.mxu0 %v9074
    %9131 = vmatprep.subr.bf16.mxu0 0
    %9132 = vmatpush1.bf16.msra.mxu0 0
    %9133 = vmatprep.subr.bf16.mxu0 0
    %9134 = vmatpush1.bf16.msra.mxu0 0
    %9135 = vmatprep.subr.bf16.mxu0 0
    %9136 = vmatpush1.bf16.msra.mxu0 0
    %9137 = vmatprep.subr.bf16.mxu0 0
    %9138 = vmatpush1.bf16.msra.mxu0 0
    %9139 = vmatprep.subr.bf16.mxu0 0
    %9140 = vmatpush1.bf16.msra.mxu0 0
    %9141 = vmatprep.subr.bf16.mxu0 0
    %9142 = vmatpush1.bf16.msra.mxu0 0
    %9143 = vmatprep.mubr.bf16.mxu0 %v9097
    %9144 = vmatmul.mubr.bf16.gmra.mrb[0].mxu0 %v8965
    %v9145 = vpop.f32.mrb[0].mxu0
    %v9146 = vadd.f32 0.0, %v9145
    %v9147 = vpop.f32.mrb[0].mxu0
    %v9148 = vadd.f32 0.0, %v9147
    %v9149 = vpop.f32.mrb[0].mxu0
    %v9150 = vadd.f32 0.0, %v9149
    %v9151 = vpop.f32.mrb[0].mxu0
    %v9152 = vadd.f32 0.0, %v9151
    %9153 = vmatprep.mubr.bf16.mxu0 %v9100
    %9154 = vmatmul.mubr.bf16.gmra.mrb[0].mxu0 %v8967
    %v9155 = vpop.f32.mrb[0].mxu0
    %v9156 = vadd.f32 0.0, %v9155
    %v9157 = vpop.f32.mrb[0].mxu0
    %v9158 = vadd.f32 0.0, %v9157
    %v9159 = vpop.f32.mrb[0].mxu0
    %v9160 = vadd.f32 0.0, %v9159
    %v9161 = vpop.f32.mrb[0].mxu0
    %v9162 = vadd.f32 0.0, %v9161
    %9163 = vmatprep.mubr.bf16.mxu0 %v9103
    %9164 = vmatmul.mubr.bf16.gmra.mrb[0].mxu0 %v8969
    %v9165 = vpop.f32.mrb[0].mxu0
    %v9166 = vadd.f32 0.0, %v9165
    %v9167 = vpop.f32.mrb[0].mxu0
    %v9168 = vadd.f32 0.0, %v9167
    %v9169 = vpop.f32.mrb[0].mxu0
    %v9170 = vadd.f32 0.0, %v9169
    %v9171 = vpop.f32.mrb[0].mxu0
    %v9172 = vadd.f32 0.0, %v9171
    %9173 = vmatprep.mubr.bf16.mxu0 %v9106
    %9174 = vmatmul.mubr.bf16.gmra.mrb[0].mxu0 %v8971
    %v9175 = vpop.f32.mrb[0].mxu0
    %v9176 = vadd.f32 0.0, %v9175
    %v9177 = vpop.f32.mrb[0].mxu0
    %v9178 = vadd.f32 0.0, %v9177
    %v9179 = vpop.f32.mrb[0].mxu0
    %v9180 = vadd.f32 0.0, %v9179
    %v9181 = vpop.f32.mrb[0].mxu0
    %v9182 = vadd.f32 0.0, %v9181
    %9183 = vmatprep.mubr.bf16.mxu0 %v9109
    %9184 = vmatmul.mubr.bf16.gmra.mrb[0].mxu0 %v8973
    %v9185 = vpop.f32.mrb[0].mxu0
    %v9186 = vadd.f32 0.0, %v9185
    %v9187 = vpop.f32.mrb[0].mxu0
    %v9188 = vadd.f32 0.0, %v9187
    %v9189 = vpop.f32.mrb[0].mxu0
    %v9190 = vadd.f32 0.0, %v9189
    %v9191 = vpop.f32.mrb[0].mxu0
    %v9192 = vadd.f32 0.0, %v9191
    %9193 = vdwg.mxu0
    %v9194 = vadd.f32 %v8916, %v9146
    %v9195 = vadd.f32 %v8918, %v9148
    %v9196 = vadd.f32 %v8920, %v9150
    %v9197 = vadd.f32 %v8922, %v9152
    %v9198 = vadd.f32 %v8926, %v9156
    %v9199 = vadd.f32 %v8928, %v9158
    %v9200 = vadd.f32 %v8930, %v9160
    %v9201 = vadd.f32 %v8932, %v9162
    %v9202 = vadd.f32 %v8936, %v9166
    %v9203 = vadd.f32 %v8938, %v9168
    %v9204 = vadd.f32 %v8940, %v9170
    %v9205 = vadd.f32 %v8942, %v9172
    %v9206 = vadd.f32 %v8946, %v9176
    %v9207 = vadd.f32 %v8948, %v9178
    %v9208 = vadd.f32 %v8950, %v9180
    %v9209 = vadd.f32 %v8952, %v9182
    %v9210 = vadd.f32 %v8956, %v9186
    %v9211 = vadd.f32 %v8958, %v9188
    %v9212 = vadd.f32 %v8960, %v9190
    %v9213 = vadd.f32 %v8962, %v9192
    %v9214 = vld [vmem:[#allocation16] sm:$0x3]
    %v9216 = vlaneseq
    %v9217 = vshrl.u32 %v9216, 7
    %v9218 = vsub.s32 0, %v9217
    %v9219 = vrot.slane %v9214, %v9218
    %v9220 = vlaneseq
    %v9221 = vshrl.u32 %v9220, 7
    %v9222 = vsub.s32 1, %v9221
    %v9223 = vrot.slane %v9214, %v9222
    %v9226 = vadd.f32 %v9194, %v9219
    %v9227 = vadd.f32 %v9195, %v9223
    %v9228 = vadd.f32 %v9196, %v9219
    %v9229 = vadd.f32 %v9197, %v9223
    %v9230 = vadd.f32 %v9198, %v9219
    %v9231 = vadd.f32 %v9199, %v9223
    %v9232 = vadd.f32 %v9200, %v9219
    %v9233 = vadd.f32 %v9201, %v9223
    %v9234 = vadd.f32 %v9202, %v9219
    %v9235 = vadd.f32 %v9203, %v9223
    %v9236 = vadd.f32 %v9204, %v9219
    %v9237 = vadd.f32 %v9205, %v9223
    %v9238 = vadd.f32 %v9206, %v9219
    %v9239 = vadd.f32 %v9207, %v9223
    %v9240 = vadd.f32 %v9208, %v9219
    %v9241 = vadd.f32 %v9209, %v9223
    %v9242 = vadd.f32 %v9210, %v9219
    %v9243 = vadd.f32 %v9211, %v9223
    %v9244 = vadd.f32 %v9212, %v9219
    %v9245 = vadd.f32 %v9213, %v9223
    %v9246 = vmax.f32 %v9226, 0.0
    %v9247 = vmax.f32 %v9227, 0.0
    %v9248 = vmax.f32 %v9228, 0.0
    %v9249 = vmax.f32 %v9229, 0.0
    %v9250 = vmax.f32 %v9230, 0.0
    %v9251 = vmax.f32 %v9231, 0.0
    %v9252 = vmax.f32 %v9232, 0.0
    %v9253 = vmax.f32 %v9233, 0.0
    %v9254 = vmax.f32 %v9234, 0.0
    %v9255 = vmax.f32 %v9235, 0.0
    %v9256 = vmax.f32 %v9236, 0.0
    %v9257 = vmax.f32 %v9237, 0.0
    %v9258 = vmax.f32 %v9238, 0.0
    %v9259 = vmax.f32 %v9239, 0.0
    %v9260 = vmax.f32 %v9240, 0.0
    %v9261 = vmax.f32 %v9241, 0.0
    %v9262 = vmax.f32 %v9242, 0.0
    %v9263 = vmax.f32 %v9243, 0.0
    %v9264 = vmax.f32 %v9244, 0.0
    %v9265 = vmax.f32 %v9245, 0.0
    %v9266 = vpack.c.bf16 %v9248, %v9246
    %v9267 = vpack.c.bf16 %v9249, %v9247
    %v9268 = vpack.c.bf16 %v9252, %v9250
    %v9269 = vpack.c.bf16 %v9253, %v9251
    %v9270 = vpack.c.bf16 %v9256, %v9254
    %v9271 = vpack.c.bf16 %v9257, %v9255
    %v9272 = vpack.c.bf16 %v9260, %v9258
    %v9273 = vpack.c.bf16 %v9261, %v9259
    %v9274 = vpack.c.bf16 %v9264, %v9262
    %v9275 = vpack.c.bf16 %v9265, %v9263
    %s9276 = scalar_lea.vmem [#allocation7], 16
    %9277 = vst [vmem:[%s9276] sm:$0xff] %v9266
    %9278 = vst.msk [vmem:[%s9276 + $0x8] sm:$0xff] %vm187, %v9267
    %9279 = vst [vmem:[%s9276 + $0x10] sm:$0xff] %v9268
    %9280 = vst.msk [vmem:[%s9276 + $0x18] sm:$0xff] %vm187, %v9269
    %9281 = vst [vmem:[%s9276 + $0x20] sm:$0xff] %v9270
    %9282 = vst.msk [vmem:[%s9276 + $0x28] sm:$0xff] %vm187, %v9271
    %9283 = vst [vmem:[%s9276 + $0x30] sm:$0xff] %v9272
    %9284 = vst.msk [vmem:[%s9276 + $0x38] sm:$0xff] %vm187, %v9273
    %9285 = vst [vmem:[%s9276 + $0x40] sm:$0xff] %v9274
    %9286 = vst.msk [vmem:[%s9276 + $0x48] sm:$0xff] %vm187, %v9275
    %v9287 = vld [vmem:[#allocation7] sm:$0xff]
    %v9288 = vld [vmem:[#allocation7 + $0x8] sm:$0xff]
    %v9289 = vld [vmem:[#allocation7 + $0x20] sm:$0xff]
    %v9290 = vld [vmem:[#allocation7 + $0x28] sm:$0xff]
    %v9291 = vld [vmem:[#allocation7 + $0x40] sm:$0xff]
    %v9292 = vld [vmem:[#allocation7 + $0x48] sm:$0xff]
    %v9293 = vld [vmem:[#allocation18] sm:$0xff]
    %v9294 = vld [vmem:[#allocation18 + $0x8] sm:$0xff]
    %v9295 = vld [vmem:[#allocation18 + $0x10] sm:$0xff]
    %v9296 = vld [vmem:[#allocation18 + $0x18] sm:$0xff]
    %v9297 = vld [vmem:[#allocation18 + $0x20] sm:$0xff]
    %v9298 = vld [vmem:[#allocation18 + $0x28] sm:$0xff]
    %v9299 = vld [vmem:[#allocation18 + $0x30] sm:$0xff]
    %v9300 = vld [vmem:[#allocation18 + $0x38] sm:$0xff]
    %v9301 = vld [vmem:[#allocation18 + $0x40] sm:$0xff]
    %v9302 = vld [vmem:[#allocation18 + $0x48] sm:$0xff]
    %v9303 = vld [vmem:[#allocation18 + $0x50] sm:$0xff]
    %v9304 = vld [vmem:[#allocation18 + $0x58] sm:$0xff]
    %v9305 = vld [vmem:[#allocation18 + $0x60] sm:$0xff]
    %v9306 = vld [vmem:[#allocation18 + $0x68] sm:$0xff]
    %v9307 = vld [vmem:[#allocation18 + $0x70] sm:$0xff]
    %v9308 = vld [vmem:[#allocation18 + $0x78] sm:$0xff]
    %v9309 = vld [vmem:[#allocation18 + $0x80] sm:$0xff]
    %v9310 = vld [vmem:[#allocation18 + $0x88] sm:$0xff]
    %v9311 = vld [vmem:[#allocation18 + $0x90] sm:$0xff]
    %v9312 = vld [vmem:[#allocation18 + $0x98] sm:$0xff]
    %v9313 = vld [vmem:[%s9276] sm:$0xff]
    %v9314 = vld [vmem:[%s9276 + $0x8] sm:$0xff]
    %v9315 = vld [vmem:[%s9276 + $0x20] sm:$0xff]
    %v9316 = vld [vmem:[%s9276 + $0x28] sm:$0xff]
    %v9317 = vld [vmem:[%s9276 + $0x40] sm:$0xff]
    %v9318 = vld [vmem:[%s9276 + $0x48] sm:$0xff]
    %s9319 = scalar_lea.vmem [#allocation18], 160
    %v9320 = vld [vmem:[%s9319] sm:$0xff]
    %v9321 = vld [vmem:[%s9319 + $0x8] sm:$0xff]
    %v9322 = vld [vmem:[%s9319 + $0x10] sm:$0xff]
    %v9323 = vld [vmem:[%s9319 + $0x18] sm:$0xff]
    %v9324 = vld [vmem:[%s9319 + $0x20] sm:$0xff]
    %v9325 = vld [vmem:[%s9319 + $0x28] sm:$0xff]
    %v9326 = vld [vmem:[%s9319 + $0x30] sm:$0xff]
    %v9327 = vld [vmem:[%s9319 + $0x38] sm:$0xff]
    %v9328 = vld [vmem:[%s9319 + $0x40] sm:$0xff]
    %v9329 = vld [vmem:[%s9319 + $0x48] sm:$0xff]
    %v9330 = vld [vmem:[%s9319 + $0x50] sm:$0xff]
    %v9331 = vld [vmem:[%s9319 + $0x58] sm:$0xff]
    %v9332 = vld [vmem:[%s9319 + $0x60] sm:$0xff]
    %v9333 = vld [vmem:[%s9319 + $0x68] sm:$0xff]
    %v9334 = vld [vmem:[%s9319 + $0x70] sm:$0xff]
    %v9335 = vld [vmem:[%s9319 + $0x78] sm:$0xff]
    %v9336 = vld [vmem:[%s9319 + $0x80] sm:$0xff]
    %v9337 = vld [vmem:[%s9319 + $0x88] sm:$0xff]
    %v9338 = vld [vmem:[%s9319 + $0x90] sm:$0xff]
    %v9339 = vld [vmem:[%s9319 + $0x98] sm:$0xff]
    %v9360 = vunpack.c.l.b16 %v9320
    %v9361 = vunpack.c.h.b16 %v9320
    %v9362 = vunpack.c.l.b16 %v9321
    %v9363 = vunpack.c.h.b16 %v9321
    %v9364 = vunpack.c.l.b16 %v9322
    %v9365 = vunpack.c.h.b16 %v9322
    %v9366 = vunpack.c.l.b16 %v9323
    %v9367 = vunpack.c.h.b16 %v9323
    %v9368 = vunpack.c.l.b16 %v9324
    %v9369 = vunpack.c.h.b16 %v9324
    %v9370 = vunpack.c.l.b16 %v9325
    %v9371 = vunpack.c.h.b16 %v9325
    %v9372 = vunpack.c.l.b16 %v9326
    %v9373 = vunpack.c.h.b16 %v9326
    %v9374 = vunpack.c.l.b16 %v9327
    %v9375 = vunpack.c.h.b16 %v9327
    %v9376 = vunpack.c.l.b16 %v9328
    %v9377 = vunpack.c.h.b16 %v9328
    %v9378 = vunpack.c.l.b16 %v9329
    %v9379 = vunpack.c.h.b16 %v9329
    %v9380 = vunpack.c.l.b16 %v9330
    %v9381 = vunpack.c.h.b16 %v9330
    %v9382 = vunpack.c.l.b16 %v9331
    %v9383 = vunpack.c.h.b16 %v9331
    %v9384 = vunpack.c.l.b16 %v9332
    %v9385 = vunpack.c.h.b16 %v9332
    %v9386 = vunpack.c.l.b16 %v9333
    %v9387 = vunpack.c.h.b16 %v9333
    %v9388 = vunpack.c.l.b16 %v9334
    %v9389 = vunpack.c.h.b16 %v9334
    %v9390 = vunpack.c.l.b16 %v9335
    %v9391 = vunpack.c.h.b16 %v9335
    %v9392 = vunpack.c.l.b16 %v9336
    %v9393 = vunpack.c.h.b16 %v9336
    %v9394 = vunpack.c.l.b16 %v9337
    %v9395 = vunpack.c.h.b16 %v9337
    %v9396 = vunpack.c.l.b16 %v9338
    %v9397 = vunpack.c.h.b16 %v9338
    %v9398 = vunpack.c.l.b16 %v9339
    %v9399 = vunpack.c.h.b16 %v9339
    %v9400 = vpack.c.b16 %v9362, %v9360
    %v9401 = vpack.c.b16 %v9363, %v9361
    %v9402 = vpack.c.b16 %v9366, %v9364
    %v9403 = vpack.c.b16 %v9367, %v9365
    %v9404 = vpack.c.b16 %v9370, %v9368
    %v9405 = vpack.c.b16 %v9371, %v9369
    %v9406 = vpack.c.b16 %v9374, %v9372
    %v9407 = vpack.c.b16 %v9375, %v9373
    %v9408 = vpack.c.b16 %v9378, %v9376
    %v9409 = vpack.c.b16 %v9379, %v9377
    %v9410 = vpack.c.b16 %v9382, %v9380
    %v9411 = vpack.c.b16 %v9383, %v9381
    %v9412 = vpack.c.b16 %v9386, %v9384
    %v9413 = vpack.c.b16 %v9387, %v9385
    %v9414 = vpack.c.b16 %v9390, %v9388
    %v9415 = vpack.c.b16 %v9391, %v9389
    %v9416 = vpack.c.b16 %v9394, %v9392
    %v9417 = vpack.c.b16 %v9395, %v9393
    %v9418 = vpack.c.b16 %v9398, %v9396
    %v9419 = vpack.c.b16 %v9399, %v9397
    %v9441 = vsel %vm187, %v9314, 0
    %v9444 = vsel %vm187, %v9316, 0
    %v9447 = vsel %vm187, %v9318, 0
    %9449 = vmatprep.subr.bf16.mxu0 %v9401
    %9450 = vmatpush1.bf16.msra.mxu0 %v9400
    %9451 = vmatprep.subr.bf16.mxu0 %v9403
    %9452 = vmatpush1.bf16.msra.mxu0 %v9402
    %9453 = vmatprep.subr.bf16.mxu0 %v9405
    %9454 = vmatpush1.bf16.msra.mxu0 %v9404
    %9455 = vmatprep.subr.bf16.mxu0 %v9407
    %9456 = vmatpush1.bf16.msra.mxu0 %v9406
    %9457 = vmatprep.subr.bf16.mxu0 %v9409
    %9458 = vmatpush1.bf16.msra.mxu0 %v9408
    %9459 = vmatprep.subr.bf16.mxu0 %v9411
    %9460 = vmatpush1.bf16.msra.mxu0 %v9410
    %9461 = vmatprep.subr.bf16.mxu0 %v9413
    %9462 = vmatpush1.bf16.msra.mxu0 %v9412
    %9463 = vmatprep.subr.bf16.mxu0 %v9415
    %9464 = vmatpush1.bf16.msra.mxu0 %v9414
    %9465 = vmatprep.subr.bf16.mxu0 %v9417
    %9466 = vmatpush1.bf16.msra.mxu0 %v9416
    %9467 = vmatprep.subr.bf16.mxu0 %v9419
    %9468 = vmatpush1.bf16.msra.mxu0 %v9418
    %9469 = vmatprep.subr.bf16.mxu0 0
    %9470 = vmatpush1.bf16.msra.mxu0 0
    %9471 = vmatprep.subr.bf16.mxu0 0
    %9472 = vmatpush1.bf16.msra.mxu0 0
    %9473 = vmatprep.subr.bf16.mxu0 0
    %9474 = vmatpush1.bf16.msra.mxu0 0
    %9475 = vmatprep.subr.bf16.mxu0 0
    %9476 = vmatpush1.bf16.msra.mxu0 0
    %9477 = vmatprep.subr.bf16.mxu0 0
    %9478 = vmatpush1.bf16.msra.mxu0 0
    %9479 = vmatprep.subr.bf16.mxu0 0
    %9480 = vmatpush1.bf16.msra.mxu0 0
    %9481 = vmatprep.mubr.bf16.mxu0 %v9441
    %9482 = vmatmul.mubr.bf16.gmra.mrb[0].mxu0 %v9313
    %v9483 = vpop.f32.mrb[0].mxu0
    %v9484 = vadd.f32 0.0, %v9483
    %v9485 = vpop.f32.mrb[0].mxu0
    %v9486 = vadd.f32 0.0, %v9485
    %v9487 = vpop.f32.mrb[0].mxu0
    %v9488 = vadd.f32 0.0, %v9487
    %v9489 = vpop.f32.mrb[0].mxu0
    %v9490 = vadd.f32 0.0, %v9489
    %9491 = vmatprep.mubr.bf16.mxu0 %v9444
    %9492 = vmatmul.mubr.bf16.gmra.mrb[0].mxu0 %v9315
    %v9493 = vpop.f32.mrb[0].mxu0
    %v9494 = vadd.f32 0.0, %v9493
    %v9495 = vpop.f32.mrb[0].mxu0
    %v9496 = vadd.f32 0.0, %v9495
    %v9497 = vpop.f32.mrb[0].mxu0
    %v9498 = vadd.f32 0.0, %v9497
    %v9499 = vpop.f32.mrb[0].mxu0
    %v9500 = vadd.f32 0.0, %v9499
    %9501 = vmatprep.mubr.bf16.mxu0 %v9447
    %9502 = vmatmul.mubr.bf16.gmra.mrb[0].mxu0 %v9317
    %v9503 = vpop.f32.mrb[0].mxu0
    %v9504 = vadd.f32 0.0, %v9503
    %v9505 = vpop.f32.mrb[0].mxu0
    %v9506 = vadd.f32 0.0, %v9505
    %v9507 = vpop.f32.mrb[0].mxu0
    %v9508 = vadd.f32 0.0, %v9507
    %v9509 = vpop.f32.mrb[0].mxu0
    %v9510 = vadd.f32 0.0, %v9509
    %9511 = vdwg.mxu0
    %v9532 = vunpack.c.l.b16 %v9293
    %v9533 = vunpack.c.h.b16 %v9293
    %v9534 = vunpack.c.l.b16 %v9294
    %v9535 = vunpack.c.h.b16 %v9294
    %v9536 = vunpack.c.l.b16 %v9295
    %v9537 = vunpack.c.h.b16 %v9295
    %v9538 = vunpack.c.l.b16 %v9296
    %v9539 = vunpack.c.h.b16 %v9296
    %v9540 = vunpack.c.l.b16 %v9297
    %v9541 = vunpack.c.h.b16 %v9297
    %v9542 = vunpack.c.l.b16 %v9298
    %v9543 = vunpack.c.h.b16 %v9298
    %v9544 = vunpack.c.l.b16 %v9299
    %v9545 = vunpack.c.h.b16 %v9299
    %v9546 = vunpack.c.l.b16 %v9300
    %v9547 = vunpack.c.h.b16 %v9300
    %v9548 = vunpack.c.l.b16 %v9301
    %v9549 = vunpack.c.h.b16 %v9301
    %v9550 = vunpack.c.l.b16 %v9302
    %v9551 = vunpack.c.h.b16 %v9302
    %v9552 = vunpack.c.l.b16 %v9303
    %v9553 = vunpack.c.h.b16 %v9303
    %v9554 = vunpack.c.l.b16 %v9304
    %v9555 = vunpack.c.h.b16 %v9304
    %v9556 = vunpack.c.l.b16 %v9305
    %v9557 = vunpack.c.h.b16 %v9305
    %v9558 = vunpack.c.l.b16 %v9306
    %v9559 = vunpack.c.h.b16 %v9306
    %v9560 = vunpack.c.l.b16 %v9307
    %v9561 = vunpack.c.h.b16 %v9307
    %v9562 = vunpack.c.l.b16 %v9308
    %v9563 = vunpack.c.h.b16 %v9308
    %v9564 = vunpack.c.l.b16 %v9309
    %v9565 = vunpack.c.h.b16 %v9309
    %v9566 = vunpack.c.l.b16 %v9310
    %v9567 = vunpack.c.h.b16 %v9310
    %v9568 = vunpack.c.l.b16 %v9311
    %v9569 = vunpack.c.h.b16 %v9311
    %v9570 = vunpack.c.l.b16 %v9312
    %v9571 = vunpack.c.h.b16 %v9312
    %v9572 = vpack.c.b16 %v9534, %v9532
    %v9573 = vpack.c.b16 %v9535, %v9533
    %v9574 = vpack.c.b16 %v9538, %v9536
    %v9575 = vpack.c.b16 %v9539, %v9537
    %v9576 = vpack.c.b16 %v9542, %v9540
    %v9577 = vpack.c.b16 %v9543, %v9541
    %v9578 = vpack.c.b16 %v9546, %v9544
    %v9579 = vpack.c.b16 %v9547, %v9545
    %v9580 = vpack.c.b16 %v9550, %v9548
    %v9581 = vpack.c.b16 %v9551, %v9549
    %v9582 = vpack.c.b16 %v9554, %v9552
    %v9583 = vpack.c.b16 %v9555, %v9553
    %v9584 = vpack.c.b16 %v9558, %v9556
    %v9585 = vpack.c.b16 %v9559, %v9557
    %v9586 = vpack.c.b16 %v9562, %v9560
    %v9587 = vpack.c.b16 %v9563, %v9561
    %v9588 = vpack.c.b16 %v9566, %v9564
    %v9589 = vpack.c.b16 %v9567, %v9565
    %v9590 = vpack.c.b16 %v9570, %v9568
    %v9591 = vpack.c.b16 %v9571, %v9569
    %v9613 = vsel %vm187, %v9288, 0
    %v9616 = vsel %vm187, %v9290, 0
    %v9619 = vsel %vm187, %v9292, 0
    %9621 = vmatprep.subr.bf16.mxu0 %v9573
    %9622 = vmatpush1.bf16.msra.mxu0 %v9572
    %9623 = vmatprep.subr.bf16.mxu0 %v9575
    %9624 = vmatpush1.bf16.msra.mxu0 %v9574
    %9625 = vmatprep.subr.bf16.mxu0 %v9577
    %9626 = vmatpush1.bf16.msra.mxu0 %v9576
    %9627 = vmatprep.subr.bf16.mxu0 %v9579
    %9628 = vmatpush1.bf16.msra.mxu0 %v9578
    %9629 = vmatprep.subr.bf16.mxu0 %v9581
    %9630 = vmatpush1.bf16.msra.mxu0 %v9580
    %9631 = vmatprep.subr.bf16.mxu0 %v9583
    %9632 = vmatpush1.bf16.msra.mxu0 %v9582
    %9633 = vmatprep.subr.bf16.mxu0 %v9585
    %9634 = vmatpush1.bf16.msra.mxu0 %v9584
    %9635 = vmatprep.subr.bf16.mxu0 %v9587
    %9636 = vmatpush1.bf16.msra.mxu0 %v9586
    %9637 = vmatprep.subr.bf16.mxu0 %v9589
    %9638 = vmatpush1.bf16.msra.mxu0 %v9588
    %9639 = vmatprep.subr.bf16.mxu0 %v9591
    %9640 = vmatpush1.bf16.msra.mxu0 %v9590
    %9641 = vmatprep.subr.bf16.mxu0 0
    %9642 = vmatpush1.bf16.msra.mxu0 0
    %9643 = vmatprep.subr.bf16.mxu0 0
    %9644 = vmatpush1.bf16.msra.mxu0 0
    %9645 = vmatprep.subr.bf16.mxu0 0
    %9646 = vmatpush1.bf16.msra.mxu0 0
    %9647 = vmatprep.subr.bf16.mxu0 0
    %9648 = vmatpush1.bf16.msra.mxu0 0
    %9649 = vmatprep.subr.bf16.mxu0 0
    %9650 = vmatpush1.bf16.msra.mxu0 0
    %9651 = vmatprep.subr.bf16.mxu0 0
    %9652 = vmatpush1.bf16.msra.mxu0 0
    %9653 = vmatprep.mubr.bf16.mxu0 %v9613
    %9654 = vmatmul.mubr.bf16.gmra.mrb[0].mxu0 %v9287
    %v9655 = vpop.f32.mrb[0].mxu0
    %v9656 = vadd.f32 %v9484, %v9655
    %v9657 = vpop.f32.mrb[0].mxu0
    %v9658 = vadd.f32 %v9486, %v9657
    %v9659 = vpop.f32.mrb[0].mxu0
    %v9660 = vadd.f32 %v9488, %v9659
    %v9661 = vpop.f32.mrb[0].mxu0
    %v9662 = vadd.f32 %v9490, %v9661
    %9663 = vmatprep.mubr.bf16.mxu0 %v9616
    %9664 = vmatmul.mubr.bf16.gmra.mrb[0].mxu0 %v9289
    %v9665 = vpop.f32.mrb[0].mxu0
    %v9666 = vadd.f32 %v9494, %v9665
    %v9667 = vpop.f32.mrb[0].mxu0
    %v9668 = vadd.f32 %v9496, %v9667
    %v9669 = vpop.f32.mrb[0].mxu0
    %v9670 = vadd.f32 %v9498, %v9669
    %v9671 = vpop.f32.mrb[0].mxu0
    %v9672 = vadd.f32 %v9500, %v9671
    %9673 = vmatprep.mubr.bf16.mxu0 %v9619
    %9674 = vmatmul.mubr.bf16.gmra.mrb[0].mxu0 %v9291
    %v9675 = vpop.f32.mrb[0].mxu0
    %v9676 = vadd.f32 %v9504, %v9675
    %v9677 = vpop.f32.mrb[0].mxu0
    %v9678 = vadd.f32 %v9506, %v9677
    %v9679 = vpop.f32.mrb[0].mxu0
    %v9680 = vadd.f32 %v9508, %v9679
    %v9681 = vpop.f32.mrb[0].mxu0
    %v9682 = vadd.f32 %v9510, %v9681
    %9683 = vdwg.mxu0
    %s9684 = scalar_lea.vmem [#allocation7], 32
    %v9685 = vld [vmem:[%s9684] sm:$0xff]
    %v9686 = vld [vmem:[%s9684 + $0x8] sm:$0xff]
    %v9687 = vld [vmem:[%s9684 + $0x20] sm:$0xff]
    %v9688 = vld [vmem:[%s9684 + $0x28] sm:$0xff]
    %v9689 = vld [vmem:[%s9684 + $0x40] sm:$0xff]
    %v9690 = vld [vmem:[%s9684 + $0x48] sm:$0xff]
    %s9691 = scalar_lea.vmem [#allocation18], 320
    %v9692 = vld [vmem:[%s9691] sm:$0xff]
    %v9693 = vld [vmem:[%s9691 + $0x8] sm:$0xff]
    %v9694 = vld [vmem:[%s9691 + $0x10] sm:$0xff]
    %v9695 = vld [vmem:[%s9691 + $0x18] sm:$0xff]
    %v9696 = vld [vmem:[%s9691 + $0x20] sm:$0xff]
    %v9697 = vld [vmem:[%s9691 + $0x28] sm:$0xff]
    %v9698 = vld [vmem:[%s9691 + $0x30] sm:$0xff]
    %v9699 = vld [vmem:[%s9691 + $0x38] sm:$0xff]
    %v9700 = vld [vmem:[%s9691 + $0x40] sm:$0xff]
    %v9701 = vld [vmem:[%s9691 + $0x48] sm:$0xff]
    %v9702 = vld [vmem:[%s9691 + $0x50] sm:$0xff]
    %v9703 = vld [vmem:[%s9691 + $0x58] sm:$0xff]
    %v9704 = vld [vmem:[%s9691 + $0x60] sm:$0xff]
    %v9705 = vld [vmem:[%s9691 + $0x68] sm:$0xff]
    %v9706 = vld [vmem:[%s9691 + $0x70] sm:$0xff]
    %v9707 = vld [vmem:[%s9691 + $0x78] sm:$0xff]
    %v9708 = vld [vmem:[%s9691 + $0x80] sm:$0xff]
    %v9709 = vld [vmem:[%s9691 + $0x88] sm:$0xff]
    %v9710 = vld [vmem:[%s9691 + $0x90] sm:$0xff]
    %v9711 = vld [vmem:[%s9691 + $0x98] sm:$0xff]
    %v9732 = vunpack.c.l.b16 %v9692
    %v9733 = vunpack.c.h.b16 %v9692
    %v9734 = vunpack.c.l.b16 %v9693
    %v9735 = vunpack.c.h.b16 %v9693
    %v9736 = vunpack.c.l.b16 %v9694
    %v9737 = vunpack.c.h.b16 %v9694
    %v9738 = vunpack.c.l.b16 %v9695
    %v9739 = vunpack.c.h.b16 %v9695
    %v9740 = vunpack.c.l.b16 %v9696
    %v9741 = vunpack.c.h.b16 %v9696
    %v9742 = vunpack.c.l.b16 %v9697
    %v9743 = vunpack.c.h.b16 %v9697
    %v9744 = vunpack.c.l.b16 %v9698
    %v9745 = vunpack.c.h.b16 %v9698
    %v9746 = vunpack.c.l.b16 %v9699
    %v9747 = vunpack.c.h.b16 %v9699
    %v9748 = vunpack.c.l.b16 %v9700
    %v9749 = vunpack.c.h.b16 %v9700
    %v9750 = vunpack.c.l.b16 %v9701
    %v9751 = vunpack.c.h.b16 %v9701
    %v9752 = vunpack.c.l.b16 %v9702
    %v9753 = vunpack.c.h.b16 %v9702
    %v9754 = vunpack.c.l.b16 %v9703
    %v9755 = vunpack.c.h.b16 %v9703
    %v9756 = vunpack.c.l.b16 %v9704
    %v9757 = vunpack.c.h.b16 %v9704
    %v9758 = vunpack.c.l.b16 %v9705
    %v9759 = vunpack.c.h.b16 %v9705
    %v9760 = vunpack.c.l.b16 %v9706
    %v9761 = vunpack.c.h.b16 %v9706
    %v9762 = vunpack.c.l.b16 %v9707
    %v9763 = vunpack.c.h.b16 %v9707
    %v9764 = vunpack.c.l.b16 %v9708
    %v9765 = vunpack.c.h.b16 %v9708
    %v9766 = vunpack.c.l.b16 %v9709
    %v9767 = vunpack.c.h.b16 %v9709
    %v9768 = vunpack.c.l.b16 %v9710
    %v9769 = vunpack.c.h.b16 %v9710
    %v9770 = vunpack.c.l.b16 %v9711
    %v9771 = vunpack.c.h.b16 %v9711
    %v9772 = vpack.c.b16 %v9734, %v9732
    %v9773 = vpack.c.b16 %v9735, %v9733
    %v9774 = vpack.c.b16 %v9738, %v9736
    %v9775 = vpack.c.b16 %v9739, %v9737
    %v9776 = vpack.c.b16 %v9742, %v9740
    %v9777 = vpack.c.b16 %v9743, %v9741
    %v9778 = vpack.c.b16 %v9746, %v9744
    %v9779 = vpack.c.b16 %v9747, %v9745
    %v9780 = vpack.c.b16 %v9750, %v9748
    %v9781 = vpack.c.b16 %v9751, %v9749
    %v9782 = vpack.c.b16 %v9754, %v9752
    %v9783 = vpack.c.b16 %v9755, %v9753
    %v9784 = vpack.c.b16 %v9758, %v9756
    %v9785 = vpack.c.b16 %v9759, %v9757
    %v9786 = vpack.c.b16 %v9762, %v9760
    %v9787 = vpack.c.b16 %v9763, %v9761
    %v9788 = vpack.c.b16 %v9766, %v9764
    %v9789 = vpack.c.b16 %v9767, %v9765
    %v9790 = vpack.c.b16 %v9770, %v9768
    %v9791 = vpack.c.b16 %v9771, %v9769
    %v9813 = vsel %vm187, %v9686, 0
    %v9816 = vsel %vm187, %v9688, 0
    %v9819 = vsel %vm187, %v9690, 0
    %9821 = vmatprep.subr.bf16.mxu0 %v9773
    %9822 = vmatpush1.bf16.msra.mxu0 %v9772
    %9823 = vmatprep.subr.bf16.mxu0 %v9775
    %9824 = vmatpush1.bf16.msra.mxu0 %v9774
    %9825 = vmatprep.subr.bf16.mxu0 %v9777
    %9826 = vmatpush1.bf16.msra.mxu0 %v9776
    %9827 = vmatprep.subr.bf16.mxu0 %v9779
    %9828 = vmatpush1.bf16.msra.mxu0 %v9778
    %9829 = vmatprep.subr.bf16.mxu0 %v9781
    %9830 = vmatpush1.bf16.msra.mxu0 %v9780
    %9831 = vmatprep.subr.bf16.mxu0 %v9783
    %9832 = vmatpush1.bf16.msra.mxu0 %v9782
    %9833 = vmatprep.subr.bf16.mxu0 %v9785
    %9834 = vmatpush1.bf16.msra.mxu0 %v9784
    %9835 = vmatprep.subr.bf16.mxu0 %v9787
    %9836 = vmatpush1.bf16.msra.mxu0 %v9786
    %9837 = vmatprep.subr.bf16.mxu0 %v9789
    %9838 = vmatpush1.bf16.msra.mxu0 %v9788
    %9839 = vmatprep.subr.bf16.mxu0 %v9791
    %9840 = vmatpush1.bf16.msra.mxu0 %v9790
    %9841 = vmatprep.subr.bf16.mxu0 0
    %9842 = vmatpush1.bf16.msra.mxu0 0
    %9843 = vmatprep.subr.bf16.mxu0 0
    %9844 = vmatpush1.bf16.msra.mxu0 0
    %9845 = vmatprep.subr.bf16.mxu0 0
    %9846 = vmatpush1.bf16.msra.mxu0 0
    %9847 = vmatprep.subr.bf16.mxu0 0
    %9848 = vmatpush1.bf16.msra.mxu0 0
    %9849 = vmatprep.subr.bf16.mxu0 0
    %9850 = vmatpush1.bf16.msra.mxu0 0
    %9851 = vmatprep.subr.bf16.mxu0 0
    %9852 = vmatpush1.bf16.msra.mxu0 0
    %9853 = vmatprep.mubr.bf16.mxu0 %v9813
    %9854 = vmatmul.mubr.bf16.gmra.mrb[0].mxu0 %v9685
    %v9855 = vpop.f32.mrb[0].mxu0
    %v9856 = vadd.f32 0.0, %v9855
    %v9857 = vpop.f32.mrb[0].mxu0
    %v9858 = vadd.f32 0.0, %v9857
    %v9859 = vpop.f32.mrb[0].mxu0
    %v9860 = vadd.f32 0.0, %v9859
    %v9861 = vpop.f32.mrb[0].mxu0
    %v9862 = vadd.f32 0.0, %v9861
    %9863 = vmatprep.mubr.bf16.mxu0 %v9816
    %9864 = vmatmul.mubr.bf16.gmra.mrb[0].mxu0 %v9687
    %v9865 = vpop.f32.mrb[0].mxu0
    %v9866 = vadd.f32 0.0, %v9865
    %v9867 = vpop.f32.mrb[0].mxu0
    %v9868 = vadd.f32 0.0, %v9867
    %v9869 = vpop.f32.mrb[0].mxu0
    %v9870 = vadd.f32 0.0, %v9869
    %v9871 = vpop.f32.mrb[0].mxu0
    %v9872 = vadd.f32 0.0, %v9871
    %9873 = vmatprep.mubr.bf16.mxu0 %v9819
    %9874 = vmatmul.mubr.bf16.gmra.mrb[0].mxu0 %v9689
    %v9875 = vpop.f32.mrb[0].mxu0
    %v9876 = vadd.f32 0.0, %v9875
    %v9877 = vpop.f32.mrb[0].mxu0
    %v9878 = vadd.f32 0.0, %v9877
    %v9879 = vpop.f32.mrb[0].mxu0
    %v9880 = vadd.f32 0.0, %v9879
    %v9881 = vpop.f32.mrb[0].mxu0
    %v9882 = vadd.f32 0.0, %v9881
    %9883 = vdwg.mxu0
    %v9884 = vadd.f32 %v9656, %v9856
    %v9885 = vadd.f32 %v9658, %v9858
    %v9886 = vadd.f32 %v9660, %v9860
    %v9887 = vadd.f32 %v9662, %v9862
    %v9888 = vadd.f32 %v9666, %v9866
    %v9889 = vadd.f32 %v9668, %v9868
    %v9890 = vadd.f32 %v9670, %v9870
    %v9891 = vadd.f32 %v9672, %v9872
    %v9892 = vadd.f32 %v9676, %v9876
    %v9893 = vadd.f32 %v9678, %v9878
    %v9894 = vadd.f32 %v9680, %v9880
    %v9895 = vadd.f32 %v9682, %v9882
    %v9896 = vld [vmem:[%s12] sm:$0x3]
    %v9898 = vlaneseq
    %v9899 = vshrl.u32 %v9898, 7
    %v9900 = vsub.s32 0, %v9899
    %v9901 = vrot.slane %v9896, %v9900
    %v9902 = vlaneseq
    %v9903 = vshrl.u32 %v9902, 7
    %v9904 = vsub.s32 1, %v9903
    %v9905 = vrot.slane %v9896, %v9904
    %v9908 = vadd.f32 %v9884, %v9901
    %v9909 = vadd.f32 %v9885, %v9905
    %v9910 = vadd.f32 %v9886, %v9901
    %v9911 = vadd.f32 %v9887, %v9905
    %v9912 = vadd.f32 %v9888, %v9901
    %v9913 = vadd.f32 %v9889, %v9905
    %v9914 = vadd.f32 %v9890, %v9901
    %v9915 = vadd.f32 %v9891, %v9905
    %v9916 = vadd.f32 %v9892, %v9901
    %v9917 = vadd.f32 %v9893, %v9905
    %v9918 = vadd.f32 %v9894, %v9901
    %v9919 = vadd.f32 %v9895, %v9905
    %v9920 = vmax.f32 %v9908, 0.0
    %v9921 = vmax.f32 %v9909, 0.0
    %v9922 = vmax.f32 %v9910, 0.0
    %v9923 = vmax.f32 %v9911, 0.0
    %v9924 = vmax.f32 %v9912, 0.0
    %v9925 = vmax.f32 %v9913, 0.0
    %v9926 = vmax.f32 %v9914, 0.0
    %v9927 = vmax.f32 %v9915, 0.0
    %v9928 = vmax.f32 %v9916, 0.0
    %v9929 = vmax.f32 %v9917, 0.0
    %v9930 = vmax.f32 %v9918, 0.0
    %v9931 = vmax.f32 %v9919, 0.0
    %v9932 = vpack.c.bf16 %v9922, %v9920
    %v9933 = vpack.c.bf16 %v9923, %v9921
    %v9934 = vpack.c.bf16 %v9926, %v9924
    %v9935 = vpack.c.bf16 %v9927, %v9925
    %v9936 = vpack.c.bf16 %v9930, %v9928
    %v9937 = vpack.c.bf16 %v9931, %v9929
    %v9938 = vld [vmem:[#allocation19] sm:$0xf]
    %v9939 = vld [vmem:[#allocation19 + $0x4] sm:$0xf]
    %v9940 = vld [vmem:[#allocation19 + $0x8] sm:$0xf]
    %v9941 = vld [vmem:[#allocation19 + $0xc] sm:$0xf]
    %v9942 = vld [vmem:[#allocation19 + $0x10] sm:$0xf]
    %v9943 = vld [vmem:[#allocation19 + $0x14] sm:$0xf]
    %v9944 = vld [vmem:[#allocation19 + $0x18] sm:$0xf]
    %v9945 = vld [vmem:[#allocation19 + $0x1c] sm:$0xf]
    %v9946 = vld [vmem:[#allocation19 + $0x20] sm:$0xf]
    %v9947 = vld [vmem:[#allocation19 + $0x24] sm:$0xf]
    %v9948 = vld [vmem:[#allocation19 + $0x28] sm:$0xf]
    %v9949 = vld [vmem:[#allocation19 + $0x2c] sm:$0xf]
    %v9950 = vld [vmem:[#allocation19 + $0x30] sm:$0xf]
    %v9951 = vld [vmem:[#allocation19 + $0x34] sm:$0xf]
    %v9952 = vld [vmem:[#allocation19 + $0x38] sm:$0xf]
    %v9953 = vld [vmem:[#allocation19 + $0x3c] sm:$0xf]
    %v9954 = vld [vmem:[#allocation19 + $0x40] sm:$0xf]
    %v9955 = vld [vmem:[#allocation19 + $0x44] sm:$0xf]
    %v9956 = vld [vmem:[#allocation19 + $0x48] sm:$0xf]
    %v9957 = vld [vmem:[#allocation19 + $0x4c] sm:$0xf]
    %v9958 = vld [vmem:[#allocation19 + $0x50] sm:$0xf]
    %v9959 = vld [vmem:[#allocation19 + $0x54] sm:$0xf]
    %v9960 = vld [vmem:[#allocation19 + $0x58] sm:$0xf]
    %v9961 = vld [vmem:[#allocation19 + $0x5c] sm:$0xf]
    %s9962 = scalar_lea.vmem [#allocation19], 96
    %v9963 = vld [vmem:[%s9962] sm:$0xf]
    %v9964 = vld [vmem:[%s9962 + $0x4] sm:$0xf]
    %v9965 = vld [vmem:[%s9962 + $0x8] sm:$0xf]
    %v9966 = vld [vmem:[%s9962 + $0xc] sm:$0xf]
    %v9967 = vld [vmem:[%s9962 + $0x10] sm:$0xf]
    %v9968 = vld [vmem:[%s9962 + $0x14] sm:$0xf]
    %v9969 = vld [vmem:[%s9962 + $0x18] sm:$0xf]
    %v9970 = vld [vmem:[%s9962 + $0x1c] sm:$0xf]
    %v9971 = vld [vmem:[%s9962 + $0x20] sm:$0xf]
    %v9972 = vld [vmem:[%s9962 + $0x24] sm:$0xf]
    %v9973 = vld [vmem:[%s9962 + $0x28] sm:$0xf]
    %v9974 = vld [vmem:[%s9962 + $0x2c] sm:$0xf]
    %v9975 = vld [vmem:[%s9962 + $0x30] sm:$0xf]
    %v9976 = vld [vmem:[%s9962 + $0x34] sm:$0xf]
    %v9977 = vld [vmem:[%s9962 + $0x38] sm:$0xf]
    %v9978 = vld [vmem:[%s9962 + $0x3c] sm:$0xf]
    %v9979 = vld [vmem:[%s9962 + $0x40] sm:$0xf]
    %v9980 = vld [vmem:[%s9962 + $0x44] sm:$0xf]
    %v9981 = vld [vmem:[%s9962 + $0x48] sm:$0xf]
    %v9982 = vld [vmem:[%s9962 + $0x4c] sm:$0xf]
    %v9983 = vld [vmem:[%s9962 + $0x50] sm:$0xf]
    %v9984 = vld [vmem:[%s9962 + $0x54] sm:$0xf]
    %v9985 = vld [vmem:[%s9962 + $0x58] sm:$0xf]
    %v9986 = vld [vmem:[%s9962 + $0x5c] sm:$0xf]
    %v10011 = vunpack.c.l.b16 %v9963
    %v10012 = vunpack.c.l.b16 %v9964
    %v10013 = vunpack.c.l.b16 %v9965
    %v10014 = vunpack.c.l.b16 %v9966
    %v10015 = vunpack.c.l.b16 %v9967
    %v10016 = vunpack.c.l.b16 %v9968
    %v10017 = vunpack.c.l.b16 %v9969
    %v10018 = vunpack.c.l.b16 %v9970
    %v10019 = vunpack.c.l.b16 %v9971
    %v10020 = vunpack.c.l.b16 %v9972
    %v10021 = vunpack.c.l.b16 %v9973
    %v10022 = vunpack.c.l.b16 %v9974
    %v10023 = vunpack.c.l.b16 %v9975
    %v10024 = vunpack.c.l.b16 %v9976
    %v10025 = vunpack.c.l.b16 %v9977
    %v10026 = vunpack.c.l.b16 %v9978
    %v10027 = vunpack.c.l.b16 %v9979
    %v10028 = vunpack.c.l.b16 %v9980
    %v10029 = vunpack.c.l.b16 %v9981
    %v10030 = vunpack.c.l.b16 %v9982
    %v10031 = vunpack.c.l.b16 %v9983
    %v10032 = vunpack.c.l.b16 %v9984
    %v10033 = vunpack.c.l.b16 %v9985
    %v10034 = vunpack.c.l.b16 %v9986
    %v10035 = vpack.c.b16 %v10012, %v10011
    %v10036 = vpack.c.b16 %v10014, %v10013
    %v10037 = vpack.c.b16 %v10016, %v10015
    %v10038 = vpack.c.b16 %v10018, %v10017
    %v10039 = vpack.c.b16 %v10020, %v10019
    %v10040 = vpack.c.b16 %v10022, %v10021
    %v10041 = vpack.c.b16 %v10024, %v10023
    %v10042 = vpack.c.b16 %v10026, %v10025
    %v10043 = vpack.c.b16 %v10028, %v10027
    %v10044 = vpack.c.b16 %v10030, %v10029
    %v10045 = vpack.c.b16 %v10032, %v10031
    %v10046 = vpack.c.b16 %v10034, %v10033
    %vm10059 = vcmask 523264
    %v10061 = vsel %vm10059, %v9935, 0
    %10063 = vmatprep.subr.bf16.mxu0 0
    %10064 = vmatpush1.bf16.msra.mxu0 %v10035
    %10065 = vmatprep.subr.bf16.mxu0 0
    %10066 = vmatpush1.bf16.msra.mxu0 %v10036
    %10067 = vmatprep.subr.bf16.mxu0 0
    %10068 = vmatpush1.bf16.msra.mxu0 %v10037
    %10069 = vmatprep.subr.bf16.mxu0 0
    %10070 = vmatpush1.bf16.msra.mxu0 %v10038
    %10071 = vmatprep.subr.bf16.mxu0 0
    %10072 = vmatpush1.bf16.msra.mxu0 %v10039
    %10073 = vmatprep.subr.bf16.mxu0 0
    %10074 = vmatpush1.bf16.msra.mxu0 %v10040
    %10075 = vmatprep.subr.bf16.mxu0 0
    %10076 = vmatpush1.bf16.msra.mxu0 %v10041
    %10077 = vmatprep.subr.bf16.mxu0 0
    %10078 = vmatpush1.bf16.msra.mxu0 %v10042
    %10079 = vmatprep.subr.bf16.mxu0 0
    %10080 = vmatpush1.bf16.msra.mxu0 %v10043
    %10081 = vmatprep.subr.bf16.mxu0 0
    %10082 = vmatpush1.bf16.msra.mxu0 %v10044
    %10083 = vmatprep.subr.bf16.mxu0 0
    %10084 = vmatpush1.bf16.msra.mxu0 %v10045
    %10085 = vmatprep.subr.bf16.mxu0 0
    %10086 = vmatpush1.bf16.msra.mxu0 %v10046
    %10087 = vmatprep.subr.bf16.mxu0 0
    %10088 = vmatpush1.bf16.msra.mxu0 0
    %10089 = vmatprep.subr.bf16.mxu0 0
    %10090 = vmatpush1.bf16.msra.mxu0 0
    %10091 = vmatprep.subr.bf16.mxu0 0
    %10092 = vmatpush1.bf16.msra.mxu0 0
    %10093 = vmatprep.subr.bf16.mxu0 0
    %10094 = vmatpush1.bf16.msra.mxu0 0
    %10095 = vmatprep.mubr.bf16.mxu0 %v10061
    %10096 = vmatmul.mubr.bf16.gmra.mrb[0].mxu0 %v9934
    %v10097 = vpop.f32.mrb[0].mxu0
    %v10098 = vadd.f32 0.0, %v10097
    %v10099 = vpop.f32.mrb[0].mxu0
    %v10100 = vpop.f32.mrb[0].mxu0
    %v10101 = vadd.f32 0.0, %v10100
    %v10102 = vpop.f32.mrb[0].mxu0
    %10103 = vdwg.mxu0
    %v10128 = vunpack.c.l.b16 %v9938
    %v10129 = vunpack.c.l.b16 %v9939
    %v10130 = vunpack.c.l.b16 %v9940
    %v10131 = vunpack.c.l.b16 %v9941
    %v10132 = vunpack.c.l.b16 %v9942
    %v10133 = vunpack.c.l.b16 %v9943
    %v10134 = vunpack.c.l.b16 %v9944
    %v10135 = vunpack.c.l.b16 %v9945
    %v10136 = vunpack.c.l.b16 %v9946
    %v10137 = vunpack.c.l.b16 %v9947
    %v10138 = vunpack.c.l.b16 %v9948
    %v10139 = vunpack.c.l.b16 %v9949
    %v10140 = vunpack.c.l.b16 %v9950
    %v10141 = vunpack.c.l.b16 %v9951
    %v10142 = vunpack.c.l.b16 %v9952
    %v10143 = vunpack.c.l.b16 %v9953
    %v10144 = vunpack.c.l.b16 %v9954
    %v10145 = vunpack.c.l.b16 %v9955
    %v10146 = vunpack.c.l.b16 %v9956
    %v10147 = vunpack.c.l.b16 %v9957
    %v10148 = vunpack.c.l.b16 %v9958
    %v10149 = vunpack.c.l.b16 %v9959
    %v10150 = vunpack.c.l.b16 %v9960
    %v10151 = vunpack.c.l.b16 %v9961
    %v10152 = vpack.c.b16 %v10129, %v10128
    %v10153 = vpack.c.b16 %v10131, %v10130
    %v10154 = vpack.c.b16 %v10133, %v10132
    %v10155 = vpack.c.b16 %v10135, %v10134
    %v10156 = vpack.c.b16 %v10137, %v10136
    %v10157 = vpack.c.b16 %v10139, %v10138
    %v10158 = vpack.c.b16 %v10141, %v10140
    %v10159 = vpack.c.b16 %v10143, %v10142
    %v10160 = vpack.c.b16 %v10145, %v10144
    %v10161 = vpack.c.b16 %v10147, %v10146
    %v10162 = vpack.c.b16 %v10149, %v10148
    %v10163 = vpack.c.b16 %v10151, %v10150
    %v10177 = vsel %vm10059, %v9933, 0
    %10179 = vmatprep.subr.bf16.mxu0 0
    %10180 = vmatpush1.bf16.msra.mxu0 %v10152
    %10181 = vmatprep.subr.bf16.mxu0 0
    %10182 = vmatpush1.bf16.msra.mxu0 %v10153
    %10183 = vmatprep.subr.bf16.mxu0 0
    %10184 = vmatpush1.bf16.msra.mxu0 %v10154
    %10185 = vmatprep.subr.bf16.mxu0 0
    %10186 = vmatpush1.bf16.msra.mxu0 %v10155
    %10187 = vmatprep.subr.bf16.mxu0 0
    %10188 = vmatpush1.bf16.msra.mxu0 %v10156
    %10189 = vmatprep.subr.bf16.mxu0 0
    %10190 = vmatpush1.bf16.msra.mxu0 %v10157
    %10191 = vmatprep.subr.bf16.mxu0 0
    %10192 = vmatpush1.bf16.msra.mxu0 %v10158
    %10193 = vmatprep.subr.bf16.mxu0 0
    %10194 = vmatpush1.bf16.msra.mxu0 %v10159
    %10195 = vmatprep.subr.bf16.mxu0 0
    %10196 = vmatpush1.bf16.msra.mxu0 %v10160
    %10197 = vmatprep.subr.bf16.mxu0 0
    %10198 = vmatpush1.bf16.msra.mxu0 %v10161
    %10199 = vmatprep.subr.bf16.mxu0 0
    %10200 = vmatpush1.bf16.msra.mxu0 %v10162
    %10201 = vmatprep.subr.bf16.mxu0 0
    %10202 = vmatpush1.bf16.msra.mxu0 %v10163
    %10203 = vmatprep.subr.bf16.mxu0 0
    %10204 = vmatpush1.bf16.msra.mxu0 0
    %10205 = vmatprep.subr.bf16.mxu0 0
    %10206 = vmatpush1.bf16.msra.mxu0 0
    %10207 = vmatprep.subr.bf16.mxu0 0
    %10208 = vmatpush1.bf16.msra.mxu0 0
    %10209 = vmatprep.subr.bf16.mxu0 0
    %10210 = vmatpush1.bf16.msra.mxu0 0
    %10211 = vmatprep.mubr.bf16.mxu0 %v10177
    %10212 = vmatmul.mubr.bf16.gmra.mrb[0].mxu0 %v9932
    %v10213 = vpop.f32.mrb[0].mxu0
    %v10214 = vadd.f32 %v10098, %v10213
    %v10215 = vpop.f32.mrb[0].mxu0
    %v10216 = vpop.f32.mrb[0].mxu0
    %v10217 = vadd.f32 %v10101, %v10216
    %v10218 = vpop.f32.mrb[0].mxu0
    %10219 = vdwg.mxu0
    %s10220 = scalar_lea.vmem [#allocation19], 192
    %v10221 = vld [vmem:[%s10220] sm:$0xf]
    %v10222 = vld [vmem:[%s10220 + $0x4] sm:$0xf]
    %v10223 = vld [vmem:[%s10220 + $0x8] sm:$0xf]
    %v10224 = vld [vmem:[%s10220 + $0xc] sm:$0xf]
    %v10225 = vld [vmem:[%s10220 + $0x10] sm:$0xf]
    %v10226 = vld [vmem:[%s10220 + $0x14] sm:$0xf]
    %v10227 = vld [vmem:[%s10220 + $0x18] sm:$0xf]
    %v10228 = vld [vmem:[%s10220 + $0x1c] sm:$0xf]
    %v10229 = vld [vmem:[%s10220 + $0x20] sm:$0xf]
    %v10230 = vld [vmem:[%s10220 + $0x24] sm:$0xf]
    %v10231 = vld [vmem:[%s10220 + $0x28] sm:$0xf]
    %v10232 = vld [vmem:[%s10220 + $0x2c] sm:$0xf]
    %v10233 = vld [vmem:[%s10220 + $0x30] sm:$0xf]
    %v10234 = vld [vmem:[%s10220 + $0x34] sm:$0xf]
    %v10235 = vld [vmem:[%s10220 + $0x38] sm:$0xf]
    %v10236 = vld [vmem:[%s10220 + $0x3c] sm:$0xf]
    %v10237 = vld [vmem:[%s10220 + $0x40] sm:$0xf]
    %v10238 = vld [vmem:[%s10220 + $0x44] sm:$0xf]
    %v10239 = vld [vmem:[%s10220 + $0x48] sm:$0xf]
    %v10240 = vld [vmem:[%s10220 + $0x4c] sm:$0xf]
    %v10241 = vld [vmem:[%s10220 + $0x50] sm:$0xf]
    %v10242 = vld [vmem:[%s10220 + $0x54] sm:$0xf]
    %v10243 = vld [vmem:[%s10220 + $0x58] sm:$0xf]
    %v10244 = vld [vmem:[%s10220 + $0x5c] sm:$0xf]
    %v10269 = vunpack.c.l.b16 %v10221
    %v10270 = vunpack.c.l.b16 %v10222
    %v10271 = vunpack.c.l.b16 %v10223
    %v10272 = vunpack.c.l.b16 %v10224
    %v10273 = vunpack.c.l.b16 %v10225
    %v10274 = vunpack.c.l.b16 %v10226
    %v10275 = vunpack.c.l.b16 %v10227
    %v10276 = vunpack.c.l.b16 %v10228
    %v10277 = vunpack.c.l.b16 %v10229
    %v10278 = vunpack.c.l.b16 %v10230
    %v10279 = vunpack.c.l.b16 %v10231
    %v10280 = vunpack.c.l.b16 %v10232
    %v10281 = vunpack.c.l.b16 %v10233
    %v10282 = vunpack.c.l.b16 %v10234
    %v10283 = vunpack.c.l.b16 %v10235
    %v10284 = vunpack.c.l.b16 %v10236
    %v10285 = vunpack.c.l.b16 %v10237
    %v10286 = vunpack.c.l.b16 %v10238
    %v10287 = vunpack.c.l.b16 %v10239
    %v10288 = vunpack.c.l.b16 %v10240
    %v10289 = vunpack.c.l.b16 %v10241
    %v10290 = vunpack.c.l.b16 %v10242
    %v10291 = vunpack.c.l.b16 %v10243
    %v10292 = vunpack.c.l.b16 %v10244
    %v10293 = vpack.c.b16 %v10270, %v10269
    %v10294 = vpack.c.b16 %v10272, %v10271
    %v10295 = vpack.c.b16 %v10274, %v10273
    %v10296 = vpack.c.b16 %v10276, %v10275
    %v10297 = vpack.c.b16 %v10278, %v10277
    %v10298 = vpack.c.b16 %v10280, %v10279
    %v10299 = vpack.c.b16 %v10282, %v10281
    %v10300 = vpack.c.b16 %v10284, %v10283
    %v10301 = vpack.c.b16 %v10286, %v10285
    %v10302 = vpack.c.b16 %v10288, %v10287
    %v10303 = vpack.c.b16 %v10290, %v10289
    %v10304 = vpack.c.b16 %v10292, %v10291
    %v10318 = vsel %vm10059, %v9937, 0
    %10320 = vmatprep.subr.bf16.mxu0 0
    %10321 = vmatpush1.bf16.msra.mxu0 %v10293
    %10322 = vmatprep.subr.bf16.mxu0 0
    %10323 = vmatpush1.bf16.msra.mxu0 %v10294
    %10324 = vmatprep.subr.bf16.mxu0 0
    %10325 = vmatpush1.bf16.msra.mxu0 %v10295
    %10326 = vmatprep.subr.bf16.mxu0 0
    %10327 = vmatpush1.bf16.msra.mxu0 %v10296
    %10328 = vmatprep.subr.bf16.mxu0 0
    %10329 = vmatpush1.bf16.msra.mxu0 %v10297
    %10330 = vmatprep.subr.bf16.mxu0 0
    %10331 = vmatpush1.bf16.msra.mxu0 %v10298
    %10332 = vmatprep.subr.bf16.mxu0 0
    %10333 = vmatpush1.bf16.msra.mxu0 %v10299
    %10334 = vmatprep.subr.bf16.mxu0 0
    %10335 = vmatpush1.bf16.msra.mxu0 %v10300
    %10336 = vmatprep.subr.bf16.mxu0 0
    %10337 = vmatpush1.bf16.msra.mxu0 %v10301
    %10338 = vmatprep.subr.bf16.mxu0 0
    %10339 = vmatpush1.bf16.msra.mxu0 %v10302
    %10340 = vmatprep.subr.bf16.mxu0 0
    %10341 = vmatpush1.bf16.msra.mxu0 %v10303
    %10342 = vmatprep.subr.bf16.mxu0 0
    %10343 = vmatpush1.bf16.msra.mxu0 %v10304
    %10344 = vmatprep.subr.bf16.mxu0 0
    %10345 = vmatpush1.bf16.msra.mxu0 0
    %10346 = vmatprep.subr.bf16.mxu0 0
    %10347 = vmatpush1.bf16.msra.mxu0 0
    %10348 = vmatprep.subr.bf16.mxu0 0
    %10349 = vmatpush1.bf16.msra.mxu0 0
    %10350 = vmatprep.subr.bf16.mxu0 0
    %10351 = vmatpush1.bf16.msra.mxu0 0
    %10352 = vmatprep.mubr.bf16.mxu0 %v10318
    %10353 = vmatmul.mubr.bf16.gmra.mrb[0].mxu0 %v9936
    %v10354 = vpop.f32.mrb[0].mxu0
    %v10355 = vadd.f32 0.0, %v10354
    %v10356 = vpop.f32.mrb[0].mxu0
    %v10357 = vpop.f32.mrb[0].mxu0
    %v10358 = vadd.f32 0.0, %v10357
    %v10359 = vpop.f32.mrb[0].mxu0
    %10360 = vdwg.mxu0
    %v10361 = vadd.f32 %v10214, %v10355
    %v10362 = vadd.f32 %v10217, %v10358
    %v10363 = vld [vmem:[%s14] sm:$0x1]
    %v10365 = vlaneseq
    %v10366 = vshrl.u32 %v10365, 7
    %v10367 = vsub.s32 0, %v10366
    %v10368 = vrot.slane %v10363, %v10367
    %v10370 = vadd.f32 %v10361, %v10368
    %v10371 = vadd.f32 %v10362, %v10368
    %v10372 = vmax.f32 %v10370, 0.0
    %v10373 = vmax.f32 %v10371, 0.0
    %v10374 = vpack.c.bf16 %v10373, %v10372
    %v10375 = vld [vmem:[%s15] sm:$0xf]
    %v10376 = vld [vmem:[%s15 + $0x4] sm:$0xf]
    %v10377 = vld [vmem:[%s15 + $0x8] sm:$0xf]
    %v10378 = vld [vmem:[%s15 + $0xc] sm:$0xf]
    %v10379 = vld [vmem:[%s15 + $0x10] sm:$0xf]
    %v10380 = vld [vmem:[%s15 + $0x14] sm:$0xf]
    %v10381 = vld [vmem:[%s15 + $0x18] sm:$0xf]
    %v10382 = vld [vmem:[%s15 + $0x1c] sm:$0xf]
    %v10383 = vld [vmem:[%s15 + $0x20] sm:$0xf]
    %v10384 = vld [vmem:[%s15 + $0x24] sm:$0xf]
    %v10385 = vld [vmem:[%s15 + $0x28] sm:$0xf]
    %v10386 = vld [vmem:[%s15 + $0x2c] sm:$0xf]
    %v10387 = vld [vmem:[%s15 + $0x30] sm:$0xf]
    %v10388 = vld [vmem:[%s15 + $0x34] sm:$0xf]
    %v10389 = vld [vmem:[%s15 + $0x38] sm:$0xf]
    %v10390 = vld [vmem:[%s15 + $0x3c] sm:$0xf]
    %v10391 = vld [vmem:[#allocation21] sm:$0x1]
    %v10393 = vlaneseq
    %v10394 = vshrl.u32 %v10393, 7
    %v10395 = vsub.s32 0, %v10394
    %v10396 = vrot.slane %v10391, %v10395
    %v10414 = vunpack.c.l.b16 %v10375
    %v10415 = vunpack.c.l.b16 %v10376
    %v10416 = vunpack.c.l.b16 %v10377
    %v10417 = vunpack.c.l.b16 %v10378
    %v10418 = vunpack.c.l.b16 %v10379
    %v10419 = vunpack.c.l.b16 %v10380
    %v10420 = vunpack.c.l.b16 %v10381
    %v10421 = vunpack.c.l.b16 %v10382
    %v10422 = vunpack.c.l.b16 %v10383
    %v10423 = vunpack.c.l.b16 %v10384
    %v10424 = vunpack.c.l.b16 %v10385
    %v10425 = vunpack.c.l.b16 %v10386
    %v10426 = vunpack.c.l.b16 %v10387
    %v10427 = vunpack.c.l.b16 %v10388
    %v10428 = vunpack.c.l.b16 %v10389
    %v10429 = vunpack.c.l.b16 %v10390
    %v10430 = vpack.c.b16 %v10415, %v10414
    %v10431 = vpack.c.b16 %v10417, %v10416
    %v10432 = vpack.c.b16 %v10419, %v10418
    %v10433 = vpack.c.b16 %v10421, %v10420
    %v10434 = vpack.c.b16 %v10423, %v10422
    %v10435 = vpack.c.b16 %v10425, %v10424
    %v10436 = vpack.c.b16 %v10427, %v10426
    %v10437 = vpack.c.b16 %v10429, %v10428
    %10446 = vmatprep.subr.bf16.mxu0 0
    %10447 = vmatpush1.bf16.msra.mxu0 %v10430
    %10448 = vmatprep.subr.bf16.mxu0 0
    %10449 = vmatpush1.bf16.msra.mxu0 %v10431
    %10450 = vmatprep.subr.bf16.mxu0 0
    %10451 = vmatpush1.bf16.msra.mxu0 %v10432
    %10452 = vmatprep.subr.bf16.mxu0 0
    %10453 = vmatpush1.bf16.msra.mxu0 %v10433
    %10454 = vmatprep.subr.bf16.mxu0 0
    %10455 = vmatpush1.bf16.msra.mxu0 %v10434
    %10456 = vmatprep.subr.bf16.mxu0 0
    %10457 = vmatpush1.bf16.msra.mxu0 %v10435
    %10458 = vmatprep.subr.bf16.mxu0 0
    %10459 = vmatpush1.bf16.msra.mxu0 %v10436
    %10460 = vmatprep.subr.bf16.mxu0 0
    %10461 = vmatpush1.bf16.msra.mxu0 %v10437
    %10462 = vmatprep.subr.bf16.mxu0 0
    %10463 = vmatpush1.bf16.msra.mxu0 0
    %10464 = vmatprep.subr.bf16.mxu0 0
    %10465 = vmatpush1.bf16.msra.mxu0 0
    %10466 = vmatprep.subr.bf16.mxu0 0
    %10467 = vmatpush1.bf16.msra.mxu0 0
    %10468 = vmatprep.subr.bf16.mxu0 0
    %10469 = vmatpush1.bf16.msra.mxu0 0
    %10470 = vmatprep.subr.bf16.mxu0 0
    %10471 = vmatpush1.bf16.msra.mxu0 0
    %10472 = vmatprep.subr.bf16.mxu0 0
    %10473 = vmatpush1.bf16.msra.mxu0 0
    %10474 = vmatprep.subr.bf16.mxu0 0
    %10475 = vmatpush1.bf16.msra.mxu0 0
    %10476 = vmatprep.subr.bf16.mxu0 0
    %10477 = vmatpush1.bf16.msra.mxu0 0
    %10478 = vmatprep.mubr.bf16.mxu0 0
    %10479 = vmatmul.mubr.bf16.gmra.mrb[0].mxu0 %v10374
    %v10480 = vpop.f32.mrb[0].mxu0
    %v10481 = vadd.f32 %v10396, %v10480
    %v10482 = vpop.f32.mrb[0].mxu0
    %v10483 = vpop.f32.mrb[0].mxu0
    %v10484 = vadd.f32 %v10396, %v10483
    %v10485 = vpop.f32.mrb[0].mxu0
    %10486 = vdwg.mxu0
    %v10487 = vmax.f32 %v10481, 0.0
    %v10488 = vmax.f32 %v10484, 0.0
    %10489 = vst.msk [vmem:[%s17] sm:$0xff] %vm10059, %v10487
    %10490 = vst.msk [vmem:[%s17 + $0x8] sm:$0xff] %vm10059, %v10488
    // Predicated region
    $region106: #{encoder_forward.1} parent=1 // pred_check
      _
    $region107: #{encoder_forward.1} parent=1 // pred_check_branch
      %10492 = sbr.rel (0) target = $region109
    $region108: #{encoder_forward.1} parent=1 // pred_region
      _
    $region109: #{encoder_forward.1} parent=1 // pred_fallthru
      _
    // Predicated region
    $region110: #{encoder_forward.1} parent=1 // pred_check
      _
    $region111: #{encoder_forward.1} parent=1 // pred_check_branch
      %10494 = sbr.rel (0) target = $region113
    $region112: #{encoder_forward.1} parent=1 // pred_region
      _
    $region113: #{encoder_forward.1} parent=1 // pred_fallthru
      _
    %10495 = vsyncpa [#allocation9], 1
    %10496 = vsyncpa [#allocation11], 1
    %10497 = vsyncpa [#allocation14], 1
    %10498 = vsyncpa [#allocation17], 1
    %10499 = vsyncpa [#allocation20], 1

</llo_original>
